<compile_context>
chip_gen: v7x
topology: tpu7x:2x2x1
jax: 0.10.0
libtpu: 0.0.40
codegen_flags: <defaults>
</compile_context>

<pallas_src>
import numpy as np
import jax
import jax.numpy as jnp
from jax.experimental import pallas as pl
from jax.experimental.pallas import tpu as pltpu

# ---------------------------------------------------------------------------
# Static problem sizes (small shapes consistent with the module).
# ---------------------------------------------------------------------------
B_DEMO = 256             # demo batch (amortizes the one-time weight DMA)
BLOCK_B = 128            # batch tile (multiple of 8; 128 rows feed the MXU well)
H = W = 16               # input_dims = (16, 16, 1)
C_IN = 1
C1, C2 = 8, 4            # conv_channels[0], conv_channels[1]  (C2 must be 4, see NOTE)
HID = (64, 32, 16)       # hidden_layers
OUT_DIM = 1              # output_dims
K = 5                    # 5x5 convs, padding=2, stride=1 ('same')
NEG = 0.01               # F.leaky_relu default negative_slope
H1, W1 = H // 2, W // 2  # after pool1 (AdaptiveAvgPool2d == exact 2x2 avg pool here)
H2, W2 = H // 4, W // 4  # after pool2
HW, HW1, HW2 = H * W, H1 * W1, H2 * W2

# AdaptiveAvgPool2d degenerates to an exact 2x2 average pool only because the
# spatial dims are multiples of 4 (16 -> 8 -> 4); guard against silent misuse.
assert H % 4 == 0 and W % 4 == 0, "pool folding requires H, W multiples of 4"
assert C2 == 4, "module's fc1 hard-codes 4 channels into the flattened features"


def _lrelu(x):
    return jnp.where(x > 0, x, NEG * x)


# ---------------------------------------------------------------------------
# Structural (weight- and data-independent) constants, built once with numpy.
# ---------------------------------------------------------------------------
def _im2col_tensor(n):
    """E[q, tap, p] = 1 iff a 'same' 5x5 conv tap `tap` at output p reads input q."""
    e = np.zeros((n * n, K * K, n * n), np.float32)
    for oy in range(n):
        for ox in range(n):
            p = oy * n + ox
            for dy in range(K):
                for dx in range(K):
                    iy, ix = oy + dy - K // 2, ox + dx - K // 2
                    if 0 <= iy < n and 0 <= ix < n:
                        e[iy * n + ix, dy * K + dx, p] = 1.0
    return e


def _pool_kron(n):
    """Flattened-plane right-multiplication matrix for an exact 2x2 average pool."""
    p = np.zeros((n // 2, n), np.float32)
    for i in range(n // 2):
        p[i, 2 * i] = 0.5
        p[i, 2 * i + 1] = 0.5
    return np.kron(p, p).T                       # (n*n, (n//2)*(n//2))


_E1 = _im2col_tensor(H)                          # (256, 25, 256)
_E2 = _im2col_tensor(H1)                         # (64, 25, 64)
_PK1 = _pool_kron(H)                             # (256, 64)
_PK2 = _pool_kron(H1)                            # (64, 16)
_M3_NP = np.zeros((C2 * HW1, C2 * HW2), np.float32)   # pool2, block-diag over channels
for _c in range(C2):
    _M3_NP[_c * HW1:(_c + 1) * HW1, _c * HW2:(_c + 1) * HW2] = _PK2


# ---------------------------------------------------------------------------
# Parameter preprocessing (done once per weight set, NOT per forward call):
#   * conv1          -> dense Toeplitz operator m1  (bf16, HBM bytes halved)
#   * pool1 o conv2  -> dense Toeplitz operator m2  (bf16)
#   * pool2 o fc1    -> folded fc1 weight fw1' = m3 @ fw1 (exact at inference)
# Activation layout everywhere: row index = batch, lanes = co*(H*W) + y*W + x
# (identical to PyTorch's NCHW .reshape(B, -1) ordering).
# ---------------------------------------------------------------------------
def prepare_operands(params):
    w1 = params["cw1"].reshape(C1, K * K)                          # (8, 25)
    m1 = jnp.einsum("qtp,ot->qop", jnp.asarray(_E1), w1).reshape(HW, C1 * HW)
    b1 = jnp.repeat(params["cb1"], HW)[None, :]                    # (1, 2048)

    w2 = params["cw2"].reshape(C2, C1, K * K)                      # (4, 8, 25)
    m2 = jnp.einsum("qr,rtp,oit->iqop",
                    jnp.asarray(_PK1), jnp.asarray(_E2), w2)       # pool1 o conv2
    m2 = m2.reshape(C1 * HW, C2 * HW1)                             # (2048, 256)
    b2 = jnp.repeat(params["cb2"], HW1)[None, :]                   # (1, 256)

    fw1p = jnp.asarray(_M3_NP) @ params["fw1"]                     # pool2 o fc1, (256, 64)

    return {
        "m1": m1.astype(jnp.bfloat16), "b1": b1,
        "m2": m2.astype(jnp.bfloat16), "b2": b2,
        "fw1": fw1p, "fb1": params["fb1"][None, :],
        "fw2": params["fw2"], "fb2": params["fb2"][None, :],
        "fw3": params["fw3"], "fb3": params["fb3"][None, :],
        "fw4": params["fw4"], "fb4": params["fb4"][None, :],
    }


# ---------------------------------------------------------------------------
# The single fused kernel per batch tile: conv1 -> lrelu -> (pool1 o conv2) ->
# lrelu -> (pool2 o fc1) -> lrelu -> fc2 -> fc3 -> fc4.  6 MXU matmuls, all
# lane-dense; bf16 weights on the two big contractions with f32 accumulation.
# ---------------------------------------------------------------------------
def observer_kernel(x_ref, m1_ref, b1_ref, m2_ref, b2_ref,
                    fw1_ref, fb1_ref, fw2_ref, fb2_ref,
                    fw3_ref, fb3_ref, fw4_ref, fb4_ref, o_ref):
    f32 = jnp.float32
    bf16 = jnp.bfloat16
    # conv1 (Toeplitz matmul, bf16 weights) + bias + leaky_relu   (BM, C1*H*W)
    h = _lrelu(jnp.dot(x_ref[...].astype(bf16), m1_ref[...],
                       preferred_element_type=f32) + b1_ref[...])
    # pool1 fused with conv2 (one matmul) + bias + leaky_relu     (BM, C2*H1*W1)
    h = _lrelu(jnp.dot(h.astype(bf16), m2_ref[...],
                       preferred_element_type=f32) + b2_ref[...])
    # pool2 folded into fc1 (fw1' = m3 @ fw1), then fc2..fc4 (f32 weights).
    # TODO(synk): Dropout2d / Dropout are identity at inference; not implemented.
    h = _lrelu(jnp.dot(h, fw1_ref[...], preferred_element_type=f32) + fb1_ref[...])
    h = _lrelu(jnp.dot(h, fw2_ref[...], preferred_element_type=f32) + fb2_ref[...])
    h = _lrelu(jnp.dot(h, fw3_ref[...], preferred_element_type=f32) + fb3_ref[...])
    o_ref[...] = jnp.dot(h, fw4_ref[...], preferred_element_type=f32) + fb4_ref[...]


def _resident_spec(arr):
    """Weight BlockSpec: same (0,...,0) block every grid step -> DMA'd once,
    kept resident in VMEM across the whole batch grid."""
    nd = arr.ndim
    return pl.BlockSpec(arr.shape, lambda *_: (0,) * nd)


def observer_forward(img, ops, *, block_b=BLOCK_B):
    b = img.shape[0]
    assert img.shape[1:] == (C_IN, H, W)
    # torch.tensor(img, dtype=torch.float); single input channel flattened to lanes.
    x = img.astype(jnp.float32).reshape(b, HW)
    bp = int(pl.cdiv(b, block_b)) * block_b          # pad batch to a tile multiple
    if bp != b:
        x = jnp.pad(x, ((0, bp - b), (0, 0)))

    in_specs = [pl.BlockSpec((block_b, HW), lambda i: (i, 0))] + [
        _resident_spec(ops[k]) for k in
        ("m1", "b1", "m2", "b2", "fw1", "fb1", "fw2", "fb2",
         "fw3", "fb3", "fw4", "fb4")]

    out = pl.pallas_call(
        observer_kernel,
        out_shape=jax.ShapeDtypeStruct((bp, OUT_DIM), jnp.float32),
        grid_spec=pltpu.PrefetchScalarGridSpec(
            num_scalar_prefetch=0,
            grid=(bp // block_b,),
            in_specs=in_specs,
            out_specs=pl.BlockSpec((block_b, OUT_DIM), lambda i: (i, 0))),
        compiler_params=pltpu.CompilerParams(
            dimension_semantics=("parallel",),      # shard batch tiles on v7x megacore
            vmem_limit_bytes=32 * 1024 * 1024),
    )(x, ops["m1"], ops["b1"], ops["m2"], ops["b2"],
      ops["fw1"], ops["fb1"], ops["fw2"], ops["fb2"],
      ops["fw3"], ops["fb3"], ops["fw4"], ops["fb4"])
    return out[:b]


# ---------------------------------------------------------------------------
# Pure-JAX f32 reference (for numerical validation of the kernel).
# ---------------------------------------------------------------------------
def reference_forward(img, p):
    dn = ("NCHW", "OIHW", "NCHW")
    x = jax.lax.conv_general_dilated(img.astype(jnp.float32), p["cw1"], (1, 1),
                                     [(2, 2), (2, 2)], dimension_numbers=dn)
    x = _lrelu(x + p["cb1"][None, :, None, None])
    b, c, h, w = x.shape
    x = x.reshape(b, c, h // 2, 2, w // 2, 2).mean(axis=(3, 5))
    x = jax.lax.conv_general_dilated(x, p["cw2"], (1, 1), [(2, 2), (2, 2)],
                                     dimension_numbers=dn)
    x = _lrelu(x + p["cb2"][None, :, None, None])
    b, c, h, w = x.shape
    x = x.reshape(b, c, h // 2, 2, w // 2, 2).mean(axis=(3, 5))
    x = x.reshape(b, -1)
    x = _lrelu(x @ p["fw1"] + p["fb1"])
    x = _lrelu(x @ p["fw2"] + p["fb2"])
    x = _lrelu(x @ p["fw3"] + p["fb3"])
    return x @ p["fw4"] + p["fb4"]


# ---------------------------------------------------------------------------
# Deterministic synthetic parameters (PyTorch-like uniform(+-1/sqrt(fan_in))).
# Linear weights are stored (in, out) == torch weight.T; conv weights are OIHW.
# ---------------------------------------------------------------------------
def init_params(key):
    ks = jax.random.split(key, 12)

    def u(k, shape, fan_in):
        bnd = 1.0 / float(np.sqrt(fan_in))
        return jax.random.uniform(k, shape, jnp.float32, -bnd, bnd)

    fin1 = C2 * HW2   # 4 * (H//4) * (W//4), as hard-coded in the module
    return {
        "cw1": u(ks[0], (C1, C_IN, K, K), C_IN * K * K),
        "cb1": u(ks[1], (C1,), C_IN * K * K),
        "cw2": u(ks[2], (C2, C1, K, K), C1 * K * K),
        "cb2": u(ks[3], (C2,), C1 * K * K),
        "fw1": u(ks[4], (fin1, HID[0]), fin1),
        "fb1": u(ks[5], (HID[0],), fin1),
        "fw2": u(ks[6], (HID[0], HID[1]), HID[0]),
        "fb2": u(ks[7], (HID[1],), HID[0]),
        "fw3": u(ks[8], (HID[1], HID[2]), HID[1]),
        "fb3": u(ks[9], (HID[2],), HID[1]),
        "fw4": u(ks[10], (HID[2], OUT_DIM), HID[2]),
        "fb4": u(ks[11], (OUT_DIM,), HID[2]),
    }


if __name__ == "__main__":
    key = jax.random.PRNGKey(0)
    pkey, xkey = jax.random.split(key)
    params = init_params(pkey)
    ops = prepare_operands(params)            # weight folding, once per weight set

    # Batched forward: grid over batch tiles with VMEM-resident weights
    # (weights DMA'd once per call; x / out tiles streamed per grid step).
    img = jax.random.normal(xkey, (B_DEMO, C_IN, H, W), jnp.float32)
    out = jax.block_until_ready(observer_forward(img, ops))
    assert out.shape == (B_DEMO, OUT_DIM)

    ref = reference_forward(img, params)
    # Tolerance is loosened vs. the pure-f32 reference because m1/m2 (and the
    # activations fed to those two dots) are bf16 with f32 accumulation.
    np.testing.assert_allclose(np.asarray(out), np.asarray(ref),
                               rtol=2e-2, atol=2e-2)

    # Tiny-batch path (module-scale B=2): exercises padding to the batch tile.
    out_small = jax.block_until_ready(observer_forward(img[:2], ops))
    np.testing.assert_allclose(np.asarray(out_small), np.asarray(ref[:2]),
                               rtol=2e-2, atol=2e-2)

    print("KERNEL_OK")
</pallas_src>

<mosaic_0001>
module attributes {stable_mosaic.version = 11 : i64} {
  func.func @observer_kernel(%arg0: i32, %arg1: memref<128x256xf32, #tpu.memory_space<vmem>>, %arg2: memref<256x2048xbf16, #tpu.memory_space<vmem>>, %arg3: memref<1x2048xf32, #tpu.memory_space<vmem>>, %arg4: memref<2048x256xbf16, #tpu.memory_space<vmem>>, %arg5: memref<1x256xf32, #tpu.memory_space<vmem>>, %arg6: memref<256x64xf32, #tpu.memory_space<vmem>>, %arg7: memref<1x64xf32, #tpu.memory_space<vmem>>, %arg8: memref<64x32xf32, #tpu.memory_space<vmem>>, %arg9: memref<1x32xf32, #tpu.memory_space<vmem>>, %arg10: memref<32x16xf32, #tpu.memory_space<vmem>>, %arg11: memref<1x16xf32, #tpu.memory_space<vmem>>, %arg12: memref<16x1xf32, #tpu.memory_space<vmem>>, %arg13: memref<1x1xf32, #tpu.memory_space<vmem>>, %arg14: memref<128x1xf32, #tpu.memory_space<vmem>>) attributes {dimension_semantics = [#tpu.dimension_semantics<parallel>], iteration_bounds = array<i64: 2>, scalar_prefetch = 0 : i64, scratch_operands = 0 : i64, tpu.core_type = #tpu.core_type<tc>, window_params = [{transform_indices = @transform_0, window_bounds = array<i64: 128, 256>}, {pipeline_mode = #tpu.pipeline_mode<synchronous>, transform_indices = @transform_1, window_bounds = array<i64: 256, 2048>}, {pipeline_mode = #tpu.pipeline_mode<synchronous>, transform_indices = @transform_2, window_bounds = array<i64: 1, 2048>}, {pipeline_mode = #tpu.pipeline_mode<synchronous>, transform_indices = @transform_3, window_bounds = array<i64: 2048, 256>}, {pipeline_mode = #tpu.pipeline_mode<synchronous>, transform_indices = @transform_4, window_bounds = array<i64: 1, 256>}, {pipeline_mode = #tpu.pipeline_mode<synchronous>, transform_indices = @transform_5, window_bounds = array<i64: 256, 64>}, {pipeline_mode = #tpu.pipeline_mode<synchronous>, transform_indices = @transform_6, window_bounds = array<i64: 1, 64>}, {pipeline_mode = #tpu.pipeline_mode<synchronous>, transform_indices = @transform_7, window_bounds = array<i64: 64, 32>}, {pipeline_mode = #tpu.pipeline_mode<synchronous>, transform_indices = @transform_8, window_bounds = array<i64: 1, 32>}, {pipeline_mode = #tpu.pipeline_mode<synchronous>, transform_indices = @transform_9, window_bounds = array<i64: 32, 16>}, {pipeline_mode = #tpu.pipeline_mode<synchronous>, transform_indices = @transform_10, window_bounds = array<i64: 1, 16>}, {pipeline_mode = #tpu.pipeline_mode<synchronous>, transform_indices = @transform_11, window_bounds = array<i64: 16, 1>}, {pipeline_mode = #tpu.pipeline_mode<synchronous>, transform_indices = @transform_12, window_bounds = array<i64: 1, 1>}, {transform_indices = @transform_13, window_bounds = array<i64: 128, 1>}]} {
    %c0 = arith.constant 0 : index
    %c0_0 = arith.constant 0 : index
    %0 = vector.load %arg1[%c0, %c0_0] : memref<128x256xf32, #tpu.memory_space<vmem>>, vector<128x256xf32>
    %1 = arith.truncf %0 : vector<128x256xf32> to vector<128x256xbf16>
    %c0_1 = arith.constant 0 : index
    %c0_2 = arith.constant 0 : index
    %2 = vector.load %arg2[%c0_1, %c0_2] : memref<256x2048xbf16, #tpu.memory_space<vmem>>, vector<256x2048xbf16>
    %cst = arith.constant dense<0.000000e+00> : vector<128x2048xf32>
    %3 = tpu.matmul %1, %2, %cst {dimension_numbers = #tpu.dot_dimension_numbers<[1], [0], [0], [1], [0, 0, 1, 1], [], []>} : vector<128x256xbf16>, vector<256x2048xbf16>, vector<128x2048xf32> -> vector<128x2048xf32>
    %c0_3 = arith.constant 0 : index
    %c0_4 = arith.constant 0 : index
    %4 = vector.load %arg3[%c0_3, %c0_4] : memref<1x2048xf32, #tpu.memory_space<vmem>>, vector<1x2048xf32>
    %5 = vector.broadcast %4 : vector<1x2048xf32> to vector<128x2048xf32>
    %6 = arith.addf %3, %5 : vector<128x2048xf32>
    %cst_5 = arith.constant 0.000000e+00 : f32
    %7 = vector.broadcast %cst_5 : f32 to vector<128x2048xf32>
    %8 = arith.cmpf ogt, %6, %7 : vector<128x2048xf32>
    %cst_6 = arith.constant 0.00999999977 : f32
    %9 = vector.broadcast %cst_6 : f32 to vector<128x2048xf32>
    %10 = arith.mulf %9, %6 : vector<128x2048xf32>
    %11 = arith.select %8, %6, %10 : vector<128x2048xi1>, vector<128x2048xf32>
    %12 = arith.truncf %11 : vector<128x2048xf32> to vector<128x2048xbf16>
    %c0_7 = arith.constant 0 : index
    %c0_8 = arith.constant 0 : index
    %13 = vector.load %arg4[%c0_7, %c0_8] : memref<2048x256xbf16, #tpu.memory_space<vmem>>, vector<2048x256xbf16>
    %cst_9 = arith.constant dense<0.000000e+00> : vector<128x256xf32>
    %14 = tpu.matmul %12, %13, %cst_9 {dimension_numbers = #tpu.dot_dimension_numbers<[1], [0], [0], [1], [0, 0, 1, 1], [], []>} : vector<128x2048xbf16>, vector<2048x256xbf16>, vector<128x256xf32> -> vector<128x256xf32>
    %c0_10 = arith.constant 0 : index
    %c0_11 = arith.constant 0 : index
    %15 = vector.load %arg5[%c0_10, %c0_11] : memref<1x256xf32, #tpu.memory_space<vmem>>, vector<1x256xf32>
    %16 = vector.broadcast %15 : vector<1x256xf32> to vector<128x256xf32>
    %17 = arith.addf %14, %16 : vector<128x256xf32>
    %cst_12 = arith.constant 0.000000e+00 : f32
    %18 = vector.broadcast %cst_12 : f32 to vector<128x256xf32>
    %19 = arith.cmpf ogt, %17, %18 : vector<128x256xf32>
    %cst_13 = arith.constant 0.00999999977 : f32
    %20 = vector.broadcast %cst_13 : f32 to vector<128x256xf32>
    %21 = arith.mulf %20, %17 : vector<128x256xf32>
    %22 = arith.select %19, %17, %21 : vector<128x256xi1>, vector<128x256xf32>
    %c0_14 = arith.constant 0 : index
    %c0_15 = arith.constant 0 : index
    %23 = vector.load %arg6[%c0_14, %c0_15] : memref<256x64xf32, #tpu.memory_space<vmem>>, vector<256x64xf32>
    %cst_16 = arith.constant dense<0.000000e+00> : vector<128x64xf32>
    %24 = tpu.matmul %22, %23, %cst_16 {dimension_numbers = #tpu.dot_dimension_numbers<[1], [0], [0], [1], [0, 0, 1, 1], [], []>} : vector<128x256xf32>, vector<256x64xf32>, vector<128x64xf32> -> vector<128x64xf32>
    %c0_17 = arith.constant 0 : index
    %c0_18 = arith.constant 0 : index
    %25 = vector.load %arg7[%c0_17, %c0_18] : memref<1x64xf32, #tpu.memory_space<vmem>>, vector<1x64xf32>
    %26 = vector.broadcast %25 : vector<1x64xf32> to vector<128x64xf32>
    %27 = arith.addf %24, %26 : vector<128x64xf32>
    %cst_19 = arith.constant 0.000000e+00 : f32
    %28 = vector.broadcast %cst_19 : f32 to vector<128x64xf32>
    %29 = arith.cmpf ogt, %27, %28 : vector<128x64xf32>
    %cst_20 = arith.constant 0.00999999977 : f32
    %30 = vector.broadcast %cst_20 : f32 to vector<128x64xf32>
    %31 = arith.mulf %30, %27 : vector<128x64xf32>
    %32 = arith.select %29, %27, %31 : vector<128x64xi1>, vector<128x64xf32>
    %c0_21 = arith.constant 0 : index
    %c0_22 = arith.constant 0 : index
    %33 = vector.load %arg8[%c0_21, %c0_22] : memref<64x32xf32, #tpu.memory_space<vmem>>, vector<64x32xf32>
    %cst_23 = arith.constant dense<0.000000e+00> : vector<128x32xf32>
    %34 = tpu.matmul %32, %33, %cst_23 {dimension_numbers = #tpu.dot_dimension_numbers<[1], [0], [0], [1], [0, 0, 1, 1], [], []>} : vector<128x64xf32>, vector<64x32xf32>, vector<128x32xf32> -> vector<128x32xf32>
    %c0_24 = arith.constant 0 : index
    %c0_25 = arith.constant 0 : index
    %35 = vector.load %arg9[%c0_24, %c0_25] : memref<1x32xf32, #tpu.memory_space<vmem>>, vector<1x32xf32>
    %36 = vector.broadcast %35 : vector<1x32xf32> to vector<128x32xf32>
    %37 = arith.addf %34, %36 : vector<128x32xf32>
    %cst_26 = arith.constant 0.000000e+00 : f32
    %38 = vector.broadcast %cst_26 : f32 to vector<128x32xf32>
    %39 = arith.cmpf ogt, %37, %38 : vector<128x32xf32>
    %cst_27 = arith.constant 0.00999999977 : f32
    %40 = vector.broadcast %cst_27 : f32 to vector<128x32xf32>
    %41 = arith.mulf %40, %37 : vector<128x32xf32>
    %42 = arith.select %39, %37, %41 : vector<128x32xi1>, vector<128x32xf32>
    %c0_28 = arith.constant 0 : index
    %c0_29 = arith.constant 0 : index
    %43 = vector.load %arg10[%c0_28, %c0_29] : memref<32x16xf32, #tpu.memory_space<vmem>>, vector<32x16xf32>
    %cst_30 = arith.constant dense<0.000000e+00> : vector<128x16xf32>
    %44 = tpu.matmul %42, %43, %cst_30 {dimension_numbers = #tpu.dot_dimension_numbers<[1], [0], [0], [1], [0, 0, 1, 1], [], []>} : vector<128x32xf32>, vector<32x16xf32>, vector<128x16xf32> -> vector<128x16xf32>
    %c0_31 = arith.constant 0 : index
    %c0_32 = arith.constant 0 : index
    %45 = vector.load %arg11[%c0_31, %c0_32] : memref<1x16xf32, #tpu.memory_space<vmem>>, vector<1x16xf32>
    %46 = vector.broadcast %45 : vector<1x16xf32> to vector<128x16xf32>
    %47 = arith.addf %44, %46 : vector<128x16xf32>
    %cst_33 = arith.constant 0.000000e+00 : f32
    %48 = vector.broadcast %cst_33 : f32 to vector<128x16xf32>
    %49 = arith.cmpf ogt, %47, %48 : vector<128x16xf32>
    %cst_34 = arith.constant 0.00999999977 : f32
    %50 = vector.broadcast %cst_34 : f32 to vector<128x16xf32>
    %51 = arith.mulf %50, %47 : vector<128x16xf32>
    %52 = arith.select %49, %47, %51 : vector<128x16xi1>, vector<128x16xf32>
    %c0_35 = arith.constant 0 : index
    %c0_36 = arith.constant 0 : index
    %53 = vector.load %arg12[%c0_35, %c0_36] : memref<16x1xf32, #tpu.memory_space<vmem>>, vector<16x1xf32>
    %cst_37 = arith.constant dense<0.000000e+00> : vector<128x1xf32>
    %54 = tpu.matmul %52, %53, %cst_37 {dimension_numbers = #tpu.dot_dimension_numbers<[1], [0], [0], [1], [0, 0, 1, 1], [], []>} : vector<128x16xf32>, vector<16x1xf32>, vector<128x1xf32> -> vector<128x1xf32>
    %c0_38 = arith.constant 0 : index
    %c0_39 = arith.constant 0 : index
    %55 = vector.load %arg13[%c0_38, %c0_39] : memref<1x1xf32, #tpu.memory_space<vmem>>, vector<1x1xf32>
    %56 = vector.broadcast %55 : vector<1x1xf32> to vector<128x1xf32>
    %57 = arith.addf %54, %56 : vector<128x1xf32>
    %c0_40 = arith.constant 0 : index
    %c0_41 = arith.constant 0 : index
    %58 = vector.load %arg14[%c0_40, %c0_41] : memref<128x1xf32, #tpu.memory_space<vmem>>, vector<128x1xf32>
    tpu.vector_store %arg14[%c0_40, %c0_41], %57 {strides = array<i32>} : memref<128x1xf32, #tpu.memory_space<vmem>>, vector<128x1xf32>,
    return
  }
  func.func @transform_0(%arg0: i32) -> (i32, i32) {
    %c0_i32 = arith.constant 0 : i32
    %c0_i32_0 = arith.constant 0 : i32
    return %arg0, %c0_i32 : i32, i32
  }
  func.func @transform_1(%arg0: i32) -> (i32, i32) {
    %c0_i32 = arith.constant 0 : i32
    %c0_i32_0 = arith.constant 0 : i32
    %c0_i32_1 = arith.constant 0 : i32
    return %c0_i32, %c0_i32_0 : i32, i32
  }
  func.func @transform_2(%arg0: i32) -> (i32, i32) {
    %c0_i32 = arith.constant 0 : i32
    %c0_i32_0 = arith.constant 0 : i32
    %c0_i32_1 = arith.constant 0 : i32
    return %c0_i32, %c0_i32_0 : i32, i32
  }
  func.func @transform_3(%arg0: i32) -> (i32, i32) {
    %c0_i32 = arith.constant 0 : i32
    %c0_i32_0 = arith.constant 0 : i32
    %c0_i32_1 = arith.constant 0 : i32
    return %c0_i32, %c0_i32_0 : i32, i32
  }
  func.func @transform_4(%arg0: i32) -> (i32, i32) {
    %c0_i32 = arith.constant 0 : i32
    %c0_i32_0 = arith.constant 0 : i32
    %c0_i32_1 = arith.constant 0 : i32
    return %c0_i32, %c0_i32_0 : i32, i32
  }
  func.func @transform_5(%arg0: i32) -> (i32, i32) {
    %c0_i32 = arith.constant 0 : i32
    %c0_i32_0 = arith.constant 0 : i32
    %c0_i32_1 = arith.constant 0 : i32
    return %c0_i32, %c0_i32_0 : i32, i32
  }
  func.func @transform_6(%arg0: i32) -> (i32, i32) {
    %c0_i32 = arith.constant 0 : i32
    %c0_i32_0 = arith.constant 0 : i32
    %c0_i32_1 = arith.constant 0 : i32
    return %c0_i32, %c0_i32_0 : i32, i32
  }
  func.func @transform_7(%arg0: i32) -> (i32, i32) {
    %c0_i32 = arith.constant 0 : i32
    %c0_i32_0 = arith.constant 0 : i32
    %c0_i32_1 = arith.constant 0 : i32
    return %c0_i32, %c0_i32_0 : i32, i32
  }
  func.func @transform_8(%arg0: i32) -> (i32, i32) {
    %c0_i32 = arith.constant 0 : i32
    %c0_i32_0 = arith.constant 0 : i32
    %c0_i32_1 = arith.constant 0 : i32
    return %c0_i32, %c0_i32_0 : i32, i32
  }
  func.func @transform_9(%arg0: i32) -> (i32, i32) {
    %c0_i32 = arith.constant 0 : i32
    %c0_i32_0 = arith.constant 0 : i32
    %c0_i32_1 = arith.constant 0 : i32
    return %c0_i32, %c0_i32_0 : i32, i32
  }
  func.func @transform_10(%arg0: i32) -> (i32, i32) {
    %c0_i32 = arith.constant 0 : i32
    %c0_i32_0 = arith.constant 0 : i32
    %c0_i32_1 = arith.constant 0 : i32
    return %c0_i32, %c0_i32_0 : i32, i32
  }
  func.func @transform_11(%arg0: i32) -> (i32, i32) {
    %c0_i32 = arith.constant 0 : i32
    %c0_i32_0 = arith.constant 0 : i32
    %c0_i32_1 = arith.constant 0 : i32
    return %c0_i32, %c0_i32_0 : i32, i32
  }
  func.func @transform_12(%arg0: i32) -> (i32, i32) {
    %c0_i32 = arith.constant 0 : i32
    %c0_i32_0 = arith.constant 0 : i32
    %c0_i32_1 = arith.constant 0 : i32
    return %c0_i32, %c0_i32_0 : i32, i32
  }
  func.func @transform_13(%arg0: i32) -> (i32, i32) {
    %c0_i32 = arith.constant 0 : i32
    %c0_i32_0 = arith.constant 0 : i32
    return %arg0, %c0_i32 : i32, i32
  }
}

</mosaic_0001>

<llo_original>
// kernel: tpu_custom_call.1
$region0: #{tpu_custom_call.1}
  #allocation0 [shape = 'u32[]', space=smem, size = 0x4, offset = 0x4, fixed_abs, tag = 'smem constant byte address 0x4 - core index']
  #allocation1 [shape = 'u32[144,128]{1,0:T(1,128)}', space=vmem, size = 0x12000, scoped, tag = 'internal scratch']
  #allocation2 [shape = 'f32[1,1]{1,0:T(1,128)S(1)}', space=vmem, size = 0x200, scoped, tag = 'scoped memory for tpu_custom_call.1']
  %s0 = inlined_call_operand.vmem [shape: f32[256,256], index: 0, kind: input, shape index: {}]
  %s1 = inlined_call_operand.hbm [shape: bf16[256,2048], index: 1, kind: input, shape index: {}]
  %s2 = inlined_call_operand.hbm [shape: f32[1,2048], index: 2, kind: input, shape index: {}]
  %s3 = inlined_call_operand.hbm [shape: bf16[2048,256], index: 3, kind: input, shape index: {}]
  %s4 = inlined_call_operand.hbm [shape: f32[1,256], index: 4, kind: input, shape index: {}]
  %s5 = inlined_call_operand.vmem [shape: f32[256,64], index: 5, kind: input, shape index: {}]
  %s6 = inlined_call_operand.vmem [shape: f32[1,64], index: 6, kind: input, shape index: {}]
  %s7 = inlined_call_operand.vmem [shape: f32[64,32], index: 7, kind: input, shape index: {}]
  %s8 = inlined_call_operand.vmem [shape: f32[1,32], index: 8, kind: input, shape index: {}]
  %s9 = inlined_call_operand.vmem [shape: f32[32,16], index: 9, kind: input, shape index: {}]
  %s10 = inlined_call_operand.vmem [shape: f32[1,16], index: 10, kind: input, shape index: {}]
  %s11 = inlined_call_operand.vmem [shape: f32[16,1], index: 11, kind: input, shape index: {}]
  %s12 = inlined_call_operand.<no memory space> [shape: f32[1,1], index: 12, kind: input, shape index: {}]
  %s13 = inlined_call_operand.vmem [shape: f32[256,1], index: 13, kind: output, shape index: {}]
  %s14 = sld [smem:[#allocation0]]
  $region101: #{tpu_custom_call.1} parent=0
    _
  %s16 = ssub.s32 1, %s14
  %s17 = scalar_select 0, %s16, %s14
  %v18 = vstv %s12
  %19 = vst [vmem:[#allocation2] sm:$0x1] %v18
  $region1: #{tpu_custom_call.1} parent=0
    #allocation3 [shape = 'u8[1048576]{0}', space=vmem, size = 0x100000, scoped, tag = 'input window, operand 1, single buffered']
    #allocation4 [shape = 's32[2]{0}', space=sflag, size = 0x8, scoped, tag = 'scoped memory for tpu_custom_call.1']
    #allocation5 [shape = 'u8[8192]{0}', space=vmem, size = 0x2000, scoped, tag = 'input window, operand 2, single buffered']
    #allocation6 [shape = 's32[1]{0}', space=sflag, size = 0x4, scoped, tag = 'scoped memory for tpu_custom_call.1']
    #allocation7 [shape = 'u8[1048576]{0}', space=vmem, size = 0x100000, scoped, tag = 'input window, operand 3, single buffered']
    #allocation8 [shape = 'u8[1024]{0}', space=vmem, size = 0x400, scoped, tag = 'input window, operand 4, single buffered']
    #allocation9 [shape = 's32[1]{0}', space=sflag, size = 0x4, scoped, tag = 'scoped memory for tpu_custom_call.1']
    %20 = vsyncpa [#allocation4], 0
    %21 = vsyncpa [#allocation6], 0
    %22 = vsyncpa [#allocation9], 0
    loop: start=0, step=1, limit=4
    $region2: #{tpu_custom_call.1} parent=1 // loop_pre_header
      _
    $region3: #{tpu_custom_call.1} parent=1 // loop_header
      %s24 = sphi 0, %s28
      %p25 = scmp.ge.s32.totalorder %s24, 4
      %s34 = sphi 0, %s36
      %s37 = sphi 0, %s34
      %s38 = sphi 0, %s37
      %s54 = sphi 0, %s38
      %s58 = sphi 0, %s58
      %s60 = sphi 0, %s58
      %s61 = sphi 0, %s60
      %s75 = sphi 0, %s61
      %s79 = sphi 0, %s79
      %s81 = sphi 0, %s79
      %s82 = sphi 0, %s81
      %s96 = sphi 0, %s82
      %s100 = sphi 0, %s100
      %s102 = sphi 0, %s100
      %s103 = sphi 0, %s102
      %s117 = sphi 0, %s103
      %s121 = sphi 0, %s121
      %s123 = sphi 0, %s121
      %s124 = sphi 0, %s123
      %s138 = sphi 0, %s124
      %s142 = sphi 0, %s142
      %s144 = sphi 0, %s142
      %s145 = sphi 0, %s144
      %s159 = sphi 0, %s145
      %s163 = sphi 0, %s163
      %s165 = sphi 0, %s163
      %s166 = sphi 0, %s165
      %s180 = sphi 0, %s166
      %s184 = sphi 0, %s184
      %s186 = sphi 0, %s184
      %s187 = sphi 0, %s186
      %s201 = sphi 0, %s187
      %s205 = sphi 0, %s205
      %s207 = sphi 0, %s205
      %s208 = sphi 0, %s207
      %s222 = sphi 0, %s208
      %s226 = sphi 0, %s226
      %s228 = sphi 0, %s226
      %s229 = sphi 0, %s228
      %s243 = sphi 0, %s229
      %s247 = sphi 0, %s247
      %s249 = sphi 0, %s247
      %s250 = sphi 0, %s249
      %s264 = sphi 0, %s250
      %s268 = sphi 0, %s268
      %s270 = sphi 0, %s268
      %s271 = sphi 0, %s270
      %s285 = sphi 0, %s271
      %s289 = sphi 0, %s289
      %s291 = sphi 0, %s289
      %s292 = sphi 0, %s291
      %s306 = sphi 0, %s292
      %s312 = sphi 0, %s314
      %s315 = sphi 0, %s312
      %s316 = sphi 0, %s315
      %s332 = sphi 0, %s316
    $region4: #{tpu_custom_call.1} parent=1 // loop_header_branch
      %27 = sbr.rel (%p25) target = $region8
    $region5: #{tpu_custom_call.1} parent=1 // loop_body
      %s29 = ssub.s32 %s24, 1
      %s30 = ssub.s32 %s24, 2
      %s31 = sadd.s32 %s24, 1
      %s32 = ssub.s32 %s24, %s31
      %p33 = scmp.eq.s32.totalorder %s32, 0
      %s35 = sadd.s32 %s34, 1
      %s36 = scalar_select %p33, %s34, %s35
      %p39 = pneg %p33
      %p40 = scmp.eq.s32.totalorder %s24, 1
      %p41 = por %p39, %p40
      %p42 = scmp.ne.s32.totalorder %s34, %s37
      %p43 = scmp.eq.s32.totalorder %s24, 0
      %p44 = por %p42, %p43
      %p45 = scmp.ne.s32.totalorder %s34, %s37
      %p46 = scmp.eq.s32.totalorder %s29, 1
      %p47 = por %p45, %p46
      %p48 = scmp.ne.s32.totalorder %s37, %s38
      %p49 = scmp.eq.s32.totalorder %s29, 0
      %p50 = por %p48, %p49
      %p51 = scmp.ne.s32.totalorder %s37, %s38
      %p52 = scmp.eq.s32.totalorder %s30, 1
      %p53 = por %p51, %p52
      %p55 = scmp.ne.s32.totalorder %s38, %s54
      %p56 = scmp.eq.s32.totalorder %s30, 0
      %p57 = por %p55, %p56
      %s59 = sadd.s32 %s58, 1
      %p62 = scmp.eq.s32.totalorder %s24, 1
      %p63 = scmp.ne.s32.totalorder %s58, %s60
      %p64 = scmp.eq.s32.totalorder %s24, 0
      %p65 = por %p63, %p64
      %p66 = scmp.ne.s32.totalorder %s58, %s60
      %p67 = scmp.eq.s32.totalorder %s29, 1
      %p68 = por %p66, %p67
      %p69 = scmp.ne.s32.totalorder %s60, %s61
      %p70 = scmp.eq.s32.totalorder %s29, 0
      %p71 = por %p69, %p70
      %p72 = scmp.ne.s32.totalorder %s60, %s61
      %p73 = scmp.eq.s32.totalorder %s30, 1
      %p74 = por %p72, %p73
      %p76 = scmp.ne.s32.totalorder %s61, %s75
      %p77 = scmp.eq.s32.totalorder %s30, 0
      %p78 = por %p76, %p77
      %s80 = sadd.s32 %s79, 1
      %p83 = scmp.eq.s32.totalorder %s24, 1
      %p84 = scmp.ne.s32.totalorder %s79, %s81
      %p85 = scmp.eq.s32.totalorder %s24, 0
      %p86 = por %p84, %p85
      %p87 = scmp.ne.s32.totalorder %s79, %s81
      %p88 = scmp.eq.s32.totalorder %s29, 1
      %p89 = por %p87, %p88
      %p90 = scmp.ne.s32.totalorder %s81, %s82
      %p91 = scmp.eq.s32.totalorder %s29, 0
      %p92 = por %p90, %p91
      %p93 = scmp.ne.s32.totalorder %s81, %s82
      %p94 = scmp.eq.s32.totalorder %s30, 1
      %p95 = por %p93, %p94
      %p97 = scmp.ne.s32.totalorder %s82, %s96
      %p98 = scmp.eq.s32.totalorder %s30, 0
      %p99 = por %p97, %p98
      %s101 = sadd.s32 %s100, 1
      %p104 = scmp.eq.s32.totalorder %s24, 1
      %p105 = scmp.ne.s32.totalorder %s100, %s102
      %p106 = scmp.eq.s32.totalorder %s24, 0
      %p107 = por %p105, %p106
      %p108 = scmp.ne.s32.totalorder %s100, %s102
      %p109 = scmp.eq.s32.totalorder %s29, 1
      %p110 = por %p108, %p109
      %p111 = scmp.ne.s32.totalorder %s102, %s103
      %p112 = scmp.eq.s32.totalorder %s29, 0
      %p113 = por %p111, %p112
      %p114 = scmp.ne.s32.totalorder %s102, %s103
      %p115 = scmp.eq.s32.totalorder %s30, 1
      %p116 = por %p114, %p115
      %p118 = scmp.ne.s32.totalorder %s103, %s117
      %p119 = scmp.eq.s32.totalorder %s30, 0
      %p120 = por %p118, %p119
      %s122 = sadd.s32 %s121, 1
      %p125 = scmp.eq.s32.totalorder %s24, 1
      %p126 = scmp.ne.s32.totalorder %s121, %s123
      %p127 = scmp.eq.s32.totalorder %s24, 0
      %p128 = por %p126, %p127
      %p129 = scmp.ne.s32.totalorder %s121, %s123
      %p130 = scmp.eq.s32.totalorder %s29, 1
      %p131 = por %p129, %p130
      %p132 = scmp.ne.s32.totalorder %s123, %s124
      %p133 = scmp.eq.s32.totalorder %s29, 0
      %p134 = por %p132, %p133
      %p135 = scmp.ne.s32.totalorder %s123, %s124
      %p136 = scmp.eq.s32.totalorder %s30, 1
      %p137 = por %p135, %p136
      %p139 = scmp.ne.s32.totalorder %s124, %s138
      %p140 = scmp.eq.s32.totalorder %s30, 0
      %p141 = por %p139, %p140
      %s143 = sadd.s32 %s142, 1
      %p146 = scmp.eq.s32.totalorder %s24, 1
      %p147 = scmp.ne.s32.totalorder %s142, %s144
      %p148 = scmp.eq.s32.totalorder %s24, 0
      %p149 = por %p147, %p148
      %p150 = scmp.ne.s32.totalorder %s142, %s144
      %p151 = scmp.eq.s32.totalorder %s29, 1
      %p152 = por %p150, %p151
      %p153 = scmp.ne.s32.totalorder %s144, %s145
      %p154 = scmp.eq.s32.totalorder %s29, 0
      %p155 = por %p153, %p154
      %p156 = scmp.ne.s32.totalorder %s144, %s145
      %p157 = scmp.eq.s32.totalorder %s30, 1
      %p158 = por %p156, %p157
      %p160 = scmp.ne.s32.totalorder %s145, %s159
      %p161 = scmp.eq.s32.totalorder %s30, 0
      %p162 = por %p160, %p161
      %s164 = sadd.s32 %s163, 1
      %p167 = scmp.eq.s32.totalorder %s24, 1
      %p168 = scmp.ne.s32.totalorder %s163, %s165
      %p169 = scmp.eq.s32.totalorder %s24, 0
      %p170 = por %p168, %p169
      %p171 = scmp.ne.s32.totalorder %s163, %s165
      %p172 = scmp.eq.s32.totalorder %s29, 1
      %p173 = por %p171, %p172
      %p174 = scmp.ne.s32.totalorder %s165, %s166
      %p175 = scmp.eq.s32.totalorder %s29, 0
      %p176 = por %p174, %p175
      %p177 = scmp.ne.s32.totalorder %s165, %s166
      %p178 = scmp.eq.s32.totalorder %s30, 1
      %p179 = por %p177, %p178
      %p181 = scmp.ne.s32.totalorder %s166, %s180
      %p182 = scmp.eq.s32.totalorder %s30, 0
      %p183 = por %p181, %p182
      %s185 = sadd.s32 %s184, 1
      %p188 = scmp.eq.s32.totalorder %s24, 1
      %p189 = scmp.ne.s32.totalorder %s184, %s186
      %p190 = scmp.eq.s32.totalorder %s24, 0
      %p191 = por %p189, %p190
      %p192 = scmp.ne.s32.totalorder %s184, %s186
      %p193 = scmp.eq.s32.totalorder %s29, 1
      %p194 = por %p192, %p193
      %p195 = scmp.ne.s32.totalorder %s186, %s187
      %p196 = scmp.eq.s32.totalorder %s29, 0
      %p197 = por %p195, %p196
      %p198 = scmp.ne.s32.totalorder %s186, %s187
      %p199 = scmp.eq.s32.totalorder %s30, 1
      %p200 = por %p198, %p199
      %p202 = scmp.ne.s32.totalorder %s187, %s201
      %p203 = scmp.eq.s32.totalorder %s30, 0
      %p204 = por %p202, %p203
      %s206 = sadd.s32 %s205, 1
      %p209 = scmp.eq.s32.totalorder %s24, 1
      %p210 = scmp.ne.s32.totalorder %s205, %s207
      %p211 = scmp.eq.s32.totalorder %s24, 0
      %p212 = por %p210, %p211
      %p213 = scmp.ne.s32.totalorder %s205, %s207
      %p214 = scmp.eq.s32.totalorder %s29, 1
      %p215 = por %p213, %p214
      %p216 = scmp.ne.s32.totalorder %s207, %s208
      %p217 = scmp.eq.s32.totalorder %s29, 0
      %p218 = por %p216, %p217
      %p219 = scmp.ne.s32.totalorder %s207, %s208
      %p220 = scmp.eq.s32.totalorder %s30, 1
      %p221 = por %p219, %p220
      %p223 = scmp.ne.s32.totalorder %s208, %s222
      %p224 = scmp.eq.s32.totalorder %s30, 0
      %p225 = por %p223, %p224
      %s227 = sadd.s32 %s226, 1
      %p230 = scmp.eq.s32.totalorder %s24, 1
      %p231 = scmp.ne.s32.totalorder %s226, %s228
      %p232 = scmp.eq.s32.totalorder %s24, 0
      %p233 = por %p231, %p232
      %p234 = scmp.ne.s32.totalorder %s226, %s228
      %p235 = scmp.eq.s32.totalorder %s29, 1
      %p236 = por %p234, %p235
      %p237 = scmp.ne.s32.totalorder %s228, %s229
      %p238 = scmp.eq.s32.totalorder %s29, 0
      %p239 = por %p237, %p238
      %p240 = scmp.ne.s32.totalorder %s228, %s229
      %p241 = scmp.eq.s32.totalorder %s30, 1
      %p242 = por %p240, %p241
      %p244 = scmp.ne.s32.totalorder %s229, %s243
      %p245 = scmp.eq.s32.totalorder %s30, 0
      %p246 = por %p244, %p245
      %s248 = sadd.s32 %s247, 1
      %p251 = scmp.eq.s32.totalorder %s24, 1
      %p252 = scmp.ne.s32.totalorder %s247, %s249
      %p253 = scmp.eq.s32.totalorder %s24, 0
      %p254 = por %p252, %p253
      %p255 = scmp.ne.s32.totalorder %s247, %s249
      %p256 = scmp.eq.s32.totalorder %s29, 1
      %p257 = por %p255, %p256
      %p258 = scmp.ne.s32.totalorder %s249, %s250
      %p259 = scmp.eq.s32.totalorder %s29, 0
      %p260 = por %p258, %p259
      %p261 = scmp.ne.s32.totalorder %s249, %s250
      %p262 = scmp.eq.s32.totalorder %s30, 1
      %p263 = por %p261, %p262
      %p265 = scmp.ne.s32.totalorder %s250, %s264
      %p266 = scmp.eq.s32.totalorder %s30, 0
      %p267 = por %p265, %p266
      %s269 = sadd.s32 %s268, 1
      %p272 = scmp.eq.s32.totalorder %s24, 1
      %p273 = scmp.ne.s32.totalorder %s268, %s270
      %p274 = scmp.eq.s32.totalorder %s24, 0
      %p275 = por %p273, %p274
      %p276 = scmp.ne.s32.totalorder %s268, %s270
      %p277 = scmp.eq.s32.totalorder %s29, 1
      %p278 = por %p276, %p277
      %p279 = scmp.ne.s32.totalorder %s270, %s271
      %p280 = scmp.eq.s32.totalorder %s29, 0
      %p281 = por %p279, %p280
      %p282 = scmp.ne.s32.totalorder %s270, %s271
      %p283 = scmp.eq.s32.totalorder %s30, 1
      %p284 = por %p282, %p283
      %p286 = scmp.ne.s32.totalorder %s271, %s285
      %p287 = scmp.eq.s32.totalorder %s30, 0
      %p288 = por %p286, %p287
      %s290 = sadd.s32 %s289, 1
      %p293 = scmp.eq.s32.totalorder %s24, 1
      %p294 = scmp.ne.s32.totalorder %s289, %s291
      %p295 = scmp.eq.s32.totalorder %s24, 0
      %p296 = por %p294, %p295
      %p297 = scmp.ne.s32.totalorder %s289, %s291
      %p298 = scmp.eq.s32.totalorder %s29, 1
      %p299 = por %p297, %p298
      %p300 = scmp.ne.s32.totalorder %s291, %s292
      %p301 = scmp.eq.s32.totalorder %s29, 0
      %p302 = por %p300, %p301
      %p303 = scmp.ne.s32.totalorder %s291, %s292
      %p304 = scmp.eq.s32.totalorder %s30, 1
      %p305 = por %p303, %p304
      %p307 = scmp.ne.s32.totalorder %s292, %s306
      %p308 = scmp.eq.s32.totalorder %s30, 0
      %p309 = por %p307, %p308
      %s310 = ssub.s32 %s24, %s31
      %p311 = scmp.eq.s32.totalorder %s310, 0
      %s313 = sadd.s32 %s312, 1
      %s314 = scalar_select %p311, %s312, %s313
      %p317 = pneg %p311
      %p318 = scmp.eq.s32.totalorder %s24, 1
      %p319 = por %p317, %p318
      %p320 = scmp.ne.s32.totalorder %s312, %s315
      %p321 = scmp.eq.s32.totalorder %s24, 0
      %p322 = por %p320, %p321
      %p323 = scmp.ne.s32.totalorder %s312, %s315
      %p324 = scmp.eq.s32.totalorder %s29, 1
      %p325 = por %p323, %p324
      %p326 = scmp.ne.s32.totalorder %s315, %s316
      %p327 = scmp.eq.s32.totalorder %s29, 0
      %p328 = por %p326, %p327
      %p329 = scmp.ne.s32.totalorder %s315, %s316
      %p330 = scmp.eq.s32.totalorder %s30, 1
      %p331 = por %p329, %p330
      %p333 = scmp.ne.s32.totalorder %s316, %s332
      %p334 = scmp.eq.s32.totalorder %s30, 0
      %p335 = por %p333, %p334
      %p336 = scmp.le.s32.totalorder 1, %s24
      %p337 = scmp.lt.s32.totalorder %s24, 3
      %p338 = pnand %p336, %p337
      %p339 = pneg %p338
      // Predicated region
      $region9: #{tpu_custom_call.1} parent=5 // pred_check
        _
      $region10: #{tpu_custom_call.1} parent=5 // pred_check_branch
        %341 = sbr.rel (%p338) target = $region12
      $region11: #{tpu_custom_call.1} parent=5 // pred_region
        %s342 = ssub.s32 %s24, 1
        // Predicated region
        $region13: #{tpu_custom_call.1} parent=11 // pred_check
          %p343 = pneg %p71
        $region14: #{tpu_custom_call.1} parent=11 // pred_check_branch
          %345 = sbr.rel (%p343) target = $region16
        $region15: #{tpu_custom_call.1} parent=11 // pred_region
          %s347 = ssub.s32 32768, 32768
          %348 = vsyncadd [#allocation4], %s347
          %s349 = sshll.u32 [#allocation3], 4
          %s350 = int_to_ptr.vmem [resolvable:$true] %s349
          %355 = dma.hbm_to_vmem [thread:$0]  %s1, 32768, %s350, [#allocation4], 1024, 1024, 64
        $region16: #{tpu_custom_call.1} parent=11 // pred_fallthru
          _
        // Predicated region
        $region17: #{tpu_custom_call.1} parent=11 // pred_check
          %p356 = pneg %p92
        $region18: #{tpu_custom_call.1} parent=11 // pred_check_branch
          %358 = sbr.rel (%p356) target = $region20
        $region19: #{tpu_custom_call.1} parent=11 // pred_region
          %s360 = ssub.s32 256, 256
          %361 = vsyncadd [#allocation6], %s360
          %s363 = sshll.u32 [#allocation5], 4
          %s364 = int_to_ptr.vmem [resolvable:$true] %s363
          %366 = dma.hbm_to_vmem [thread:$0]  %s2, 256, %s364, [#allocation6]
        $region20: #{tpu_custom_call.1} parent=11 // pred_fallthru
          _
        // Predicated region
        $region21: #{tpu_custom_call.1} parent=11 // pred_check
          %p367 = pneg %p113
        $region22: #{tpu_custom_call.1} parent=11 // pred_check_branch
          %369 = sbr.rel (%p367) target = $region24
        $region23: #{tpu_custom_call.1} parent=11 // pred_region
          %s371 = ssub.s32 32768, 32768
          %372 = vsyncadd [#allocation6], %s371
          %s373 = sshll.u32 [#allocation7], 4
          %s374 = int_to_ptr.vmem [resolvable:$true] %s373
          %379 = dma.hbm_to_vmem [thread:$0]  %s3, 32768, %s374, [#allocation6], 128, 128, 8
        $region24: #{tpu_custom_call.1} parent=11 // pred_fallthru
          _
        // Predicated region
        $region25: #{tpu_custom_call.1} parent=11 // pred_check
          %p380 = pneg %p134
        $region26: #{tpu_custom_call.1} parent=11 // pred_check_branch
          %382 = sbr.rel (%p380) target = $region28
        $region27: #{tpu_custom_call.1} parent=11 // pred_region
          %s384 = ssub.s32 32, 32
          %385 = vsyncadd [#allocation9], %s384
          %s387 = sshll.u32 [#allocation8], 4
          %s388 = int_to_ptr.vmem [resolvable:$true] %s387
          %390 = dma.hbm_to_vmem [thread:$0]  %s4, 32, %s388, [#allocation9]
        $region28: #{tpu_custom_call.1} parent=11 // pred_fallthru
          _
        // Predicated region
        $region29: #{tpu_custom_call.1} parent=11 // pred_check
          %p391 = pneg %p155
        $region30: #{tpu_custom_call.1} parent=11 // pred_check_branch
          %393 = sbr.rel (%p391) target = $region32
        $region31: #{tpu_custom_call.1} parent=11 // pred_region
          _
        $region32: #{tpu_custom_call.1} parent=11 // pred_fallthru
          _
        // Predicated region
        $region33: #{tpu_custom_call.1} parent=11 // pred_check
          %p394 = pneg %p176
        $region34: #{tpu_custom_call.1} parent=11 // pred_check_branch
          %396 = sbr.rel (%p394) target = $region36
        $region35: #{tpu_custom_call.1} parent=11 // pred_region
          _
        $region36: #{tpu_custom_call.1} parent=11 // pred_fallthru
          _
        // Predicated region
        $region37: #{tpu_custom_call.1} parent=11 // pred_check
          %p397 = pneg %p197
        $region38: #{tpu_custom_call.1} parent=11 // pred_check_branch
          %399 = sbr.rel (%p397) target = $region40
        $region39: #{tpu_custom_call.1} parent=11 // pred_region
          _
        $region40: #{tpu_custom_call.1} parent=11 // pred_fallthru
          _
        // Predicated region
        $region41: #{tpu_custom_call.1} parent=11 // pred_check
          %p400 = pneg %p218
        $region42: #{tpu_custom_call.1} parent=11 // pred_check_branch
          %402 = sbr.rel (%p400) target = $region44
        $region43: #{tpu_custom_call.1} parent=11 // pred_region
          _
        $region44: #{tpu_custom_call.1} parent=11 // pred_fallthru
          _
        // Predicated region
        $region45: #{tpu_custom_call.1} parent=11 // pred_check
          %p403 = pneg %p239
        $region46: #{tpu_custom_call.1} parent=11 // pred_check_branch
          %405 = sbr.rel (%p403) target = $region48
        $region47: #{tpu_custom_call.1} parent=11 // pred_region
          _
        $region48: #{tpu_custom_call.1} parent=11 // pred_fallthru
          _
        // Predicated region
        $region49: #{tpu_custom_call.1} parent=11 // pred_check
          %p406 = pneg %p260
        $region50: #{tpu_custom_call.1} parent=11 // pred_check_branch
          %408 = sbr.rel (%p406) target = $region52
        $region51: #{tpu_custom_call.1} parent=11 // pred_region
          _
        $region52: #{tpu_custom_call.1} parent=11 // pred_fallthru
          _
        // Predicated region
        $region53: #{tpu_custom_call.1} parent=11 // pred_check
          %p409 = pneg %p281
        $region54: #{tpu_custom_call.1} parent=11 // pred_check_branch
          %411 = sbr.rel (%p409) target = $region56
        $region55: #{tpu_custom_call.1} parent=11 // pred_region
          _
        $region56: #{tpu_custom_call.1} parent=11 // pred_fallthru
          _
        // Predicated region
        $region57: #{tpu_custom_call.1} parent=11 // pred_check
          %p412 = pneg %p302
        $region58: #{tpu_custom_call.1} parent=11 // pred_check_branch
          %414 = sbr.rel (%p412) target = $region60
        $region59: #{tpu_custom_call.1} parent=11 // pred_region
          _
        $region60: #{tpu_custom_call.1} parent=11 // pred_fallthru
          _
      $region12: #{tpu_custom_call.1} parent=5 // pred_fallthru
        _
      %p415 = scmp.lt.s32.totalorder %s24, 2
      // Predicated region
      $region61: #{tpu_custom_call.1} parent=5 // pred_check
        %p416 = pneg %p415
      $region62: #{tpu_custom_call.1} parent=5 // pred_check_branch
        %418 = sbr.rel (%p416) target = $region64
      $region63: #{tpu_custom_call.1} parent=5 // pred_region
        // Predicated region
        $region65: #{tpu_custom_call.1} parent=63 // pred_check
          %p419 = pneg %p44
        $region66: #{tpu_custom_call.1} parent=63 // pred_check_branch
          %421 = sbr.rel (%p419) target = $region68
        $region67: #{tpu_custom_call.1} parent=63 // pred_region
          %s422 = smul.u32 16, %s24
          %p423 = scmp.lt.s32.totalorder %s422, 31
          %s424 = scalar_select %p423, %s422, 31
          %s425 = smul.addr %s424, 2
          %s426 = smul.addr %s425, 8
          %s427 = scalar_lea.vmem %s0, %s426
          %s428 = smul.u32 16, %s24
        $region68: #{tpu_custom_call.1} parent=63 // pred_fallthru
          _
      $region64: #{tpu_custom_call.1} parent=5 // pred_fallthru
        _
      %p429 = scmp.le.s32.totalorder 1, %s24
      %p430 = scmp.lt.s32.totalorder %s24, 3
      %p431 = pnand %p429, %p430
      %p432 = pneg %p431
      // Predicated region
      $region69: #{tpu_custom_call.1} parent=5 // pred_check
        _
      $region70: #{tpu_custom_call.1} parent=5 // pred_check_branch
        %434 = sbr.rel (%p431) target = $region72
      $region71: #{tpu_custom_call.1} parent=5 // pred_region
        %s435 = ssub.s32 %s24, 1
        // Predicated region
        $region73: #{tpu_custom_call.1} parent=71 // pred_check
          %p436 = pneg %p71
        $region74: #{tpu_custom_call.1} parent=71 // pred_check_branch
          %438 = sbr.rel (%p436) target = $region76
        $region75: #{tpu_custom_call.1} parent=71 // pred_region
          %439 = dma.done [#allocation4], 32768
        $region76: #{tpu_custom_call.1} parent=71 // pred_fallthru
          _
        // Predicated region
        $region77: #{tpu_custom_call.1} parent=71 // pred_check
          %p440 = pneg %p92
        $region78: #{tpu_custom_call.1} parent=71 // pred_check_branch
          %442 = sbr.rel (%p440) target = $region80
        $region79: #{tpu_custom_call.1} parent=71 // pred_region
          %443 = dma.done [#allocation6], 256
        $region80: #{tpu_custom_call.1} parent=71 // pred_fallthru
          _
        // Predicated region
        $region81: #{tpu_custom_call.1} parent=71 // pred_check
          %p444 = pneg %p113
        $region82: #{tpu_custom_call.1} parent=71 // pred_check_branch
          %446 = sbr.rel (%p444) target = $region84
        $region83: #{tpu_custom_call.1} parent=71 // pred_region
          %447 = dma.done [#allocation6], 32768
        $region84: #{tpu_custom_call.1} parent=71 // pred_fallthru
          _
        // Predicated region
        $region85: #{tpu_custom_call.1} parent=71 // pred_check
          %p448 = pneg %p134
        $region86: #{tpu_custom_call.1} parent=71 // pred_check_branch
          %450 = sbr.rel (%p448) target = $region88
        $region87: #{tpu_custom_call.1} parent=71 // pred_region
          %451 = dma.done [#allocation9], 32
        $region88: #{tpu_custom_call.1} parent=71 // pred_fallthru
          _
        %s452 = smul.u32 16, %s29
        %p453 = scmp.lt.s32.totalorder %s452, 31
        %s454 = scalar_select %p453, %s452, 31
        %s455 = smul.addr %s454, 2
        %s456 = smul.addr %s455, 8
        %s457 = scalar_lea.vmem %s0, %s456
        %p458 = pneg %p50
        %p459 = pneg %p47
        %p460 = pneg %p71
        %p461 = pneg %p68
        %p462 = pneg %p92
        %p463 = pneg %p89
        %p464 = pneg %p113
        %p465 = pneg %p110
        %p466 = pneg %p134
        %p467 = pneg %p131
        %p468 = pneg %p155
        %p469 = pneg %p152
        %p470 = pneg %p176
        %p471 = pneg %p173
        %p472 = pneg %p197
        %p473 = pneg %p194
        %p474 = pneg %p218
        %p475 = pneg %p215
        %p476 = pneg %p239
        %p477 = pneg %p236
        %p478 = pneg %p260
        %p479 = pneg %p257
        %p480 = pneg %p281
        %p481 = pneg %p278
        %p482 = pneg %p302
        %p483 = pneg %p299
        %p484 = pneg %p328
        %p485 = pneg %p325
        %s486 = smul.u32 16, %s29
        %p487 = scmp.lt.s32.totalorder %s486, 31
        %s488 = scalar_select %p487, %s486, 31
        %s489 = smul.addr %s488, 8
        %s490 = scalar_lea.vmem %s13, %s489
        %s491 = smul.u32 16, %s29
        %p492 = scmp.lt.s32.totalorder %s491, 31
        %s493 = scalar_select %p492, %s491, 31
        %s494 = smul.addr %s493, 2
        %s495 = smul.addr %s494, 8
        %s496 = scalar_lea.vmem %s0, %s495
        %s497 = smul.u32 16, %s29
        %s498 = smul.u32 16, %s29
        %p499 = scmp.lt.s32.totalorder %s498, 31
        %s500 = scalar_select %p499, %s498, 31
        %s501 = smul.addr %s500, 8
        %s502 = scalar_lea.vmem %s13, %s501
        %s503 = smul.u32 16, %s29
        %v504 = vld [vmem:[%s496] sm:$0xff]
        %v505 = vld [vmem:[%s496 + $0x8] sm:$0xff]
        %v506 = vld [vmem:[%s496 + $0x10] sm:$0xff]
        %v507 = vld [vmem:[%s496 + $0x18] sm:$0xff]
        %v508 = vld [vmem:[%s496 + $0x20] sm:$0xff]
        %v509 = vld [vmem:[%s496 + $0x28] sm:$0xff]
        %v510 = vld [vmem:[%s496 + $0x30] sm:$0xff]
        %v511 = vld [vmem:[%s496 + $0x38] sm:$0xff]
        %v512 = vld [vmem:[%s496 + $0x40] sm:$0xff]
        %v513 = vld [vmem:[%s496 + $0x48] sm:$0xff]
        %v514 = vld [vmem:[%s496 + $0x50] sm:$0xff]
        %v515 = vld [vmem:[%s496 + $0x58] sm:$0xff]
        %v516 = vld [vmem:[%s496 + $0x60] sm:$0xff]
        %v517 = vld [vmem:[%s496 + $0x68] sm:$0xff]
        %v518 = vld [vmem:[%s496 + $0x70] sm:$0xff]
        %v519 = vld [vmem:[%s496 + $0x78] sm:$0xff]
        %v520 = vld [vmem:[%s496 + $0x80] sm:$0xff]
        %v521 = vld [vmem:[%s496 + $0x88] sm:$0xff]
        %v522 = vld [vmem:[%s496 + $0x90] sm:$0xff]
        %v523 = vld [vmem:[%s496 + $0x98] sm:$0xff]
        %v524 = vld [vmem:[%s496 + $0xa0] sm:$0xff]
        %v525 = vld [vmem:[%s496 + $0xa8] sm:$0xff]
        %v526 = vld [vmem:[%s496 + $0xb0] sm:$0xff]
        %v527 = vld [vmem:[%s496 + $0xb8] sm:$0xff]
        %v528 = vld [vmem:[%s496 + $0xc0] sm:$0xff]
        %v529 = vld [vmem:[%s496 + $0xc8] sm:$0xff]
        %v530 = vld [vmem:[%s496 + $0xd0] sm:$0xff]
        %v531 = vld [vmem:[%s496 + $0xd8] sm:$0xff]
        %v532 = vld [vmem:[%s496 + $0xe0] sm:$0xff]
        %v533 = vld [vmem:[%s496 + $0xe8] sm:$0xff]
        %v534 = vld [vmem:[%s496 + $0xf0] sm:$0xff]
        %v535 = vld [vmem:[%s496 + $0xf8] sm:$0xff]
        %v536 = vpack.c.bf16 %v506, %v504
        %v537 = vpack.c.bf16 %v507, %v505
        %v538 = vpack.c.bf16 %v510, %v508
        %v539 = vpack.c.bf16 %v511, %v509
        %v540 = vpack.c.bf16 %v514, %v512
        %v541 = vpack.c.bf16 %v515, %v513
        %v542 = vpack.c.bf16 %v518, %v516
        %v543 = vpack.c.bf16 %v519, %v517
        %v544 = vpack.c.bf16 %v522, %v520
        %v545 = vpack.c.bf16 %v523, %v521
        %v546 = vpack.c.bf16 %v526, %v524
        %v547 = vpack.c.bf16 %v527, %v525
        %v548 = vpack.c.bf16 %v530, %v528
        %v549 = vpack.c.bf16 %v531, %v529
        %v550 = vpack.c.bf16 %v534, %v532
        %v551 = vpack.c.bf16 %v535, %v533
        %v552 = vld [vmem:[#allocation3] sm:$0xff]
        %v553 = vld [vmem:[#allocation3 + $0x8] sm:$0xff]
        %v554 = vld [vmem:[#allocation3 + $0x10] sm:$0xff]
        %v555 = vld [vmem:[#allocation3 + $0x18] sm:$0xff]
        %v556 = vld [vmem:[#allocation3 + $0x20] sm:$0xff]
        %v557 = vld [vmem:[#allocation3 + $0x28] sm:$0xff]
        %v558 = vld [vmem:[#allocation3 + $0x30] sm:$0xff]
        %v559 = vld [vmem:[#allocation3 + $0x38] sm:$0xff]
        %v560 = vld [vmem:[#allocation3 + $0x40] sm:$0xff]
        %v561 = vld [vmem:[#allocation3 + $0x48] sm:$0xff]
        %v562 = vld [vmem:[#allocation3 + $0x50] sm:$0xff]
        %v563 = vld [vmem:[#allocation3 + $0x58] sm:$0xff]
        %v564 = vld [vmem:[#allocation3 + $0x60] sm:$0xff]
        %v565 = vld [vmem:[#allocation3 + $0x68] sm:$0xff]
        %v566 = vld [vmem:[#allocation3 + $0x70] sm:$0xff]
        %v567 = vld [vmem:[#allocation3 + $0x78] sm:$0xff]
        %v568 = vld [vmem:[#allocation3 + $0x80] sm:$0xff]
        %v569 = vld [vmem:[#allocation3 + $0x88] sm:$0xff]
        %v570 = vld [vmem:[#allocation3 + $0x90] sm:$0xff]
        %v571 = vld [vmem:[#allocation3 + $0x98] sm:$0xff]
        %v572 = vld [vmem:[#allocation3 + $0xa0] sm:$0xff]
        %v573 = vld [vmem:[#allocation3 + $0xa8] sm:$0xff]
        %v574 = vld [vmem:[#allocation3 + $0xb0] sm:$0xff]
        %v575 = vld [vmem:[#allocation3 + $0xb8] sm:$0xff]
        %v576 = vld [vmem:[#allocation3 + $0xc0] sm:$0xff]
        %v577 = vld [vmem:[#allocation3 + $0xc8] sm:$0xff]
        %v578 = vld [vmem:[#allocation3 + $0xd0] sm:$0xff]
        %v579 = vld [vmem:[#allocation3 + $0xd8] sm:$0xff]
        %v580 = vld [vmem:[#allocation3 + $0xe0] sm:$0xff]
        %v581 = vld [vmem:[#allocation3 + $0xe8] sm:$0xff]
        %v582 = vld [vmem:[#allocation3 + $0xf0] sm:$0xff]
        %v583 = vld [vmem:[#allocation3 + $0xf8] sm:$0xff]
        %v584 = vld [vmem:[#allocation3 + $0x100] sm:$0xff]
        %v585 = vld [vmem:[#allocation3 + $0x108] sm:$0xff]
        %v586 = vld [vmem:[#allocation3 + $0x110] sm:$0xff]
        %v587 = vld [vmem:[#allocation3 + $0x118] sm:$0xff]
        %v588 = vld [vmem:[#allocation3 + $0x120] sm:$0xff]
        %v589 = vld [vmem:[#allocation3 + $0x128] sm:$0xff]
        %v590 = vld [vmem:[#allocation3 + $0x130] sm:$0xff]
        %v591 = vld [vmem:[#allocation3 + $0x138] sm:$0xff]
        %v592 = vld [vmem:[#allocation3 + $0x140] sm:$0xff]
        %v593 = vld [vmem:[#allocation3 + $0x148] sm:$0xff]
        %v594 = vld [vmem:[#allocation3 + $0x150] sm:$0xff]
        %v595 = vld [vmem:[#allocation3 + $0x158] sm:$0xff]
        %v596 = vld [vmem:[#allocation3 + $0x160] sm:$0xff]
        %v597 = vld [vmem:[#allocation3 + $0x168] sm:$0xff]
        %v598 = vld [vmem:[#allocation3 + $0x170] sm:$0xff]
        %v599 = vld [vmem:[#allocation3 + $0x178] sm:$0xff]
        %v600 = vld [vmem:[#allocation3 + $0x180] sm:$0xff]
        %v601 = vld [vmem:[#allocation3 + $0x188] sm:$0xff]
        %v602 = vld [vmem:[#allocation3 + $0x190] sm:$0xff]
        %v603 = vld [vmem:[#allocation3 + $0x198] sm:$0xff]
        %v604 = vld [vmem:[#allocation3 + $0x1a0] sm:$0xff]
        %v605 = vld [vmem:[#allocation3 + $0x1a8] sm:$0xff]
        %v606 = vld [vmem:[#allocation3 + $0x1b0] sm:$0xff]
        %v607 = vld [vmem:[#allocation3 + $0x1b8] sm:$0xff]
        %v608 = vld [vmem:[#allocation3 + $0x1c0] sm:$0xff]
        %v609 = vld [vmem:[#allocation3 + $0x1c8] sm:$0xff]
        %v610 = vld [vmem:[#allocation3 + $0x1d0] sm:$0xff]
        %v611 = vld [vmem:[#allocation3 + $0x1d8] sm:$0xff]
        %v612 = vld [vmem:[#allocation3 + $0x1e0] sm:$0xff]
        %v613 = vld [vmem:[#allocation3 + $0x1e8] sm:$0xff]
        %v614 = vld [vmem:[#allocation3 + $0x1f0] sm:$0xff]
        %v615 = vld [vmem:[#allocation3 + $0x1f8] sm:$0xff]
        %v616 = vld [vmem:[#allocation3 + $0x200] sm:$0xff]
        %v617 = vld [vmem:[#allocation3 + $0x208] sm:$0xff]
        %v618 = vld [vmem:[#allocation3 + $0x210] sm:$0xff]
        %v619 = vld [vmem:[#allocation3 + $0x218] sm:$0xff]
        %v620 = vld [vmem:[#allocation3 + $0x220] sm:$0xff]
        %v621 = vld [vmem:[#allocation3 + $0x228] sm:$0xff]
        %v622 = vld [vmem:[#allocation3 + $0x230] sm:$0xff]
        %v623 = vld [vmem:[#allocation3 + $0x238] sm:$0xff]
        %v624 = vld [vmem:[#allocation3 + $0x240] sm:$0xff]
        %v625 = vld [vmem:[#allocation3 + $0x248] sm:$0xff]
        %v626 = vld [vmem:[#allocation3 + $0x250] sm:$0xff]
        %v627 = vld [vmem:[#allocation3 + $0x258] sm:$0xff]
        %v628 = vld [vmem:[#allocation3 + $0x260] sm:$0xff]
        %v629 = vld [vmem:[#allocation3 + $0x268] sm:$0xff]
        %v630 = vld [vmem:[#allocation3 + $0x270] sm:$0xff]
        %v631 = vld [vmem:[#allocation3 + $0x278] sm:$0xff]
        %v632 = vld [vmem:[#allocation3 + $0x280] sm:$0xff]
        %v633 = vld [vmem:[#allocation3 + $0x288] sm:$0xff]
        %v634 = vld [vmem:[#allocation3 + $0x290] sm:$0xff]
        %v635 = vld [vmem:[#allocation3 + $0x298] sm:$0xff]
        %v636 = vld [vmem:[#allocation3 + $0x2a0] sm:$0xff]
        %v637 = vld [vmem:[#allocation3 + $0x2a8] sm:$0xff]
        %v638 = vld [vmem:[#allocation3 + $0x2b0] sm:$0xff]
        %v639 = vld [vmem:[#allocation3 + $0x2b8] sm:$0xff]
        %v640 = vld [vmem:[#allocation3 + $0x2c0] sm:$0xff]
        %v641 = vld [vmem:[#allocation3 + $0x2c8] sm:$0xff]
        %v642 = vld [vmem:[#allocation3 + $0x2d0] sm:$0xff]
        %v643 = vld [vmem:[#allocation3 + $0x2d8] sm:$0xff]
        %v644 = vld [vmem:[#allocation3 + $0x2e0] sm:$0xff]
        %v645 = vld [vmem:[#allocation3 + $0x2e8] sm:$0xff]
        %v646 = vld [vmem:[#allocation3 + $0x2f0] sm:$0xff]
        %v647 = vld [vmem:[#allocation3 + $0x2f8] sm:$0xff]
        %v648 = vld [vmem:[#allocation3 + $0x300] sm:$0xff]
        %v649 = vld [vmem:[#allocation3 + $0x308] sm:$0xff]
        %v650 = vld [vmem:[#allocation3 + $0x310] sm:$0xff]
        %v651 = vld [vmem:[#allocation3 + $0x318] sm:$0xff]
        %v652 = vld [vmem:[#allocation3 + $0x320] sm:$0xff]
        %v653 = vld [vmem:[#allocation3 + $0x328] sm:$0xff]
        %v654 = vld [vmem:[#allocation3 + $0x330] sm:$0xff]
        %v655 = vld [vmem:[#allocation3 + $0x338] sm:$0xff]
        %v656 = vld [vmem:[#allocation3 + $0x340] sm:$0xff]
        %v657 = vld [vmem:[#allocation3 + $0x348] sm:$0xff]
        %v658 = vld [vmem:[#allocation3 + $0x350] sm:$0xff]
        %v659 = vld [vmem:[#allocation3 + $0x358] sm:$0xff]
        %v660 = vld [vmem:[#allocation3 + $0x360] sm:$0xff]
        %v661 = vld [vmem:[#allocation3 + $0x368] sm:$0xff]
        %v662 = vld [vmem:[#allocation3 + $0x370] sm:$0xff]
        %v663 = vld [vmem:[#allocation3 + $0x378] sm:$0xff]
        %v664 = vld [vmem:[#allocation3 + $0x380] sm:$0xff]
        %v665 = vld [vmem:[#allocation3 + $0x388] sm:$0xff]
        %v666 = vld [vmem:[#allocation3 + $0x390] sm:$0xff]
        %v667 = vld [vmem:[#allocation3 + $0x398] sm:$0xff]
        %v668 = vld [vmem:[#allocation3 + $0x3a0] sm:$0xff]
        %v669 = vld [vmem:[#allocation3 + $0x3a8] sm:$0xff]
        %v670 = vld [vmem:[#allocation3 + $0x3b0] sm:$0xff]
        %v671 = vld [vmem:[#allocation3 + $0x3b8] sm:$0xff]
        %v672 = vld [vmem:[#allocation3 + $0x3c0] sm:$0xff]
        %v673 = vld [vmem:[#allocation3 + $0x3c8] sm:$0xff]
        %v674 = vld [vmem:[#allocation3 + $0x3d0] sm:$0xff]
        %v675 = vld [vmem:[#allocation3 + $0x3d8] sm:$0xff]
        %v676 = vld [vmem:[#allocation3 + $0x3e0] sm:$0xff]
        %v677 = vld [vmem:[#allocation3 + $0x3e8] sm:$0xff]
        %v678 = vld [vmem:[#allocation3 + $0x3f0] sm:$0xff]
        %v679 = vld [vmem:[#allocation3 + $0x3f8] sm:$0xff]
        %v680 = vld [vmem:[#allocation3 + $0x400] sm:$0xff]
        %v681 = vld [vmem:[#allocation3 + $0x408] sm:$0xff]
        %v682 = vld [vmem:[#allocation3 + $0x410] sm:$0xff]
        %v683 = vld [vmem:[#allocation3 + $0x418] sm:$0xff]
        %v684 = vld [vmem:[#allocation3 + $0x420] sm:$0xff]
        %v685 = vld [vmem:[#allocation3 + $0x428] sm:$0xff]
        %v686 = vld [vmem:[#allocation3 + $0x430] sm:$0xff]
        %v687 = vld [vmem:[#allocation3 + $0x438] sm:$0xff]
        %v688 = vld [vmem:[#allocation3 + $0x440] sm:$0xff]
        %v689 = vld [vmem:[#allocation3 + $0x448] sm:$0xff]
        %v690 = vld [vmem:[#allocation3 + $0x450] sm:$0xff]
        %v691 = vld [vmem:[#allocation3 + $0x458] sm:$0xff]
        %v692 = vld [vmem:[#allocation3 + $0x460] sm:$0xff]
        %v693 = vld [vmem:[#allocation3 + $0x468] sm:$0xff]
        %v694 = vld [vmem:[#allocation3 + $0x470] sm:$0xff]
        %v695 = vld [vmem:[#allocation3 + $0x478] sm:$0xff]
        %v696 = vld [vmem:[#allocation3 + $0x480] sm:$0xff]
        %v697 = vld [vmem:[#allocation3 + $0x488] sm:$0xff]
        %v698 = vld [vmem:[#allocation3 + $0x490] sm:$0xff]
        %v699 = vld [vmem:[#allocation3 + $0x498] sm:$0xff]
        %v700 = vld [vmem:[#allocation3 + $0x4a0] sm:$0xff]
        %v701 = vld [vmem:[#allocation3 + $0x4a8] sm:$0xff]
        %v702 = vld [vmem:[#allocation3 + $0x4b0] sm:$0xff]
        %v703 = vld [vmem:[#allocation3 + $0x4b8] sm:$0xff]
        %v704 = vld [vmem:[#allocation3 + $0x4c0] sm:$0xff]
        %v705 = vld [vmem:[#allocation3 + $0x4c8] sm:$0xff]
        %v706 = vld [vmem:[#allocation3 + $0x4d0] sm:$0xff]
        %v707 = vld [vmem:[#allocation3 + $0x4d8] sm:$0xff]
        %v708 = vld [vmem:[#allocation3 + $0x4e0] sm:$0xff]
        %v709 = vld [vmem:[#allocation3 + $0x4e8] sm:$0xff]
        %v710 = vld [vmem:[#allocation3 + $0x4f0] sm:$0xff]
        %v711 = vld [vmem:[#allocation3 + $0x4f8] sm:$0xff]
        %v712 = vld [vmem:[#allocation3 + $0x500] sm:$0xff]
        %v713 = vld [vmem:[#allocation3 + $0x508] sm:$0xff]
        %v714 = vld [vmem:[#allocation3 + $0x510] sm:$0xff]
        %v715 = vld [vmem:[#allocation3 + $0x518] sm:$0xff]
        %v716 = vld [vmem:[#allocation3 + $0x520] sm:$0xff]
        %v717 = vld [vmem:[#allocation3 + $0x528] sm:$0xff]
        %v718 = vld [vmem:[#allocation3 + $0x530] sm:$0xff]
        %v719 = vld [vmem:[#allocation3 + $0x538] sm:$0xff]
        %v720 = vld [vmem:[#allocation3 + $0x540] sm:$0xff]
        %v721 = vld [vmem:[#allocation3 + $0x548] sm:$0xff]
        %v722 = vld [vmem:[#allocation3 + $0x550] sm:$0xff]
        %v723 = vld [vmem:[#allocation3 + $0x558] sm:$0xff]
        %v724 = vld [vmem:[#allocation3 + $0x560] sm:$0xff]
        %v725 = vld [vmem:[#allocation3 + $0x568] sm:$0xff]
        %v726 = vld [vmem:[#allocation3 + $0x570] sm:$0xff]
        %v727 = vld [vmem:[#allocation3 + $0x578] sm:$0xff]
        %v728 = vld [vmem:[#allocation3 + $0x580] sm:$0xff]
        %v729 = vld [vmem:[#allocation3 + $0x588] sm:$0xff]
        %v730 = vld [vmem:[#allocation3 + $0x590] sm:$0xff]
        %v731 = vld [vmem:[#allocation3 + $0x598] sm:$0xff]
        %v732 = vld [vmem:[#allocation3 + $0x5a0] sm:$0xff]
        %v733 = vld [vmem:[#allocation3 + $0x5a8] sm:$0xff]
        %v734 = vld [vmem:[#allocation3 + $0x5b0] sm:$0xff]
        %v735 = vld [vmem:[#allocation3 + $0x5b8] sm:$0xff]
        %v736 = vld [vmem:[#allocation3 + $0x5c0] sm:$0xff]
        %v737 = vld [vmem:[#allocation3 + $0x5c8] sm:$0xff]
        %v738 = vld [vmem:[#allocation3 + $0x5d0] sm:$0xff]
        %v739 = vld [vmem:[#allocation3 + $0x5d8] sm:$0xff]
        %v740 = vld [vmem:[#allocation3 + $0x5e0] sm:$0xff]
        %v741 = vld [vmem:[#allocation3 + $0x5e8] sm:$0xff]
        %v742 = vld [vmem:[#allocation3 + $0x5f0] sm:$0xff]
        %v743 = vld [vmem:[#allocation3 + $0x5f8] sm:$0xff]
        %v744 = vld [vmem:[#allocation3 + $0x600] sm:$0xff]
        %v745 = vld [vmem:[#allocation3 + $0x608] sm:$0xff]
        %v746 = vld [vmem:[#allocation3 + $0x610] sm:$0xff]
        %v747 = vld [vmem:[#allocation3 + $0x618] sm:$0xff]
        %v748 = vld [vmem:[#allocation3 + $0x620] sm:$0xff]
        %v749 = vld [vmem:[#allocation3 + $0x628] sm:$0xff]
        %v750 = vld [vmem:[#allocation3 + $0x630] sm:$0xff]
        %v751 = vld [vmem:[#allocation3 + $0x638] sm:$0xff]
        %v752 = vld [vmem:[#allocation3 + $0x640] sm:$0xff]
        %v753 = vld [vmem:[#allocation3 + $0x648] sm:$0xff]
        %v754 = vld [vmem:[#allocation3 + $0x650] sm:$0xff]
        %v755 = vld [vmem:[#allocation3 + $0x658] sm:$0xff]
        %v756 = vld [vmem:[#allocation3 + $0x660] sm:$0xff]
        %v757 = vld [vmem:[#allocation3 + $0x668] sm:$0xff]
        %v758 = vld [vmem:[#allocation3 + $0x670] sm:$0xff]
        %v759 = vld [vmem:[#allocation3 + $0x678] sm:$0xff]
        %v760 = vld [vmem:[#allocation3 + $0x680] sm:$0xff]
        %v761 = vld [vmem:[#allocation3 + $0x688] sm:$0xff]
        %v762 = vld [vmem:[#allocation3 + $0x690] sm:$0xff]
        %v763 = vld [vmem:[#allocation3 + $0x698] sm:$0xff]
        %v764 = vld [vmem:[#allocation3 + $0x6a0] sm:$0xff]
        %v765 = vld [vmem:[#allocation3 + $0x6a8] sm:$0xff]
        %v766 = vld [vmem:[#allocation3 + $0x6b0] sm:$0xff]
        %v767 = vld [vmem:[#allocation3 + $0x6b8] sm:$0xff]
        %v768 = vld [vmem:[#allocation3 + $0x6c0] sm:$0xff]
        %v769 = vld [vmem:[#allocation3 + $0x6c8] sm:$0xff]
        %v770 = vld [vmem:[#allocation3 + $0x6d0] sm:$0xff]
        %v771 = vld [vmem:[#allocation3 + $0x6d8] sm:$0xff]
        %v772 = vld [vmem:[#allocation3 + $0x6e0] sm:$0xff]
        %v773 = vld [vmem:[#allocation3 + $0x6e8] sm:$0xff]
        %v774 = vld [vmem:[#allocation3 + $0x6f0] sm:$0xff]
        %v775 = vld [vmem:[#allocation3 + $0x6f8] sm:$0xff]
        %v776 = vld [vmem:[#allocation3 + $0x700] sm:$0xff]
        %v777 = vld [vmem:[#allocation3 + $0x708] sm:$0xff]
        %v778 = vld [vmem:[#allocation3 + $0x710] sm:$0xff]
        %v779 = vld [vmem:[#allocation3 + $0x718] sm:$0xff]
        %v780 = vld [vmem:[#allocation3 + $0x720] sm:$0xff]
        %v781 = vld [vmem:[#allocation3 + $0x728] sm:$0xff]
        %v782 = vld [vmem:[#allocation3 + $0x730] sm:$0xff]
        %v783 = vld [vmem:[#allocation3 + $0x738] sm:$0xff]
        %v784 = vld [vmem:[#allocation3 + $0x740] sm:$0xff]
        %v785 = vld [vmem:[#allocation3 + $0x748] sm:$0xff]
        %v786 = vld [vmem:[#allocation3 + $0x750] sm:$0xff]
        %v787 = vld [vmem:[#allocation3 + $0x758] sm:$0xff]
        %v788 = vld [vmem:[#allocation3 + $0x760] sm:$0xff]
        %v789 = vld [vmem:[#allocation3 + $0x768] sm:$0xff]
        %v790 = vld [vmem:[#allocation3 + $0x770] sm:$0xff]
        %v791 = vld [vmem:[#allocation3 + $0x778] sm:$0xff]
        %v792 = vld [vmem:[#allocation3 + $0x780] sm:$0xff]
        %v793 = vld [vmem:[#allocation3 + $0x788] sm:$0xff]
        %v794 = vld [vmem:[#allocation3 + $0x790] sm:$0xff]
        %v795 = vld [vmem:[#allocation3 + $0x798] sm:$0xff]
        %v796 = vld [vmem:[#allocation3 + $0x7a0] sm:$0xff]
        %v797 = vld [vmem:[#allocation3 + $0x7a8] sm:$0xff]
        %v798 = vld [vmem:[#allocation3 + $0x7b0] sm:$0xff]
        %v799 = vld [vmem:[#allocation3 + $0x7b8] sm:$0xff]
        %v800 = vld [vmem:[#allocation3 + $0x7c0] sm:$0xff]
        %v801 = vld [vmem:[#allocation3 + $0x7c8] sm:$0xff]
        %v802 = vld [vmem:[#allocation3 + $0x7d0] sm:$0xff]
        %v803 = vld [vmem:[#allocation3 + $0x7d8] sm:$0xff]
        %v804 = vld [vmem:[#allocation3 + $0x7e0] sm:$0xff]
        %v805 = vld [vmem:[#allocation3 + $0x7e8] sm:$0xff]
        %v806 = vld [vmem:[#allocation3 + $0x7f0] sm:$0xff]
        %v807 = vld [vmem:[#allocation3 + $0x7f8] sm:$0xff]
        %v808 = vld [vmem:[#allocation5] sm:$0xff]
        %v809 = vld [vmem:[#allocation5 + $0x8] sm:$0xff]
        %v812 = vlaneseq
        %v813 = vshrl.u32 %v812, 7
        %v814 = vsub.s32 0, %v813
        %v815 = vrot.slane %v808, %v814
        %v816 = vlaneseq
        %v817 = vshrl.u32 %v816, 7
        %v818 = vsub.s32 1, %v817
        %v819 = vrot.slane %v808, %v818
        %v820 = vlaneseq
        %v821 = vshrl.u32 %v820, 7
        %v822 = vsub.s32 2, %v821
        %v823 = vrot.slane %v808, %v822
        %v824 = vlaneseq
        %v825 = vshrl.u32 %v824, 7
        %v826 = vsub.s32 3, %v825
        %v827 = vrot.slane %v808, %v826
        %v828 = vlaneseq
        %v829 = vshrl.u32 %v828, 7
        %v830 = vsub.s32 4, %v829
        %v831 = vrot.slane %v808, %v830
        %v832 = vlaneseq
        %v833 = vshrl.u32 %v832, 7
        %v834 = vsub.s32 5, %v833
        %v835 = vrot.slane %v808, %v834
        %v836 = vlaneseq
        %v837 = vshrl.u32 %v836, 7
        %v838 = vsub.s32 6, %v837
        %v839 = vrot.slane %v808, %v838
        %v840 = vlaneseq
        %v841 = vshrl.u32 %v840, 7
        %v842 = vsub.s32 7, %v841
        %v843 = vrot.slane %v808, %v842
        %v844 = vlaneseq
        %v845 = vshrl.u32 %v844, 7
        %v846 = vsub.s32 0, %v845
        %v847 = vrot.slane %v809, %v846
        %v848 = vlaneseq
        %v849 = vshrl.u32 %v848, 7
        %v850 = vsub.s32 1, %v849
        %v851 = vrot.slane %v809, %v850
        %v852 = vlaneseq
        %v853 = vshrl.u32 %v852, 7
        %v854 = vsub.s32 2, %v853
        %v855 = vrot.slane %v809, %v854
        %v856 = vlaneseq
        %v857 = vshrl.u32 %v856, 7
        %v858 = vsub.s32 3, %v857
        %v859 = vrot.slane %v809, %v858
        %v860 = vlaneseq
        %v861 = vshrl.u32 %v860, 7
        %v862 = vsub.s32 4, %v861
        %v863 = vrot.slane %v809, %v862
        %v864 = vlaneseq
        %v865 = vshrl.u32 %v864, 7
        %v866 = vsub.s32 5, %v865
        %v867 = vrot.slane %v809, %v866
        %v868 = vlaneseq
        %v869 = vshrl.u32 %v868, 7
        %v870 = vsub.s32 6, %v869
        %v871 = vrot.slane %v809, %v870
        %v872 = vlaneseq
        %v873 = vshrl.u32 %v872, 7
        %v874 = vsub.s32 7, %v873
        %v875 = vrot.slane %v809, %v874
        %v1148 = vunpack.c.l.b16 %v552
        %v1149 = vunpack.c.h.b16 %v552
        %v1150 = vunpack.c.l.b16 %v553
        %v1151 = vunpack.c.h.b16 %v553
        %v1152 = vunpack.c.l.b16 %v554
        %v1153 = vunpack.c.h.b16 %v554
        %v1154 = vunpack.c.l.b16 %v555
        %v1155 = vunpack.c.h.b16 %v555
        %v1156 = vunpack.c.l.b16 %v556
        %v1157 = vunpack.c.h.b16 %v556
        %v1158 = vunpack.c.l.b16 %v557
        %v1159 = vunpack.c.h.b16 %v557
        %v1160 = vunpack.c.l.b16 %v558
        %v1161 = vunpack.c.h.b16 %v558
        %v1162 = vunpack.c.l.b16 %v559
        %v1163 = vunpack.c.h.b16 %v559
        %v1164 = vunpack.c.l.b16 %v560
        %v1165 = vunpack.c.h.b16 %v560
        %v1166 = vunpack.c.l.b16 %v561
        %v1167 = vunpack.c.h.b16 %v561
        %v1168 = vunpack.c.l.b16 %v562
        %v1169 = vunpack.c.h.b16 %v562
        %v1170 = vunpack.c.l.b16 %v563
        %v1171 = vunpack.c.h.b16 %v563
        %v1172 = vunpack.c.l.b16 %v564
        %v1173 = vunpack.c.h.b16 %v564
        %v1174 = vunpack.c.l.b16 %v565
        %v1175 = vunpack.c.h.b16 %v565
        %v1176 = vunpack.c.l.b16 %v566
        %v1177 = vunpack.c.h.b16 %v566
        %v1178 = vunpack.c.l.b16 %v567
        %v1179 = vunpack.c.h.b16 %v567
        %v1180 = vunpack.c.l.b16 %v568
        %v1181 = vunpack.c.h.b16 %v568
        %v1182 = vunpack.c.l.b16 %v569
        %v1183 = vunpack.c.h.b16 %v569
        %v1184 = vunpack.c.l.b16 %v570
        %v1185 = vunpack.c.h.b16 %v570
        %v1186 = vunpack.c.l.b16 %v571
        %v1187 = vunpack.c.h.b16 %v571
        %v1188 = vunpack.c.l.b16 %v572
        %v1189 = vunpack.c.h.b16 %v572
        %v1190 = vunpack.c.l.b16 %v573
        %v1191 = vunpack.c.h.b16 %v573
        %v1192 = vunpack.c.l.b16 %v574
        %v1193 = vunpack.c.h.b16 %v574
        %v1194 = vunpack.c.l.b16 %v575
        %v1195 = vunpack.c.h.b16 %v575
        %v1196 = vunpack.c.l.b16 %v576
        %v1197 = vunpack.c.h.b16 %v576
        %v1198 = vunpack.c.l.b16 %v577
        %v1199 = vunpack.c.h.b16 %v577
        %v1200 = vunpack.c.l.b16 %v578
        %v1201 = vunpack.c.h.b16 %v578
        %v1202 = vunpack.c.l.b16 %v579
        %v1203 = vunpack.c.h.b16 %v579
        %v1204 = vunpack.c.l.b16 %v580
        %v1205 = vunpack.c.h.b16 %v580
        %v1206 = vunpack.c.l.b16 %v581
        %v1207 = vunpack.c.h.b16 %v581
        %v1208 = vunpack.c.l.b16 %v582
        %v1209 = vunpack.c.h.b16 %v582
        %v1210 = vunpack.c.l.b16 %v583
        %v1211 = vunpack.c.h.b16 %v583
        %v1212 = vunpack.c.l.b16 %v584
        %v1213 = vunpack.c.h.b16 %v584
        %v1214 = vunpack.c.l.b16 %v585
        %v1215 = vunpack.c.h.b16 %v585
        %v1216 = vunpack.c.l.b16 %v586
        %v1217 = vunpack.c.h.b16 %v586
        %v1218 = vunpack.c.l.b16 %v587
        %v1219 = vunpack.c.h.b16 %v587
        %v1220 = vunpack.c.l.b16 %v588
        %v1221 = vunpack.c.h.b16 %v588
        %v1222 = vunpack.c.l.b16 %v589
        %v1223 = vunpack.c.h.b16 %v589
        %v1224 = vunpack.c.l.b16 %v590
        %v1225 = vunpack.c.h.b16 %v590
        %v1226 = vunpack.c.l.b16 %v591
        %v1227 = vunpack.c.h.b16 %v591
        %v1228 = vunpack.c.l.b16 %v592
        %v1229 = vunpack.c.h.b16 %v592
        %v1230 = vunpack.c.l.b16 %v593
        %v1231 = vunpack.c.h.b16 %v593
        %v1232 = vunpack.c.l.b16 %v594
        %v1233 = vunpack.c.h.b16 %v594
        %v1234 = vunpack.c.l.b16 %v595
        %v1235 = vunpack.c.h.b16 %v595
        %v1236 = vunpack.c.l.b16 %v596
        %v1237 = vunpack.c.h.b16 %v596
        %v1238 = vunpack.c.l.b16 %v597
        %v1239 = vunpack.c.h.b16 %v597
        %v1240 = vunpack.c.l.b16 %v598
        %v1241 = vunpack.c.h.b16 %v598
        %v1242 = vunpack.c.l.b16 %v599
        %v1243 = vunpack.c.h.b16 %v599
        %v1244 = vunpack.c.l.b16 %v600
        %v1245 = vunpack.c.h.b16 %v600
        %v1246 = vunpack.c.l.b16 %v601
        %v1247 = vunpack.c.h.b16 %v601
        %v1248 = vunpack.c.l.b16 %v602
        %v1249 = vunpack.c.h.b16 %v602
        %v1250 = vunpack.c.l.b16 %v603
        %v1251 = vunpack.c.h.b16 %v603
        %v1252 = vunpack.c.l.b16 %v604
        %v1253 = vunpack.c.h.b16 %v604
        %v1254 = vunpack.c.l.b16 %v605
        %v1255 = vunpack.c.h.b16 %v605
        %v1256 = vunpack.c.l.b16 %v606
        %v1257 = vunpack.c.h.b16 %v606
        %v1258 = vunpack.c.l.b16 %v607
        %v1259 = vunpack.c.h.b16 %v607
        %v1260 = vunpack.c.l.b16 %v608
        %v1261 = vunpack.c.h.b16 %v608
        %v1262 = vunpack.c.l.b16 %v609
        %v1263 = vunpack.c.h.b16 %v609
        %v1264 = vunpack.c.l.b16 %v610
        %v1265 = vunpack.c.h.b16 %v610
        %v1266 = vunpack.c.l.b16 %v611
        %v1267 = vunpack.c.h.b16 %v611
        %v1268 = vunpack.c.l.b16 %v612
        %v1269 = vunpack.c.h.b16 %v612
        %v1270 = vunpack.c.l.b16 %v613
        %v1271 = vunpack.c.h.b16 %v613
        %v1272 = vunpack.c.l.b16 %v614
        %v1273 = vunpack.c.h.b16 %v614
        %v1274 = vunpack.c.l.b16 %v615
        %v1275 = vunpack.c.h.b16 %v615
        %v1276 = vunpack.c.l.b16 %v616
        %v1277 = vunpack.c.h.b16 %v616
        %v1278 = vunpack.c.l.b16 %v617
        %v1279 = vunpack.c.h.b16 %v617
        %v1280 = vunpack.c.l.b16 %v618
        %v1281 = vunpack.c.h.b16 %v618
        %v1282 = vunpack.c.l.b16 %v619
        %v1283 = vunpack.c.h.b16 %v619
        %v1284 = vunpack.c.l.b16 %v620
        %v1285 = vunpack.c.h.b16 %v620
        %v1286 = vunpack.c.l.b16 %v621
        %v1287 = vunpack.c.h.b16 %v621
        %v1288 = vunpack.c.l.b16 %v622
        %v1289 = vunpack.c.h.b16 %v622
        %v1290 = vunpack.c.l.b16 %v623
        %v1291 = vunpack.c.h.b16 %v623
        %v1292 = vunpack.c.l.b16 %v624
        %v1293 = vunpack.c.h.b16 %v624
        %v1294 = vunpack.c.l.b16 %v625
        %v1295 = vunpack.c.h.b16 %v625
        %v1296 = vunpack.c.l.b16 %v626
        %v1297 = vunpack.c.h.b16 %v626
        %v1298 = vunpack.c.l.b16 %v627
        %v1299 = vunpack.c.h.b16 %v627
        %v1300 = vunpack.c.l.b16 %v628
        %v1301 = vunpack.c.h.b16 %v628
        %v1302 = vunpack.c.l.b16 %v629
        %v1303 = vunpack.c.h.b16 %v629
        %v1304 = vunpack.c.l.b16 %v630
        %v1305 = vunpack.c.h.b16 %v630
        %v1306 = vunpack.c.l.b16 %v631
        %v1307 = vunpack.c.h.b16 %v631
        %v1308 = vunpack.c.l.b16 %v632
        %v1309 = vunpack.c.h.b16 %v632
        %v1310 = vunpack.c.l.b16 %v633
        %v1311 = vunpack.c.h.b16 %v633
        %v1312 = vunpack.c.l.b16 %v634
        %v1313 = vunpack.c.h.b16 %v634
        %v1314 = vunpack.c.l.b16 %v635
        %v1315 = vunpack.c.h.b16 %v635
        %v1316 = vunpack.c.l.b16 %v636
        %v1317 = vunpack.c.h.b16 %v636
        %v1318 = vunpack.c.l.b16 %v637
        %v1319 = vunpack.c.h.b16 %v637
        %v1320 = vunpack.c.l.b16 %v638
        %v1321 = vunpack.c.h.b16 %v638
        %v1322 = vunpack.c.l.b16 %v639
        %v1323 = vunpack.c.h.b16 %v639
        %v1324 = vunpack.c.l.b16 %v640
        %v1325 = vunpack.c.h.b16 %v640
        %v1326 = vunpack.c.l.b16 %v641
        %v1327 = vunpack.c.h.b16 %v641
        %v1328 = vunpack.c.l.b16 %v642
        %v1329 = vunpack.c.h.b16 %v642
        %v1330 = vunpack.c.l.b16 %v643
        %v1331 = vunpack.c.h.b16 %v643
        %v1332 = vunpack.c.l.b16 %v644
        %v1333 = vunpack.c.h.b16 %v644
        %v1334 = vunpack.c.l.b16 %v645
        %v1335 = vunpack.c.h.b16 %v645
        %v1336 = vunpack.c.l.b16 %v646
        %v1337 = vunpack.c.h.b16 %v646
        %v1338 = vunpack.c.l.b16 %v647
        %v1339 = vunpack.c.h.b16 %v647
        %v1340 = vunpack.c.l.b16 %v648
        %v1341 = vunpack.c.h.b16 %v648
        %v1342 = vunpack.c.l.b16 %v649
        %v1343 = vunpack.c.h.b16 %v649
        %v1344 = vunpack.c.l.b16 %v650
        %v1345 = vunpack.c.h.b16 %v650
        %v1346 = vunpack.c.l.b16 %v651
        %v1347 = vunpack.c.h.b16 %v651
        %v1348 = vunpack.c.l.b16 %v652
        %v1349 = vunpack.c.h.b16 %v652
        %v1350 = vunpack.c.l.b16 %v653
        %v1351 = vunpack.c.h.b16 %v653
        %v1352 = vunpack.c.l.b16 %v654
        %v1353 = vunpack.c.h.b16 %v654
        %v1354 = vunpack.c.l.b16 %v655
        %v1355 = vunpack.c.h.b16 %v655
        %v1356 = vunpack.c.l.b16 %v656
        %v1357 = vunpack.c.h.b16 %v656
        %v1358 = vunpack.c.l.b16 %v657
        %v1359 = vunpack.c.h.b16 %v657
        %v1360 = vunpack.c.l.b16 %v658
        %v1361 = vunpack.c.h.b16 %v658
        %v1362 = vunpack.c.l.b16 %v659
        %v1363 = vunpack.c.h.b16 %v659
        %v1364 = vunpack.c.l.b16 %v660
        %v1365 = vunpack.c.h.b16 %v660
        %v1366 = vunpack.c.l.b16 %v661
        %v1367 = vunpack.c.h.b16 %v661
        %v1368 = vunpack.c.l.b16 %v662
        %v1369 = vunpack.c.h.b16 %v662
        %v1370 = vunpack.c.l.b16 %v663
        %v1371 = vunpack.c.h.b16 %v663
        %v1372 = vunpack.c.l.b16 %v664
        %v1373 = vunpack.c.h.b16 %v664
        %v1374 = vunpack.c.l.b16 %v665
        %v1375 = vunpack.c.h.b16 %v665
        %v1376 = vunpack.c.l.b16 %v666
        %v1377 = vunpack.c.h.b16 %v666
        %v1378 = vunpack.c.l.b16 %v667
        %v1379 = vunpack.c.h.b16 %v667
        %v1380 = vunpack.c.l.b16 %v668
        %v1381 = vunpack.c.h.b16 %v668
        %v1382 = vunpack.c.l.b16 %v669
        %v1383 = vunpack.c.h.b16 %v669
        %v1384 = vunpack.c.l.b16 %v670
        %v1385 = vunpack.c.h.b16 %v670
        %v1386 = vunpack.c.l.b16 %v671
        %v1387 = vunpack.c.h.b16 %v671
        %v1388 = vunpack.c.l.b16 %v672
        %v1389 = vunpack.c.h.b16 %v672
        %v1390 = vunpack.c.l.b16 %v673
        %v1391 = vunpack.c.h.b16 %v673
        %v1392 = vunpack.c.l.b16 %v674
        %v1393 = vunpack.c.h.b16 %v674
        %v1394 = vunpack.c.l.b16 %v675
        %v1395 = vunpack.c.h.b16 %v675
        %v1396 = vunpack.c.l.b16 %v676
        %v1397 = vunpack.c.h.b16 %v676
        %v1398 = vunpack.c.l.b16 %v677
        %v1399 = vunpack.c.h.b16 %v677
        %v1400 = vunpack.c.l.b16 %v678
        %v1401 = vunpack.c.h.b16 %v678
        %v1402 = vunpack.c.l.b16 %v679
        %v1403 = vunpack.c.h.b16 %v679
        %v1404 = vunpack.c.l.b16 %v680
        %v1405 = vunpack.c.h.b16 %v680
        %v1406 = vunpack.c.l.b16 %v681
        %v1407 = vunpack.c.h.b16 %v681
        %v1408 = vunpack.c.l.b16 %v682
        %v1409 = vunpack.c.h.b16 %v682
        %v1410 = vunpack.c.l.b16 %v683
        %v1411 = vunpack.c.h.b16 %v683
        %v1412 = vunpack.c.l.b16 %v684
        %v1413 = vunpack.c.h.b16 %v684
        %v1414 = vunpack.c.l.b16 %v685
        %v1415 = vunpack.c.h.b16 %v685
        %v1416 = vunpack.c.l.b16 %v686
        %v1417 = vunpack.c.h.b16 %v686
        %v1418 = vunpack.c.l.b16 %v687
        %v1419 = vunpack.c.h.b16 %v687
        %v1420 = vunpack.c.l.b16 %v688
        %v1421 = vunpack.c.h.b16 %v688
        %v1422 = vunpack.c.l.b16 %v689
        %v1423 = vunpack.c.h.b16 %v689
        %v1424 = vunpack.c.l.b16 %v690
        %v1425 = vunpack.c.h.b16 %v690
        %v1426 = vunpack.c.l.b16 %v691
        %v1427 = vunpack.c.h.b16 %v691
        %v1428 = vunpack.c.l.b16 %v692
        %v1429 = vunpack.c.h.b16 %v692
        %v1430 = vunpack.c.l.b16 %v693
        %v1431 = vunpack.c.h.b16 %v693
        %v1432 = vunpack.c.l.b16 %v694
        %v1433 = vunpack.c.h.b16 %v694
        %v1434 = vunpack.c.l.b16 %v695
        %v1435 = vunpack.c.h.b16 %v695
        %v1436 = vunpack.c.l.b16 %v696
        %v1437 = vunpack.c.h.b16 %v696
        %v1438 = vunpack.c.l.b16 %v697
        %v1439 = vunpack.c.h.b16 %v697
        %v1440 = vunpack.c.l.b16 %v698
        %v1441 = vunpack.c.h.b16 %v698
        %v1442 = vunpack.c.l.b16 %v699
        %v1443 = vunpack.c.h.b16 %v699
        %v1444 = vunpack.c.l.b16 %v700
        %v1445 = vunpack.c.h.b16 %v700
        %v1446 = vunpack.c.l.b16 %v701
        %v1447 = vunpack.c.h.b16 %v701
        %v1448 = vunpack.c.l.b16 %v702
        %v1449 = vunpack.c.h.b16 %v702
        %v1450 = vunpack.c.l.b16 %v703
        %v1451 = vunpack.c.h.b16 %v703
        %v1452 = vunpack.c.l.b16 %v704
        %v1453 = vunpack.c.h.b16 %v704
        %v1454 = vunpack.c.l.b16 %v705
        %v1455 = vunpack.c.h.b16 %v705
        %v1456 = vunpack.c.l.b16 %v706
        %v1457 = vunpack.c.h.b16 %v706
        %v1458 = vunpack.c.l.b16 %v707
        %v1459 = vunpack.c.h.b16 %v707
        %v1460 = vunpack.c.l.b16 %v708
        %v1461 = vunpack.c.h.b16 %v708
        %v1462 = vunpack.c.l.b16 %v709
        %v1463 = vunpack.c.h.b16 %v709
        %v1464 = vunpack.c.l.b16 %v710
        %v1465 = vunpack.c.h.b16 %v710
        %v1466 = vunpack.c.l.b16 %v711
        %v1467 = vunpack.c.h.b16 %v711
        %v1468 = vunpack.c.l.b16 %v712
        %v1469 = vunpack.c.h.b16 %v712
        %v1470 = vunpack.c.l.b16 %v713
        %v1471 = vunpack.c.h.b16 %v713
        %v1472 = vunpack.c.l.b16 %v714
        %v1473 = vunpack.c.h.b16 %v714
        %v1474 = vunpack.c.l.b16 %v715
        %v1475 = vunpack.c.h.b16 %v715
        %v1476 = vunpack.c.l.b16 %v716
        %v1477 = vunpack.c.h.b16 %v716
        %v1478 = vunpack.c.l.b16 %v717
        %v1479 = vunpack.c.h.b16 %v717
        %v1480 = vunpack.c.l.b16 %v718
        %v1481 = vunpack.c.h.b16 %v718
        %v1482 = vunpack.c.l.b16 %v719
        %v1483 = vunpack.c.h.b16 %v719
        %v1484 = vunpack.c.l.b16 %v720
        %v1485 = vunpack.c.h.b16 %v720
        %v1486 = vunpack.c.l.b16 %v721
        %v1487 = vunpack.c.h.b16 %v721
        %v1488 = vunpack.c.l.b16 %v722
        %v1489 = vunpack.c.h.b16 %v722
        %v1490 = vunpack.c.l.b16 %v723
        %v1491 = vunpack.c.h.b16 %v723
        %v1492 = vunpack.c.l.b16 %v724
        %v1493 = vunpack.c.h.b16 %v724
        %v1494 = vunpack.c.l.b16 %v725
        %v1495 = vunpack.c.h.b16 %v725
        %v1496 = vunpack.c.l.b16 %v726
        %v1497 = vunpack.c.h.b16 %v726
        %v1498 = vunpack.c.l.b16 %v727
        %v1499 = vunpack.c.h.b16 %v727
        %v1500 = vunpack.c.l.b16 %v728
        %v1501 = vunpack.c.h.b16 %v728
        %v1502 = vunpack.c.l.b16 %v729
        %v1503 = vunpack.c.h.b16 %v729
        %v1504 = vunpack.c.l.b16 %v730
        %v1505 = vunpack.c.h.b16 %v730
        %v1506 = vunpack.c.l.b16 %v731
        %v1507 = vunpack.c.h.b16 %v731
        %v1508 = vunpack.c.l.b16 %v732
        %v1509 = vunpack.c.h.b16 %v732
        %v1510 = vunpack.c.l.b16 %v733
        %v1511 = vunpack.c.h.b16 %v733
        %v1512 = vunpack.c.l.b16 %v734
        %v1513 = vunpack.c.h.b16 %v734
        %v1514 = vunpack.c.l.b16 %v735
        %v1515 = vunpack.c.h.b16 %v735
        %v1516 = vunpack.c.l.b16 %v736
        %v1517 = vunpack.c.h.b16 %v736
        %v1518 = vunpack.c.l.b16 %v737
        %v1519 = vunpack.c.h.b16 %v737
        %v1520 = vunpack.c.l.b16 %v738
        %v1521 = vunpack.c.h.b16 %v738
        %v1522 = vunpack.c.l.b16 %v739
        %v1523 = vunpack.c.h.b16 %v739
        %v1524 = vunpack.c.l.b16 %v740
        %v1525 = vunpack.c.h.b16 %v740
        %v1526 = vunpack.c.l.b16 %v741
        %v1527 = vunpack.c.h.b16 %v741
        %v1528 = vunpack.c.l.b16 %v742
        %v1529 = vunpack.c.h.b16 %v742
        %v1530 = vunpack.c.l.b16 %v743
        %v1531 = vunpack.c.h.b16 %v743
        %v1532 = vunpack.c.l.b16 %v744
        %v1533 = vunpack.c.h.b16 %v744
        %v1534 = vunpack.c.l.b16 %v745
        %v1535 = vunpack.c.h.b16 %v745
        %v1536 = vunpack.c.l.b16 %v746
        %v1537 = vunpack.c.h.b16 %v746
        %v1538 = vunpack.c.l.b16 %v747
        %v1539 = vunpack.c.h.b16 %v747
        %v1540 = vunpack.c.l.b16 %v748
        %v1541 = vunpack.c.h.b16 %v748
        %v1542 = vunpack.c.l.b16 %v749
        %v1543 = vunpack.c.h.b16 %v749
        %v1544 = vunpack.c.l.b16 %v750
        %v1545 = vunpack.c.h.b16 %v750
        %v1546 = vunpack.c.l.b16 %v751
        %v1547 = vunpack.c.h.b16 %v751
        %v1548 = vunpack.c.l.b16 %v752
        %v1549 = vunpack.c.h.b16 %v752
        %v1550 = vunpack.c.l.b16 %v753
        %v1551 = vunpack.c.h.b16 %v753
        %v1552 = vunpack.c.l.b16 %v754
        %v1553 = vunpack.c.h.b16 %v754
        %v1554 = vunpack.c.l.b16 %v755
        %v1555 = vunpack.c.h.b16 %v755
        %v1556 = vunpack.c.l.b16 %v756
        %v1557 = vunpack.c.h.b16 %v756
        %v1558 = vunpack.c.l.b16 %v757
        %v1559 = vunpack.c.h.b16 %v757
        %v1560 = vunpack.c.l.b16 %v758
        %v1561 = vunpack.c.h.b16 %v758
        %v1562 = vunpack.c.l.b16 %v759
        %v1563 = vunpack.c.h.b16 %v759
        %v1564 = vunpack.c.l.b16 %v760
        %v1565 = vunpack.c.h.b16 %v760
        %v1566 = vunpack.c.l.b16 %v761
        %v1567 = vunpack.c.h.b16 %v761
        %v1568 = vunpack.c.l.b16 %v762
        %v1569 = vunpack.c.h.b16 %v762
        %v1570 = vunpack.c.l.b16 %v763
        %v1571 = vunpack.c.h.b16 %v763
        %v1572 = vunpack.c.l.b16 %v764
        %v1573 = vunpack.c.h.b16 %v764
        %v1574 = vunpack.c.l.b16 %v765
        %v1575 = vunpack.c.h.b16 %v765
        %v1576 = vunpack.c.l.b16 %v766
        %v1577 = vunpack.c.h.b16 %v766
        %v1578 = vunpack.c.l.b16 %v767
        %v1579 = vunpack.c.h.b16 %v767
        %v1580 = vunpack.c.l.b16 %v768
        %v1581 = vunpack.c.h.b16 %v768
        %v1582 = vunpack.c.l.b16 %v769
        %v1583 = vunpack.c.h.b16 %v769
        %v1584 = vunpack.c.l.b16 %v770
        %v1585 = vunpack.c.h.b16 %v770
        %v1586 = vunpack.c.l.b16 %v771
        %v1587 = vunpack.c.h.b16 %v771
        %v1588 = vunpack.c.l.b16 %v772
        %v1589 = vunpack.c.h.b16 %v772
        %v1590 = vunpack.c.l.b16 %v773
        %v1591 = vunpack.c.h.b16 %v773
        %v1592 = vunpack.c.l.b16 %v774
        %v1593 = vunpack.c.h.b16 %v774
        %v1594 = vunpack.c.l.b16 %v775
        %v1595 = vunpack.c.h.b16 %v775
        %v1596 = vunpack.c.l.b16 %v776
        %v1597 = vunpack.c.h.b16 %v776
        %v1598 = vunpack.c.l.b16 %v777
        %v1599 = vunpack.c.h.b16 %v777
        %v1600 = vunpack.c.l.b16 %v778
        %v1601 = vunpack.c.h.b16 %v778
        %v1602 = vunpack.c.l.b16 %v779
        %v1603 = vunpack.c.h.b16 %v779
        %v1604 = vunpack.c.l.b16 %v780
        %v1605 = vunpack.c.h.b16 %v780
        %v1606 = vunpack.c.l.b16 %v781
        %v1607 = vunpack.c.h.b16 %v781
        %v1608 = vunpack.c.l.b16 %v782
        %v1609 = vunpack.c.h.b16 %v782
        %v1610 = vunpack.c.l.b16 %v783
        %v1611 = vunpack.c.h.b16 %v783
        %v1612 = vunpack.c.l.b16 %v784
        %v1613 = vunpack.c.h.b16 %v784
        %v1614 = vunpack.c.l.b16 %v785
        %v1615 = vunpack.c.h.b16 %v785
        %v1616 = vunpack.c.l.b16 %v786
        %v1617 = vunpack.c.h.b16 %v786
        %v1618 = vunpack.c.l.b16 %v787
        %v1619 = vunpack.c.h.b16 %v787
        %v1620 = vunpack.c.l.b16 %v788
        %v1621 = vunpack.c.h.b16 %v788
        %v1622 = vunpack.c.l.b16 %v789
        %v1623 = vunpack.c.h.b16 %v789
        %v1624 = vunpack.c.l.b16 %v790
        %v1625 = vunpack.c.h.b16 %v790
        %v1626 = vunpack.c.l.b16 %v791
        %v1627 = vunpack.c.h.b16 %v791
        %v1628 = vunpack.c.l.b16 %v792
        %v1629 = vunpack.c.h.b16 %v792
        %v1630 = vunpack.c.l.b16 %v793
        %v1631 = vunpack.c.h.b16 %v793
        %v1632 = vunpack.c.l.b16 %v794
        %v1633 = vunpack.c.h.b16 %v794
        %v1634 = vunpack.c.l.b16 %v795
        %v1635 = vunpack.c.h.b16 %v795
        %v1636 = vunpack.c.l.b16 %v796
        %v1637 = vunpack.c.h.b16 %v796
        %v1638 = vunpack.c.l.b16 %v797
        %v1639 = vunpack.c.h.b16 %v797
        %v1640 = vunpack.c.l.b16 %v798
        %v1641 = vunpack.c.h.b16 %v798
        %v1642 = vunpack.c.l.b16 %v799
        %v1643 = vunpack.c.h.b16 %v799
        %v1644 = vunpack.c.l.b16 %v800
        %v1645 = vunpack.c.h.b16 %v800
        %v1646 = vunpack.c.l.b16 %v801
        %v1647 = vunpack.c.h.b16 %v801
        %v1648 = vunpack.c.l.b16 %v802
        %v1649 = vunpack.c.h.b16 %v802
        %v1650 = vunpack.c.l.b16 %v803
        %v1651 = vunpack.c.h.b16 %v803
        %v1652 = vunpack.c.l.b16 %v804
        %v1653 = vunpack.c.h.b16 %v804
        %v1654 = vunpack.c.l.b16 %v805
        %v1655 = vunpack.c.h.b16 %v805
        %v1656 = vunpack.c.l.b16 %v806
        %v1657 = vunpack.c.h.b16 %v806
        %v1658 = vunpack.c.l.b16 %v807
        %v1659 = vunpack.c.h.b16 %v807
        %v1660 = vpack.c.b16 %v1164, %v1148
        %v1661 = vpack.c.b16 %v1165, %v1149
        %v1662 = vpack.c.b16 %v1166, %v1150
        %v1663 = vpack.c.b16 %v1167, %v1151
        %v1664 = vpack.c.b16 %v1168, %v1152
        %v1665 = vpack.c.b16 %v1169, %v1153
        %v1666 = vpack.c.b16 %v1170, %v1154
        %v1667 = vpack.c.b16 %v1171, %v1155
        %v1668 = vpack.c.b16 %v1172, %v1156
        %v1669 = vpack.c.b16 %v1173, %v1157
        %v1670 = vpack.c.b16 %v1174, %v1158
        %v1671 = vpack.c.b16 %v1175, %v1159
        %v1672 = vpack.c.b16 %v1176, %v1160
        %v1673 = vpack.c.b16 %v1177, %v1161
        %v1674 = vpack.c.b16 %v1178, %v1162
        %v1675 = vpack.c.b16 %v1179, %v1163
        %v1676 = vpack.c.b16 %v1196, %v1180
        %v1677 = vpack.c.b16 %v1197, %v1181
        %v1678 = vpack.c.b16 %v1198, %v1182
        %v1679 = vpack.c.b16 %v1199, %v1183
        %v1680 = vpack.c.b16 %v1200, %v1184
        %v1681 = vpack.c.b16 %v1201, %v1185
        %v1682 = vpack.c.b16 %v1202, %v1186
        %v1683 = vpack.c.b16 %v1203, %v1187
        %v1684 = vpack.c.b16 %v1204, %v1188
        %v1685 = vpack.c.b16 %v1205, %v1189
        %v1686 = vpack.c.b16 %v1206, %v1190
        %v1687 = vpack.c.b16 %v1207, %v1191
        %v1688 = vpack.c.b16 %v1208, %v1192
        %v1689 = vpack.c.b16 %v1209, %v1193
        %v1690 = vpack.c.b16 %v1210, %v1194
        %v1691 = vpack.c.b16 %v1211, %v1195
        %v1692 = vpack.c.b16 %v1228, %v1212
        %v1693 = vpack.c.b16 %v1229, %v1213
        %v1694 = vpack.c.b16 %v1230, %v1214
        %v1695 = vpack.c.b16 %v1231, %v1215
        %v1696 = vpack.c.b16 %v1232, %v1216
        %v1697 = vpack.c.b16 %v1233, %v1217
        %v1698 = vpack.c.b16 %v1234, %v1218
        %v1699 = vpack.c.b16 %v1235, %v1219
        %v1700 = vpack.c.b16 %v1236, %v1220
        %v1701 = vpack.c.b16 %v1237, %v1221
        %v1702 = vpack.c.b16 %v1238, %v1222
        %v1703 = vpack.c.b16 %v1239, %v1223
        %v1704 = vpack.c.b16 %v1240, %v1224
        %v1705 = vpack.c.b16 %v1241, %v1225
        %v1706 = vpack.c.b16 %v1242, %v1226
        %v1707 = vpack.c.b16 %v1243, %v1227
        %v1708 = vpack.c.b16 %v1260, %v1244
        %v1709 = vpack.c.b16 %v1261, %v1245
        %v1710 = vpack.c.b16 %v1262, %v1246
        %v1711 = vpack.c.b16 %v1263, %v1247
        %v1712 = vpack.c.b16 %v1264, %v1248
        %v1713 = vpack.c.b16 %v1265, %v1249
        %v1714 = vpack.c.b16 %v1266, %v1250
        %v1715 = vpack.c.b16 %v1267, %v1251
        %v1716 = vpack.c.b16 %v1268, %v1252
        %v1717 = vpack.c.b16 %v1269, %v1253
        %v1718 = vpack.c.b16 %v1270, %v1254
        %v1719 = vpack.c.b16 %v1271, %v1255
        %v1720 = vpack.c.b16 %v1272, %v1256
        %v1721 = vpack.c.b16 %v1273, %v1257
        %v1722 = vpack.c.b16 %v1274, %v1258
        %v1723 = vpack.c.b16 %v1275, %v1259
        %v1724 = vpack.c.b16 %v1292, %v1276
        %v1725 = vpack.c.b16 %v1293, %v1277
        %v1726 = vpack.c.b16 %v1294, %v1278
        %v1727 = vpack.c.b16 %v1295, %v1279
        %v1728 = vpack.c.b16 %v1296, %v1280
        %v1729 = vpack.c.b16 %v1297, %v1281
        %v1730 = vpack.c.b16 %v1298, %v1282
        %v1731 = vpack.c.b16 %v1299, %v1283
        %v1732 = vpack.c.b16 %v1300, %v1284
        %v1733 = vpack.c.b16 %v1301, %v1285
        %v1734 = vpack.c.b16 %v1302, %v1286
        %v1735 = vpack.c.b16 %v1303, %v1287
        %v1736 = vpack.c.b16 %v1304, %v1288
        %v1737 = vpack.c.b16 %v1305, %v1289
        %v1738 = vpack.c.b16 %v1306, %v1290
        %v1739 = vpack.c.b16 %v1307, %v1291
        %v1740 = vpack.c.b16 %v1324, %v1308
        %v1741 = vpack.c.b16 %v1325, %v1309
        %v1742 = vpack.c.b16 %v1326, %v1310
        %v1743 = vpack.c.b16 %v1327, %v1311
        %v1744 = vpack.c.b16 %v1328, %v1312
        %v1745 = vpack.c.b16 %v1329, %v1313
        %v1746 = vpack.c.b16 %v1330, %v1314
        %v1747 = vpack.c.b16 %v1331, %v1315
        %v1748 = vpack.c.b16 %v1332, %v1316
        %v1749 = vpack.c.b16 %v1333, %v1317
        %v1750 = vpack.c.b16 %v1334, %v1318
        %v1751 = vpack.c.b16 %v1335, %v1319
        %v1752 = vpack.c.b16 %v1336, %v1320
        %v1753 = vpack.c.b16 %v1337, %v1321
        %v1754 = vpack.c.b16 %v1338, %v1322
        %v1755 = vpack.c.b16 %v1339, %v1323
        %v1756 = vpack.c.b16 %v1356, %v1340
        %v1757 = vpack.c.b16 %v1357, %v1341
        %v1758 = vpack.c.b16 %v1358, %v1342
        %v1759 = vpack.c.b16 %v1359, %v1343
        %v1760 = vpack.c.b16 %v1360, %v1344
        %v1761 = vpack.c.b16 %v1361, %v1345
        %v1762 = vpack.c.b16 %v1362, %v1346
        %v1763 = vpack.c.b16 %v1363, %v1347
        %v1764 = vpack.c.b16 %v1364, %v1348
        %v1765 = vpack.c.b16 %v1365, %v1349
        %v1766 = vpack.c.b16 %v1366, %v1350
        %v1767 = vpack.c.b16 %v1367, %v1351
        %v1768 = vpack.c.b16 %v1368, %v1352
        %v1769 = vpack.c.b16 %v1369, %v1353
        %v1770 = vpack.c.b16 %v1370, %v1354
        %v1771 = vpack.c.b16 %v1371, %v1355
        %v1772 = vpack.c.b16 %v1388, %v1372
        %v1773 = vpack.c.b16 %v1389, %v1373
        %v1774 = vpack.c.b16 %v1390, %v1374
        %v1775 = vpack.c.b16 %v1391, %v1375
        %v1776 = vpack.c.b16 %v1392, %v1376
        %v1777 = vpack.c.b16 %v1393, %v1377
        %v1778 = vpack.c.b16 %v1394, %v1378
        %v1779 = vpack.c.b16 %v1395, %v1379
        %v1780 = vpack.c.b16 %v1396, %v1380
        %v1781 = vpack.c.b16 %v1397, %v1381
        %v1782 = vpack.c.b16 %v1398, %v1382
        %v1783 = vpack.c.b16 %v1399, %v1383
        %v1784 = vpack.c.b16 %v1400, %v1384
        %v1785 = vpack.c.b16 %v1401, %v1385
        %v1786 = vpack.c.b16 %v1402, %v1386
        %v1787 = vpack.c.b16 %v1403, %v1387
        %v1788 = vpack.c.b16 %v1420, %v1404
        %v1789 = vpack.c.b16 %v1421, %v1405
        %v1790 = vpack.c.b16 %v1422, %v1406
        %v1791 = vpack.c.b16 %v1423, %v1407
        %v1792 = vpack.c.b16 %v1424, %v1408
        %v1793 = vpack.c.b16 %v1425, %v1409
        %v1794 = vpack.c.b16 %v1426, %v1410
        %v1795 = vpack.c.b16 %v1427, %v1411
        %v1796 = vpack.c.b16 %v1428, %v1412
        %v1797 = vpack.c.b16 %v1429, %v1413
        %v1798 = vpack.c.b16 %v1430, %v1414
        %v1799 = vpack.c.b16 %v1431, %v1415
        %v1800 = vpack.c.b16 %v1432, %v1416
        %v1801 = vpack.c.b16 %v1433, %v1417
        %v1802 = vpack.c.b16 %v1434, %v1418
        %v1803 = vpack.c.b16 %v1435, %v1419
        %v1804 = vpack.c.b16 %v1452, %v1436
        %v1805 = vpack.c.b16 %v1453, %v1437
        %v1806 = vpack.c.b16 %v1454, %v1438
        %v1807 = vpack.c.b16 %v1455, %v1439
        %v1808 = vpack.c.b16 %v1456, %v1440
        %v1809 = vpack.c.b16 %v1457, %v1441
        %v1810 = vpack.c.b16 %v1458, %v1442
        %v1811 = vpack.c.b16 %v1459, %v1443
        %v1812 = vpack.c.b16 %v1460, %v1444
        %v1813 = vpack.c.b16 %v1461, %v1445
        %v1814 = vpack.c.b16 %v1462, %v1446
        %v1815 = vpack.c.b16 %v1463, %v1447
        %v1816 = vpack.c.b16 %v1464, %v1448
        %v1817 = vpack.c.b16 %v1465, %v1449
        %v1818 = vpack.c.b16 %v1466, %v1450
        %v1819 = vpack.c.b16 %v1467, %v1451
        %v1820 = vpack.c.b16 %v1484, %v1468
        %v1821 = vpack.c.b16 %v1485, %v1469
        %v1822 = vpack.c.b16 %v1486, %v1470
        %v1823 = vpack.c.b16 %v1487, %v1471
        %v1824 = vpack.c.b16 %v1488, %v1472
        %v1825 = vpack.c.b16 %v1489, %v1473
        %v1826 = vpack.c.b16 %v1490, %v1474
        %v1827 = vpack.c.b16 %v1491, %v1475
        %v1828 = vpack.c.b16 %v1492, %v1476
        %v1829 = vpack.c.b16 %v1493, %v1477
        %v1830 = vpack.c.b16 %v1494, %v1478
        %v1831 = vpack.c.b16 %v1495, %v1479
        %v1832 = vpack.c.b16 %v1496, %v1480
        %v1833 = vpack.c.b16 %v1497, %v1481
        %v1834 = vpack.c.b16 %v1498, %v1482
        %v1835 = vpack.c.b16 %v1499, %v1483
        %v1836 = vpack.c.b16 %v1516, %v1500
        %v1837 = vpack.c.b16 %v1517, %v1501
        %v1838 = vpack.c.b16 %v1518, %v1502
        %v1839 = vpack.c.b16 %v1519, %v1503
        %v1840 = vpack.c.b16 %v1520, %v1504
        %v1841 = vpack.c.b16 %v1521, %v1505
        %v1842 = vpack.c.b16 %v1522, %v1506
        %v1843 = vpack.c.b16 %v1523, %v1507
        %v1844 = vpack.c.b16 %v1524, %v1508
        %v1845 = vpack.c.b16 %v1525, %v1509
        %v1846 = vpack.c.b16 %v1526, %v1510
        %v1847 = vpack.c.b16 %v1527, %v1511
        %v1848 = vpack.c.b16 %v1528, %v1512
        %v1849 = vpack.c.b16 %v1529, %v1513
        %v1850 = vpack.c.b16 %v1530, %v1514
        %v1851 = vpack.c.b16 %v1531, %v1515
        %v1852 = vpack.c.b16 %v1548, %v1532
        %v1853 = vpack.c.b16 %v1549, %v1533
        %v1854 = vpack.c.b16 %v1550, %v1534
        %v1855 = vpack.c.b16 %v1551, %v1535
        %v1856 = vpack.c.b16 %v1552, %v1536
        %v1857 = vpack.c.b16 %v1553, %v1537
        %v1858 = vpack.c.b16 %v1554, %v1538
        %v1859 = vpack.c.b16 %v1555, %v1539
        %v1860 = vpack.c.b16 %v1556, %v1540
        %v1861 = vpack.c.b16 %v1557, %v1541
        %v1862 = vpack.c.b16 %v1558, %v1542
        %v1863 = vpack.c.b16 %v1559, %v1543
        %v1864 = vpack.c.b16 %v1560, %v1544
        %v1865 = vpack.c.b16 %v1561, %v1545
        %v1866 = vpack.c.b16 %v1562, %v1546
        %v1867 = vpack.c.b16 %v1563, %v1547
        %v1868 = vpack.c.b16 %v1580, %v1564
        %v1869 = vpack.c.b16 %v1581, %v1565
        %v1870 = vpack.c.b16 %v1582, %v1566
        %v1871 = vpack.c.b16 %v1583, %v1567
        %v1872 = vpack.c.b16 %v1584, %v1568
        %v1873 = vpack.c.b16 %v1585, %v1569
        %v1874 = vpack.c.b16 %v1586, %v1570
        %v1875 = vpack.c.b16 %v1587, %v1571
        %v1876 = vpack.c.b16 %v1588, %v1572
        %v1877 = vpack.c.b16 %v1589, %v1573
        %v1878 = vpack.c.b16 %v1590, %v1574
        %v1879 = vpack.c.b16 %v1591, %v1575
        %v1880 = vpack.c.b16 %v1592, %v1576
        %v1881 = vpack.c.b16 %v1593, %v1577
        %v1882 = vpack.c.b16 %v1594, %v1578
        %v1883 = vpack.c.b16 %v1595, %v1579
        %v1884 = vpack.c.b16 %v1612, %v1596
        %v1885 = vpack.c.b16 %v1613, %v1597
        %v1886 = vpack.c.b16 %v1614, %v1598
        %v1887 = vpack.c.b16 %v1615, %v1599
        %v1888 = vpack.c.b16 %v1616, %v1600
        %v1889 = vpack.c.b16 %v1617, %v1601
        %v1890 = vpack.c.b16 %v1618, %v1602
        %v1891 = vpack.c.b16 %v1619, %v1603
        %v1892 = vpack.c.b16 %v1620, %v1604
        %v1893 = vpack.c.b16 %v1621, %v1605
        %v1894 = vpack.c.b16 %v1622, %v1606
        %v1895 = vpack.c.b16 %v1623, %v1607
        %v1896 = vpack.c.b16 %v1624, %v1608
        %v1897 = vpack.c.b16 %v1625, %v1609
        %v1898 = vpack.c.b16 %v1626, %v1610
        %v1899 = vpack.c.b16 %v1627, %v1611
        %v1900 = vpack.c.b16 %v1644, %v1628
        %v1901 = vpack.c.b16 %v1645, %v1629
        %v1902 = vpack.c.b16 %v1646, %v1630
        %v1903 = vpack.c.b16 %v1647, %v1631
        %v1904 = vpack.c.b16 %v1648, %v1632
        %v1905 = vpack.c.b16 %v1649, %v1633
        %v1906 = vpack.c.b16 %v1650, %v1634
        %v1907 = vpack.c.b16 %v1651, %v1635
        %v1908 = vpack.c.b16 %v1652, %v1636
        %v1909 = vpack.c.b16 %v1653, %v1637
        %v1910 = vpack.c.b16 %v1654, %v1638
        %v1911 = vpack.c.b16 %v1655, %v1639
        %v1912 = vpack.c.b16 %v1656, %v1640
        %v1913 = vpack.c.b16 %v1657, %v1641
        %v1914 = vpack.c.b16 %v1658, %v1642
        %v1915 = vpack.c.b16 %v1659, %v1643
        %2172 = vmatprep.subr.bf16.mxu0 %v1661
        %2173 = vmatpush1.bf16.msra.mxu0 %v1660
        %2174 = vmatprep.subr.bf16.mxu0 %v1677
        %2175 = vmatpush1.bf16.msra.mxu0 %v1676
        %2176 = vmatprep.subr.bf16.mxu0 %v1693
        %2177 = vmatpush1.bf16.msra.mxu0 %v1692
        %2178 = vmatprep.subr.bf16.mxu0 %v1709
        %2179 = vmatpush1.bf16.msra.mxu0 %v1708
        %2180 = vmatprep.subr.bf16.mxu0 %v1725
        %2181 = vmatpush1.bf16.msra.mxu0 %v1724
        %2182 = vmatprep.subr.bf16.mxu0 %v1741
        %2183 = vmatpush1.bf16.msra.mxu0 %v1740
        %2184 = vmatprep.subr.bf16.mxu0 %v1757
        %2185 = vmatpush1.bf16.msra.mxu0 %v1756
        %2186 = vmatprep.subr.bf16.mxu0 %v1773
        %2187 = vmatpush1.bf16.msra.mxu0 %v1772
        %2188 = vmatprep.subr.bf16.mxu0 %v1789
        %2189 = vmatpush1.bf16.msra.mxu0 %v1788
        %2190 = vmatprep.subr.bf16.mxu0 %v1805
        %2191 = vmatpush1.bf16.msra.mxu0 %v1804
        %2192 = vmatprep.subr.bf16.mxu0 %v1821
        %2193 = vmatpush1.bf16.msra.mxu0 %v1820
        %2194 = vmatprep.subr.bf16.mxu0 %v1837
        %2195 = vmatpush1.bf16.msra.mxu0 %v1836
        %2196 = vmatprep.subr.bf16.mxu0 %v1853
        %2197 = vmatpush1.bf16.msra.mxu0 %v1852
        %2198 = vmatprep.subr.bf16.mxu0 %v1869
        %2199 = vmatpush1.bf16.msra.mxu0 %v1868
        %2200 = vmatprep.subr.bf16.mxu0 %v1885
        %2201 = vmatpush1.bf16.msra.mxu0 %v1884
        %2202 = vmatprep.subr.bf16.mxu0 %v1901
        %2203 = vmatpush1.bf16.msra.mxu0 %v1900
        %2204 = vmatprep.mubr.bf16.mxu0 %v537
        %2205 = vmatmul.mubr.bf16.gmra.mrb[0].mxu0 %v536
        %v2206 = vpop.f32.mrb[0].mxu0
        %v2207 = vadd.f32 %v815, %v2206
        %v2208 = vpop.f32.mrb[0].mxu0
        %v2209 = vadd.f32 %v819, %v2208
        %v2210 = vpop.f32.mrb[0].mxu0
        %v2211 = vadd.f32 %v815, %v2210
        %v2212 = vpop.f32.mrb[0].mxu0
        %v2213 = vadd.f32 %v819, %v2212
        %2214 = vmatprep.mubr.bf16.mxu0 %v539
        %2215 = vmatmul.mubr.bf16.gmra.mrb[0].mxu0 %v538
        %v2216 = vpop.f32.mrb[0].mxu0
        %v2217 = vadd.f32 %v815, %v2216
        %v2218 = vpop.f32.mrb[0].mxu0
        %v2219 = vadd.f32 %v819, %v2218
        %v2220 = vpop.f32.mrb[0].mxu0
        %v2221 = vadd.f32 %v815, %v2220
        %v2222 = vpop.f32.mrb[0].mxu0
        %v2223 = vadd.f32 %v819, %v2222
        %2224 = vmatprep.mubr.bf16.mxu0 %v541
        %2225 = vmatmul.mubr.bf16.gmra.mrb[0].mxu0 %v540
        %v2226 = vpop.f32.mrb[0].mxu0
        %v2227 = vadd.f32 %v815, %v2226
        %v2228 = vpop.f32.mrb[0].mxu0
        %v2229 = vadd.f32 %v819, %v2228
        %v2230 = vpop.f32.mrb[0].mxu0
        %v2231 = vadd.f32 %v815, %v2230
        %v2232 = vpop.f32.mrb[0].mxu0
        %v2233 = vadd.f32 %v819, %v2232
        %2234 = vmatprep.mubr.bf16.mxu0 %v543
        %2235 = vmatmul.mubr.bf16.gmra.mrb[0].mxu0 %v542
        %v2236 = vpop.f32.mrb[0].mxu0
        %v2237 = vadd.f32 %v815, %v2236
        %v2238 = vpop.f32.mrb[0].mxu0
        %v2239 = vadd.f32 %v819, %v2238
        %v2240 = vpop.f32.mrb[0].mxu0
        %v2241 = vadd.f32 %v815, %v2240
        %v2242 = vpop.f32.mrb[0].mxu0
        %v2243 = vadd.f32 %v819, %v2242
        %2244 = vmatprep.mubr.bf16.mxu0 %v545
        %2245 = vmatmul.mubr.bf16.gmra.mrb[0].mxu0 %v544
        %v2246 = vpop.f32.mrb[0].mxu0
        %v2247 = vadd.f32 %v815, %v2246
        %v2248 = vpop.f32.mrb[0].mxu0
        %v2249 = vadd.f32 %v819, %v2248
        %v2250 = vpop.f32.mrb[0].mxu0
        %v2251 = vadd.f32 %v815, %v2250
        %v2252 = vpop.f32.mrb[0].mxu0
        %v2253 = vadd.f32 %v819, %v2252
        %2254 = vmatprep.mubr.bf16.mxu0 %v547
        %2255 = vmatmul.mubr.bf16.gmra.mrb[0].mxu0 %v546
        %v2256 = vpop.f32.mrb[0].mxu0
        %v2257 = vadd.f32 %v815, %v2256
        %v2258 = vpop.f32.mrb[0].mxu0
        %v2259 = vadd.f32 %v819, %v2258
        %v2260 = vpop.f32.mrb[0].mxu0
        %v2261 = vadd.f32 %v815, %v2260
        %v2262 = vpop.f32.mrb[0].mxu0
        %v2263 = vadd.f32 %v819, %v2262
        %2264 = vmatprep.mubr.bf16.mxu0 %v549
        %2265 = vmatmul.mubr.bf16.gmra.mrb[0].mxu0 %v548
        %v2266 = vpop.f32.mrb[0].mxu0
        %v2267 = vadd.f32 %v815, %v2266
        %v2268 = vpop.f32.mrb[0].mxu0
        %v2269 = vadd.f32 %v819, %v2268
        %v2270 = vpop.f32.mrb[0].mxu0
        %v2271 = vadd.f32 %v815, %v2270
        %v2272 = vpop.f32.mrb[0].mxu0
        %v2273 = vadd.f32 %v819, %v2272
        %2274 = vmatprep.mubr.bf16.mxu0 %v551
        %2275 = vmatmul.mubr.bf16.gmra.mrb[0].mxu0 %v550
        %v2276 = vpop.f32.mrb[0].mxu0
        %v2277 = vadd.f32 %v815, %v2276
        %v2278 = vpop.f32.mrb[0].mxu0
        %v2279 = vadd.f32 %v819, %v2278
        %v2280 = vpop.f32.mrb[0].mxu0
        %v2281 = vadd.f32 %v815, %v2280
        %v2282 = vpop.f32.mrb[0].mxu0
        %v2283 = vadd.f32 %v819, %v2282
        %2284 = vdwg.mxu0
        %2285 = vmatprep.subr.bf16.mxu0 %v1663
        %2286 = vmatpush1.bf16.msra.mxu0 %v1662
        %2287 = vmatprep.subr.bf16.mxu0 %v1679
        %2288 = vmatpush1.bf16.msra.mxu0 %v1678
        %2289 = vmatprep.subr.bf16.mxu0 %v1695
        %2290 = vmatpush1.bf16.msra.mxu0 %v1694
        %2291 = vmatprep.subr.bf16.mxu0 %v1711
        %2292 = vmatpush1.bf16.msra.mxu0 %v1710
        %2293 = vmatprep.subr.bf16.mxu0 %v1727
        %2294 = vmatpush1.bf16.msra.mxu0 %v1726
        %2295 = vmatprep.subr.bf16.mxu0 %v1743
        %2296 = vmatpush1.bf16.msra.mxu0 %v1742
        %2297 = vmatprep.subr.bf16.mxu0 %v1759
        %2298 = vmatpush1.bf16.msra.mxu0 %v1758
        %2299 = vmatprep.subr.bf16.mxu0 %v1775
        %2300 = vmatpush1.bf16.msra.mxu0 %v1774
        %2301 = vmatprep.subr.bf16.mxu0 %v1791
        %2302 = vmatpush1.bf16.msra.mxu0 %v1790
        %2303 = vmatprep.subr.bf16.mxu0 %v1807
        %2304 = vmatpush1.bf16.msra.mxu0 %v1806
        %2305 = vmatprep.subr.bf16.mxu0 %v1823
        %2306 = vmatpush1.bf16.msra.mxu0 %v1822
        %2307 = vmatprep.subr.bf16.mxu0 %v1839
        %2308 = vmatpush1.bf16.msra.mxu0 %v1838
        %2309 = vmatprep.subr.bf16.mxu0 %v1855
        %2310 = vmatpush1.bf16.msra.mxu0 %v1854
        %2311 = vmatprep.subr.bf16.mxu0 %v1871
        %2312 = vmatpush1.bf16.msra.mxu0 %v1870
        %2313 = vmatprep.subr.bf16.mxu0 %v1887
        %2314 = vmatpush1.bf16.msra.mxu0 %v1886
        %2315 = vmatprep.subr.bf16.mxu0 %v1903
        %2316 = vmatpush1.bf16.msra.mxu0 %v1902
        %2317 = vmatprep.mubr.bf16.mxu0 %v537
        %2318 = vmatmul.mubr.bf16.gmra.mrb[0].mxu0 %v536
        %v2319 = vpop.f32.mrb[0].mxu0
        %v2320 = vadd.f32 %v823, %v2319
        %v2321 = vpop.f32.mrb[0].mxu0
        %v2322 = vadd.f32 %v827, %v2321
        %v2323 = vpop.f32.mrb[0].mxu0
        %v2324 = vadd.f32 %v823, %v2323
        %v2325 = vpop.f32.mrb[0].mxu0
        %v2326 = vadd.f32 %v827, %v2325
        %2327 = vmatprep.mubr.bf16.mxu0 %v539
        %2328 = vmatmul.mubr.bf16.gmra.mrb[0].mxu0 %v538
        %v2329 = vpop.f32.mrb[0].mxu0
        %v2330 = vadd.f32 %v823, %v2329
        %v2331 = vpop.f32.mrb[0].mxu0
        %v2332 = vadd.f32 %v827, %v2331
        %v2333 = vpop.f32.mrb[0].mxu0
        %v2334 = vadd.f32 %v823, %v2333
        %v2335 = vpop.f32.mrb[0].mxu0
        %v2336 = vadd.f32 %v827, %v2335
        %2337 = vmatprep.mubr.bf16.mxu0 %v541
        %2338 = vmatmul.mubr.bf16.gmra.mrb[0].mxu0 %v540
        %v2339 = vpop.f32.mrb[0].mxu0
        %v2340 = vadd.f32 %v823, %v2339
        %v2341 = vpop.f32.mrb[0].mxu0
        %v2342 = vadd.f32 %v827, %v2341
        %v2343 = vpop.f32.mrb[0].mxu0
        %v2344 = vadd.f32 %v823, %v2343
        %v2345 = vpop.f32.mrb[0].mxu0
        %v2346 = vadd.f32 %v827, %v2345
        %2347 = vmatprep.mubr.bf16.mxu0 %v543
        %2348 = vmatmul.mubr.bf16.gmra.mrb[0].mxu0 %v542
        %v2349 = vpop.f32.mrb[0].mxu0
        %v2350 = vadd.f32 %v823, %v2349
        %v2351 = vpop.f32.mrb[0].mxu0
        %v2352 = vadd.f32 %v827, %v2351
        %v2353 = vpop.f32.mrb[0].mxu0
        %v2354 = vadd.f32 %v823, %v2353
        %v2355 = vpop.f32.mrb[0].mxu0
        %v2356 = vadd.f32 %v827, %v2355
        %2357 = vmatprep.mubr.bf16.mxu0 %v545
        %2358 = vmatmul.mubr.bf16.gmra.mrb[0].mxu0 %v544
        %v2359 = vpop.f32.mrb[0].mxu0
        %v2360 = vadd.f32 %v823, %v2359
        %v2361 = vpop.f32.mrb[0].mxu0
        %v2362 = vadd.f32 %v827, %v2361
        %v2363 = vpop.f32.mrb[0].mxu0
        %v2364 = vadd.f32 %v823, %v2363
        %v2365 = vpop.f32.mrb[0].mxu0
        %v2366 = vadd.f32 %v827, %v2365
        %2367 = vmatprep.mubr.bf16.mxu0 %v547
        %2368 = vmatmul.mubr.bf16.gmra.mrb[0].mxu0 %v546
        %v2369 = vpop.f32.mrb[0].mxu0
        %v2370 = vadd.f32 %v823, %v2369
        %v2371 = vpop.f32.mrb[0].mxu0
        %v2372 = vadd.f32 %v827, %v2371
        %v2373 = vpop.f32.mrb[0].mxu0
        %v2374 = vadd.f32 %v823, %v2373
        %v2375 = vpop.f32.mrb[0].mxu0
        %v2376 = vadd.f32 %v827, %v2375
        %2377 = vmatprep.mubr.bf16.mxu0 %v549
        %2378 = vmatmul.mubr.bf16.gmra.mrb[0].mxu0 %v548
        %v2379 = vpop.f32.mrb[0].mxu0
        %v2380 = vadd.f32 %v823, %v2379
        %v2381 = vpop.f32.mrb[0].mxu0
        %v2382 = vadd.f32 %v827, %v2381
        %v2383 = vpop.f32.mrb[0].mxu0
        %v2384 = vadd.f32 %v823, %v2383
        %v2385 = vpop.f32.mrb[0].mxu0
        %v2386 = vadd.f32 %v827, %v2385
        %2387 = vmatprep.mubr.bf16.mxu0 %v551
        %2388 = vmatmul.mubr.bf16.gmra.mrb[0].mxu0 %v550
        %v2389 = vpop.f32.mrb[0].mxu0
        %v2390 = vadd.f32 %v823, %v2389
        %v2391 = vpop.f32.mrb[0].mxu0
        %v2392 = vadd.f32 %v827, %v2391
        %v2393 = vpop.f32.mrb[0].mxu0
        %v2394 = vadd.f32 %v823, %v2393
        %v2395 = vpop.f32.mrb[0].mxu0
        %v2396 = vadd.f32 %v827, %v2395
        %2397 = vdwg.mxu0
        %2398 = vmatprep.subr.bf16.mxu0 %v1665
        %2399 = vmatpush1.bf16.msra.mxu0 %v1664
        %2400 = vmatprep.subr.bf16.mxu0 %v1681
        %2401 = vmatpush1.bf16.msra.mxu0 %v1680
        %2402 = vmatprep.subr.bf16.mxu0 %v1697
        %2403 = vmatpush1.bf16.msra.mxu0 %v1696
        %2404 = vmatprep.subr.bf16.mxu0 %v1713
        %2405 = vmatpush1.bf16.msra.mxu0 %v1712
        %2406 = vmatprep.subr.bf16.mxu0 %v1729
        %2407 = vmatpush1.bf16.msra.mxu0 %v1728
        %2408 = vmatprep.subr.bf16.mxu0 %v1745
        %2409 = vmatpush1.bf16.msra.mxu0 %v1744
        %2410 = vmatprep.subr.bf16.mxu0 %v1761
        %2411 = vmatpush1.bf16.msra.mxu0 %v1760
        %2412 = vmatprep.subr.bf16.mxu0 %v1777
        %2413 = vmatpush1.bf16.msra.mxu0 %v1776
        %2414 = vmatprep.subr.bf16.mxu0 %v1793
        %2415 = vmatpush1.bf16.msra.mxu0 %v1792
        %2416 = vmatprep.subr.bf16.mxu0 %v1809
        %2417 = vmatpush1.bf16.msra.mxu0 %v1808
        %2418 = vmatprep.subr.bf16.mxu0 %v1825
        %2419 = vmatpush1.bf16.msra.mxu0 %v1824
        %2420 = vmatprep.subr.bf16.mxu0 %v1841
        %2421 = vmatpush1.bf16.msra.mxu0 %v1840
        %2422 = vmatprep.subr.bf16.mxu0 %v1857
        %2423 = vmatpush1.bf16.msra.mxu0 %v1856
        %2424 = vmatprep.subr.bf16.mxu0 %v1873
        %2425 = vmatpush1.bf16.msra.mxu0 %v1872
        %2426 = vmatprep.subr.bf16.mxu0 %v1889
        %2427 = vmatpush1.bf16.msra.mxu0 %v1888
        %2428 = vmatprep.subr.bf16.mxu0 %v1905
        %2429 = vmatpush1.bf16.msra.mxu0 %v1904
        %2430 = vmatprep.mubr.bf16.mxu0 %v537
        %2431 = vmatmul.mubr.bf16.gmra.mrb[0].mxu0 %v536
        %v2432 = vpop.f32.mrb[0].mxu0
        %v2433 = vadd.f32 %v831, %v2432
        %v2434 = vpop.f32.mrb[0].mxu0
        %v2435 = vadd.f32 %v835, %v2434
        %v2436 = vpop.f32.mrb[0].mxu0
        %v2437 = vadd.f32 %v831, %v2436
        %v2438 = vpop.f32.mrb[0].mxu0
        %v2439 = vadd.f32 %v835, %v2438
        %2440 = vmatprep.mubr.bf16.mxu0 %v539
        %2441 = vmatmul.mubr.bf16.gmra.mrb[0].mxu0 %v538
        %v2442 = vpop.f32.mrb[0].mxu0
        %v2443 = vadd.f32 %v831, %v2442
        %v2444 = vpop.f32.mrb[0].mxu0
        %v2445 = vadd.f32 %v835, %v2444
        %v2446 = vpop.f32.mrb[0].mxu0
        %v2447 = vadd.f32 %v831, %v2446
        %v2448 = vpop.f32.mrb[0].mxu0
        %v2449 = vadd.f32 %v835, %v2448
        %2450 = vmatprep.mubr.bf16.mxu0 %v541
        %2451 = vmatmul.mubr.bf16.gmra.mrb[0].mxu0 %v540
        %v2452 = vpop.f32.mrb[0].mxu0
        %v2453 = vadd.f32 %v831, %v2452
        %v2454 = vpop.f32.mrb[0].mxu0
        %v2455 = vadd.f32 %v835, %v2454
        %v2456 = vpop.f32.mrb[0].mxu0
        %v2457 = vadd.f32 %v831, %v2456
        %v2458 = vpop.f32.mrb[0].mxu0
        %v2459 = vadd.f32 %v835, %v2458
        %2460 = vmatprep.mubr.bf16.mxu0 %v543
        %2461 = vmatmul.mubr.bf16.gmra.mrb[0].mxu0 %v542
        %v2462 = vpop.f32.mrb[0].mxu0
        %v2463 = vadd.f32 %v831, %v2462
        %v2464 = vpop.f32.mrb[0].mxu0
        %v2465 = vadd.f32 %v835, %v2464
        %v2466 = vpop.f32.mrb[0].mxu0
        %v2467 = vadd.f32 %v831, %v2466
        %v2468 = vpop.f32.mrb[0].mxu0
        %v2469 = vadd.f32 %v835, %v2468
        %2470 = vmatprep.mubr.bf16.mxu0 %v545
        %2471 = vmatmul.mubr.bf16.gmra.mrb[0].mxu0 %v544
        %v2472 = vpop.f32.mrb[0].mxu0
        %v2473 = vadd.f32 %v831, %v2472
        %v2474 = vpop.f32.mrb[0].mxu0
        %v2475 = vadd.f32 %v835, %v2474
        %v2476 = vpop.f32.mrb[0].mxu0
        %v2477 = vadd.f32 %v831, %v2476
        %v2478 = vpop.f32.mrb[0].mxu0
        %v2479 = vadd.f32 %v835, %v2478
        %2480 = vmatprep.mubr.bf16.mxu0 %v547
        %2481 = vmatmul.mubr.bf16.gmra.mrb[0].mxu0 %v546
        %v2482 = vpop.f32.mrb[0].mxu0
        %v2483 = vadd.f32 %v831, %v2482
        %v2484 = vpop.f32.mrb[0].mxu0
        %v2485 = vadd.f32 %v835, %v2484
        %v2486 = vpop.f32.mrb[0].mxu0
        %v2487 = vadd.f32 %v831, %v2486
        %v2488 = vpop.f32.mrb[0].mxu0
        %v2489 = vadd.f32 %v835, %v2488
        %2490 = vmatprep.mubr.bf16.mxu0 %v549
        %2491 = vmatmul.mubr.bf16.gmra.mrb[0].mxu0 %v548
        %v2492 = vpop.f32.mrb[0].mxu0
        %v2493 = vadd.f32 %v831, %v2492
        %v2494 = vpop.f32.mrb[0].mxu0
        %v2495 = vadd.f32 %v835, %v2494
        %v2496 = vpop.f32.mrb[0].mxu0
        %v2497 = vadd.f32 %v831, %v2496
        %v2498 = vpop.f32.mrb[0].mxu0
        %v2499 = vadd.f32 %v835, %v2498
        %2500 = vmatprep.mubr.bf16.mxu0 %v551
        %2501 = vmatmul.mubr.bf16.gmra.mrb[0].mxu0 %v550
        %v2502 = vpop.f32.mrb[0].mxu0
        %v2503 = vadd.f32 %v831, %v2502
        %v2504 = vpop.f32.mrb[0].mxu0
        %v2505 = vadd.f32 %v835, %v2504
        %v2506 = vpop.f32.mrb[0].mxu0
        %v2507 = vadd.f32 %v831, %v2506
        %v2508 = vpop.f32.mrb[0].mxu0
        %v2509 = vadd.f32 %v835, %v2508
        %2510 = vdwg.mxu0
        %2511 = vmatprep.subr.bf16.mxu0 %v1667
        %2512 = vmatpush1.bf16.msra.mxu0 %v1666
        %2513 = vmatprep.subr.bf16.mxu0 %v1683
        %2514 = vmatpush1.bf16.msra.mxu0 %v1682
        %2515 = vmatprep.subr.bf16.mxu0 %v1699
        %2516 = vmatpush1.bf16.msra.mxu0 %v1698
        %2517 = vmatprep.subr.bf16.mxu0 %v1715
        %2518 = vmatpush1.bf16.msra.mxu0 %v1714
        %2519 = vmatprep.subr.bf16.mxu0 %v1731
        %2520 = vmatpush1.bf16.msra.mxu0 %v1730
        %2521 = vmatprep.subr.bf16.mxu0 %v1747
        %2522 = vmatpush1.bf16.msra.mxu0 %v1746
        %2523 = vmatprep.subr.bf16.mxu0 %v1763
        %2524 = vmatpush1.bf16.msra.mxu0 %v1762
        %2525 = vmatprep.subr.bf16.mxu0 %v1779
        %2526 = vmatpush1.bf16.msra.mxu0 %v1778
        %2527 = vmatprep.subr.bf16.mxu0 %v1795
        %2528 = vmatpush1.bf16.msra.mxu0 %v1794
        %2529 = vmatprep.subr.bf16.mxu0 %v1811
        %2530 = vmatpush1.bf16.msra.mxu0 %v1810
        %2531 = vmatprep.subr.bf16.mxu0 %v1827
        %2532 = vmatpush1.bf16.msra.mxu0 %v1826
        %2533 = vmatprep.subr.bf16.mxu0 %v1843
        %2534 = vmatpush1.bf16.msra.mxu0 %v1842
        %2535 = vmatprep.subr.bf16.mxu0 %v1859
        %2536 = vmatpush1.bf16.msra.mxu0 %v1858
        %2537 = vmatprep.subr.bf16.mxu0 %v1875
        %2538 = vmatpush1.bf16.msra.mxu0 %v1874
        %2539 = vmatprep.subr.bf16.mxu0 %v1891
        %2540 = vmatpush1.bf16.msra.mxu0 %v1890
        %2541 = vmatprep.subr.bf16.mxu0 %v1907
        %2542 = vmatpush1.bf16.msra.mxu0 %v1906
        %2543 = vmatprep.mubr.bf16.mxu0 %v537
        %2544 = vmatmul.mubr.bf16.gmra.mrb[0].mxu0 %v536
        %v2545 = vpop.f32.mrb[0].mxu0
        %v2546 = vadd.f32 %v839, %v2545
        %v2547 = vpop.f32.mrb[0].mxu0
        %v2548 = vadd.f32 %v843, %v2547
        %v2549 = vpop.f32.mrb[0].mxu0
        %v2550 = vadd.f32 %v839, %v2549
        %v2551 = vpop.f32.mrb[0].mxu0
        %v2552 = vadd.f32 %v843, %v2551
        %2553 = vmatprep.mubr.bf16.mxu0 %v539
        %2554 = vmatmul.mubr.bf16.gmra.mrb[0].mxu0 %v538
        %v2555 = vpop.f32.mrb[0].mxu0
        %v2556 = vadd.f32 %v839, %v2555
        %v2557 = vpop.f32.mrb[0].mxu0
        %v2558 = vadd.f32 %v843, %v2557
        %v2559 = vpop.f32.mrb[0].mxu0
        %v2560 = vadd.f32 %v839, %v2559
        %v2561 = vpop.f32.mrb[0].mxu0
        %v2562 = vadd.f32 %v843, %v2561
        %2563 = vmatprep.mubr.bf16.mxu0 %v541
        %2564 = vmatmul.mubr.bf16.gmra.mrb[0].mxu0 %v540
        %v2565 = vpop.f32.mrb[0].mxu0
        %v2566 = vadd.f32 %v839, %v2565
        %v2567 = vpop.f32.mrb[0].mxu0
        %v2568 = vadd.f32 %v843, %v2567
        %v2569 = vpop.f32.mrb[0].mxu0
        %v2570 = vadd.f32 %v839, %v2569
        %v2571 = vpop.f32.mrb[0].mxu0
        %v2572 = vadd.f32 %v843, %v2571
        %2573 = vmatprep.mubr.bf16.mxu0 %v543
        %2574 = vmatmul.mubr.bf16.gmra.mrb[0].mxu0 %v542
        %v2575 = vpop.f32.mrb[0].mxu0
        %v2576 = vadd.f32 %v839, %v2575
        %v2577 = vpop.f32.mrb[0].mxu0
        %v2578 = vadd.f32 %v843, %v2577
        %v2579 = vpop.f32.mrb[0].mxu0
        %v2580 = vadd.f32 %v839, %v2579
        %v2581 = vpop.f32.mrb[0].mxu0
        %v2582 = vadd.f32 %v843, %v2581
        %2583 = vmatprep.mubr.bf16.mxu0 %v545
        %2584 = vmatmul.mubr.bf16.gmra.mrb[0].mxu0 %v544
        %v2585 = vpop.f32.mrb[0].mxu0
        %v2586 = vadd.f32 %v839, %v2585
        %v2587 = vpop.f32.mrb[0].mxu0
        %v2588 = vadd.f32 %v843, %v2587
        %v2589 = vpop.f32.mrb[0].mxu0
        %v2590 = vadd.f32 %v839, %v2589
        %v2591 = vpop.f32.mrb[0].mxu0
        %v2592 = vadd.f32 %v843, %v2591
        %2593 = vmatprep.mubr.bf16.mxu0 %v547
        %2594 = vmatmul.mubr.bf16.gmra.mrb[0].mxu0 %v546
        %v2595 = vpop.f32.mrb[0].mxu0
        %v2596 = vadd.f32 %v839, %v2595
        %v2597 = vpop.f32.mrb[0].mxu0
        %v2598 = vadd.f32 %v843, %v2597
        %v2599 = vpop.f32.mrb[0].mxu0
        %v2600 = vadd.f32 %v839, %v2599
        %v2601 = vpop.f32.mrb[0].mxu0
        %v2602 = vadd.f32 %v843, %v2601
        %2603 = vmatprep.mubr.bf16.mxu0 %v549
        %2604 = vmatmul.mubr.bf16.gmra.mrb[0].mxu0 %v548
        %v2605 = vpop.f32.mrb[0].mxu0
        %v2606 = vadd.f32 %v839, %v2605
        %v2607 = vpop.f32.mrb[0].mxu0
        %v2608 = vadd.f32 %v843, %v2607
        %v2609 = vpop.f32.mrb[0].mxu0
        %v2610 = vadd.f32 %v839, %v2609
        %v2611 = vpop.f32.mrb[0].mxu0
        %v2612 = vadd.f32 %v843, %v2611
        %2613 = vmatprep.mubr.bf16.mxu0 %v551
        %2614 = vmatmul.mubr.bf16.gmra.mrb[0].mxu0 %v550
        %v2615 = vpop.f32.mrb[0].mxu0
        %v2616 = vadd.f32 %v839, %v2615
        %v2617 = vpop.f32.mrb[0].mxu0
        %v2618 = vadd.f32 %v843, %v2617
        %v2619 = vpop.f32.mrb[0].mxu0
        %v2620 = vadd.f32 %v839, %v2619
        %v2621 = vpop.f32.mrb[0].mxu0
        %v2622 = vadd.f32 %v843, %v2621
        %2623 = vdwg.mxu0
        %2624 = vmatprep.subr.bf16.mxu0 %v1669
        %2625 = vmatpush1.bf16.msra.mxu0 %v1668
        %2626 = vmatprep.subr.bf16.mxu0 %v1685
        %2627 = vmatpush1.bf16.msra.mxu0 %v1684
        %2628 = vmatprep.subr.bf16.mxu0 %v1701
        %2629 = vmatpush1.bf16.msra.mxu0 %v1700
        %2630 = vmatprep.subr.bf16.mxu0 %v1717
        %2631 = vmatpush1.bf16.msra.mxu0 %v1716
        %2632 = vmatprep.subr.bf16.mxu0 %v1733
        %2633 = vmatpush1.bf16.msra.mxu0 %v1732
        %2634 = vmatprep.subr.bf16.mxu0 %v1749
        %2635 = vmatpush1.bf16.msra.mxu0 %v1748
        %2636 = vmatprep.subr.bf16.mxu0 %v1765
        %2637 = vmatpush1.bf16.msra.mxu0 %v1764
        %2638 = vmatprep.subr.bf16.mxu0 %v1781
        %2639 = vmatpush1.bf16.msra.mxu0 %v1780
        %2640 = vmatprep.subr.bf16.mxu0 %v1797
        %2641 = vmatpush1.bf16.msra.mxu0 %v1796
        %2642 = vmatprep.subr.bf16.mxu0 %v1813
        %2643 = vmatpush1.bf16.msra.mxu0 %v1812
        %2644 = vmatprep.subr.bf16.mxu0 %v1829
        %2645 = vmatpush1.bf16.msra.mxu0 %v1828
        %2646 = vmatprep.subr.bf16.mxu0 %v1845
        %2647 = vmatpush1.bf16.msra.mxu0 %v1844
        %2648 = vmatprep.subr.bf16.mxu0 %v1861
        %2649 = vmatpush1.bf16.msra.mxu0 %v1860
        %2650 = vmatprep.subr.bf16.mxu0 %v1877
        %2651 = vmatpush1.bf16.msra.mxu0 %v1876
        %2652 = vmatprep.subr.bf16.mxu0 %v1893
        %2653 = vmatpush1.bf16.msra.mxu0 %v1892
        %2654 = vmatprep.subr.bf16.mxu0 %v1909
        %2655 = vmatpush1.bf16.msra.mxu0 %v1908
        %2656 = vmatprep.mubr.bf16.mxu0 %v537
        %2657 = vmatmul.mubr.bf16.gmra.mrb[0].mxu0 %v536
        %v2658 = vpop.f32.mrb[0].mxu0
        %v2659 = vadd.f32 %v847, %v2658
        %v2660 = vpop.f32.mrb[0].mxu0
        %v2661 = vadd.f32 %v851, %v2660
        %v2662 = vpop.f32.mrb[0].mxu0
        %v2663 = vadd.f32 %v847, %v2662
        %v2664 = vpop.f32.mrb[0].mxu0
        %v2665 = vadd.f32 %v851, %v2664
        %2666 = vmatprep.mubr.bf16.mxu0 %v539
        %2667 = vmatmul.mubr.bf16.gmra.mrb[0].mxu0 %v538
        %v2668 = vpop.f32.mrb[0].mxu0
        %v2669 = vadd.f32 %v847, %v2668
        %v2670 = vpop.f32.mrb[0].mxu0
        %v2671 = vadd.f32 %v851, %v2670
        %v2672 = vpop.f32.mrb[0].mxu0
        %v2673 = vadd.f32 %v847, %v2672
        %v2674 = vpop.f32.mrb[0].mxu0
        %v2675 = vadd.f32 %v851, %v2674
        %2676 = vmatprep.mubr.bf16.mxu0 %v541
        %2677 = vmatmul.mubr.bf16.gmra.mrb[0].mxu0 %v540
        %v2678 = vpop.f32.mrb[0].mxu0
        %v2679 = vadd.f32 %v847, %v2678
        %v2680 = vpop.f32.mrb[0].mxu0
        %v2681 = vadd.f32 %v851, %v2680
        %v2682 = vpop.f32.mrb[0].mxu0
        %v2683 = vadd.f32 %v847, %v2682
        %v2684 = vpop.f32.mrb[0].mxu0
        %v2685 = vadd.f32 %v851, %v2684
        %2686 = vmatprep.mubr.bf16.mxu0 %v543
        %2687 = vmatmul.mubr.bf16.gmra.mrb[0].mxu0 %v542
        %v2688 = vpop.f32.mrb[0].mxu0
        %v2689 = vadd.f32 %v847, %v2688
        %v2690 = vpop.f32.mrb[0].mxu0
        %v2691 = vadd.f32 %v851, %v2690
        %v2692 = vpop.f32.mrb[0].mxu0
        %v2693 = vadd.f32 %v847, %v2692
        %v2694 = vpop.f32.mrb[0].mxu0
        %v2695 = vadd.f32 %v851, %v2694
        %2696 = vmatprep.mubr.bf16.mxu0 %v545
        %2697 = vmatmul.mubr.bf16.gmra.mrb[0].mxu0 %v544
        %v2698 = vpop.f32.mrb[0].mxu0
        %v2699 = vadd.f32 %v847, %v2698
        %v2700 = vpop.f32.mrb[0].mxu0
        %v2701 = vadd.f32 %v851, %v2700
        %v2702 = vpop.f32.mrb[0].mxu0
        %v2703 = vadd.f32 %v847, %v2702
        %v2704 = vpop.f32.mrb[0].mxu0
        %v2705 = vadd.f32 %v851, %v2704
        %2706 = vmatprep.mubr.bf16.mxu0 %v547
        %2707 = vmatmul.mubr.bf16.gmra.mrb[0].mxu0 %v546
        %v2708 = vpop.f32.mrb[0].mxu0
        %v2709 = vadd.f32 %v847, %v2708
        %v2710 = vpop.f32.mrb[0].mxu0
        %v2711 = vadd.f32 %v851, %v2710
        %v2712 = vpop.f32.mrb[0].mxu0
        %v2713 = vadd.f32 %v847, %v2712
        %v2714 = vpop.f32.mrb[0].mxu0
        %v2715 = vadd.f32 %v851, %v2714
        %2716 = vmatprep.mubr.bf16.mxu0 %v549
        %2717 = vmatmul.mubr.bf16.gmra.mrb[0].mxu0 %v548
        %v2718 = vpop.f32.mrb[0].mxu0
        %v2719 = vadd.f32 %v847, %v2718
        %v2720 = vpop.f32.mrb[0].mxu0
        %v2721 = vadd.f32 %v851, %v2720
        %v2722 = vpop.f32.mrb[0].mxu0
        %v2723 = vadd.f32 %v847, %v2722
        %v2724 = vpop.f32.mrb[0].mxu0
        %v2725 = vadd.f32 %v851, %v2724
        %2726 = vmatprep.mubr.bf16.mxu0 %v551
        %2727 = vmatmul.mubr.bf16.gmra.mrb[0].mxu0 %v550
        %v2728 = vpop.f32.mrb[0].mxu0
        %v2729 = vadd.f32 %v847, %v2728
        %v2730 = vpop.f32.mrb[0].mxu0
        %v2731 = vadd.f32 %v851, %v2730
        %v2732 = vpop.f32.mrb[0].mxu0
        %v2733 = vadd.f32 %v847, %v2732
        %v2734 = vpop.f32.mrb[0].mxu0
        %v2735 = vadd.f32 %v851, %v2734
        %2736 = vdwg.mxu0
        %2737 = vmatprep.subr.bf16.mxu0 %v1671
        %2738 = vmatpush1.bf16.msra.mxu0 %v1670
        %2739 = vmatprep.subr.bf16.mxu0 %v1687
        %2740 = vmatpush1.bf16.msra.mxu0 %v1686
        %2741 = vmatprep.subr.bf16.mxu0 %v1703
        %2742 = vmatpush1.bf16.msra.mxu0 %v1702
        %2743 = vmatprep.subr.bf16.mxu0 %v1719
        %2744 = vmatpush1.bf16.msra.mxu0 %v1718
        %2745 = vmatprep.subr.bf16.mxu0 %v1735
        %2746 = vmatpush1.bf16.msra.mxu0 %v1734
        %2747 = vmatprep.subr.bf16.mxu0 %v1751
        %2748 = vmatpush1.bf16.msra.mxu0 %v1750
        %2749 = vmatprep.subr.bf16.mxu0 %v1767
        %2750 = vmatpush1.bf16.msra.mxu0 %v1766
        %2751 = vmatprep.subr.bf16.mxu0 %v1783
        %2752 = vmatpush1.bf16.msra.mxu0 %v1782
        %2753 = vmatprep.subr.bf16.mxu0 %v1799
        %2754 = vmatpush1.bf16.msra.mxu0 %v1798
        %2755 = vmatprep.subr.bf16.mxu0 %v1815
        %2756 = vmatpush1.bf16.msra.mxu0 %v1814
        %2757 = vmatprep.subr.bf16.mxu0 %v1831
        %2758 = vmatpush1.bf16.msra.mxu0 %v1830
        %2759 = vmatprep.subr.bf16.mxu0 %v1847
        %2760 = vmatpush1.bf16.msra.mxu0 %v1846
        %2761 = vmatprep.subr.bf16.mxu0 %v1863
        %2762 = vmatpush1.bf16.msra.mxu0 %v1862
        %2763 = vmatprep.subr.bf16.mxu0 %v1879
        %2764 = vmatpush1.bf16.msra.mxu0 %v1878
        %2765 = vmatprep.subr.bf16.mxu0 %v1895
        %2766 = vmatpush1.bf16.msra.mxu0 %v1894
        %2767 = vmatprep.subr.bf16.mxu0 %v1911
        %2768 = vmatpush1.bf16.msra.mxu0 %v1910
        %2769 = vmatprep.mubr.bf16.mxu0 %v537
        %2770 = vmatmul.mubr.bf16.gmra.mrb[0].mxu0 %v536
        %v2771 = vpop.f32.mrb[0].mxu0
        %v2772 = vadd.f32 %v855, %v2771
        %v2773 = vpop.f32.mrb[0].mxu0
        %v2774 = vadd.f32 %v859, %v2773
        %v2775 = vpop.f32.mrb[0].mxu0
        %v2776 = vadd.f32 %v855, %v2775
        %v2777 = vpop.f32.mrb[0].mxu0
        %v2778 = vadd.f32 %v859, %v2777
        %2779 = vmatprep.mubr.bf16.mxu0 %v539
        %2780 = vmatmul.mubr.bf16.gmra.mrb[0].mxu0 %v538
        %v2781 = vpop.f32.mrb[0].mxu0
        %v2782 = vadd.f32 %v855, %v2781
        %v2783 = vpop.f32.mrb[0].mxu0
        %v2784 = vadd.f32 %v859, %v2783
        %v2785 = vpop.f32.mrb[0].mxu0
        %v2786 = vadd.f32 %v855, %v2785
        %v2787 = vpop.f32.mrb[0].mxu0
        %v2788 = vadd.f32 %v859, %v2787
        %2789 = vmatprep.mubr.bf16.mxu0 %v541
        %2790 = vmatmul.mubr.bf16.gmra.mrb[0].mxu0 %v540
        %v2791 = vpop.f32.mrb[0].mxu0
        %v2792 = vadd.f32 %v855, %v2791
        %v2793 = vpop.f32.mrb[0].mxu0
        %v2794 = vadd.f32 %v859, %v2793
        %v2795 = vpop.f32.mrb[0].mxu0
        %v2796 = vadd.f32 %v855, %v2795
        %v2797 = vpop.f32.mrb[0].mxu0
        %v2798 = vadd.f32 %v859, %v2797
        %2799 = vmatprep.mubr.bf16.mxu0 %v543
        %2800 = vmatmul.mubr.bf16.gmra.mrb[0].mxu0 %v542
        %v2801 = vpop.f32.mrb[0].mxu0
        %v2802 = vadd.f32 %v855, %v2801
        %v2803 = vpop.f32.mrb[0].mxu0
        %v2804 = vadd.f32 %v859, %v2803
        %v2805 = vpop.f32.mrb[0].mxu0
        %v2806 = vadd.f32 %v855, %v2805
        %v2807 = vpop.f32.mrb[0].mxu0
        %v2808 = vadd.f32 %v859, %v2807
        %2809 = vmatprep.mubr.bf16.mxu0 %v545
        %2810 = vmatmul.mubr.bf16.gmra.mrb[0].mxu0 %v544
        %v2811 = vpop.f32.mrb[0].mxu0
        %v2812 = vadd.f32 %v855, %v2811
        %v2813 = vpop.f32.mrb[0].mxu0
        %v2814 = vadd.f32 %v859, %v2813
        %v2815 = vpop.f32.mrb[0].mxu0
        %v2816 = vadd.f32 %v855, %v2815
        %v2817 = vpop.f32.mrb[0].mxu0
        %v2818 = vadd.f32 %v859, %v2817
        %2819 = vmatprep.mubr.bf16.mxu0 %v547
        %2820 = vmatmul.mubr.bf16.gmra.mrb[0].mxu0 %v546
        %v2821 = vpop.f32.mrb[0].mxu0
        %v2822 = vadd.f32 %v855, %v2821
        %v2823 = vpop.f32.mrb[0].mxu0
        %v2824 = vadd.f32 %v859, %v2823
        %v2825 = vpop.f32.mrb[0].mxu0
        %v2826 = vadd.f32 %v855, %v2825
        %v2827 = vpop.f32.mrb[0].mxu0
        %v2828 = vadd.f32 %v859, %v2827
        %2829 = vmatprep.mubr.bf16.mxu0 %v549
        %2830 = vmatmul.mubr.bf16.gmra.mrb[0].mxu0 %v548
        %v2831 = vpop.f32.mrb[0].mxu0
        %v2832 = vadd.f32 %v855, %v2831
        %v2833 = vpop.f32.mrb[0].mxu0
        %v2834 = vadd.f32 %v859, %v2833
        %v2835 = vpop.f32.mrb[0].mxu0
        %v2836 = vadd.f32 %v855, %v2835
        %v2837 = vpop.f32.mrb[0].mxu0
        %v2838 = vadd.f32 %v859, %v2837
        %2839 = vmatprep.mubr.bf16.mxu0 %v551
        %2840 = vmatmul.mubr.bf16.gmra.mrb[0].mxu0 %v550
        %v2841 = vpop.f32.mrb[0].mxu0
        %v2842 = vadd.f32 %v855, %v2841
        %v2843 = vpop.f32.mrb[0].mxu0
        %v2844 = vadd.f32 %v859, %v2843
        %v2845 = vpop.f32.mrb[0].mxu0
        %v2846 = vadd.f32 %v855, %v2845
        %v2847 = vpop.f32.mrb[0].mxu0
        %v2848 = vadd.f32 %v859, %v2847
        %2849 = vdwg.mxu0
        %2850 = vmatprep.subr.bf16.mxu0 %v1673
        %2851 = vmatpush1.bf16.msra.mxu0 %v1672
        %2852 = vmatprep.subr.bf16.mxu0 %v1689
        %2853 = vmatpush1.bf16.msra.mxu0 %v1688
        %2854 = vmatprep.subr.bf16.mxu0 %v1705
        %2855 = vmatpush1.bf16.msra.mxu0 %v1704
        %2856 = vmatprep.subr.bf16.mxu0 %v1721
        %2857 = vmatpush1.bf16.msra.mxu0 %v1720
        %2858 = vmatprep.subr.bf16.mxu0 %v1737
        %2859 = vmatpush1.bf16.msra.mxu0 %v1736
        %2860 = vmatprep.subr.bf16.mxu0 %v1753
        %2861 = vmatpush1.bf16.msra.mxu0 %v1752
        %2862 = vmatprep.subr.bf16.mxu0 %v1769
        %2863 = vmatpush1.bf16.msra.mxu0 %v1768
        %2864 = vmatprep.subr.bf16.mxu0 %v1785
        %2865 = vmatpush1.bf16.msra.mxu0 %v1784
        %2866 = vmatprep.subr.bf16.mxu0 %v1801
        %2867 = vmatpush1.bf16.msra.mxu0 %v1800
        %2868 = vmatprep.subr.bf16.mxu0 %v1817
        %2869 = vmatpush1.bf16.msra.mxu0 %v1816
        %2870 = vmatprep.subr.bf16.mxu0 %v1833
        %2871 = vmatpush1.bf16.msra.mxu0 %v1832
        %2872 = vmatprep.subr.bf16.mxu0 %v1849
        %2873 = vmatpush1.bf16.msra.mxu0 %v1848
        %2874 = vmatprep.subr.bf16.mxu0 %v1865
        %2875 = vmatpush1.bf16.msra.mxu0 %v1864
        %2876 = vmatprep.subr.bf16.mxu0 %v1881
        %2877 = vmatpush1.bf16.msra.mxu0 %v1880
        %2878 = vmatprep.subr.bf16.mxu0 %v1897
        %2879 = vmatpush1.bf16.msra.mxu0 %v1896
        %2880 = vmatprep.subr.bf16.mxu0 %v1913
        %2881 = vmatpush1.bf16.msra.mxu0 %v1912
        %2882 = vmatprep.mubr.bf16.mxu0 %v537
        %2883 = vmatmul.mubr.bf16.gmra.mrb[0].mxu0 %v536
        %v2884 = vpop.f32.mrb[0].mxu0
        %v2885 = vadd.f32 %v863, %v2884
        %v2886 = vpop.f32.mrb[0].mxu0
        %v2887 = vadd.f32 %v867, %v2886
        %v2888 = vpop.f32.mrb[0].mxu0
        %v2889 = vadd.f32 %v863, %v2888
        %v2890 = vpop.f32.mrb[0].mxu0
        %v2891 = vadd.f32 %v867, %v2890
        %2892 = vmatprep.mubr.bf16.mxu0 %v539
        %2893 = vmatmul.mubr.bf16.gmra.mrb[0].mxu0 %v538
        %v2894 = vpop.f32.mrb[0].mxu0
        %v2895 = vadd.f32 %v863, %v2894
        %v2896 = vpop.f32.mrb[0].mxu0
        %v2897 = vadd.f32 %v867, %v2896
        %v2898 = vpop.f32.mrb[0].mxu0
        %v2899 = vadd.f32 %v863, %v2898
        %v2900 = vpop.f32.mrb[0].mxu0
        %v2901 = vadd.f32 %v867, %v2900
        %2902 = vmatprep.mubr.bf16.mxu0 %v541
        %2903 = vmatmul.mubr.bf16.gmra.mrb[0].mxu0 %v540
        %v2904 = vpop.f32.mrb[0].mxu0
        %v2905 = vadd.f32 %v863, %v2904
        %v2906 = vpop.f32.mrb[0].mxu0
        %v2907 = vadd.f32 %v867, %v2906
        %v2908 = vpop.f32.mrb[0].mxu0
        %v2909 = vadd.f32 %v863, %v2908
        %v2910 = vpop.f32.mrb[0].mxu0
        %v2911 = vadd.f32 %v867, %v2910
        %2912 = vmatprep.mubr.bf16.mxu0 %v543
        %2913 = vmatmul.mubr.bf16.gmra.mrb[0].mxu0 %v542
        %v2914 = vpop.f32.mrb[0].mxu0
        %v2915 = vadd.f32 %v863, %v2914
        %v2916 = vpop.f32.mrb[0].mxu0
        %v2917 = vadd.f32 %v867, %v2916
        %v2918 = vpop.f32.mrb[0].mxu0
        %v2919 = vadd.f32 %v863, %v2918
        %v2920 = vpop.f32.mrb[0].mxu0
        %v2921 = vadd.f32 %v867, %v2920
        %2922 = vmatprep.mubr.bf16.mxu0 %v545
        %2923 = vmatmul.mubr.bf16.gmra.mrb[0].mxu0 %v544
        %v2924 = vpop.f32.mrb[0].mxu0
        %v2925 = vadd.f32 %v863, %v2924
        %v2926 = vpop.f32.mrb[0].mxu0
        %v2927 = vadd.f32 %v867, %v2926
        %v2928 = vpop.f32.mrb[0].mxu0
        %v2929 = vadd.f32 %v863, %v2928
        %v2930 = vpop.f32.mrb[0].mxu0
        %v2931 = vadd.f32 %v867, %v2930
        %2932 = vmatprep.mubr.bf16.mxu0 %v547
        %2933 = vmatmul.mubr.bf16.gmra.mrb[0].mxu0 %v546
        %v2934 = vpop.f32.mrb[0].mxu0
        %v2935 = vadd.f32 %v863, %v2934
        %v2936 = vpop.f32.mrb[0].mxu0
        %v2937 = vadd.f32 %v867, %v2936
        %v2938 = vpop.f32.mrb[0].mxu0
        %v2939 = vadd.f32 %v863, %v2938
        %v2940 = vpop.f32.mrb[0].mxu0
        %v2941 = vadd.f32 %v867, %v2940
        %2942 = vmatprep.mubr.bf16.mxu0 %v549
        %2943 = vmatmul.mubr.bf16.gmra.mrb[0].mxu0 %v548
        %v2944 = vpop.f32.mrb[0].mxu0
        %v2945 = vadd.f32 %v863, %v2944
        %v2946 = vpop.f32.mrb[0].mxu0
        %v2947 = vadd.f32 %v867, %v2946
        %v2948 = vpop.f32.mrb[0].mxu0
        %v2949 = vadd.f32 %v863, %v2948
        %v2950 = vpop.f32.mrb[0].mxu0
        %v2951 = vadd.f32 %v867, %v2950
        %2952 = vmatprep.mubr.bf16.mxu0 %v551
        %2953 = vmatmul.mubr.bf16.gmra.mrb[0].mxu0 %v550
        %v2954 = vpop.f32.mrb[0].mxu0
        %v2955 = vadd.f32 %v863, %v2954
        %v2956 = vpop.f32.mrb[0].mxu0
        %v2957 = vadd.f32 %v867, %v2956
        %v2958 = vpop.f32.mrb[0].mxu0
        %v2959 = vadd.f32 %v863, %v2958
        %v2960 = vpop.f32.mrb[0].mxu0
        %v2961 = vadd.f32 %v867, %v2960
        %2962 = vdwg.mxu0
        %2963 = vmatprep.subr.bf16.mxu0 %v1675
        %2964 = vmatpush1.bf16.msra.mxu0 %v1674
        %2965 = vmatprep.subr.bf16.mxu0 %v1691
        %2966 = vmatpush1.bf16.msra.mxu0 %v1690
        %2967 = vmatprep.subr.bf16.mxu0 %v1707
        %2968 = vmatpush1.bf16.msra.mxu0 %v1706
        %2969 = vmatprep.subr.bf16.mxu0 %v1723
        %2970 = vmatpush1.bf16.msra.mxu0 %v1722
        %2971 = vmatprep.subr.bf16.mxu0 %v1739
        %2972 = vmatpush1.bf16.msra.mxu0 %v1738
        %2973 = vmatprep.subr.bf16.mxu0 %v1755
        %2974 = vmatpush1.bf16.msra.mxu0 %v1754
        %2975 = vmatprep.subr.bf16.mxu0 %v1771
        %2976 = vmatpush1.bf16.msra.mxu0 %v1770
        %2977 = vmatprep.subr.bf16.mxu0 %v1787
        %2978 = vmatpush1.bf16.msra.mxu0 %v1786
        %2979 = vmatprep.subr.bf16.mxu0 %v1803
        %2980 = vmatpush1.bf16.msra.mxu0 %v1802
        %2981 = vmatprep.subr.bf16.mxu0 %v1819
        %2982 = vmatpush1.bf16.msra.mxu0 %v1818
        %2983 = vmatprep.subr.bf16.mxu0 %v1835
        %2984 = vmatpush1.bf16.msra.mxu0 %v1834
        %2985 = vmatprep.subr.bf16.mxu0 %v1851
        %2986 = vmatpush1.bf16.msra.mxu0 %v1850
        %2987 = vmatprep.subr.bf16.mxu0 %v1867
        %2988 = vmatpush1.bf16.msra.mxu0 %v1866
        %2989 = vmatprep.subr.bf16.mxu0 %v1883
        %2990 = vmatpush1.bf16.msra.mxu0 %v1882
        %2991 = vmatprep.subr.bf16.mxu0 %v1899
        %2992 = vmatpush1.bf16.msra.mxu0 %v1898
        %2993 = vmatprep.subr.bf16.mxu0 %v1915
        %2994 = vmatpush1.bf16.msra.mxu0 %v1914
        %2995 = vmatprep.mubr.bf16.mxu0 %v537
        %2996 = vmatmul.mubr.bf16.gmra.mrb[0].mxu0 %v536
        %v2997 = vpop.f32.mrb[0].mxu0
        %v2998 = vadd.f32 %v871, %v2997
        %v2999 = vpop.f32.mrb[0].mxu0
        %v3000 = vadd.f32 %v875, %v2999
        %v3001 = vpop.f32.mrb[0].mxu0
        %v3002 = vadd.f32 %v871, %v3001
        %v3003 = vpop.f32.mrb[0].mxu0
        %v3004 = vadd.f32 %v875, %v3003
        %3005 = vmatprep.mubr.bf16.mxu0 %v539
        %3006 = vmatmul.mubr.bf16.gmra.mrb[0].mxu0 %v538
        %v3007 = vpop.f32.mrb[0].mxu0
        %v3008 = vadd.f32 %v871, %v3007
        %v3009 = vpop.f32.mrb[0].mxu0
        %v3010 = vadd.f32 %v875, %v3009
        %v3011 = vpop.f32.mrb[0].mxu0
        %v3012 = vadd.f32 %v871, %v3011
        %v3013 = vpop.f32.mrb[0].mxu0
        %v3014 = vadd.f32 %v875, %v3013
        %3015 = vmatprep.mubr.bf16.mxu0 %v541
        %3016 = vmatmul.mubr.bf16.gmra.mrb[0].mxu0 %v540
        %v3017 = vpop.f32.mrb[0].mxu0
        %v3018 = vadd.f32 %v871, %v3017
        %v3019 = vpop.f32.mrb[0].mxu0
        %v3020 = vadd.f32 %v875, %v3019
        %v3021 = vpop.f32.mrb[0].mxu0
        %v3022 = vadd.f32 %v871, %v3021
        %v3023 = vpop.f32.mrb[0].mxu0
        %v3024 = vadd.f32 %v875, %v3023
        %3025 = vmatprep.mubr.bf16.mxu0 %v543
        %3026 = vmatmul.mubr.bf16.gmra.mrb[0].mxu0 %v542
        %v3027 = vpop.f32.mrb[0].mxu0
        %v3028 = vadd.f32 %v871, %v3027
        %v3029 = vpop.f32.mrb[0].mxu0
        %v3030 = vadd.f32 %v875, %v3029
        %v3031 = vpop.f32.mrb[0].mxu0
        %v3032 = vadd.f32 %v871, %v3031
        %v3033 = vpop.f32.mrb[0].mxu0
        %v3034 = vadd.f32 %v875, %v3033
        %3035 = vmatprep.mubr.bf16.mxu0 %v545
        %3036 = vmatmul.mubr.bf16.gmra.mrb[0].mxu0 %v544
        %v3037 = vpop.f32.mrb[0].mxu0
        %v3038 = vadd.f32 %v871, %v3037
        %v3039 = vpop.f32.mrb[0].mxu0
        %v3040 = vadd.f32 %v875, %v3039
        %v3041 = vpop.f32.mrb[0].mxu0
        %v3042 = vadd.f32 %v871, %v3041
        %v3043 = vpop.f32.mrb[0].mxu0
        %v3044 = vadd.f32 %v875, %v3043
        %3045 = vmatprep.mubr.bf16.mxu0 %v547
        %3046 = vmatmul.mubr.bf16.gmra.mrb[0].mxu0 %v546
        %v3047 = vpop.f32.mrb[0].mxu0
        %v3048 = vadd.f32 %v871, %v3047
        %v3049 = vpop.f32.mrb[0].mxu0
        %v3050 = vadd.f32 %v875, %v3049
        %v3051 = vpop.f32.mrb[0].mxu0
        %v3052 = vadd.f32 %v871, %v3051
        %v3053 = vpop.f32.mrb[0].mxu0
        %v3054 = vadd.f32 %v875, %v3053
        %3055 = vmatprep.mubr.bf16.mxu0 %v549
        %3056 = vmatmul.mubr.bf16.gmra.mrb[0].mxu0 %v548
        %v3057 = vpop.f32.mrb[0].mxu0
        %v3058 = vadd.f32 %v871, %v3057
        %v3059 = vpop.f32.mrb[0].mxu0
        %v3060 = vadd.f32 %v875, %v3059
        %v3061 = vpop.f32.mrb[0].mxu0
        %v3062 = vadd.f32 %v871, %v3061
        %v3063 = vpop.f32.mrb[0].mxu0
        %v3064 = vadd.f32 %v875, %v3063
        %3065 = vmatprep.mubr.bf16.mxu0 %v551
        %3066 = vmatmul.mubr.bf16.gmra.mrb[0].mxu0 %v550
        %v3067 = vpop.f32.mrb[0].mxu0
        %v3068 = vadd.f32 %v871, %v3067
        %v3069 = vpop.f32.mrb[0].mxu0
        %v3070 = vadd.f32 %v875, %v3069
        %v3071 = vpop.f32.mrb[0].mxu0
        %v3072 = vadd.f32 %v871, %v3071
        %v3073 = vpop.f32.mrb[0].mxu0
        %v3074 = vadd.f32 %v875, %v3073
        %3075 = vdwg.mxu0
        %vm3076 = vcmp.gt.f32.partialorder %v2207, 0.0
        %vm3077 = vcmp.gt.f32.partialorder %v2209, 0.0
        %vm3078 = vcmp.gt.f32.partialorder %v2320, 0.0
        %vm3079 = vcmp.gt.f32.partialorder %v2322, 0.0
        %vm3080 = vcmp.gt.f32.partialorder %v2433, 0.0
        %vm3081 = vcmp.gt.f32.partialorder %v2435, 0.0
        %vm3082 = vcmp.gt.f32.partialorder %v2546, 0.0
        %vm3083 = vcmp.gt.f32.partialorder %v2548, 0.0
        %vm3084 = vcmp.gt.f32.partialorder %v2659, 0.0
        %vm3085 = vcmp.gt.f32.partialorder %v2661, 0.0
        %vm3086 = vcmp.gt.f32.partialorder %v2772, 0.0
        %vm3087 = vcmp.gt.f32.partialorder %v2774, 0.0
        %vm3088 = vcmp.gt.f32.partialorder %v2885, 0.0
        %vm3089 = vcmp.gt.f32.partialorder %v2887, 0.0
        %vm3090 = vcmp.gt.f32.partialorder %v2998, 0.0
        %vm3091 = vcmp.gt.f32.partialorder %v3000, 0.0
        %vm3092 = vcmp.gt.f32.partialorder %v2211, 0.0
        %vm3093 = vcmp.gt.f32.partialorder %v2213, 0.0
        %vm3094 = vcmp.gt.f32.partialorder %v2324, 0.0
        %vm3095 = vcmp.gt.f32.partialorder %v2326, 0.0
        %vm3096 = vcmp.gt.f32.partialorder %v2437, 0.0
        %vm3097 = vcmp.gt.f32.partialorder %v2439, 0.0
        %vm3098 = vcmp.gt.f32.partialorder %v2550, 0.0
        %vm3099 = vcmp.gt.f32.partialorder %v2552, 0.0
        %vm3100 = vcmp.gt.f32.partialorder %v2663, 0.0
        %vm3101 = vcmp.gt.f32.partialorder %v2665, 0.0
        %vm3102 = vcmp.gt.f32.partialorder %v2776, 0.0
        %vm3103 = vcmp.gt.f32.partialorder %v2778, 0.0
        %vm3104 = vcmp.gt.f32.partialorder %v2889, 0.0
        %vm3105 = vcmp.gt.f32.partialorder %v2891, 0.0
        %vm3106 = vcmp.gt.f32.partialorder %v3002, 0.0
        %vm3107 = vcmp.gt.f32.partialorder %v3004, 0.0
        %vm3108 = vcmp.gt.f32.partialorder %v2217, 0.0
        %vm3109 = vcmp.gt.f32.partialorder %v2219, 0.0
        %vm3110 = vcmp.gt.f32.partialorder %v2330, 0.0
        %vm3111 = vcmp.gt.f32.partialorder %v2332, 0.0
        %vm3112 = vcmp.gt.f32.partialorder %v2443, 0.0
        %vm3113 = vcmp.gt.f32.partialorder %v2445, 0.0
        %vm3114 = vcmp.gt.f32.partialorder %v2556, 0.0
        %vm3115 = vcmp.gt.f32.partialorder %v2558, 0.0
        %vm3116 = vcmp.gt.f32.partialorder %v2669, 0.0
        %vm3117 = vcmp.gt.f32.partialorder %v2671, 0.0
        %vm3118 = vcmp.gt.f32.partialorder %v2782, 0.0
        %vm3119 = vcmp.gt.f32.partialorder %v2784, 0.0
        %vm3120 = vcmp.gt.f32.partialorder %v2895, 0.0
        %vm3121 = vcmp.gt.f32.partialorder %v2897, 0.0
        %vm3122 = vcmp.gt.f32.partialorder %v3008, 0.0
        %vm3123 = vcmp.gt.f32.partialorder %v3010, 0.0
        %vm3124 = vcmp.gt.f32.partialorder %v2221, 0.0
        %vm3125 = vcmp.gt.f32.partialorder %v2223, 0.0
        %vm3126 = vcmp.gt.f32.partialorder %v2334, 0.0
        %vm3127 = vcmp.gt.f32.partialorder %v2336, 0.0
        %vm3128 = vcmp.gt.f32.partialorder %v2447, 0.0
        %vm3129 = vcmp.gt.f32.partialorder %v2449, 0.0
        %vm3130 = vcmp.gt.f32.partialorder %v2560, 0.0
        %vm3131 = vcmp.gt.f32.partialorder %v2562, 0.0
        %vm3132 = vcmp.gt.f32.partialorder %v2673, 0.0
        %vm3133 = vcmp.gt.f32.partialorder %v2675, 0.0
        %vm3134 = vcmp.gt.f32.partialorder %v2786, 0.0
        %vm3135 = vcmp.gt.f32.partialorder %v2788, 0.0
        %vm3136 = vcmp.gt.f32.partialorder %v2899, 0.0
        %vm3137 = vcmp.gt.f32.partialorder %v2901, 0.0
        %vm3138 = vcmp.gt.f32.partialorder %v3012, 0.0
        %vm3139 = vcmp.gt.f32.partialorder %v3014, 0.0
        %vm3140 = vcmp.gt.f32.partialorder %v2227, 0.0
        %vm3141 = vcmp.gt.f32.partialorder %v2229, 0.0
        %vm3142 = vcmp.gt.f32.partialorder %v2340, 0.0
        %vm3143 = vcmp.gt.f32.partialorder %v2342, 0.0
        %vm3144 = vcmp.gt.f32.partialorder %v2453, 0.0
        %vm3145 = vcmp.gt.f32.partialorder %v2455, 0.0
        %vm3146 = vcmp.gt.f32.partialorder %v2566, 0.0
        %vm3147 = vcmp.gt.f32.partialorder %v2568, 0.0
        %vm3148 = vcmp.gt.f32.partialorder %v2679, 0.0
        %vm3149 = vcmp.gt.f32.partialorder %v2681, 0.0
        %vm3150 = vcmp.gt.f32.partialorder %v2792, 0.0
        %vm3151 = vcmp.gt.f32.partialorder %v2794, 0.0
        %vm3152 = vcmp.gt.f32.partialorder %v2905, 0.0
        %vm3153 = vcmp.gt.f32.partialorder %v2907, 0.0
        %vm3154 = vcmp.gt.f32.partialorder %v3018, 0.0
        %vm3155 = vcmp.gt.f32.partialorder %v3020, 0.0
        %vm3156 = vcmp.gt.f32.partialorder %v2231, 0.0
        %vm3157 = vcmp.gt.f32.partialorder %v2233, 0.0
        %vm3158 = vcmp.gt.f32.partialorder %v2344, 0.0
        %vm3159 = vcmp.gt.f32.partialorder %v2346, 0.0
        %vm3160 = vcmp.gt.f32.partialorder %v2457, 0.0
        %vm3161 = vcmp.gt.f32.partialorder %v2459, 0.0
        %vm3162 = vcmp.gt.f32.partialorder %v2570, 0.0
        %vm3163 = vcmp.gt.f32.partialorder %v2572, 0.0
        %vm3164 = vcmp.gt.f32.partialorder %v2683, 0.0
        %vm3165 = vcmp.gt.f32.partialorder %v2685, 0.0
        %vm3166 = vcmp.gt.f32.partialorder %v2796, 0.0
        %vm3167 = vcmp.gt.f32.partialorder %v2798, 0.0
        %vm3168 = vcmp.gt.f32.partialorder %v2909, 0.0
        %vm3169 = vcmp.gt.f32.partialorder %v2911, 0.0
        %vm3170 = vcmp.gt.f32.partialorder %v3022, 0.0
        %vm3171 = vcmp.gt.f32.partialorder %v3024, 0.0
        %vm3172 = vcmp.gt.f32.partialorder %v2237, 0.0
        %vm3173 = vcmp.gt.f32.partialorder %v2239, 0.0
        %vm3174 = vcmp.gt.f32.partialorder %v2350, 0.0
        %vm3175 = vcmp.gt.f32.partialorder %v2352, 0.0
        %vm3176 = vcmp.gt.f32.partialorder %v2463, 0.0
        %vm3177 = vcmp.gt.f32.partialorder %v2465, 0.0
        %vm3178 = vcmp.gt.f32.partialorder %v2576, 0.0
        %vm3179 = vcmp.gt.f32.partialorder %v2578, 0.0
        %vm3180 = vcmp.gt.f32.partialorder %v2689, 0.0
        %vm3181 = vcmp.gt.f32.partialorder %v2691, 0.0
        %vm3182 = vcmp.gt.f32.partialorder %v2802, 0.0
        %vm3183 = vcmp.gt.f32.partialorder %v2804, 0.0
        %vm3184 = vcmp.gt.f32.partialorder %v2915, 0.0
        %vm3185 = vcmp.gt.f32.partialorder %v2917, 0.0
        %vm3186 = vcmp.gt.f32.partialorder %v3028, 0.0
        %vm3187 = vcmp.gt.f32.partialorder %v3030, 0.0
        %vm3188 = vcmp.gt.f32.partialorder %v2241, 0.0
        %vm3189 = vcmp.gt.f32.partialorder %v2243, 0.0
        %vm3190 = vcmp.gt.f32.partialorder %v2354, 0.0
        %vm3191 = vcmp.gt.f32.partialorder %v2356, 0.0
        %vm3192 = vcmp.gt.f32.partialorder %v2467, 0.0
        %vm3193 = vcmp.gt.f32.partialorder %v2469, 0.0
        %vm3194 = vcmp.gt.f32.partialorder %v2580, 0.0
        %vm3195 = vcmp.gt.f32.partialorder %v2582, 0.0
        %vm3196 = vcmp.gt.f32.partialorder %v2693, 0.0
        %vm3197 = vcmp.gt.f32.partialorder %v2695, 0.0
        %vm3198 = vcmp.gt.f32.partialorder %v2806, 0.0
        %vm3199 = vcmp.gt.f32.partialorder %v2808, 0.0
        %vm3200 = vcmp.gt.f32.partialorder %v2919, 0.0
        %vm3201 = vcmp.gt.f32.partialorder %v2921, 0.0
        %vm3202 = vcmp.gt.f32.partialorder %v3032, 0.0
        %vm3203 = vcmp.gt.f32.partialorder %v3034, 0.0
        %vm3204 = vcmp.gt.f32.partialorder %v2247, 0.0
        %vm3205 = vcmp.gt.f32.partialorder %v2249, 0.0
        %vm3206 = vcmp.gt.f32.partialorder %v2360, 0.0
        %vm3207 = vcmp.gt.f32.partialorder %v2362, 0.0
        %vm3208 = vcmp.gt.f32.partialorder %v2473, 0.0
        %vm3209 = vcmp.gt.f32.partialorder %v2475, 0.0
        %vm3210 = vcmp.gt.f32.partialorder %v2586, 0.0
        %vm3211 = vcmp.gt.f32.partialorder %v2588, 0.0
        %vm3212 = vcmp.gt.f32.partialorder %v2699, 0.0
        %vm3213 = vcmp.gt.f32.partialorder %v2701, 0.0
        %vm3214 = vcmp.gt.f32.partialorder %v2812, 0.0
        %vm3215 = vcmp.gt.f32.partialorder %v2814, 0.0
        %vm3216 = vcmp.gt.f32.partialorder %v2925, 0.0
        %vm3217 = vcmp.gt.f32.partialorder %v2927, 0.0
        %vm3218 = vcmp.gt.f32.partialorder %v3038, 0.0
        %vm3219 = vcmp.gt.f32.partialorder %v3040, 0.0
        %vm3220 = vcmp.gt.f32.partialorder %v2251, 0.0
        %vm3221 = vcmp.gt.f32.partialorder %v2253, 0.0
        %vm3222 = vcmp.gt.f32.partialorder %v2364, 0.0
        %vm3223 = vcmp.gt.f32.partialorder %v2366, 0.0
        %vm3224 = vcmp.gt.f32.partialorder %v2477, 0.0
        %vm3225 = vcmp.gt.f32.partialorder %v2479, 0.0
        %vm3226 = vcmp.gt.f32.partialorder %v2590, 0.0
        %vm3227 = vcmp.gt.f32.partialorder %v2592, 0.0
        %vm3228 = vcmp.gt.f32.partialorder %v2703, 0.0
        %vm3229 = vcmp.gt.f32.partialorder %v2705, 0.0
        %vm3230 = vcmp.gt.f32.partialorder %v2816, 0.0
        %vm3231 = vcmp.gt.f32.partialorder %v2818, 0.0
        %vm3232 = vcmp.gt.f32.partialorder %v2929, 0.0
        %vm3233 = vcmp.gt.f32.partialorder %v2931, 0.0
        %vm3234 = vcmp.gt.f32.partialorder %v3042, 0.0
        %vm3235 = vcmp.gt.f32.partialorder %v3044, 0.0
        %vm3236 = vcmp.gt.f32.partialorder %v2257, 0.0
        %vm3237 = vcmp.gt.f32.partialorder %v2259, 0.0
        %vm3238 = vcmp.gt.f32.partialorder %v2370, 0.0
        %vm3239 = vcmp.gt.f32.partialorder %v2372, 0.0
        %vm3240 = vcmp.gt.f32.partialorder %v2483, 0.0
        %vm3241 = vcmp.gt.f32.partialorder %v2485, 0.0
        %vm3242 = vcmp.gt.f32.partialorder %v2596, 0.0
        %vm3243 = vcmp.gt.f32.partialorder %v2598, 0.0
        %vm3244 = vcmp.gt.f32.partialorder %v2709, 0.0
        %vm3245 = vcmp.gt.f32.partialorder %v2711, 0.0
        %vm3246 = vcmp.gt.f32.partialorder %v2822, 0.0
        %vm3247 = vcmp.gt.f32.partialorder %v2824, 0.0
        %vm3248 = vcmp.gt.f32.partialorder %v2935, 0.0
        %vm3249 = vcmp.gt.f32.partialorder %v2937, 0.0
        %vm3250 = vcmp.gt.f32.partialorder %v3048, 0.0
        %vm3251 = vcmp.gt.f32.partialorder %v3050, 0.0
        %vm3252 = vcmp.gt.f32.partialorder %v2261, 0.0
        %vm3253 = vcmp.gt.f32.partialorder %v2263, 0.0
        %vm3254 = vcmp.gt.f32.partialorder %v2374, 0.0
        %vm3255 = vcmp.gt.f32.partialorder %v2376, 0.0
        %vm3256 = vcmp.gt.f32.partialorder %v2487, 0.0
        %vm3257 = vcmp.gt.f32.partialorder %v2489, 0.0
        %vm3258 = vcmp.gt.f32.partialorder %v2600, 0.0
        %vm3259 = vcmp.gt.f32.partialorder %v2602, 0.0
        %vm3260 = vcmp.gt.f32.partialorder %v2713, 0.0
        %vm3261 = vcmp.gt.f32.partialorder %v2715, 0.0
        %vm3262 = vcmp.gt.f32.partialorder %v2826, 0.0
        %vm3263 = vcmp.gt.f32.partialorder %v2828, 0.0
        %vm3264 = vcmp.gt.f32.partialorder %v2939, 0.0
        %vm3265 = vcmp.gt.f32.partialorder %v2941, 0.0
        %vm3266 = vcmp.gt.f32.partialorder %v3052, 0.0
        %vm3267 = vcmp.gt.f32.partialorder %v3054, 0.0
        %vm3268 = vcmp.gt.f32.partialorder %v2267, 0.0
        %vm3269 = vcmp.gt.f32.partialorder %v2269, 0.0
        %vm3270 = vcmp.gt.f32.partialorder %v2380, 0.0
        %vm3271 = vcmp.gt.f32.partialorder %v2382, 0.0
        %vm3272 = vcmp.gt.f32.partialorder %v2493, 0.0
        %vm3273 = vcmp.gt.f32.partialorder %v2495, 0.0
        %vm3274 = vcmp.gt.f32.partialorder %v2606, 0.0
        %vm3275 = vcmp.gt.f32.partialorder %v2608, 0.0
        %vm3276 = vcmp.gt.f32.partialorder %v2719, 0.0
        %vm3277 = vcmp.gt.f32.partialorder %v2721, 0.0
        %vm3278 = vcmp.gt.f32.partialorder %v2832, 0.0
        %vm3279 = vcmp.gt.f32.partialorder %v2834, 0.0
        %vm3280 = vcmp.gt.f32.partialorder %v2945, 0.0
        %vm3281 = vcmp.gt.f32.partialorder %v2947, 0.0
        %vm3282 = vcmp.gt.f32.partialorder %v3058, 0.0
        %vm3283 = vcmp.gt.f32.partialorder %v3060, 0.0
        %vm3284 = vcmp.gt.f32.partialorder %v2271, 0.0
        %vm3285 = vcmp.gt.f32.partialorder %v2273, 0.0
        %vm3286 = vcmp.gt.f32.partialorder %v2384, 0.0
        %vm3287 = vcmp.gt.f32.partialorder %v2386, 0.0
        %vm3288 = vcmp.gt.f32.partialorder %v2497, 0.0
        %vm3289 = vcmp.gt.f32.partialorder %v2499, 0.0
        %vm3290 = vcmp.gt.f32.partialorder %v2610, 0.0
        %vm3291 = vcmp.gt.f32.partialorder %v2612, 0.0
        %vm3292 = vcmp.gt.f32.partialorder %v2723, 0.0
        %vm3293 = vcmp.gt.f32.partialorder %v2725, 0.0
        %vm3294 = vcmp.gt.f32.partialorder %v2836, 0.0
        %vm3295 = vcmp.gt.f32.partialorder %v2838, 0.0
        %vm3296 = vcmp.gt.f32.partialorder %v2949, 0.0
        %vm3297 = vcmp.gt.f32.partialorder %v2951, 0.0
        %vm3298 = vcmp.gt.f32.partialorder %v3062, 0.0
        %vm3299 = vcmp.gt.f32.partialorder %v3064, 0.0
        %vm3300 = vcmp.gt.f32.partialorder %v2277, 0.0
        %vm3301 = vcmp.gt.f32.partialorder %v2279, 0.0
        %vm3302 = vcmp.gt.f32.partialorder %v2390, 0.0
        %vm3303 = vcmp.gt.f32.partialorder %v2392, 0.0
        %vm3304 = vcmp.gt.f32.partialorder %v2503, 0.0
        %vm3305 = vcmp.gt.f32.partialorder %v2505, 0.0
        %vm3306 = vcmp.gt.f32.partialorder %v2616, 0.0
        %vm3307 = vcmp.gt.f32.partialorder %v2618, 0.0
        %vm3308 = vcmp.gt.f32.partialorder %v2729, 0.0
        %vm3309 = vcmp.gt.f32.partialorder %v2731, 0.0
        %vm3310 = vcmp.gt.f32.partialorder %v2842, 0.0
        %vm3311 = vcmp.gt.f32.partialorder %v2844, 0.0
        %vm3312 = vcmp.gt.f32.partialorder %v2955, 0.0
        %vm3313 = vcmp.gt.f32.partialorder %v2957, 0.0
        %vm3314 = vcmp.gt.f32.partialorder %v3068, 0.0
        %vm3315 = vcmp.gt.f32.partialorder %v3070, 0.0
        %vm3316 = vcmp.gt.f32.partialorder %v2281, 0.0
        %vm3317 = vcmp.gt.f32.partialorder %v2283, 0.0
        %vm3318 = vcmp.gt.f32.partialorder %v2394, 0.0
        %vm3319 = vcmp.gt.f32.partialorder %v2396, 0.0
        %vm3320 = vcmp.gt.f32.partialorder %v2507, 0.0
        %vm3321 = vcmp.gt.f32.partialorder %v2509, 0.0
        %vm3322 = vcmp.gt.f32.partialorder %v2620, 0.0
        %vm3323 = vcmp.gt.f32.partialorder %v2622, 0.0
        %vm3324 = vcmp.gt.f32.partialorder %v2733, 0.0
        %vm3325 = vcmp.gt.f32.partialorder %v2735, 0.0
        %vm3326 = vcmp.gt.f32.partialorder %v2846, 0.0
        %vm3327 = vcmp.gt.f32.partialorder %v2848, 0.0
        %vm3328 = vcmp.gt.f32.partialorder %v2959, 0.0
        %vm3329 = vcmp.gt.f32.partialorder %v2961, 0.0
        %vm3330 = vcmp.gt.f32.partialorder %v3072, 0.0
        %vm3331 = vcmp.gt.f32.partialorder %v3074, 0.0
        %v3332 = vmul.f32 %v2207, 0.01
        %v3333 = vmul.f32 %v2209, 0.01
        %v3334 = vmul.f32 %v2320, 0.01
        %v3335 = vmul.f32 %v2322, 0.01
        %v3336 = vmul.f32 %v2433, 0.01
        %v3337 = vmul.f32 %v2435, 0.01
        %v3338 = vmul.f32 %v2546, 0.01
        %v3339 = vmul.f32 %v2548, 0.01
        %v3340 = vmul.f32 %v2659, 0.01
        %v3341 = vmul.f32 %v2661, 0.01
        %v3342 = vmul.f32 %v2772, 0.01
        %v3343 = vmul.f32 %v2774, 0.01
        %v3344 = vmul.f32 %v2885, 0.01
        %v3345 = vmul.f32 %v2887, 0.01
        %v3346 = vmul.f32 %v2998, 0.01
        %v3347 = vmul.f32 %v3000, 0.01
        %v3348 = vmul.f32 %v2211, 0.01
        %v3349 = vmul.f32 %v2213, 0.01
        %v3350 = vmul.f32 %v2324, 0.01
        %v3351 = vmul.f32 %v2326, 0.01
        %v3352 = vmul.f32 %v2437, 0.01
        %v3353 = vmul.f32 %v2439, 0.01
        %v3354 = vmul.f32 %v2550, 0.01
        %v3355 = vmul.f32 %v2552, 0.01
        %v3356 = vmul.f32 %v2663, 0.01
        %v3357 = vmul.f32 %v2665, 0.01
        %v3358 = vmul.f32 %v2776, 0.01
        %v3359 = vmul.f32 %v2778, 0.01
        %v3360 = vmul.f32 %v2889, 0.01
        %v3361 = vmul.f32 %v2891, 0.01
        %v3362 = vmul.f32 %v3002, 0.01
        %v3363 = vmul.f32 %v3004, 0.01
        %v3364 = vmul.f32 %v2217, 0.01
        %v3365 = vmul.f32 %v2219, 0.01
        %v3366 = vmul.f32 %v2330, 0.01
        %v3367 = vmul.f32 %v2332, 0.01
        %v3368 = vmul.f32 %v2443, 0.01
        %v3369 = vmul.f32 %v2445, 0.01
        %v3370 = vmul.f32 %v2556, 0.01
        %v3371 = vmul.f32 %v2558, 0.01
        %v3372 = vmul.f32 %v2669, 0.01
        %v3373 = vmul.f32 %v2671, 0.01
        %v3374 = vmul.f32 %v2782, 0.01
        %v3375 = vmul.f32 %v2784, 0.01
        %v3376 = vmul.f32 %v2895, 0.01
        %v3377 = vmul.f32 %v2897, 0.01
        %v3378 = vmul.f32 %v3008, 0.01
        %v3379 = vmul.f32 %v3010, 0.01
        %v3380 = vmul.f32 %v2221, 0.01
        %v3381 = vmul.f32 %v2223, 0.01
        %v3382 = vmul.f32 %v2334, 0.01
        %v3383 = vmul.f32 %v2336, 0.01
        %v3384 = vmul.f32 %v2447, 0.01
        %v3385 = vmul.f32 %v2449, 0.01
        %v3386 = vmul.f32 %v2560, 0.01
        %v3387 = vmul.f32 %v2562, 0.01
        %v3388 = vmul.f32 %v2673, 0.01
        %v3389 = vmul.f32 %v2675, 0.01
        %v3390 = vmul.f32 %v2786, 0.01
        %v3391 = vmul.f32 %v2788, 0.01
        %v3392 = vmul.f32 %v2899, 0.01
        %v3393 = vmul.f32 %v2901, 0.01
        %v3394 = vmul.f32 %v3012, 0.01
        %v3395 = vmul.f32 %v3014, 0.01
        %v3396 = vmul.f32 %v2227, 0.01
        %v3397 = vmul.f32 %v2229, 0.01
        %v3398 = vmul.f32 %v2340, 0.01
        %v3399 = vmul.f32 %v2342, 0.01
        %v3400 = vmul.f32 %v2453, 0.01
        %v3401 = vmul.f32 %v2455, 0.01
        %v3402 = vmul.f32 %v2566, 0.01
        %v3403 = vmul.f32 %v2568, 0.01
        %v3404 = vmul.f32 %v2679, 0.01
        %v3405 = vmul.f32 %v2681, 0.01
        %v3406 = vmul.f32 %v2792, 0.01
        %v3407 = vmul.f32 %v2794, 0.01
        %v3408 = vmul.f32 %v2905, 0.01
        %v3409 = vmul.f32 %v2907, 0.01
        %v3410 = vmul.f32 %v3018, 0.01
        %v3411 = vmul.f32 %v3020, 0.01
        %v3412 = vmul.f32 %v2231, 0.01
        %v3413 = vmul.f32 %v2233, 0.01
        %v3414 = vmul.f32 %v2344, 0.01
        %v3415 = vmul.f32 %v2346, 0.01
        %v3416 = vmul.f32 %v2457, 0.01
        %v3417 = vmul.f32 %v2459, 0.01
        %v3418 = vmul.f32 %v2570, 0.01
        %v3419 = vmul.f32 %v2572, 0.01
        %v3420 = vmul.f32 %v2683, 0.01
        %v3421 = vmul.f32 %v2685, 0.01
        %v3422 = vmul.f32 %v2796, 0.01
        %v3423 = vmul.f32 %v2798, 0.01
        %v3424 = vmul.f32 %v2909, 0.01
        %v3425 = vmul.f32 %v2911, 0.01
        %v3426 = vmul.f32 %v3022, 0.01
        %v3427 = vmul.f32 %v3024, 0.01
        %v3428 = vmul.f32 %v2237, 0.01
        %v3429 = vmul.f32 %v2239, 0.01
        %v3430 = vmul.f32 %v2350, 0.01
        %v3431 = vmul.f32 %v2352, 0.01
        %v3432 = vmul.f32 %v2463, 0.01
        %v3433 = vmul.f32 %v2465, 0.01
        %v3434 = vmul.f32 %v2576, 0.01
        %v3435 = vmul.f32 %v2578, 0.01
        %v3436 = vmul.f32 %v2689, 0.01
        %v3437 = vmul.f32 %v2691, 0.01
        %v3438 = vmul.f32 %v2802, 0.01
        %v3439 = vmul.f32 %v2804, 0.01
        %v3440 = vmul.f32 %v2915, 0.01
        %v3441 = vmul.f32 %v2917, 0.01
        %v3442 = vmul.f32 %v3028, 0.01
        %v3443 = vmul.f32 %v3030, 0.01
        %v3444 = vmul.f32 %v2241, 0.01
        %v3445 = vmul.f32 %v2243, 0.01
        %v3446 = vmul.f32 %v2354, 0.01
        %v3447 = vmul.f32 %v2356, 0.01
        %v3448 = vmul.f32 %v2467, 0.01
        %v3449 = vmul.f32 %v2469, 0.01
        %v3450 = vmul.f32 %v2580, 0.01
        %v3451 = vmul.f32 %v2582, 0.01
        %v3452 = vmul.f32 %v2693, 0.01
        %v3453 = vmul.f32 %v2695, 0.01
        %v3454 = vmul.f32 %v2806, 0.01
        %v3455 = vmul.f32 %v2808, 0.01
        %v3456 = vmul.f32 %v2919, 0.01
        %v3457 = vmul.f32 %v2921, 0.01
        %v3458 = vmul.f32 %v3032, 0.01
        %v3459 = vmul.f32 %v3034, 0.01
        %v3460 = vmul.f32 %v2247, 0.01
        %v3461 = vmul.f32 %v2249, 0.01
        %v3462 = vmul.f32 %v2360, 0.01
        %v3463 = vmul.f32 %v2362, 0.01
        %v3464 = vmul.f32 %v2473, 0.01
        %v3465 = vmul.f32 %v2475, 0.01
        %v3466 = vmul.f32 %v2586, 0.01
        %v3467 = vmul.f32 %v2588, 0.01
        %v3468 = vmul.f32 %v2699, 0.01
        %v3469 = vmul.f32 %v2701, 0.01
        %v3470 = vmul.f32 %v2812, 0.01
        %v3471 = vmul.f32 %v2814, 0.01
        %v3472 = vmul.f32 %v2925, 0.01
        %v3473 = vmul.f32 %v2927, 0.01
        %v3474 = vmul.f32 %v3038, 0.01
        %v3475 = vmul.f32 %v3040, 0.01
        %v3476 = vmul.f32 %v2251, 0.01
        %v3477 = vmul.f32 %v2253, 0.01
        %v3478 = vmul.f32 %v2364, 0.01
        %v3479 = vmul.f32 %v2366, 0.01
        %v3480 = vmul.f32 %v2477, 0.01
        %v3481 = vmul.f32 %v2479, 0.01
        %v3482 = vmul.f32 %v2590, 0.01
        %v3483 = vmul.f32 %v2592, 0.01
        %v3484 = vmul.f32 %v2703, 0.01
        %v3485 = vmul.f32 %v2705, 0.01
        %v3486 = vmul.f32 %v2816, 0.01
        %v3487 = vmul.f32 %v2818, 0.01
        %v3488 = vmul.f32 %v2929, 0.01
        %v3489 = vmul.f32 %v2931, 0.01
        %v3490 = vmul.f32 %v3042, 0.01
        %v3491 = vmul.f32 %v3044, 0.01
        %v3492 = vmul.f32 %v2257, 0.01
        %v3493 = vmul.f32 %v2259, 0.01
        %v3494 = vmul.f32 %v2370, 0.01
        %v3495 = vmul.f32 %v2372, 0.01
        %v3496 = vmul.f32 %v2483, 0.01
        %v3497 = vmul.f32 %v2485, 0.01
        %v3498 = vmul.f32 %v2596, 0.01
        %v3499 = vmul.f32 %v2598, 0.01
        %v3500 = vmul.f32 %v2709, 0.01
        %v3501 = vmul.f32 %v2711, 0.01
        %v3502 = vmul.f32 %v2822, 0.01
        %v3503 = vmul.f32 %v2824, 0.01
        %v3504 = vmul.f32 %v2935, 0.01
        %v3505 = vmul.f32 %v2937, 0.01
        %v3506 = vmul.f32 %v3048, 0.01
        %v3507 = vmul.f32 %v3050, 0.01
        %v3508 = vmul.f32 %v2261, 0.01
        %v3509 = vmul.f32 %v2263, 0.01
        %v3510 = vmul.f32 %v2374, 0.01
        %v3511 = vmul.f32 %v2376, 0.01
        %v3512 = vmul.f32 %v2487, 0.01
        %v3513 = vmul.f32 %v2489, 0.01
        %v3514 = vmul.f32 %v2600, 0.01
        %v3515 = vmul.f32 %v2602, 0.01
        %v3516 = vmul.f32 %v2713, 0.01
        %v3517 = vmul.f32 %v2715, 0.01
        %v3518 = vmul.f32 %v2826, 0.01
        %v3519 = vmul.f32 %v2828, 0.01
        %v3520 = vmul.f32 %v2939, 0.01
        %v3521 = vmul.f32 %v2941, 0.01
        %v3522 = vmul.f32 %v3052, 0.01
        %v3523 = vmul.f32 %v3054, 0.01
        %v3524 = vmul.f32 %v2267, 0.01
        %v3525 = vmul.f32 %v2269, 0.01
        %v3526 = vmul.f32 %v2380, 0.01
        %v3527 = vmul.f32 %v2382, 0.01
        %v3528 = vmul.f32 %v2493, 0.01
        %v3529 = vmul.f32 %v2495, 0.01
        %v3530 = vmul.f32 %v2606, 0.01
        %v3531 = vmul.f32 %v2608, 0.01
        %v3532 = vmul.f32 %v2719, 0.01
        %v3533 = vmul.f32 %v2721, 0.01
        %v3534 = vmul.f32 %v2832, 0.01
        %v3535 = vmul.f32 %v2834, 0.01
        %v3536 = vmul.f32 %v2945, 0.01
        %v3537 = vmul.f32 %v2947, 0.01
        %v3538 = vmul.f32 %v3058, 0.01
        %v3539 = vmul.f32 %v3060, 0.01
        %v3540 = vmul.f32 %v2271, 0.01
        %v3541 = vmul.f32 %v2273, 0.01
        %v3542 = vmul.f32 %v2384, 0.01
        %v3543 = vmul.f32 %v2386, 0.01
        %v3544 = vmul.f32 %v2497, 0.01
        %v3545 = vmul.f32 %v2499, 0.01
        %v3546 = vmul.f32 %v2610, 0.01
        %v3547 = vmul.f32 %v2612, 0.01
        %v3548 = vmul.f32 %v2723, 0.01
        %v3549 = vmul.f32 %v2725, 0.01
        %v3550 = vmul.f32 %v2836, 0.01
        %v3551 = vmul.f32 %v2838, 0.01
        %v3552 = vmul.f32 %v2949, 0.01
        %v3553 = vmul.f32 %v2951, 0.01
        %v3554 = vmul.f32 %v3062, 0.01
        %v3555 = vmul.f32 %v3064, 0.01
        %v3556 = vmul.f32 %v2277, 0.01
        %v3557 = vmul.f32 %v2279, 0.01
        %v3558 = vmul.f32 %v2390, 0.01
        %v3559 = vmul.f32 %v2392, 0.01
        %v3560 = vmul.f32 %v2503, 0.01
        %v3561 = vmul.f32 %v2505, 0.01
        %v3562 = vmul.f32 %v2616, 0.01
        %v3563 = vmul.f32 %v2618, 0.01
        %v3564 = vmul.f32 %v2729, 0.01
        %v3565 = vmul.f32 %v2731, 0.01
        %v3566 = vmul.f32 %v2842, 0.01
        %v3567 = vmul.f32 %v2844, 0.01
        %v3568 = vmul.f32 %v2955, 0.01
        %v3569 = vmul.f32 %v2957, 0.01
        %v3570 = vmul.f32 %v3068, 0.01
        %v3571 = vmul.f32 %v3070, 0.01
        %v3572 = vmul.f32 %v2281, 0.01
        %v3573 = vmul.f32 %v2283, 0.01
        %v3574 = vmul.f32 %v2394, 0.01
        %v3575 = vmul.f32 %v2396, 0.01
        %v3576 = vmul.f32 %v2507, 0.01
        %v3577 = vmul.f32 %v2509, 0.01
        %v3578 = vmul.f32 %v2620, 0.01
        %v3579 = vmul.f32 %v2622, 0.01
        %v3580 = vmul.f32 %v2733, 0.01
        %v3581 = vmul.f32 %v2735, 0.01
        %v3582 = vmul.f32 %v2846, 0.01
        %v3583 = vmul.f32 %v2848, 0.01
        %v3584 = vmul.f32 %v2959, 0.01
        %v3585 = vmul.f32 %v2961, 0.01
        %v3586 = vmul.f32 %v3072, 0.01
        %v3587 = vmul.f32 %v3074, 0.01
        %v3588 = vsel %vm3076, %v2207, %v3332
        %v3589 = vsel %vm3077, %v2209, %v3333
        %v3590 = vsel %vm3078, %v2320, %v3334
        %v3591 = vsel %vm3079, %v2322, %v3335
        %v3592 = vsel %vm3080, %v2433, %v3336
        %v3593 = vsel %vm3081, %v2435, %v3337
        %v3594 = vsel %vm3082, %v2546, %v3338
        %v3595 = vsel %vm3083, %v2548, %v3339
        %v3596 = vsel %vm3084, %v2659, %v3340
        %v3597 = vsel %vm3085, %v2661, %v3341
        %v3598 = vsel %vm3086, %v2772, %v3342
        %v3599 = vsel %vm3087, %v2774, %v3343
        %v3600 = vsel %vm3088, %v2885, %v3344
        %v3601 = vsel %vm3089, %v2887, %v3345
        %v3602 = vsel %vm3090, %v2998, %v3346
        %v3603 = vsel %vm3091, %v3000, %v3347
        %v3604 = vsel %vm3092, %v2211, %v3348
        %v3605 = vsel %vm3093, %v2213, %v3349
        %v3606 = vsel %vm3094, %v2324, %v3350
        %v3607 = vsel %vm3095, %v2326, %v3351
        %v3608 = vsel %vm3096, %v2437, %v3352
        %v3609 = vsel %vm3097, %v2439, %v3353
        %v3610 = vsel %vm3098, %v2550, %v3354
        %v3611 = vsel %vm3099, %v2552, %v3355
        %v3612 = vsel %vm3100, %v2663, %v3356
        %v3613 = vsel %vm3101, %v2665, %v3357
        %v3614 = vsel %vm3102, %v2776, %v3358
        %v3615 = vsel %vm3103, %v2778, %v3359
        %v3616 = vsel %vm3104, %v2889, %v3360
        %v3617 = vsel %vm3105, %v2891, %v3361
        %v3618 = vsel %vm3106, %v3002, %v3362
        %v3619 = vsel %vm3107, %v3004, %v3363
        %v3620 = vsel %vm3108, %v2217, %v3364
        %v3621 = vsel %vm3109, %v2219, %v3365
        %v3622 = vsel %vm3110, %v2330, %v3366
        %v3623 = vsel %vm3111, %v2332, %v3367
        %v3624 = vsel %vm3112, %v2443, %v3368
        %v3625 = vsel %vm3113, %v2445, %v3369
        %v3626 = vsel %vm3114, %v2556, %v3370
        %v3627 = vsel %vm3115, %v2558, %v3371
        %v3628 = vsel %vm3116, %v2669, %v3372
        %v3629 = vsel %vm3117, %v2671, %v3373
        %v3630 = vsel %vm3118, %v2782, %v3374
        %v3631 = vsel %vm3119, %v2784, %v3375
        %v3632 = vsel %vm3120, %v2895, %v3376
        %v3633 = vsel %vm3121, %v2897, %v3377
        %v3634 = vsel %vm3122, %v3008, %v3378
        %v3635 = vsel %vm3123, %v3010, %v3379
        %v3636 = vsel %vm3124, %v2221, %v3380
        %v3637 = vsel %vm3125, %v2223, %v3381
        %v3638 = vsel %vm3126, %v2334, %v3382
        %v3639 = vsel %vm3127, %v2336, %v3383
        %v3640 = vsel %vm3128, %v2447, %v3384
        %v3641 = vsel %vm3129, %v2449, %v3385
        %v3642 = vsel %vm3130, %v2560, %v3386
        %v3643 = vsel %vm3131, %v2562, %v3387
        %v3644 = vsel %vm3132, %v2673, %v3388
        %v3645 = vsel %vm3133, %v2675, %v3389
        %v3646 = vsel %vm3134, %v2786, %v3390
        %v3647 = vsel %vm3135, %v2788, %v3391
        %v3648 = vsel %vm3136, %v2899, %v3392
        %v3649 = vsel %vm3137, %v2901, %v3393
        %v3650 = vsel %vm3138, %v3012, %v3394
        %v3651 = vsel %vm3139, %v3014, %v3395
        %v3652 = vsel %vm3140, %v2227, %v3396
        %v3653 = vsel %vm3141, %v2229, %v3397
        %v3654 = vsel %vm3142, %v2340, %v3398
        %v3655 = vsel %vm3143, %v2342, %v3399
        %v3656 = vsel %vm3144, %v2453, %v3400
        %v3657 = vsel %vm3145, %v2455, %v3401
        %v3658 = vsel %vm3146, %v2566, %v3402
        %v3659 = vsel %vm3147, %v2568, %v3403
        %v3660 = vsel %vm3148, %v2679, %v3404
        %v3661 = vsel %vm3149, %v2681, %v3405
        %v3662 = vsel %vm3150, %v2792, %v3406
        %v3663 = vsel %vm3151, %v2794, %v3407
        %v3664 = vsel %vm3152, %v2905, %v3408
        %v3665 = vsel %vm3153, %v2907, %v3409
        %v3666 = vsel %vm3154, %v3018, %v3410
        %v3667 = vsel %vm3155, %v3020, %v3411
        %v3668 = vsel %vm3156, %v2231, %v3412
        %v3669 = vsel %vm3157, %v2233, %v3413
        %v3670 = vsel %vm3158, %v2344, %v3414
        %v3671 = vsel %vm3159, %v2346, %v3415
        %v3672 = vsel %vm3160, %v2457, %v3416
        %v3673 = vsel %vm3161, %v2459, %v3417
        %v3674 = vsel %vm3162, %v2570, %v3418
        %v3675 = vsel %vm3163, %v2572, %v3419
        %v3676 = vsel %vm3164, %v2683, %v3420
        %v3677 = vsel %vm3165, %v2685, %v3421
        %v3678 = vsel %vm3166, %v2796, %v3422
        %v3679 = vsel %vm3167, %v2798, %v3423
        %v3680 = vsel %vm3168, %v2909, %v3424
        %v3681 = vsel %vm3169, %v2911, %v3425
        %v3682 = vsel %vm3170, %v3022, %v3426
        %v3683 = vsel %vm3171, %v3024, %v3427
        %v3684 = vsel %vm3172, %v2237, %v3428
        %v3685 = vsel %vm3173, %v2239, %v3429
        %v3686 = vsel %vm3174, %v2350, %v3430
        %v3687 = vsel %vm3175, %v2352, %v3431
        %v3688 = vsel %vm3176, %v2463, %v3432
        %v3689 = vsel %vm3177, %v2465, %v3433
        %v3690 = vsel %vm3178, %v2576, %v3434
        %v3691 = vsel %vm3179, %v2578, %v3435
        %v3692 = vsel %vm3180, %v2689, %v3436
        %v3693 = vsel %vm3181, %v2691, %v3437
        %v3694 = vsel %vm3182, %v2802, %v3438
        %v3695 = vsel %vm3183, %v2804, %v3439
        %v3696 = vsel %vm3184, %v2915, %v3440
        %v3697 = vsel %vm3185, %v2917, %v3441
        %v3698 = vsel %vm3186, %v3028, %v3442
        %v3699 = vsel %vm3187, %v3030, %v3443
        %v3700 = vsel %vm3188, %v2241, %v3444
        %v3701 = vsel %vm3189, %v2243, %v3445
        %v3702 = vsel %vm3190, %v2354, %v3446
        %v3703 = vsel %vm3191, %v2356, %v3447
        %v3704 = vsel %vm3192, %v2467, %v3448
        %v3705 = vsel %vm3193, %v2469, %v3449
        %v3706 = vsel %vm3194, %v2580, %v3450
        %v3707 = vsel %vm3195, %v2582, %v3451
        %v3708 = vsel %vm3196, %v2693, %v3452
        %v3709 = vsel %vm3197, %v2695, %v3453
        %v3710 = vsel %vm3198, %v2806, %v3454
        %v3711 = vsel %vm3199, %v2808, %v3455
        %v3712 = vsel %vm3200, %v2919, %v3456
        %v3713 = vsel %vm3201, %v2921, %v3457
        %v3714 = vsel %vm3202, %v3032, %v3458
        %v3715 = vsel %vm3203, %v3034, %v3459
        %v3716 = vsel %vm3204, %v2247, %v3460
        %v3717 = vsel %vm3205, %v2249, %v3461
        %v3718 = vsel %vm3206, %v2360, %v3462
        %v3719 = vsel %vm3207, %v2362, %v3463
        %v3720 = vsel %vm3208, %v2473, %v3464
        %v3721 = vsel %vm3209, %v2475, %v3465
        %v3722 = vsel %vm3210, %v2586, %v3466
        %v3723 = vsel %vm3211, %v2588, %v3467
        %v3724 = vsel %vm3212, %v2699, %v3468
        %v3725 = vsel %vm3213, %v2701, %v3469
        %v3726 = vsel %vm3214, %v2812, %v3470
        %v3727 = vsel %vm3215, %v2814, %v3471
        %v3728 = vsel %vm3216, %v2925, %v3472
        %v3729 = vsel %vm3217, %v2927, %v3473
        %v3730 = vsel %vm3218, %v3038, %v3474
        %v3731 = vsel %vm3219, %v3040, %v3475
        %v3732 = vsel %vm3220, %v2251, %v3476
        %v3733 = vsel %vm3221, %v2253, %v3477
        %v3734 = vsel %vm3222, %v2364, %v3478
        %v3735 = vsel %vm3223, %v2366, %v3479
        %v3736 = vsel %vm3224, %v2477, %v3480
        %v3737 = vsel %vm3225, %v2479, %v3481
        %v3738 = vsel %vm3226, %v2590, %v3482
        %v3739 = vsel %vm3227, %v2592, %v3483
        %v3740 = vsel %vm3228, %v2703, %v3484
        %v3741 = vsel %vm3229, %v2705, %v3485
        %v3742 = vsel %vm3230, %v2816, %v3486
        %v3743 = vsel %vm3231, %v2818, %v3487
        %v3744 = vsel %vm3232, %v2929, %v3488
        %v3745 = vsel %vm3233, %v2931, %v3489
        %v3746 = vsel %vm3234, %v3042, %v3490
        %v3747 = vsel %vm3235, %v3044, %v3491
        %v3748 = vsel %vm3236, %v2257, %v3492
        %v3749 = vsel %vm3237, %v2259, %v3493
        %v3750 = vsel %vm3238, %v2370, %v3494
        %v3751 = vsel %vm3239, %v2372, %v3495
        %v3752 = vsel %vm3240, %v2483, %v3496
        %v3753 = vsel %vm3241, %v2485, %v3497
        %v3754 = vsel %vm3242, %v2596, %v3498
        %v3755 = vsel %vm3243, %v2598, %v3499
        %v3756 = vsel %vm3244, %v2709, %v3500
        %v3757 = vsel %vm3245, %v2711, %v3501
        %v3758 = vsel %vm3246, %v2822, %v3502
        %v3759 = vsel %vm3247, %v2824, %v3503
        %v3760 = vsel %vm3248, %v2935, %v3504
        %v3761 = vsel %vm3249, %v2937, %v3505
        %v3762 = vsel %vm3250, %v3048, %v3506
        %v3763 = vsel %vm3251, %v3050, %v3507
        %v3764 = vsel %vm3252, %v2261, %v3508
        %v3765 = vsel %vm3253, %v2263, %v3509
        %v3766 = vsel %vm3254, %v2374, %v3510
        %v3767 = vsel %vm3255, %v2376, %v3511
        %v3768 = vsel %vm3256, %v2487, %v3512
        %v3769 = vsel %vm3257, %v2489, %v3513
        %v3770 = vsel %vm3258, %v2600, %v3514
        %v3771 = vsel %vm3259, %v2602, %v3515
        %v3772 = vsel %vm3260, %v2713, %v3516
        %v3773 = vsel %vm3261, %v2715, %v3517
        %v3774 = vsel %vm3262, %v2826, %v3518
        %v3775 = vsel %vm3263, %v2828, %v3519
        %v3776 = vsel %vm3264, %v2939, %v3520
        %v3777 = vsel %vm3265, %v2941, %v3521
        %v3778 = vsel %vm3266, %v3052, %v3522
        %v3779 = vsel %vm3267, %v3054, %v3523
        %v3780 = vsel %vm3268, %v2267, %v3524
        %v3781 = vsel %vm3269, %v2269, %v3525
        %v3782 = vsel %vm3270, %v2380, %v3526
        %v3783 = vsel %vm3271, %v2382, %v3527
        %v3784 = vsel %vm3272, %v2493, %v3528
        %v3785 = vsel %vm3273, %v2495, %v3529
        %v3786 = vsel %vm3274, %v2606, %v3530
        %v3787 = vsel %vm3275, %v2608, %v3531
        %v3788 = vsel %vm3276, %v2719, %v3532
        %v3789 = vsel %vm3277, %v2721, %v3533
        %v3790 = vsel %vm3278, %v2832, %v3534
        %v3791 = vsel %vm3279, %v2834, %v3535
        %v3792 = vsel %vm3280, %v2945, %v3536
        %v3793 = vsel %vm3281, %v2947, %v3537
        %v3794 = vsel %vm3282, %v3058, %v3538
        %v3795 = vsel %vm3283, %v3060, %v3539
        %v3796 = vsel %vm3284, %v2271, %v3540
        %v3797 = vsel %vm3285, %v2273, %v3541
        %v3798 = vsel %vm3286, %v2384, %v3542
        %v3799 = vsel %vm3287, %v2386, %v3543
        %v3800 = vsel %vm3288, %v2497, %v3544
        %v3801 = vsel %vm3289, %v2499, %v3545
        %v3802 = vsel %vm3290, %v2610, %v3546
        %v3803 = vsel %vm3291, %v2612, %v3547
        %v3804 = vsel %vm3292, %v2723, %v3548
        %v3805 = vsel %vm3293, %v2725, %v3549
        %v3806 = vsel %vm3294, %v2836, %v3550
        %v3807 = vsel %vm3295, %v2838, %v3551
        %v3808 = vsel %vm3296, %v2949, %v3552
        %v3809 = vsel %vm3297, %v2951, %v3553
        %v3810 = vsel %vm3298, %v3062, %v3554
        %v3811 = vsel %vm3299, %v3064, %v3555
        %v3812 = vsel %vm3300, %v2277, %v3556
        %v3813 = vsel %vm3301, %v2279, %v3557
        %v3814 = vsel %vm3302, %v2390, %v3558
        %v3815 = vsel %vm3303, %v2392, %v3559
        %v3816 = vsel %vm3304, %v2503, %v3560
        %v3817 = vsel %vm3305, %v2505, %v3561
        %v3818 = vsel %vm3306, %v2616, %v3562
        %v3819 = vsel %vm3307, %v2618, %v3563
        %v3820 = vsel %vm3308, %v2729, %v3564
        %v3821 = vsel %vm3309, %v2731, %v3565
        %v3822 = vsel %vm3310, %v2842, %v3566
        %v3823 = vsel %vm3311, %v2844, %v3567
        %v3824 = vsel %vm3312, %v2955, %v3568
        %v3825 = vsel %vm3313, %v2957, %v3569
        %v3826 = vsel %vm3314, %v3068, %v3570
        %v3827 = vsel %vm3315, %v3070, %v3571
        %v3828 = vsel %vm3316, %v2281, %v3572
        %v3829 = vsel %vm3317, %v2283, %v3573
        %v3830 = vsel %vm3318, %v2394, %v3574
        %v3831 = vsel %vm3319, %v2396, %v3575
        %v3832 = vsel %vm3320, %v2507, %v3576
        %v3833 = vsel %vm3321, %v2509, %v3577
        %v3834 = vsel %vm3322, %v2620, %v3578
        %v3835 = vsel %vm3323, %v2622, %v3579
        %v3836 = vsel %vm3324, %v2733, %v3580
        %v3837 = vsel %vm3325, %v2735, %v3581
        %v3838 = vsel %vm3326, %v2846, %v3582
        %v3839 = vsel %vm3327, %v2848, %v3583
        %v3840 = vsel %vm3328, %v2959, %v3584
        %v3841 = vsel %vm3329, %v2961, %v3585
        %v3842 = vsel %vm3330, %v3072, %v3586
        %v3843 = vsel %vm3331, %v3074, %v3587
        %v3844 = vpack.c.bf16 %v3604, %v3588
        %v3845 = vpack.c.bf16 %v3605, %v3589
        %v3846 = vpack.c.bf16 %v3606, %v3590
        %v3847 = vpack.c.bf16 %v3607, %v3591
        %v3848 = vpack.c.bf16 %v3608, %v3592
        %v3849 = vpack.c.bf16 %v3609, %v3593
        %v3850 = vpack.c.bf16 %v3610, %v3594
        %v3851 = vpack.c.bf16 %v3611, %v3595
        %v3852 = vpack.c.bf16 %v3612, %v3596
        %v3853 = vpack.c.bf16 %v3613, %v3597
        %v3854 = vpack.c.bf16 %v3614, %v3598
        %v3855 = vpack.c.bf16 %v3615, %v3599
        %v3856 = vpack.c.bf16 %v3616, %v3600
        %v3857 = vpack.c.bf16 %v3617, %v3601
        %v3858 = vpack.c.bf16 %v3618, %v3602
        %v3859 = vpack.c.bf16 %v3619, %v3603
        %v3860 = vpack.c.bf16 %v3636, %v3620
        %v3861 = vpack.c.bf16 %v3637, %v3621
        %v3862 = vpack.c.bf16 %v3638, %v3622
        %v3863 = vpack.c.bf16 %v3639, %v3623
        %v3864 = vpack.c.bf16 %v3640, %v3624
        %v3865 = vpack.c.bf16 %v3641, %v3625
        %v3866 = vpack.c.bf16 %v3642, %v3626
        %v3867 = vpack.c.bf16 %v3643, %v3627
        %v3868 = vpack.c.bf16 %v3644, %v3628
        %v3869 = vpack.c.bf16 %v3645, %v3629
        %v3870 = vpack.c.bf16 %v3646, %v3630
        %v3871 = vpack.c.bf16 %v3647, %v3631
        %v3872 = vpack.c.bf16 %v3648, %v3632
        %v3873 = vpack.c.bf16 %v3649, %v3633
        %v3874 = vpack.c.bf16 %v3650, %v3634
        %v3875 = vpack.c.bf16 %v3651, %v3635
        %v3876 = vpack.c.bf16 %v3668, %v3652
        %v3877 = vpack.c.bf16 %v3669, %v3653
        %v3878 = vpack.c.bf16 %v3670, %v3654
        %v3879 = vpack.c.bf16 %v3671, %v3655
        %v3880 = vpack.c.bf16 %v3672, %v3656
        %v3881 = vpack.c.bf16 %v3673, %v3657
        %v3882 = vpack.c.bf16 %v3674, %v3658
        %v3883 = vpack.c.bf16 %v3675, %v3659
        %v3884 = vpack.c.bf16 %v3676, %v3660
        %v3885 = vpack.c.bf16 %v3677, %v3661
        %v3886 = vpack.c.bf16 %v3678, %v3662
        %v3887 = vpack.c.bf16 %v3679, %v3663
        %v3888 = vpack.c.bf16 %v3680, %v3664
        %v3889 = vpack.c.bf16 %v3681, %v3665
        %v3890 = vpack.c.bf16 %v3682, %v3666
        %v3891 = vpack.c.bf16 %v3683, %v3667
        %v3892 = vpack.c.bf16 %v3700, %v3684
        %v3893 = vpack.c.bf16 %v3701, %v3685
        %v3894 = vpack.c.bf16 %v3702, %v3686
        %v3895 = vpack.c.bf16 %v3703, %v3687
        %v3896 = vpack.c.bf16 %v3704, %v3688
        %v3897 = vpack.c.bf16 %v3705, %v3689
        %v3898 = vpack.c.bf16 %v3706, %v3690
        %v3899 = vpack.c.bf16 %v3707, %v3691
        %v3900 = vpack.c.bf16 %v3708, %v3692
        %v3901 = vpack.c.bf16 %v3709, %v3693
        %v3902 = vpack.c.bf16 %v3710, %v3694
        %v3903 = vpack.c.bf16 %v3711, %v3695
        %v3904 = vpack.c.bf16 %v3712, %v3696
        %v3905 = vpack.c.bf16 %v3713, %v3697
        %v3906 = vpack.c.bf16 %v3714, %v3698
        %v3907 = vpack.c.bf16 %v3715, %v3699
        %v3908 = vpack.c.bf16 %v3732, %v3716
        %v3909 = vpack.c.bf16 %v3733, %v3717
        %v3910 = vpack.c.bf16 %v3734, %v3718
        %v3911 = vpack.c.bf16 %v3735, %v3719
        %v3912 = vpack.c.bf16 %v3736, %v3720
        %v3913 = vpack.c.bf16 %v3737, %v3721
        %v3914 = vpack.c.bf16 %v3738, %v3722
        %v3915 = vpack.c.bf16 %v3739, %v3723
        %v3916 = vpack.c.bf16 %v3740, %v3724
        %v3917 = vpack.c.bf16 %v3741, %v3725
        %v3918 = vpack.c.bf16 %v3742, %v3726
        %v3919 = vpack.c.bf16 %v3743, %v3727
        %v3920 = vpack.c.bf16 %v3744, %v3728
        %v3921 = vpack.c.bf16 %v3745, %v3729
        %v3922 = vpack.c.bf16 %v3746, %v3730
        %v3923 = vpack.c.bf16 %v3747, %v3731
        %v3924 = vpack.c.bf16 %v3764, %v3748
        %v3925 = vpack.c.bf16 %v3765, %v3749
        %v3926 = vpack.c.bf16 %v3766, %v3750
        %v3927 = vpack.c.bf16 %v3767, %v3751
        %v3928 = vpack.c.bf16 %v3768, %v3752
        %v3929 = vpack.c.bf16 %v3769, %v3753
        %v3930 = vpack.c.bf16 %v3770, %v3754
        %v3931 = vpack.c.bf16 %v3771, %v3755
        %v3932 = vpack.c.bf16 %v3772, %v3756
        %v3933 = vpack.c.bf16 %v3773, %v3757
        %v3934 = vpack.c.bf16 %v3774, %v3758
        %v3935 = vpack.c.bf16 %v3775, %v3759
        %v3936 = vpack.c.bf16 %v3776, %v3760
        %v3937 = vpack.c.bf16 %v3777, %v3761
        %v3938 = vpack.c.bf16 %v3778, %v3762
        %v3939 = vpack.c.bf16 %v3779, %v3763
        %v3940 = vpack.c.bf16 %v3796, %v3780
        %v3941 = vpack.c.bf16 %v3797, %v3781
        %v3942 = vpack.c.bf16 %v3798, %v3782
        %v3943 = vpack.c.bf16 %v3799, %v3783
        %v3944 = vpack.c.bf16 %v3800, %v3784
        %v3945 = vpack.c.bf16 %v3801, %v3785
        %v3946 = vpack.c.bf16 %v3802, %v3786
        %v3947 = vpack.c.bf16 %v3803, %v3787
        %v3948 = vpack.c.bf16 %v3804, %v3788
        %v3949 = vpack.c.bf16 %v3805, %v3789
        %v3950 = vpack.c.bf16 %v3806, %v3790
        %v3951 = vpack.c.bf16 %v3807, %v3791
        %v3952 = vpack.c.bf16 %v3808, %v3792
        %v3953 = vpack.c.bf16 %v3809, %v3793
        %v3954 = vpack.c.bf16 %v3810, %v3794
        %v3955 = vpack.c.bf16 %v3811, %v3795
        %v3956 = vpack.c.bf16 %v3828, %v3812
        %v3957 = vpack.c.bf16 %v3829, %v3813
        %v3958 = vpack.c.bf16 %v3830, %v3814
        %v3959 = vpack.c.bf16 %v3831, %v3815
        %v3960 = vpack.c.bf16 %v3832, %v3816
        %v3961 = vpack.c.bf16 %v3833, %v3817
        %v3962 = vpack.c.bf16 %v3834, %v3818
        %v3963 = vpack.c.bf16 %v3835, %v3819
        %v3964 = vpack.c.bf16 %v3836, %v3820
        %v3965 = vpack.c.bf16 %v3837, %v3821
        %v3966 = vpack.c.bf16 %v3838, %v3822
        %v3967 = vpack.c.bf16 %v3839, %v3823
        %v3968 = vpack.c.bf16 %v3840, %v3824
        %v3969 = vpack.c.bf16 %v3841, %v3825
        %v3970 = vpack.c.bf16 %v3842, %v3826
        %v3971 = vpack.c.bf16 %v3843, %v3827
        %v3972 = vld [vmem:[#allocation7] sm:$0xff]
        %v3973 = vld [vmem:[#allocation7 + $0x8] sm:$0xff]
        %v3974 = vld [vmem:[#allocation7 + $0x10] sm:$0xff]
        %v3975 = vld [vmem:[#allocation7 + $0x18] sm:$0xff]
        %v3976 = vld [vmem:[#allocation7 + $0x20] sm:$0xff]
        %v3977 = vld [vmem:[#allocation7 + $0x28] sm:$0xff]
        %v3978 = vld [vmem:[#allocation7 + $0x30] sm:$0xff]
        %v3979 = vld [vmem:[#allocation7 + $0x38] sm:$0xff]
        %v3980 = vld [vmem:[#allocation7 + $0x40] sm:$0xff]
        %v3981 = vld [vmem:[#allocation7 + $0x48] sm:$0xff]
        %v3982 = vld [vmem:[#allocation7 + $0x50] sm:$0xff]
        %v3983 = vld [vmem:[#allocation7 + $0x58] sm:$0xff]
        %v3984 = vld [vmem:[#allocation7 + $0x60] sm:$0xff]
        %v3985 = vld [vmem:[#allocation7 + $0x68] sm:$0xff]
        %v3986 = vld [vmem:[#allocation7 + $0x70] sm:$0xff]
        %v3987 = vld [vmem:[#allocation7 + $0x78] sm:$0xff]
        %v3988 = vld [vmem:[#allocation7 + $0x80] sm:$0xff]
        %v3989 = vld [vmem:[#allocation7 + $0x88] sm:$0xff]
        %v3990 = vld [vmem:[#allocation7 + $0x90] sm:$0xff]
        %v3991 = vld [vmem:[#allocation7 + $0x98] sm:$0xff]
        %v3992 = vld [vmem:[#allocation7 + $0xa0] sm:$0xff]
        %v3993 = vld [vmem:[#allocation7 + $0xa8] sm:$0xff]
        %v3994 = vld [vmem:[#allocation7 + $0xb0] sm:$0xff]
        %v3995 = vld [vmem:[#allocation7 + $0xb8] sm:$0xff]
        %v3996 = vld [vmem:[#allocation7 + $0xc0] sm:$0xff]
        %v3997 = vld [vmem:[#allocation7 + $0xc8] sm:$0xff]
        %v3998 = vld [vmem:[#allocation7 + $0xd0] sm:$0xff]
        %v3999 = vld [vmem:[#allocation7 + $0xd8] sm:$0xff]
        %v4000 = vld [vmem:[#allocation7 + $0xe0] sm:$0xff]
        %v4001 = vld [vmem:[#allocation7 + $0xe8] sm:$0xff]
        %v4002 = vld [vmem:[#allocation7 + $0xf0] sm:$0xff]
        %v4003 = vld [vmem:[#allocation7 + $0xf8] sm:$0xff]
        %v4004 = vld [vmem:[#allocation7 + $0x100] sm:$0xff]
        %v4005 = vld [vmem:[#allocation7 + $0x108] sm:$0xff]
        %v4006 = vld [vmem:[#allocation7 + $0x110] sm:$0xff]
        %v4007 = vld [vmem:[#allocation7 + $0x118] sm:$0xff]
        %v4008 = vld [vmem:[#allocation7 + $0x120] sm:$0xff]
        %v4009 = vld [vmem:[#allocation7 + $0x128] sm:$0xff]
        %v4010 = vld [vmem:[#allocation7 + $0x130] sm:$0xff]
        %v4011 = vld [vmem:[#allocation7 + $0x138] sm:$0xff]
        %v4012 = vld [vmem:[#allocation7 + $0x140] sm:$0xff]
        %v4013 = vld [vmem:[#allocation7 + $0x148] sm:$0xff]
        %v4014 = vld [vmem:[#allocation7 + $0x150] sm:$0xff]
        %v4015 = vld [vmem:[#allocation7 + $0x158] sm:$0xff]
        %v4016 = vld [vmem:[#allocation7 + $0x160] sm:$0xff]
        %v4017 = vld [vmem:[#allocation7 + $0x168] sm:$0xff]
        %v4018 = vld [vmem:[#allocation7 + $0x170] sm:$0xff]
        %v4019 = vld [vmem:[#allocation7 + $0x178] sm:$0xff]
        %v4020 = vld [vmem:[#allocation7 + $0x180] sm:$0xff]
        %v4021 = vld [vmem:[#allocation7 + $0x188] sm:$0xff]
        %v4022 = vld [vmem:[#allocation7 + $0x190] sm:$0xff]
        %v4023 = vld [vmem:[#allocation7 + $0x198] sm:$0xff]
        %v4024 = vld [vmem:[#allocation7 + $0x1a0] sm:$0xff]
        %v4025 = vld [vmem:[#allocation7 + $0x1a8] sm:$0xff]
        %v4026 = vld [vmem:[#allocation7 + $0x1b0] sm:$0xff]
        %v4027 = vld [vmem:[#allocation7 + $0x1b8] sm:$0xff]
        %v4028 = vld [vmem:[#allocation7 + $0x1c0] sm:$0xff]
        %v4029 = vld [vmem:[#allocation7 + $0x1c8] sm:$0xff]
        %v4030 = vld [vmem:[#allocation7 + $0x1d0] sm:$0xff]
        %v4031 = vld [vmem:[#allocation7 + $0x1d8] sm:$0xff]
        %v4032 = vld [vmem:[#allocation7 + $0x1e0] sm:$0xff]
        %v4033 = vld [vmem:[#allocation7 + $0x1e8] sm:$0xff]
        %v4034 = vld [vmem:[#allocation7 + $0x1f0] sm:$0xff]
        %v4035 = vld [vmem:[#allocation7 + $0x1f8] sm:$0xff]
        %v4036 = vld [vmem:[#allocation7 + $0x200] sm:$0xff]
        %v4037 = vld [vmem:[#allocation7 + $0x208] sm:$0xff]
        %v4038 = vld [vmem:[#allocation7 + $0x210] sm:$0xff]
        %v4039 = vld [vmem:[#allocation7 + $0x218] sm:$0xff]
        %v4040 = vld [vmem:[#allocation7 + $0x220] sm:$0xff]
        %v4041 = vld [vmem:[#allocation7 + $0x228] sm:$0xff]
        %v4042 = vld [vmem:[#allocation7 + $0x230] sm:$0xff]
        %v4043 = vld [vmem:[#allocation7 + $0x238] sm:$0xff]
        %v4044 = vld [vmem:[#allocation7 + $0x240] sm:$0xff]
        %v4045 = vld [vmem:[#allocation7 + $0x248] sm:$0xff]
        %v4046 = vld [vmem:[#allocation7 + $0x250] sm:$0xff]
        %v4047 = vld [vmem:[#allocation7 + $0x258] sm:$0xff]
        %v4048 = vld [vmem:[#allocation7 + $0x260] sm:$0xff]
        %v4049 = vld [vmem:[#allocation7 + $0x268] sm:$0xff]
        %v4050 = vld [vmem:[#allocation7 + $0x270] sm:$0xff]
        %v4051 = vld [vmem:[#allocation7 + $0x278] sm:$0xff]
        %v4052 = vld [vmem:[#allocation7 + $0x280] sm:$0xff]
        %v4053 = vld [vmem:[#allocation7 + $0x288] sm:$0xff]
        %v4054 = vld [vmem:[#allocation7 + $0x290] sm:$0xff]
        %v4055 = vld [vmem:[#allocation7 + $0x298] sm:$0xff]
        %v4056 = vld [vmem:[#allocation7 + $0x2a0] sm:$0xff]
        %v4057 = vld [vmem:[#allocation7 + $0x2a8] sm:$0xff]
        %v4058 = vld [vmem:[#allocation7 + $0x2b0] sm:$0xff]
        %v4059 = vld [vmem:[#allocation7 + $0x2b8] sm:$0xff]
        %v4060 = vld [vmem:[#allocation7 + $0x2c0] sm:$0xff]
        %v4061 = vld [vmem:[#allocation7 + $0x2c8] sm:$0xff]
        %v4062 = vld [vmem:[#allocation7 + $0x2d0] sm:$0xff]
        %v4063 = vld [vmem:[#allocation7 + $0x2d8] sm:$0xff]
        %v4064 = vld [vmem:[#allocation7 + $0x2e0] sm:$0xff]
        %v4065 = vld [vmem:[#allocation7 + $0x2e8] sm:$0xff]
        %v4066 = vld [vmem:[#allocation7 + $0x2f0] sm:$0xff]
        %v4067 = vld [vmem:[#allocation7 + $0x2f8] sm:$0xff]
        %v4068 = vld [vmem:[#allocation7 + $0x300] sm:$0xff]
        %v4069 = vld [vmem:[#allocation7 + $0x308] sm:$0xff]
        %v4070 = vld [vmem:[#allocation7 + $0x310] sm:$0xff]
        %v4071 = vld [vmem:[#allocation7 + $0x318] sm:$0xff]
        %v4072 = vld [vmem:[#allocation7 + $0x320] sm:$0xff]
        %v4073 = vld [vmem:[#allocation7 + $0x328] sm:$0xff]
        %v4074 = vld [vmem:[#allocation7 + $0x330] sm:$0xff]
        %v4075 = vld [vmem:[#allocation7 + $0x338] sm:$0xff]
        %v4076 = vld [vmem:[#allocation7 + $0x340] sm:$0xff]
        %v4077 = vld [vmem:[#allocation7 + $0x348] sm:$0xff]
        %v4078 = vld [vmem:[#allocation7 + $0x350] sm:$0xff]
        %v4079 = vld [vmem:[#allocation7 + $0x358] sm:$0xff]
        %v4080 = vld [vmem:[#allocation7 + $0x360] sm:$0xff]
        %v4081 = vld [vmem:[#allocation7 + $0x368] sm:$0xff]
        %v4082 = vld [vmem:[#allocation7 + $0x370] sm:$0xff]
        %v4083 = vld [vmem:[#allocation7 + $0x378] sm:$0xff]
        %v4084 = vld [vmem:[#allocation7 + $0x380] sm:$0xff]
        %v4085 = vld [vmem:[#allocation7 + $0x388] sm:$0xff]
        %v4086 = vld [vmem:[#allocation7 + $0x390] sm:$0xff]
        %v4087 = vld [vmem:[#allocation7 + $0x398] sm:$0xff]
        %v4088 = vld [vmem:[#allocation7 + $0x3a0] sm:$0xff]
        %v4089 = vld [vmem:[#allocation7 + $0x3a8] sm:$0xff]
        %v4090 = vld [vmem:[#allocation7 + $0x3b0] sm:$0xff]
        %v4091 = vld [vmem:[#allocation7 + $0x3b8] sm:$0xff]
        %v4092 = vld [vmem:[#allocation7 + $0x3c0] sm:$0xff]
        %v4093 = vld [vmem:[#allocation7 + $0x3c8] sm:$0xff]
        %v4094 = vld [vmem:[#allocation7 + $0x3d0] sm:$0xff]
        %v4095 = vld [vmem:[#allocation7 + $0x3d8] sm:$0xff]
        %v4096 = vld [vmem:[#allocation7 + $0x3e0] sm:$0xff]
        %v4097 = vld [vmem:[#allocation7 + $0x3e8] sm:$0xff]
        %v4098 = vld [vmem:[#allocation7 + $0x3f0] sm:$0xff]
        %v4099 = vld [vmem:[#allocation7 + $0x3f8] sm:$0xff]
        %v4100 = vld [vmem:[#allocation7 + $0x400] sm:$0xff]
        %v4101 = vld [vmem:[#allocation7 + $0x408] sm:$0xff]
        %v4102 = vld [vmem:[#allocation7 + $0x410] sm:$0xff]
        %v4103 = vld [vmem:[#allocation7 + $0x418] sm:$0xff]
        %v4104 = vld [vmem:[#allocation7 + $0x420] sm:$0xff]
        %v4105 = vld [vmem:[#allocation7 + $0x428] sm:$0xff]
        %v4106 = vld [vmem:[#allocation7 + $0x430] sm:$0xff]
        %v4107 = vld [vmem:[#allocation7 + $0x438] sm:$0xff]
        %v4108 = vld [vmem:[#allocation7 + $0x440] sm:$0xff]
        %v4109 = vld [vmem:[#allocation7 + $0x448] sm:$0xff]
        %v4110 = vld [vmem:[#allocation7 + $0x450] sm:$0xff]
        %v4111 = vld [vmem:[#allocation7 + $0x458] sm:$0xff]
        %v4112 = vld [vmem:[#allocation7 + $0x460] sm:$0xff]
        %v4113 = vld [vmem:[#allocation7 + $0x468] sm:$0xff]
        %v4114 = vld [vmem:[#allocation7 + $0x470] sm:$0xff]
        %v4115 = vld [vmem:[#allocation7 + $0x478] sm:$0xff]
        %v4116 = vld [vmem:[#allocation7 + $0x480] sm:$0xff]
        %v4117 = vld [vmem:[#allocation7 + $0x488] sm:$0xff]
        %v4118 = vld [vmem:[#allocation7 + $0x490] sm:$0xff]
        %v4119 = vld [vmem:[#allocation7 + $0x498] sm:$0xff]
        %v4120 = vld [vmem:[#allocation7 + $0x4a0] sm:$0xff]
        %v4121 = vld [vmem:[#allocation7 + $0x4a8] sm:$0xff]
        %v4122 = vld [vmem:[#allocation7 + $0x4b0] sm:$0xff]
        %v4123 = vld [vmem:[#allocation7 + $0x4b8] sm:$0xff]
        %v4124 = vld [vmem:[#allocation7 + $0x4c0] sm:$0xff]
        %v4125 = vld [vmem:[#allocation7 + $0x4c8] sm:$0xff]
        %v4126 = vld [vmem:[#allocation7 + $0x4d0] sm:$0xff]
        %v4127 = vld [vmem:[#allocation7 + $0x4d8] sm:$0xff]
        %v4128 = vld [vmem:[#allocation7 + $0x4e0] sm:$0xff]
        %v4129 = vld [vmem:[#allocation7 + $0x4e8] sm:$0xff]
        %v4130 = vld [vmem:[#allocation7 + $0x4f0] sm:$0xff]
        %v4131 = vld [vmem:[#allocation7 + $0x4f8] sm:$0xff]
        %v4132 = vld [vmem:[#allocation7 + $0x500] sm:$0xff]
        %v4133 = vld [vmem:[#allocation7 + $0x508] sm:$0xff]
        %v4134 = vld [vmem:[#allocation7 + $0x510] sm:$0xff]
        %v4135 = vld [vmem:[#allocation7 + $0x518] sm:$0xff]
        %v4136 = vld [vmem:[#allocation7 + $0x520] sm:$0xff]
        %v4137 = vld [vmem:[#allocation7 + $0x528] sm:$0xff]
        %v4138 = vld [vmem:[#allocation7 + $0x530] sm:$0xff]
        %v4139 = vld [vmem:[#allocation7 + $0x538] sm:$0xff]
        %v4140 = vld [vmem:[#allocation7 + $0x540] sm:$0xff]
        %v4141 = vld [vmem:[#allocation7 + $0x548] sm:$0xff]
        %v4142 = vld [vmem:[#allocation7 + $0x550] sm:$0xff]
        %v4143 = vld [vmem:[#allocation7 + $0x558] sm:$0xff]
        %v4144 = vld [vmem:[#allocation7 + $0x560] sm:$0xff]
        %v4145 = vld [vmem:[#allocation7 + $0x568] sm:$0xff]
        %v4146 = vld [vmem:[#allocation7 + $0x570] sm:$0xff]
        %v4147 = vld [vmem:[#allocation7 + $0x578] sm:$0xff]
        %v4148 = vld [vmem:[#allocation7 + $0x580] sm:$0xff]
        %v4149 = vld [vmem:[#allocation7 + $0x588] sm:$0xff]
        %v4150 = vld [vmem:[#allocation7 + $0x590] sm:$0xff]
        %v4151 = vld [vmem:[#allocation7 + $0x598] sm:$0xff]
        %v4152 = vld [vmem:[#allocation7 + $0x5a0] sm:$0xff]
        %v4153 = vld [vmem:[#allocation7 + $0x5a8] sm:$0xff]
        %v4154 = vld [vmem:[#allocation7 + $0x5b0] sm:$0xff]
        %v4155 = vld [vmem:[#allocation7 + $0x5b8] sm:$0xff]
        %v4156 = vld [vmem:[#allocation7 + $0x5c0] sm:$0xff]
        %v4157 = vld [vmem:[#allocation7 + $0x5c8] sm:$0xff]
        %v4158 = vld [vmem:[#allocation7 + $0x5d0] sm:$0xff]
        %v4159 = vld [vmem:[#allocation7 + $0x5d8] sm:$0xff]
        %v4160 = vld [vmem:[#allocation7 + $0x5e0] sm:$0xff]
        %v4161 = vld [vmem:[#allocation7 + $0x5e8] sm:$0xff]
        %v4162 = vld [vmem:[#allocation7 + $0x5f0] sm:$0xff]
        %v4163 = vld [vmem:[#allocation7 + $0x5f8] sm:$0xff]
        %v4164 = vld [vmem:[#allocation7 + $0x600] sm:$0xff]
        %v4165 = vld [vmem:[#allocation7 + $0x608] sm:$0xff]
        %v4166 = vld [vmem:[#allocation7 + $0x610] sm:$0xff]
        %v4167 = vld [vmem:[#allocation7 + $0x618] sm:$0xff]
        %v4168 = vld [vmem:[#allocation7 + $0x620] sm:$0xff]
        %v4169 = vld [vmem:[#allocation7 + $0x628] sm:$0xff]
        %v4170 = vld [vmem:[#allocation7 + $0x630] sm:$0xff]
        %v4171 = vld [vmem:[#allocation7 + $0x638] sm:$0xff]
        %v4172 = vld [vmem:[#allocation7 + $0x640] sm:$0xff]
        %v4173 = vld [vmem:[#allocation7 + $0x648] sm:$0xff]
        %v4174 = vld [vmem:[#allocation7 + $0x650] sm:$0xff]
        %v4175 = vld [vmem:[#allocation7 + $0x658] sm:$0xff]
        %v4176 = vld [vmem:[#allocation7 + $0x660] sm:$0xff]
        %v4177 = vld [vmem:[#allocation7 + $0x668] sm:$0xff]
        %v4178 = vld [vmem:[#allocation7 + $0x670] sm:$0xff]
        %v4179 = vld [vmem:[#allocation7 + $0x678] sm:$0xff]
        %v4180 = vld [vmem:[#allocation7 + $0x680] sm:$0xff]
        %v4181 = vld [vmem:[#allocation7 + $0x688] sm:$0xff]
        %v4182 = vld [vmem:[#allocation7 + $0x690] sm:$0xff]
        %v4183 = vld [vmem:[#allocation7 + $0x698] sm:$0xff]
        %v4184 = vld [vmem:[#allocation7 + $0x6a0] sm:$0xff]
        %v4185 = vld [vmem:[#allocation7 + $0x6a8] sm:$0xff]
        %v4186 = vld [vmem:[#allocation7 + $0x6b0] sm:$0xff]
        %v4187 = vld [vmem:[#allocation7 + $0x6b8] sm:$0xff]
        %v4188 = vld [vmem:[#allocation7 + $0x6c0] sm:$0xff]
        %v4189 = vld [vmem:[#allocation7 + $0x6c8] sm:$0xff]
        %v4190 = vld [vmem:[#allocation7 + $0x6d0] sm:$0xff]
        %v4191 = vld [vmem:[#allocation7 + $0x6d8] sm:$0xff]
        %v4192 = vld [vmem:[#allocation7 + $0x6e0] sm:$0xff]
        %v4193 = vld [vmem:[#allocation7 + $0x6e8] sm:$0xff]
        %v4194 = vld [vmem:[#allocation7 + $0x6f0] sm:$0xff]
        %v4195 = vld [vmem:[#allocation7 + $0x6f8] sm:$0xff]
        %v4196 = vld [vmem:[#allocation7 + $0x700] sm:$0xff]
        %v4197 = vld [vmem:[#allocation7 + $0x708] sm:$0xff]
        %v4198 = vld [vmem:[#allocation7 + $0x710] sm:$0xff]
        %v4199 = vld [vmem:[#allocation7 + $0x718] sm:$0xff]
        %v4200 = vld [vmem:[#allocation7 + $0x720] sm:$0xff]
        %v4201 = vld [vmem:[#allocation7 + $0x728] sm:$0xff]
        %v4202 = vld [vmem:[#allocation7 + $0x730] sm:$0xff]
        %v4203 = vld [vmem:[#allocation7 + $0x738] sm:$0xff]
        %v4204 = vld [vmem:[#allocation7 + $0x740] sm:$0xff]
        %v4205 = vld [vmem:[#allocation7 + $0x748] sm:$0xff]
        %v4206 = vld [vmem:[#allocation7 + $0x750] sm:$0xff]
        %v4207 = vld [vmem:[#allocation7 + $0x758] sm:$0xff]
        %v4208 = vld [vmem:[#allocation7 + $0x760] sm:$0xff]
        %v4209 = vld [vmem:[#allocation7 + $0x768] sm:$0xff]
        %v4210 = vld [vmem:[#allocation7 + $0x770] sm:$0xff]
        %v4211 = vld [vmem:[#allocation7 + $0x778] sm:$0xff]
        %v4212 = vld [vmem:[#allocation7 + $0x780] sm:$0xff]
        %v4213 = vld [vmem:[#allocation7 + $0x788] sm:$0xff]
        %v4214 = vld [vmem:[#allocation7 + $0x790] sm:$0xff]
        %v4215 = vld [vmem:[#allocation7 + $0x798] sm:$0xff]
        %v4216 = vld [vmem:[#allocation7 + $0x7a0] sm:$0xff]
        %v4217 = vld [vmem:[#allocation7 + $0x7a8] sm:$0xff]
        %v4218 = vld [vmem:[#allocation7 + $0x7b0] sm:$0xff]
        %v4219 = vld [vmem:[#allocation7 + $0x7b8] sm:$0xff]
        %v4220 = vld [vmem:[#allocation7 + $0x7c0] sm:$0xff]
        %v4221 = vld [vmem:[#allocation7 + $0x7c8] sm:$0xff]
        %v4222 = vld [vmem:[#allocation7 + $0x7d0] sm:$0xff]
        %v4223 = vld [vmem:[#allocation7 + $0x7d8] sm:$0xff]
        %v4224 = vld [vmem:[#allocation7 + $0x7e0] sm:$0xff]
        %v4225 = vld [vmem:[#allocation7 + $0x7e8] sm:$0xff]
        %v4226 = vld [vmem:[#allocation7 + $0x7f0] sm:$0xff]
        %v4227 = vld [vmem:[#allocation7 + $0x7f8] sm:$0xff]
        %v4228 = vld [vmem:[#allocation8] sm:$0x3]
        %v4230 = vlaneseq
        %v4231 = vshrl.u32 %v4230, 7
        %v4232 = vsub.s32 0, %v4231
        %v4233 = vrot.slane %v4228, %v4232
        %v4234 = vlaneseq
        %v4235 = vshrl.u32 %v4234, 7
        %v4236 = vsub.s32 1, %v4235
        %v4237 = vrot.slane %v4228, %v4236
        %v4496 = vunpack.c.l.b16 %v3972
        %v4497 = vunpack.c.h.b16 %v3972
        %v4498 = vunpack.c.l.b16 %v3973
        %v4499 = vunpack.c.h.b16 %v3973
        %v4500 = vunpack.c.l.b16 %v3974
        %v4501 = vunpack.c.h.b16 %v3974
        %v4502 = vunpack.c.l.b16 %v3975
        %v4503 = vunpack.c.h.b16 %v3975
        %v4504 = vunpack.c.l.b16 %v3976
        %v4505 = vunpack.c.h.b16 %v3976
        %v4506 = vunpack.c.l.b16 %v3977
        %v4507 = vunpack.c.h.b16 %v3977
        %v4508 = vunpack.c.l.b16 %v3978
        %v4509 = vunpack.c.h.b16 %v3978
        %v4510 = vunpack.c.l.b16 %v3979
        %v4511 = vunpack.c.h.b16 %v3979
        %v4512 = vunpack.c.l.b16 %v3980
        %v4513 = vunpack.c.h.b16 %v3980
        %v4514 = vunpack.c.l.b16 %v3981
        %v4515 = vunpack.c.h.b16 %v3981
        %v4516 = vunpack.c.l.b16 %v3982
        %v4517 = vunpack.c.h.b16 %v3982
        %v4518 = vunpack.c.l.b16 %v3983
        %v4519 = vunpack.c.h.b16 %v3983
        %v4520 = vunpack.c.l.b16 %v3984
        %v4521 = vunpack.c.h.b16 %v3984
        %v4522 = vunpack.c.l.b16 %v3985
        %v4523 = vunpack.c.h.b16 %v3985
        %v4524 = vunpack.c.l.b16 %v3986
        %v4525 = vunpack.c.h.b16 %v3986
        %v4526 = vunpack.c.l.b16 %v3987
        %v4527 = vunpack.c.h.b16 %v3987
        %v4528 = vunpack.c.l.b16 %v3988
        %v4529 = vunpack.c.h.b16 %v3988
        %v4530 = vunpack.c.l.b16 %v3989
        %v4531 = vunpack.c.h.b16 %v3989
        %v4532 = vunpack.c.l.b16 %v3990
        %v4533 = vunpack.c.h.b16 %v3990
        %v4534 = vunpack.c.l.b16 %v3991
        %v4535 = vunpack.c.h.b16 %v3991
        %v4536 = vunpack.c.l.b16 %v3992
        %v4537 = vunpack.c.h.b16 %v3992
        %v4538 = vunpack.c.l.b16 %v3993
        %v4539 = vunpack.c.h.b16 %v3993
        %v4540 = vunpack.c.l.b16 %v3994
        %v4541 = vunpack.c.h.b16 %v3994
        %v4542 = vunpack.c.l.b16 %v3995
        %v4543 = vunpack.c.h.b16 %v3995
        %v4544 = vunpack.c.l.b16 %v3996
        %v4545 = vunpack.c.h.b16 %v3996
        %v4546 = vunpack.c.l.b16 %v3997
        %v4547 = vunpack.c.h.b16 %v3997
        %v4548 = vunpack.c.l.b16 %v3998
        %v4549 = vunpack.c.h.b16 %v3998
        %v4550 = vunpack.c.l.b16 %v3999
        %v4551 = vunpack.c.h.b16 %v3999
        %v4552 = vunpack.c.l.b16 %v4000
        %v4553 = vunpack.c.h.b16 %v4000
        %v4554 = vunpack.c.l.b16 %v4001
        %v4555 = vunpack.c.h.b16 %v4001
        %v4556 = vunpack.c.l.b16 %v4002
        %v4557 = vunpack.c.h.b16 %v4002
        %v4558 = vunpack.c.l.b16 %v4003
        %v4559 = vunpack.c.h.b16 %v4003
        %v4560 = vunpack.c.l.b16 %v4004
        %v4561 = vunpack.c.h.b16 %v4004
        %v4562 = vunpack.c.l.b16 %v4005
        %v4563 = vunpack.c.h.b16 %v4005
        %v4564 = vunpack.c.l.b16 %v4006
        %v4565 = vunpack.c.h.b16 %v4006
        %v4566 = vunpack.c.l.b16 %v4007
        %v4567 = vunpack.c.h.b16 %v4007
        %v4568 = vunpack.c.l.b16 %v4008
        %v4569 = vunpack.c.h.b16 %v4008
        %v4570 = vunpack.c.l.b16 %v4009
        %v4571 = vunpack.c.h.b16 %v4009
        %v4572 = vunpack.c.l.b16 %v4010
        %v4573 = vunpack.c.h.b16 %v4010
        %v4574 = vunpack.c.l.b16 %v4011
        %v4575 = vunpack.c.h.b16 %v4011
        %v4576 = vunpack.c.l.b16 %v4012
        %v4577 = vunpack.c.h.b16 %v4012
        %v4578 = vunpack.c.l.b16 %v4013
        %v4579 = vunpack.c.h.b16 %v4013
        %v4580 = vunpack.c.l.b16 %v4014
        %v4581 = vunpack.c.h.b16 %v4014
        %v4582 = vunpack.c.l.b16 %v4015
        %v4583 = vunpack.c.h.b16 %v4015
        %v4584 = vunpack.c.l.b16 %v4016
        %v4585 = vunpack.c.h.b16 %v4016
        %v4586 = vunpack.c.l.b16 %v4017
        %v4587 = vunpack.c.h.b16 %v4017
        %v4588 = vunpack.c.l.b16 %v4018
        %v4589 = vunpack.c.h.b16 %v4018
        %v4590 = vunpack.c.l.b16 %v4019
        %v4591 = vunpack.c.h.b16 %v4019
        %v4592 = vunpack.c.l.b16 %v4020
        %v4593 = vunpack.c.h.b16 %v4020
        %v4594 = vunpack.c.l.b16 %v4021
        %v4595 = vunpack.c.h.b16 %v4021
        %v4596 = vunpack.c.l.b16 %v4022
        %v4597 = vunpack.c.h.b16 %v4022
        %v4598 = vunpack.c.l.b16 %v4023
        %v4599 = vunpack.c.h.b16 %v4023
        %v4600 = vunpack.c.l.b16 %v4024
        %v4601 = vunpack.c.h.b16 %v4024
        %v4602 = vunpack.c.l.b16 %v4025
        %v4603 = vunpack.c.h.b16 %v4025
        %v4604 = vunpack.c.l.b16 %v4026
        %v4605 = vunpack.c.h.b16 %v4026
        %v4606 = vunpack.c.l.b16 %v4027
        %v4607 = vunpack.c.h.b16 %v4027
        %v4608 = vunpack.c.l.b16 %v4028
        %v4609 = vunpack.c.h.b16 %v4028
        %v4610 = vunpack.c.l.b16 %v4029
        %v4611 = vunpack.c.h.b16 %v4029
        %v4612 = vunpack.c.l.b16 %v4030
        %v4613 = vunpack.c.h.b16 %v4030
        %v4614 = vunpack.c.l.b16 %v4031
        %v4615 = vunpack.c.h.b16 %v4031
        %v4616 = vunpack.c.l.b16 %v4032
        %v4617 = vunpack.c.h.b16 %v4032
        %v4618 = vunpack.c.l.b16 %v4033
        %v4619 = vunpack.c.h.b16 %v4033
        %v4620 = vunpack.c.l.b16 %v4034
        %v4621 = vunpack.c.h.b16 %v4034
        %v4622 = vunpack.c.l.b16 %v4035
        %v4623 = vunpack.c.h.b16 %v4035
        %v4624 = vunpack.c.l.b16 %v4036
        %v4625 = vunpack.c.h.b16 %v4036
        %v4626 = vunpack.c.l.b16 %v4037
        %v4627 = vunpack.c.h.b16 %v4037
        %v4628 = vunpack.c.l.b16 %v4038
        %v4629 = vunpack.c.h.b16 %v4038
        %v4630 = vunpack.c.l.b16 %v4039
        %v4631 = vunpack.c.h.b16 %v4039
        %v4632 = vunpack.c.l.b16 %v4040
        %v4633 = vunpack.c.h.b16 %v4040
        %v4634 = vunpack.c.l.b16 %v4041
        %v4635 = vunpack.c.h.b16 %v4041
        %v4636 = vunpack.c.l.b16 %v4042
        %v4637 = vunpack.c.h.b16 %v4042
        %v4638 = vunpack.c.l.b16 %v4043
        %v4639 = vunpack.c.h.b16 %v4043
        %v4640 = vunpack.c.l.b16 %v4044
        %v4641 = vunpack.c.h.b16 %v4044
        %v4642 = vunpack.c.l.b16 %v4045
        %v4643 = vunpack.c.h.b16 %v4045
        %v4644 = vunpack.c.l.b16 %v4046
        %v4645 = vunpack.c.h.b16 %v4046
        %v4646 = vunpack.c.l.b16 %v4047
        %v4647 = vunpack.c.h.b16 %v4047
        %v4648 = vunpack.c.l.b16 %v4048
        %v4649 = vunpack.c.h.b16 %v4048
        %v4650 = vunpack.c.l.b16 %v4049
        %v4651 = vunpack.c.h.b16 %v4049
        %v4652 = vunpack.c.l.b16 %v4050
        %v4653 = vunpack.c.h.b16 %v4050
        %v4654 = vunpack.c.l.b16 %v4051
        %v4655 = vunpack.c.h.b16 %v4051
        %v4656 = vunpack.c.l.b16 %v4052
        %v4657 = vunpack.c.h.b16 %v4052
        %v4658 = vunpack.c.l.b16 %v4053
        %v4659 = vunpack.c.h.b16 %v4053
        %v4660 = vunpack.c.l.b16 %v4054
        %v4661 = vunpack.c.h.b16 %v4054
        %v4662 = vunpack.c.l.b16 %v4055
        %v4663 = vunpack.c.h.b16 %v4055
        %v4664 = vunpack.c.l.b16 %v4056
        %v4665 = vunpack.c.h.b16 %v4056
        %v4666 = vunpack.c.l.b16 %v4057
        %v4667 = vunpack.c.h.b16 %v4057
        %v4668 = vunpack.c.l.b16 %v4058
        %v4669 = vunpack.c.h.b16 %v4058
        %v4670 = vunpack.c.l.b16 %v4059
        %v4671 = vunpack.c.h.b16 %v4059
        %v4672 = vunpack.c.l.b16 %v4060
        %v4673 = vunpack.c.h.b16 %v4060
        %v4674 = vunpack.c.l.b16 %v4061
        %v4675 = vunpack.c.h.b16 %v4061
        %v4676 = vunpack.c.l.b16 %v4062
        %v4677 = vunpack.c.h.b16 %v4062
        %v4678 = vunpack.c.l.b16 %v4063
        %v4679 = vunpack.c.h.b16 %v4063
        %v4680 = vunpack.c.l.b16 %v4064
        %v4681 = vunpack.c.h.b16 %v4064
        %v4682 = vunpack.c.l.b16 %v4065
        %v4683 = vunpack.c.h.b16 %v4065
        %v4684 = vunpack.c.l.b16 %v4066
        %v4685 = vunpack.c.h.b16 %v4066
        %v4686 = vunpack.c.l.b16 %v4067
        %v4687 = vunpack.c.h.b16 %v4067
        %v4688 = vunpack.c.l.b16 %v4068
        %v4689 = vunpack.c.h.b16 %v4068
        %v4690 = vunpack.c.l.b16 %v4069
        %v4691 = vunpack.c.h.b16 %v4069
        %v4692 = vunpack.c.l.b16 %v4070
        %v4693 = vunpack.c.h.b16 %v4070
        %v4694 = vunpack.c.l.b16 %v4071
        %v4695 = vunpack.c.h.b16 %v4071
        %v4696 = vunpack.c.l.b16 %v4072
        %v4697 = vunpack.c.h.b16 %v4072
        %v4698 = vunpack.c.l.b16 %v4073
        %v4699 = vunpack.c.h.b16 %v4073
        %v4700 = vunpack.c.l.b16 %v4074
        %v4701 = vunpack.c.h.b16 %v4074
        %v4702 = vunpack.c.l.b16 %v4075
        %v4703 = vunpack.c.h.b16 %v4075
        %v4704 = vunpack.c.l.b16 %v4076
        %v4705 = vunpack.c.h.b16 %v4076
        %v4706 = vunpack.c.l.b16 %v4077
        %v4707 = vunpack.c.h.b16 %v4077
        %v4708 = vunpack.c.l.b16 %v4078
        %v4709 = vunpack.c.h.b16 %v4078
        %v4710 = vunpack.c.l.b16 %v4079
        %v4711 = vunpack.c.h.b16 %v4079
        %v4712 = vunpack.c.l.b16 %v4080
        %v4713 = vunpack.c.h.b16 %v4080
        %v4714 = vunpack.c.l.b16 %v4081
        %v4715 = vunpack.c.h.b16 %v4081
        %v4716 = vunpack.c.l.b16 %v4082
        %v4717 = vunpack.c.h.b16 %v4082
        %v4718 = vunpack.c.l.b16 %v4083
        %v4719 = vunpack.c.h.b16 %v4083
        %v4720 = vunpack.c.l.b16 %v4084
        %v4721 = vunpack.c.h.b16 %v4084
        %v4722 = vunpack.c.l.b16 %v4085
        %v4723 = vunpack.c.h.b16 %v4085
        %v4724 = vunpack.c.l.b16 %v4086
        %v4725 = vunpack.c.h.b16 %v4086
        %v4726 = vunpack.c.l.b16 %v4087
        %v4727 = vunpack.c.h.b16 %v4087
        %v4728 = vunpack.c.l.b16 %v4088
        %v4729 = vunpack.c.h.b16 %v4088
        %v4730 = vunpack.c.l.b16 %v4089
        %v4731 = vunpack.c.h.b16 %v4089
        %v4732 = vunpack.c.l.b16 %v4090
        %v4733 = vunpack.c.h.b16 %v4090
        %v4734 = vunpack.c.l.b16 %v4091
        %v4735 = vunpack.c.h.b16 %v4091
        %v4736 = vunpack.c.l.b16 %v4092
        %v4737 = vunpack.c.h.b16 %v4092
        %v4738 = vunpack.c.l.b16 %v4093
        %v4739 = vunpack.c.h.b16 %v4093
        %v4740 = vunpack.c.l.b16 %v4094
        %v4741 = vunpack.c.h.b16 %v4094
        %v4742 = vunpack.c.l.b16 %v4095
        %v4743 = vunpack.c.h.b16 %v4095
        %v4744 = vunpack.c.l.b16 %v4096
        %v4745 = vunpack.c.h.b16 %v4096
        %v4746 = vunpack.c.l.b16 %v4097
        %v4747 = vunpack.c.h.b16 %v4097
        %v4748 = vunpack.c.l.b16 %v4098
        %v4749 = vunpack.c.h.b16 %v4098
        %v4750 = vunpack.c.l.b16 %v4099
        %v4751 = vunpack.c.h.b16 %v4099
        %v4752 = vunpack.c.l.b16 %v4100
        %v4753 = vunpack.c.h.b16 %v4100
        %v4754 = vunpack.c.l.b16 %v4101
        %v4755 = vunpack.c.h.b16 %v4101
        %v4756 = vunpack.c.l.b16 %v4102
        %v4757 = vunpack.c.h.b16 %v4102
        %v4758 = vunpack.c.l.b16 %v4103
        %v4759 = vunpack.c.h.b16 %v4103
        %v4760 = vunpack.c.l.b16 %v4104
        %v4761 = vunpack.c.h.b16 %v4104
        %v4762 = vunpack.c.l.b16 %v4105
        %v4763 = vunpack.c.h.b16 %v4105
        %v4764 = vunpack.c.l.b16 %v4106
        %v4765 = vunpack.c.h.b16 %v4106
        %v4766 = vunpack.c.l.b16 %v4107
        %v4767 = vunpack.c.h.b16 %v4107
        %v4768 = vunpack.c.l.b16 %v4108
        %v4769 = vunpack.c.h.b16 %v4108
        %v4770 = vunpack.c.l.b16 %v4109
        %v4771 = vunpack.c.h.b16 %v4109
        %v4772 = vunpack.c.l.b16 %v4110
        %v4773 = vunpack.c.h.b16 %v4110
        %v4774 = vunpack.c.l.b16 %v4111
        %v4775 = vunpack.c.h.b16 %v4111
        %v4776 = vunpack.c.l.b16 %v4112
        %v4777 = vunpack.c.h.b16 %v4112
        %v4778 = vunpack.c.l.b16 %v4113
        %v4779 = vunpack.c.h.b16 %v4113
        %v4780 = vunpack.c.l.b16 %v4114
        %v4781 = vunpack.c.h.b16 %v4114
        %v4782 = vunpack.c.l.b16 %v4115
        %v4783 = vunpack.c.h.b16 %v4115
        %v4784 = vunpack.c.l.b16 %v4116
        %v4785 = vunpack.c.h.b16 %v4116
        %v4786 = vunpack.c.l.b16 %v4117
        %v4787 = vunpack.c.h.b16 %v4117
        %v4788 = vunpack.c.l.b16 %v4118
        %v4789 = vunpack.c.h.b16 %v4118
        %v4790 = vunpack.c.l.b16 %v4119
        %v4791 = vunpack.c.h.b16 %v4119
        %v4792 = vunpack.c.l.b16 %v4120
        %v4793 = vunpack.c.h.b16 %v4120
        %v4794 = vunpack.c.l.b16 %v4121
        %v4795 = vunpack.c.h.b16 %v4121
        %v4796 = vunpack.c.l.b16 %v4122
        %v4797 = vunpack.c.h.b16 %v4122
        %v4798 = vunpack.c.l.b16 %v4123
        %v4799 = vunpack.c.h.b16 %v4123
        %v4800 = vunpack.c.l.b16 %v4124
        %v4801 = vunpack.c.h.b16 %v4124
        %v4802 = vunpack.c.l.b16 %v4125
        %v4803 = vunpack.c.h.b16 %v4125
        %v4804 = vunpack.c.l.b16 %v4126
        %v4805 = vunpack.c.h.b16 %v4126
        %v4806 = vunpack.c.l.b16 %v4127
        %v4807 = vunpack.c.h.b16 %v4127
        %v4808 = vunpack.c.l.b16 %v4128
        %v4809 = vunpack.c.h.b16 %v4128
        %v4810 = vunpack.c.l.b16 %v4129
        %v4811 = vunpack.c.h.b16 %v4129
        %v4812 = vunpack.c.l.b16 %v4130
        %v4813 = vunpack.c.h.b16 %v4130
        %v4814 = vunpack.c.l.b16 %v4131
        %v4815 = vunpack.c.h.b16 %v4131
        %v4816 = vunpack.c.l.b16 %v4132
        %v4817 = vunpack.c.h.b16 %v4132
        %v4818 = vunpack.c.l.b16 %v4133
        %v4819 = vunpack.c.h.b16 %v4133
        %v4820 = vunpack.c.l.b16 %v4134
        %v4821 = vunpack.c.h.b16 %v4134
        %v4822 = vunpack.c.l.b16 %v4135
        %v4823 = vunpack.c.h.b16 %v4135
        %v4824 = vunpack.c.l.b16 %v4136
        %v4825 = vunpack.c.h.b16 %v4136
        %v4826 = vunpack.c.l.b16 %v4137
        %v4827 = vunpack.c.h.b16 %v4137
        %v4828 = vunpack.c.l.b16 %v4138
        %v4829 = vunpack.c.h.b16 %v4138
        %v4830 = vunpack.c.l.b16 %v4139
        %v4831 = vunpack.c.h.b16 %v4139
        %v4832 = vunpack.c.l.b16 %v4140
        %v4833 = vunpack.c.h.b16 %v4140
        %v4834 = vunpack.c.l.b16 %v4141
        %v4835 = vunpack.c.h.b16 %v4141
        %v4836 = vunpack.c.l.b16 %v4142
        %v4837 = vunpack.c.h.b16 %v4142
        %v4838 = vunpack.c.l.b16 %v4143
        %v4839 = vunpack.c.h.b16 %v4143
        %v4840 = vunpack.c.l.b16 %v4144
        %v4841 = vunpack.c.h.b16 %v4144
        %v4842 = vunpack.c.l.b16 %v4145
        %v4843 = vunpack.c.h.b16 %v4145
        %v4844 = vunpack.c.l.b16 %v4146
        %v4845 = vunpack.c.h.b16 %v4146
        %v4846 = vunpack.c.l.b16 %v4147
        %v4847 = vunpack.c.h.b16 %v4147
        %v4848 = vunpack.c.l.b16 %v4148
        %v4849 = vunpack.c.h.b16 %v4148
        %v4850 = vunpack.c.l.b16 %v4149
        %v4851 = vunpack.c.h.b16 %v4149
        %v4852 = vunpack.c.l.b16 %v4150
        %v4853 = vunpack.c.h.b16 %v4150
        %v4854 = vunpack.c.l.b16 %v4151
        %v4855 = vunpack.c.h.b16 %v4151
        %v4856 = vunpack.c.l.b16 %v4152
        %v4857 = vunpack.c.h.b16 %v4152
        %v4858 = vunpack.c.l.b16 %v4153
        %v4859 = vunpack.c.h.b16 %v4153
        %v4860 = vunpack.c.l.b16 %v4154
        %v4861 = vunpack.c.h.b16 %v4154
        %v4862 = vunpack.c.l.b16 %v4155
        %v4863 = vunpack.c.h.b16 %v4155
        %v4864 = vunpack.c.l.b16 %v4156
        %v4865 = vunpack.c.h.b16 %v4156
        %v4866 = vunpack.c.l.b16 %v4157
        %v4867 = vunpack.c.h.b16 %v4157
        %v4868 = vunpack.c.l.b16 %v4158
        %v4869 = vunpack.c.h.b16 %v4158
        %v4870 = vunpack.c.l.b16 %v4159
        %v4871 = vunpack.c.h.b16 %v4159
        %v4872 = vunpack.c.l.b16 %v4160
        %v4873 = vunpack.c.h.b16 %v4160
        %v4874 = vunpack.c.l.b16 %v4161
        %v4875 = vunpack.c.h.b16 %v4161
        %v4876 = vunpack.c.l.b16 %v4162
        %v4877 = vunpack.c.h.b16 %v4162
        %v4878 = vunpack.c.l.b16 %v4163
        %v4879 = vunpack.c.h.b16 %v4163
        %v4880 = vunpack.c.l.b16 %v4164
        %v4881 = vunpack.c.h.b16 %v4164
        %v4882 = vunpack.c.l.b16 %v4165
        %v4883 = vunpack.c.h.b16 %v4165
        %v4884 = vunpack.c.l.b16 %v4166
        %v4885 = vunpack.c.h.b16 %v4166
        %v4886 = vunpack.c.l.b16 %v4167
        %v4887 = vunpack.c.h.b16 %v4167
        %v4888 = vunpack.c.l.b16 %v4168
        %v4889 = vunpack.c.h.b16 %v4168
        %v4890 = vunpack.c.l.b16 %v4169
        %v4891 = vunpack.c.h.b16 %v4169
        %v4892 = vunpack.c.l.b16 %v4170
        %v4893 = vunpack.c.h.b16 %v4170
        %v4894 = vunpack.c.l.b16 %v4171
        %v4895 = vunpack.c.h.b16 %v4171
        %v4896 = vunpack.c.l.b16 %v4172
        %v4897 = vunpack.c.h.b16 %v4172
        %v4898 = vunpack.c.l.b16 %v4173
        %v4899 = vunpack.c.h.b16 %v4173
        %v4900 = vunpack.c.l.b16 %v4174
        %v4901 = vunpack.c.h.b16 %v4174
        %v4902 = vunpack.c.l.b16 %v4175
        %v4903 = vunpack.c.h.b16 %v4175
        %v4904 = vunpack.c.l.b16 %v4176
        %v4905 = vunpack.c.h.b16 %v4176
        %v4906 = vunpack.c.l.b16 %v4177
        %v4907 = vunpack.c.h.b16 %v4177
        %v4908 = vunpack.c.l.b16 %v4178
        %v4909 = vunpack.c.h.b16 %v4178
        %v4910 = vunpack.c.l.b16 %v4179
        %v4911 = vunpack.c.h.b16 %v4179
        %v4912 = vunpack.c.l.b16 %v4180
        %v4913 = vunpack.c.h.b16 %v4180
        %v4914 = vunpack.c.l.b16 %v4181
        %v4915 = vunpack.c.h.b16 %v4181
        %v4916 = vunpack.c.l.b16 %v4182
        %v4917 = vunpack.c.h.b16 %v4182
        %v4918 = vunpack.c.l.b16 %v4183
        %v4919 = vunpack.c.h.b16 %v4183
        %v4920 = vunpack.c.l.b16 %v4184
        %v4921 = vunpack.c.h.b16 %v4184
        %v4922 = vunpack.c.l.b16 %v4185
        %v4923 = vunpack.c.h.b16 %v4185
        %v4924 = vunpack.c.l.b16 %v4186
        %v4925 = vunpack.c.h.b16 %v4186
        %v4926 = vunpack.c.l.b16 %v4187
        %v4927 = vunpack.c.h.b16 %v4187
        %v4928 = vunpack.c.l.b16 %v4188
        %v4929 = vunpack.c.h.b16 %v4188
        %v4930 = vunpack.c.l.b16 %v4189
        %v4931 = vunpack.c.h.b16 %v4189
        %v4932 = vunpack.c.l.b16 %v4190
        %v4933 = vunpack.c.h.b16 %v4190
        %v4934 = vunpack.c.l.b16 %v4191
        %v4935 = vunpack.c.h.b16 %v4191
        %v4936 = vunpack.c.l.b16 %v4192
        %v4937 = vunpack.c.h.b16 %v4192
        %v4938 = vunpack.c.l.b16 %v4193
        %v4939 = vunpack.c.h.b16 %v4193
        %v4940 = vunpack.c.l.b16 %v4194
        %v4941 = vunpack.c.h.b16 %v4194
        %v4942 = vunpack.c.l.b16 %v4195
        %v4943 = vunpack.c.h.b16 %v4195
        %v4944 = vunpack.c.l.b16 %v4196
        %v4945 = vunpack.c.h.b16 %v4196
        %v4946 = vunpack.c.l.b16 %v4197
        %v4947 = vunpack.c.h.b16 %v4197
        %v4948 = vunpack.c.l.b16 %v4198
        %v4949 = vunpack.c.h.b16 %v4198
        %v4950 = vunpack.c.l.b16 %v4199
        %v4951 = vunpack.c.h.b16 %v4199
        %v4952 = vunpack.c.l.b16 %v4200
        %v4953 = vunpack.c.h.b16 %v4200
        %v4954 = vunpack.c.l.b16 %v4201
        %v4955 = vunpack.c.h.b16 %v4201
        %v4956 = vunpack.c.l.b16 %v4202
        %v4957 = vunpack.c.h.b16 %v4202
        %v4958 = vunpack.c.l.b16 %v4203
        %v4959 = vunpack.c.h.b16 %v4203
        %v4960 = vunpack.c.l.b16 %v4204
        %v4961 = vunpack.c.h.b16 %v4204
        %v4962 = vunpack.c.l.b16 %v4205
        %v4963 = vunpack.c.h.b16 %v4205
        %v4964 = vunpack.c.l.b16 %v4206
        %v4965 = vunpack.c.h.b16 %v4206
        %v4966 = vunpack.c.l.b16 %v4207
        %v4967 = vunpack.c.h.b16 %v4207
        %v4968 = vunpack.c.l.b16 %v4208
        %v4969 = vunpack.c.h.b16 %v4208
        %v4970 = vunpack.c.l.b16 %v4209
        %v4971 = vunpack.c.h.b16 %v4209
        %v4972 = vunpack.c.l.b16 %v4210
        %v4973 = vunpack.c.h.b16 %v4210
        %v4974 = vunpack.c.l.b16 %v4211
        %v4975 = vunpack.c.h.b16 %v4211
        %v4976 = vunpack.c.l.b16 %v4212
        %v4977 = vunpack.c.h.b16 %v4212
        %v4978 = vunpack.c.l.b16 %v4213
        %v4979 = vunpack.c.h.b16 %v4213
        %v4980 = vunpack.c.l.b16 %v4214
        %v4981 = vunpack.c.h.b16 %v4214
        %v4982 = vunpack.c.l.b16 %v4215
        %v4983 = vunpack.c.h.b16 %v4215
        %v4984 = vunpack.c.l.b16 %v4216
        %v4985 = vunpack.c.h.b16 %v4216
        %v4986 = vunpack.c.l.b16 %v4217
        %v4987 = vunpack.c.h.b16 %v4217
        %v4988 = vunpack.c.l.b16 %v4218
        %v4989 = vunpack.c.h.b16 %v4218
        %v4990 = vunpack.c.l.b16 %v4219
        %v4991 = vunpack.c.h.b16 %v4219
        %v4992 = vunpack.c.l.b16 %v4220
        %v4993 = vunpack.c.h.b16 %v4220
        %v4994 = vunpack.c.l.b16 %v4221
        %v4995 = vunpack.c.h.b16 %v4221
        %v4996 = vunpack.c.l.b16 %v4222
        %v4997 = vunpack.c.h.b16 %v4222
        %v4998 = vunpack.c.l.b16 %v4223
        %v4999 = vunpack.c.h.b16 %v4223
        %v5000 = vunpack.c.l.b16 %v4224
        %v5001 = vunpack.c.h.b16 %v4224
        %v5002 = vunpack.c.l.b16 %v4225
        %v5003 = vunpack.c.h.b16 %v4225
        %v5004 = vunpack.c.l.b16 %v4226
        %v5005 = vunpack.c.h.b16 %v4226
        %v5006 = vunpack.c.l.b16 %v4227
        %v5007 = vunpack.c.h.b16 %v4227
        %v5008 = vpack.c.b16 %v4498, %v4496
        %v5009 = vpack.c.b16 %v4499, %v4497
        %v5010 = vpack.c.b16 %v4502, %v4500
        %v5011 = vpack.c.b16 %v4503, %v4501
        %v5012 = vpack.c.b16 %v4506, %v4504
        %v5013 = vpack.c.b16 %v4507, %v4505
        %v5014 = vpack.c.b16 %v4510, %v4508
        %v5015 = vpack.c.b16 %v4511, %v4509
        %v5016 = vpack.c.b16 %v4514, %v4512
        %v5017 = vpack.c.b16 %v4515, %v4513
        %v5018 = vpack.c.b16 %v4518, %v4516
        %v5019 = vpack.c.b16 %v4519, %v4517
        %v5020 = vpack.c.b16 %v4522, %v4520
        %v5021 = vpack.c.b16 %v4523, %v4521
        %v5022 = vpack.c.b16 %v4526, %v4524
        %v5023 = vpack.c.b16 %v4527, %v4525
        %v5024 = vpack.c.b16 %v4530, %v4528
        %v5025 = vpack.c.b16 %v4531, %v4529
        %v5026 = vpack.c.b16 %v4534, %v4532
        %v5027 = vpack.c.b16 %v4535, %v4533
        %v5028 = vpack.c.b16 %v4538, %v4536
        %v5029 = vpack.c.b16 %v4539, %v4537
        %v5030 = vpack.c.b16 %v4542, %v4540
        %v5031 = vpack.c.b16 %v4543, %v4541
        %v5032 = vpack.c.b16 %v4546, %v4544
        %v5033 = vpack.c.b16 %v4547, %v4545
        %v5034 = vpack.c.b16 %v4550, %v4548
        %v5035 = vpack.c.b16 %v4551, %v4549
        %v5036 = vpack.c.b16 %v4554, %v4552
        %v5037 = vpack.c.b16 %v4555, %v4553
        %v5038 = vpack.c.b16 %v4558, %v4556
        %v5039 = vpack.c.b16 %v4559, %v4557
        %v5040 = vpack.c.b16 %v4562, %v4560
        %v5041 = vpack.c.b16 %v4563, %v4561
        %v5042 = vpack.c.b16 %v4566, %v4564
        %v5043 = vpack.c.b16 %v4567, %v4565
        %v5044 = vpack.c.b16 %v4570, %v4568
        %v5045 = vpack.c.b16 %v4571, %v4569
        %v5046 = vpack.c.b16 %v4574, %v4572
        %v5047 = vpack.c.b16 %v4575, %v4573
        %v5048 = vpack.c.b16 %v4578, %v4576
        %v5049 = vpack.c.b16 %v4579, %v4577
        %v5050 = vpack.c.b16 %v4582, %v4580
        %v5051 = vpack.c.b16 %v4583, %v4581
        %v5052 = vpack.c.b16 %v4586, %v4584
        %v5053 = vpack.c.b16 %v4587, %v4585
        %v5054 = vpack.c.b16 %v4590, %v4588
        %v5055 = vpack.c.b16 %v4591, %v4589
        %v5056 = vpack.c.b16 %v4594, %v4592
        %v5057 = vpack.c.b16 %v4595, %v4593
        %v5058 = vpack.c.b16 %v4598, %v4596
        %v5059 = vpack.c.b16 %v4599, %v4597
        %v5060 = vpack.c.b16 %v4602, %v4600
        %v5061 = vpack.c.b16 %v4603, %v4601
        %v5062 = vpack.c.b16 %v4606, %v4604
        %v5063 = vpack.c.b16 %v4607, %v4605
        %v5064 = vpack.c.b16 %v4610, %v4608
        %v5065 = vpack.c.b16 %v4611, %v4609
        %v5066 = vpack.c.b16 %v4614, %v4612
        %v5067 = vpack.c.b16 %v4615, %v4613
        %v5068 = vpack.c.b16 %v4618, %v4616
        %v5069 = vpack.c.b16 %v4619, %v4617
        %v5070 = vpack.c.b16 %v4622, %v4620
        %v5071 = vpack.c.b16 %v4623, %v4621
        %v5072 = vpack.c.b16 %v4626, %v4624
        %v5073 = vpack.c.b16 %v4627, %v4625
        %v5074 = vpack.c.b16 %v4630, %v4628
        %v5075 = vpack.c.b16 %v4631, %v4629
        %v5076 = vpack.c.b16 %v4634, %v4632
        %v5077 = vpack.c.b16 %v4635, %v4633
        %v5078 = vpack.c.b16 %v4638, %v4636
        %v5079 = vpack.c.b16 %v4639, %v4637
        %v5080 = vpack.c.b16 %v4642, %v4640
        %v5081 = vpack.c.b16 %v4643, %v4641
        %v5082 = vpack.c.b16 %v4646, %v4644
        %v5083 = vpack.c.b16 %v4647, %v4645
        %v5084 = vpack.c.b16 %v4650, %v4648
        %v5085 = vpack.c.b16 %v4651, %v4649
        %v5086 = vpack.c.b16 %v4654, %v4652
        %v5087 = vpack.c.b16 %v4655, %v4653
        %v5088 = vpack.c.b16 %v4658, %v4656
        %v5089 = vpack.c.b16 %v4659, %v4657
        %v5090 = vpack.c.b16 %v4662, %v4660
        %v5091 = vpack.c.b16 %v4663, %v4661
        %v5092 = vpack.c.b16 %v4666, %v4664
        %v5093 = vpack.c.b16 %v4667, %v4665
        %v5094 = vpack.c.b16 %v4670, %v4668
        %v5095 = vpack.c.b16 %v4671, %v4669
        %v5096 = vpack.c.b16 %v4674, %v4672
        %v5097 = vpack.c.b16 %v4675, %v4673
        %v5098 = vpack.c.b16 %v4678, %v4676
        %v5099 = vpack.c.b16 %v4679, %v4677
        %v5100 = vpack.c.b16 %v4682, %v4680
        %v5101 = vpack.c.b16 %v4683, %v4681
        %v5102 = vpack.c.b16 %v4686, %v4684
        %v5103 = vpack.c.b16 %v4687, %v4685
        %v5104 = vpack.c.b16 %v4690, %v4688
        %v5105 = vpack.c.b16 %v4691, %v4689
        %v5106 = vpack.c.b16 %v4694, %v4692
        %v5107 = vpack.c.b16 %v4695, %v4693
        %v5108 = vpack.c.b16 %v4698, %v4696
        %v5109 = vpack.c.b16 %v4699, %v4697
        %v5110 = vpack.c.b16 %v4702, %v4700
        %v5111 = vpack.c.b16 %v4703, %v4701
        %v5112 = vpack.c.b16 %v4706, %v4704
        %v5113 = vpack.c.b16 %v4707, %v4705
        %v5114 = vpack.c.b16 %v4710, %v4708
        %v5115 = vpack.c.b16 %v4711, %v4709
        %v5116 = vpack.c.b16 %v4714, %v4712
        %v5117 = vpack.c.b16 %v4715, %v4713
        %v5118 = vpack.c.b16 %v4718, %v4716
        %v5119 = vpack.c.b16 %v4719, %v4717
        %v5120 = vpack.c.b16 %v4722, %v4720
        %v5121 = vpack.c.b16 %v4723, %v4721
        %v5122 = vpack.c.b16 %v4726, %v4724
        %v5123 = vpack.c.b16 %v4727, %v4725
        %v5124 = vpack.c.b16 %v4730, %v4728
        %v5125 = vpack.c.b16 %v4731, %v4729
        %v5126 = vpack.c.b16 %v4734, %v4732
        %v5127 = vpack.c.b16 %v4735, %v4733
        %v5128 = vpack.c.b16 %v4738, %v4736
        %v5129 = vpack.c.b16 %v4739, %v4737
        %v5130 = vpack.c.b16 %v4742, %v4740
        %v5131 = vpack.c.b16 %v4743, %v4741
        %v5132 = vpack.c.b16 %v4746, %v4744
        %v5133 = vpack.c.b16 %v4747, %v4745
        %v5134 = vpack.c.b16 %v4750, %v4748
        %v5135 = vpack.c.b16 %v4751, %v4749
        %v5136 = vpack.c.b16 %v4754, %v4752
        %v5137 = vpack.c.b16 %v4755, %v4753
        %v5138 = vpack.c.b16 %v4758, %v4756
        %v5139 = vpack.c.b16 %v4759, %v4757
        %v5140 = vpack.c.b16 %v4762, %v4760
        %v5141 = vpack.c.b16 %v4763, %v4761
        %v5142 = vpack.c.b16 %v4766, %v4764
        %v5143 = vpack.c.b16 %v4767, %v4765
        %v5144 = vpack.c.b16 %v4770, %v4768
        %v5145 = vpack.c.b16 %v4771, %v4769
        %v5146 = vpack.c.b16 %v4774, %v4772
        %v5147 = vpack.c.b16 %v4775, %v4773
        %v5148 = vpack.c.b16 %v4778, %v4776
        %v5149 = vpack.c.b16 %v4779, %v4777
        %v5150 = vpack.c.b16 %v4782, %v4780
        %v5151 = vpack.c.b16 %v4783, %v4781
        %v5152 = vpack.c.b16 %v4786, %v4784
        %v5153 = vpack.c.b16 %v4787, %v4785
        %v5154 = vpack.c.b16 %v4790, %v4788
        %v5155 = vpack.c.b16 %v4791, %v4789
        %v5156 = vpack.c.b16 %v4794, %v4792
        %v5157 = vpack.c.b16 %v4795, %v4793
        %v5158 = vpack.c.b16 %v4798, %v4796
        %v5159 = vpack.c.b16 %v4799, %v4797
        %v5160 = vpack.c.b16 %v4802, %v4800
        %v5161 = vpack.c.b16 %v4803, %v4801
        %v5162 = vpack.c.b16 %v4806, %v4804
        %v5163 = vpack.c.b16 %v4807, %v4805
        %v5164 = vpack.c.b16 %v4810, %v4808
        %v5165 = vpack.c.b16 %v4811, %v4809
        %v5166 = vpack.c.b16 %v4814, %v4812
        %v5167 = vpack.c.b16 %v4815, %v4813
        %v5168 = vpack.c.b16 %v4818, %v4816
        %v5169 = vpack.c.b16 %v4819, %v4817
        %v5170 = vpack.c.b16 %v4822, %v4820
        %v5171 = vpack.c.b16 %v4823, %v4821
        %v5172 = vpack.c.b16 %v4826, %v4824
        %v5173 = vpack.c.b16 %v4827, %v4825
        %v5174 = vpack.c.b16 %v4830, %v4828
        %v5175 = vpack.c.b16 %v4831, %v4829
        %v5176 = vpack.c.b16 %v4834, %v4832
        %v5177 = vpack.c.b16 %v4835, %v4833
        %v5178 = vpack.c.b16 %v4838, %v4836
        %v5179 = vpack.c.b16 %v4839, %v4837
        %v5180 = vpack.c.b16 %v4842, %v4840
        %v5181 = vpack.c.b16 %v4843, %v4841
        %v5182 = vpack.c.b16 %v4846, %v4844
        %v5183 = vpack.c.b16 %v4847, %v4845
        %v5184 = vpack.c.b16 %v4850, %v4848
        %v5185 = vpack.c.b16 %v4851, %v4849
        %v5186 = vpack.c.b16 %v4854, %v4852
        %v5187 = vpack.c.b16 %v4855, %v4853
        %v5188 = vpack.c.b16 %v4858, %v4856
        %v5189 = vpack.c.b16 %v4859, %v4857
        %v5190 = vpack.c.b16 %v4862, %v4860
        %v5191 = vpack.c.b16 %v4863, %v4861
        %v5192 = vpack.c.b16 %v4866, %v4864
        %v5193 = vpack.c.b16 %v4867, %v4865
        %v5194 = vpack.c.b16 %v4870, %v4868
        %v5195 = vpack.c.b16 %v4871, %v4869
        %v5196 = vpack.c.b16 %v4874, %v4872
        %v5197 = vpack.c.b16 %v4875, %v4873
        %v5198 = vpack.c.b16 %v4878, %v4876
        %v5199 = vpack.c.b16 %v4879, %v4877
        %v5200 = vpack.c.b16 %v4882, %v4880
        %v5201 = vpack.c.b16 %v4883, %v4881
        %v5202 = vpack.c.b16 %v4886, %v4884
        %v5203 = vpack.c.b16 %v4887, %v4885
        %v5204 = vpack.c.b16 %v4890, %v4888
        %v5205 = vpack.c.b16 %v4891, %v4889
        %v5206 = vpack.c.b16 %v4894, %v4892
        %v5207 = vpack.c.b16 %v4895, %v4893
        %v5208 = vpack.c.b16 %v4898, %v4896
        %v5209 = vpack.c.b16 %v4899, %v4897
        %v5210 = vpack.c.b16 %v4902, %v4900
        %v5211 = vpack.c.b16 %v4903, %v4901
        %v5212 = vpack.c.b16 %v4906, %v4904
        %v5213 = vpack.c.b16 %v4907, %v4905
        %v5214 = vpack.c.b16 %v4910, %v4908
        %v5215 = vpack.c.b16 %v4911, %v4909
        %v5216 = vpack.c.b16 %v4914, %v4912
        %v5217 = vpack.c.b16 %v4915, %v4913
        %v5218 = vpack.c.b16 %v4918, %v4916
        %v5219 = vpack.c.b16 %v4919, %v4917
        %v5220 = vpack.c.b16 %v4922, %v4920
        %v5221 = vpack.c.b16 %v4923, %v4921
        %v5222 = vpack.c.b16 %v4926, %v4924
        %v5223 = vpack.c.b16 %v4927, %v4925
        %v5224 = vpack.c.b16 %v4930, %v4928
        %v5225 = vpack.c.b16 %v4931, %v4929
        %v5226 = vpack.c.b16 %v4934, %v4932
        %v5227 = vpack.c.b16 %v4935, %v4933
        %v5228 = vpack.c.b16 %v4938, %v4936
        %v5229 = vpack.c.b16 %v4939, %v4937
        %v5230 = vpack.c.b16 %v4942, %v4940
        %v5231 = vpack.c.b16 %v4943, %v4941
        %v5232 = vpack.c.b16 %v4946, %v4944
        %v5233 = vpack.c.b16 %v4947, %v4945
        %v5234 = vpack.c.b16 %v4950, %v4948
        %v5235 = vpack.c.b16 %v4951, %v4949
        %v5236 = vpack.c.b16 %v4954, %v4952
        %v5237 = vpack.c.b16 %v4955, %v4953
        %v5238 = vpack.c.b16 %v4958, %v4956
        %v5239 = vpack.c.b16 %v4959, %v4957
        %v5240 = vpack.c.b16 %v4962, %v4960
        %v5241 = vpack.c.b16 %v4963, %v4961
        %v5242 = vpack.c.b16 %v4966, %v4964
        %v5243 = vpack.c.b16 %v4967, %v4965
        %v5244 = vpack.c.b16 %v4970, %v4968
        %v5245 = vpack.c.b16 %v4971, %v4969
        %v5246 = vpack.c.b16 %v4974, %v4972
        %v5247 = vpack.c.b16 %v4975, %v4973
        %v5248 = vpack.c.b16 %v4978, %v4976
        %v5249 = vpack.c.b16 %v4979, %v4977
        %v5250 = vpack.c.b16 %v4982, %v4980
        %v5251 = vpack.c.b16 %v4983, %v4981
        %v5252 = vpack.c.b16 %v4986, %v4984
        %v5253 = vpack.c.b16 %v4987, %v4985
        %v5254 = vpack.c.b16 %v4990, %v4988
        %v5255 = vpack.c.b16 %v4991, %v4989
        %v5256 = vpack.c.b16 %v4994, %v4992
        %v5257 = vpack.c.b16 %v4995, %v4993
        %v5258 = vpack.c.b16 %v4998, %v4996
        %v5259 = vpack.c.b16 %v4999, %v4997
        %v5260 = vpack.c.b16 %v5002, %v5000
        %v5261 = vpack.c.b16 %v5003, %v5001
        %v5262 = vpack.c.b16 %v5006, %v5004
        %v5263 = vpack.c.b16 %v5007, %v5005
        %5520 = vmatprep.subr.bf16.mxu0 %v5009
        %5521 = vmatpush1.bf16.msra.mxu0 %v5008
        %5522 = vmatprep.subr.bf16.mxu0 %v5011
        %5523 = vmatpush1.bf16.msra.mxu0 %v5010
        %5524 = vmatprep.subr.bf16.mxu0 %v5013
        %5525 = vmatpush1.bf16.msra.mxu0 %v5012
        %5526 = vmatprep.subr.bf16.mxu0 %v5015
        %5527 = vmatpush1.bf16.msra.mxu0 %v5014
        %5528 = vmatprep.subr.bf16.mxu0 %v5017
        %5529 = vmatpush1.bf16.msra.mxu0 %v5016
        %5530 = vmatprep.subr.bf16.mxu0 %v5019
        %5531 = vmatpush1.bf16.msra.mxu0 %v5018
        %5532 = vmatprep.subr.bf16.mxu0 %v5021
        %5533 = vmatpush1.bf16.msra.mxu0 %v5020
        %5534 = vmatprep.subr.bf16.mxu0 %v5023
        %5535 = vmatpush1.bf16.msra.mxu0 %v5022
        %5536 = vmatprep.subr.bf16.mxu0 %v5025
        %5537 = vmatpush1.bf16.msra.mxu0 %v5024
        %5538 = vmatprep.subr.bf16.mxu0 %v5027
        %5539 = vmatpush1.bf16.msra.mxu0 %v5026
        %5540 = vmatprep.subr.bf16.mxu0 %v5029
        %5541 = vmatpush1.bf16.msra.mxu0 %v5028
        %5542 = vmatprep.subr.bf16.mxu0 %v5031
        %5543 = vmatpush1.bf16.msra.mxu0 %v5030
        %5544 = vmatprep.subr.bf16.mxu0 %v5033
        %5545 = vmatpush1.bf16.msra.mxu0 %v5032
        %5546 = vmatprep.subr.bf16.mxu0 %v5035
        %5547 = vmatpush1.bf16.msra.mxu0 %v5034
        %5548 = vmatprep.subr.bf16.mxu0 %v5037
        %5549 = vmatpush1.bf16.msra.mxu0 %v5036
        %5550 = vmatprep.subr.bf16.mxu0 %v5039
        %5551 = vmatpush1.bf16.msra.mxu0 %v5038
        %5552 = vmatprep.mubr.bf16.mxu0 %v3845
        %5553 = vmatmul.mubr.bf16.gmra.mrb[0].mxu0 %v3844
        %v5554 = vpop.f32.mrb[0].mxu0
        %v5555 = vadd.f32 %v4233, %v5554
        %v5556 = vpop.f32.mrb[0].mxu0
        %v5557 = vadd.f32 %v4237, %v5556
        %v5558 = vpop.f32.mrb[0].mxu0
        %v5559 = vadd.f32 %v4233, %v5558
        %v5560 = vpop.f32.mrb[0].mxu0
        %v5561 = vadd.f32 %v4237, %v5560
        %5562 = vmatprep.mubr.bf16.mxu0 %v3861
        %5563 = vmatmul.mubr.bf16.gmra.mrb[0].mxu0 %v3860
        %v5564 = vpop.f32.mrb[0].mxu0
        %v5565 = vadd.f32 %v4233, %v5564
        %v5566 = vpop.f32.mrb[0].mxu0
        %v5567 = vadd.f32 %v4237, %v5566
        %v5568 = vpop.f32.mrb[0].mxu0
        %v5569 = vadd.f32 %v4233, %v5568
        %v5570 = vpop.f32.mrb[0].mxu0
        %v5571 = vadd.f32 %v4237, %v5570
        %5572 = vmatprep.mubr.bf16.mxu0 %v3877
        %5573 = vmatmul.mubr.bf16.gmra.mrb[0].mxu0 %v3876
        %v5574 = vpop.f32.mrb[0].mxu0
        %v5575 = vadd.f32 %v4233, %v5574
        %v5576 = vpop.f32.mrb[0].mxu0
        %v5577 = vadd.f32 %v4237, %v5576
        %v5578 = vpop.f32.mrb[0].mxu0
        %v5579 = vadd.f32 %v4233, %v5578
        %v5580 = vpop.f32.mrb[0].mxu0
        %v5581 = vadd.f32 %v4237, %v5580
        %5582 = vmatprep.mubr.bf16.mxu0 %v3893
        %5583 = vmatmul.mubr.bf16.gmra.mrb[0].mxu0 %v3892
        %v5584 = vpop.f32.mrb[0].mxu0
        %v5585 = vadd.f32 %v4233, %v5584
        %v5586 = vpop.f32.mrb[0].mxu0
        %v5587 = vadd.f32 %v4237, %v5586
        %v5588 = vpop.f32.mrb[0].mxu0
        %v5589 = vadd.f32 %v4233, %v5588
        %v5590 = vpop.f32.mrb[0].mxu0
        %v5591 = vadd.f32 %v4237, %v5590
        %5592 = vmatprep.mubr.bf16.mxu0 %v3909
        %5593 = vmatmul.mubr.bf16.gmra.mrb[0].mxu0 %v3908
        %v5594 = vpop.f32.mrb[0].mxu0
        %v5595 = vadd.f32 %v4233, %v5594
        %v5596 = vpop.f32.mrb[0].mxu0
        %v5597 = vadd.f32 %v4237, %v5596
        %v5598 = vpop.f32.mrb[0].mxu0
        %v5599 = vadd.f32 %v4233, %v5598
        %v5600 = vpop.f32.mrb[0].mxu0
        %v5601 = vadd.f32 %v4237, %v5600
        %5602 = vmatprep.mubr.bf16.mxu0 %v3925
        %5603 = vmatmul.mubr.bf16.gmra.mrb[0].mxu0 %v3924
        %v5604 = vpop.f32.mrb[0].mxu0
        %v5605 = vadd.f32 %v4233, %v5604
        %v5606 = vpop.f32.mrb[0].mxu0
        %v5607 = vadd.f32 %v4237, %v5606
        %v5608 = vpop.f32.mrb[0].mxu0
        %v5609 = vadd.f32 %v4233, %v5608
        %v5610 = vpop.f32.mrb[0].mxu0
        %v5611 = vadd.f32 %v4237, %v5610
        %5612 = vmatprep.mubr.bf16.mxu0 %v3941
        %5613 = vmatmul.mubr.bf16.gmra.mrb[0].mxu0 %v3940
        %v5614 = vpop.f32.mrb[0].mxu0
        %v5615 = vadd.f32 %v4233, %v5614
        %v5616 = vpop.f32.mrb[0].mxu0
        %v5617 = vadd.f32 %v4237, %v5616
        %v5618 = vpop.f32.mrb[0].mxu0
        %v5619 = vadd.f32 %v4233, %v5618
        %v5620 = vpop.f32.mrb[0].mxu0
        %v5621 = vadd.f32 %v4237, %v5620
        %5622 = vmatprep.mubr.bf16.mxu0 %v3957
        %5623 = vmatmul.mubr.bf16.gmra.mrb[0].mxu0 %v3956
        %v5624 = vpop.f32.mrb[0].mxu0
        %v5625 = vadd.f32 %v4233, %v5624
        %v5626 = vpop.f32.mrb[0].mxu0
        %v5627 = vadd.f32 %v4237, %v5626
        %v5628 = vpop.f32.mrb[0].mxu0
        %v5629 = vadd.f32 %v4233, %v5628
        %v5630 = vpop.f32.mrb[0].mxu0
        %v5631 = vadd.f32 %v4237, %v5630
        %5632 = vdwg.mxu0
        %5633 = vmatprep.subr.bf16.mxu0 %v5041
        %5634 = vmatpush1.bf16.msra.mxu0 %v5040
        %5635 = vmatprep.subr.bf16.mxu0 %v5043
        %5636 = vmatpush1.bf16.msra.mxu0 %v5042
        %5637 = vmatprep.subr.bf16.mxu0 %v5045
        %5638 = vmatpush1.bf16.msra.mxu0 %v5044
        %5639 = vmatprep.subr.bf16.mxu0 %v5047
        %5640 = vmatpush1.bf16.msra.mxu0 %v5046
        %5641 = vmatprep.subr.bf16.mxu0 %v5049
        %5642 = vmatpush1.bf16.msra.mxu0 %v5048
        %5643 = vmatprep.subr.bf16.mxu0 %v5051
        %5644 = vmatpush1.bf16.msra.mxu0 %v5050
        %5645 = vmatprep.subr.bf16.mxu0 %v5053
        %5646 = vmatpush1.bf16.msra.mxu0 %v5052
        %5647 = vmatprep.subr.bf16.mxu0 %v5055
        %5648 = vmatpush1.bf16.msra.mxu0 %v5054
        %5649 = vmatprep.subr.bf16.mxu0 %v5057
        %5650 = vmatpush1.bf16.msra.mxu0 %v5056
        %5651 = vmatprep.subr.bf16.mxu0 %v5059
        %5652 = vmatpush1.bf16.msra.mxu0 %v5058
        %5653 = vmatprep.subr.bf16.mxu0 %v5061
        %5654 = vmatpush1.bf16.msra.mxu0 %v5060
        %5655 = vmatprep.subr.bf16.mxu0 %v5063
        %5656 = vmatpush1.bf16.msra.mxu0 %v5062
        %5657 = vmatprep.subr.bf16.mxu0 %v5065
        %5658 = vmatpush1.bf16.msra.mxu0 %v5064
        %5659 = vmatprep.subr.bf16.mxu0 %v5067
        %5660 = vmatpush1.bf16.msra.mxu0 %v5066
        %5661 = vmatprep.subr.bf16.mxu0 %v5069
        %5662 = vmatpush1.bf16.msra.mxu0 %v5068
        %5663 = vmatprep.subr.bf16.mxu0 %v5071
        %5664 = vmatpush1.bf16.msra.mxu0 %v5070
        %5665 = vmatprep.mubr.bf16.mxu0 %v3847
        %5666 = vmatmul.mubr.bf16.gmra.mrb[0].mxu0 %v3846
        %v5667 = vpop.f32.mrb[0].mxu0
        %v5668 = vadd.f32 %v5555, %v5667
        %v5669 = vpop.f32.mrb[0].mxu0
        %v5670 = vadd.f32 %v5557, %v5669
        %v5671 = vpop.f32.mrb[0].mxu0
        %v5672 = vadd.f32 %v5559, %v5671
        %v5673 = vpop.f32.mrb[0].mxu0
        %v5674 = vadd.f32 %v5561, %v5673
        %5675 = vmatprep.mubr.bf16.mxu0 %v3863
        %5676 = vmatmul.mubr.bf16.gmra.mrb[0].mxu0 %v3862
        %v5677 = vpop.f32.mrb[0].mxu0
        %v5678 = vadd.f32 %v5565, %v5677
        %v5679 = vpop.f32.mrb[0].mxu0
        %v5680 = vadd.f32 %v5567, %v5679
        %v5681 = vpop.f32.mrb[0].mxu0
        %v5682 = vadd.f32 %v5569, %v5681
        %v5683 = vpop.f32.mrb[0].mxu0
        %v5684 = vadd.f32 %v5571, %v5683
        %5685 = vmatprep.mubr.bf16.mxu0 %v3879
        %5686 = vmatmul.mubr.bf16.gmra.mrb[0].mxu0 %v3878
        %v5687 = vpop.f32.mrb[0].mxu0
        %v5688 = vadd.f32 %v5575, %v5687
        %v5689 = vpop.f32.mrb[0].mxu0
        %v5690 = vadd.f32 %v5577, %v5689
        %v5691 = vpop.f32.mrb[0].mxu0
        %v5692 = vadd.f32 %v5579, %v5691
        %v5693 = vpop.f32.mrb[0].mxu0
        %v5694 = vadd.f32 %v5581, %v5693
        %5695 = vmatprep.mubr.bf16.mxu0 %v3895
        %5696 = vmatmul.mubr.bf16.gmra.mrb[0].mxu0 %v3894
        %v5697 = vpop.f32.mrb[0].mxu0
        %v5698 = vadd.f32 %v5585, %v5697
        %v5699 = vpop.f32.mrb[0].mxu0
        %v5700 = vadd.f32 %v5587, %v5699
        %v5701 = vpop.f32.mrb[0].mxu0
        %v5702 = vadd.f32 %v5589, %v5701
        %v5703 = vpop.f32.mrb[0].mxu0
        %v5704 = vadd.f32 %v5591, %v5703
        %5705 = vmatprep.mubr.bf16.mxu0 %v3911
        %5706 = vmatmul.mubr.bf16.gmra.mrb[0].mxu0 %v3910
        %v5707 = vpop.f32.mrb[0].mxu0
        %v5708 = vadd.f32 %v5595, %v5707
        %v5709 = vpop.f32.mrb[0].mxu0
        %v5710 = vadd.f32 %v5597, %v5709
        %v5711 = vpop.f32.mrb[0].mxu0
        %v5712 = vadd.f32 %v5599, %v5711
        %v5713 = vpop.f32.mrb[0].mxu0
        %v5714 = vadd.f32 %v5601, %v5713
        %5715 = vmatprep.mubr.bf16.mxu0 %v3927
        %5716 = vmatmul.mubr.bf16.gmra.mrb[0].mxu0 %v3926
        %v5717 = vpop.f32.mrb[0].mxu0
        %v5718 = vadd.f32 %v5605, %v5717
        %v5719 = vpop.f32.mrb[0].mxu0
        %v5720 = vadd.f32 %v5607, %v5719
        %v5721 = vpop.f32.mrb[0].mxu0
        %v5722 = vadd.f32 %v5609, %v5721
        %v5723 = vpop.f32.mrb[0].mxu0
        %v5724 = vadd.f32 %v5611, %v5723
        %5725 = vmatprep.mubr.bf16.mxu0 %v3943
        %5726 = vmatmul.mubr.bf16.gmra.mrb[0].mxu0 %v3942
        %v5727 = vpop.f32.mrb[0].mxu0
        %v5728 = vadd.f32 %v5615, %v5727
        %v5729 = vpop.f32.mrb[0].mxu0
        %v5730 = vadd.f32 %v5617, %v5729
        %v5731 = vpop.f32.mrb[0].mxu0
        %v5732 = vadd.f32 %v5619, %v5731
        %v5733 = vpop.f32.mrb[0].mxu0
        %v5734 = vadd.f32 %v5621, %v5733
        %5735 = vmatprep.mubr.bf16.mxu0 %v3959
        %5736 = vmatmul.mubr.bf16.gmra.mrb[0].mxu0 %v3958
        %v5737 = vpop.f32.mrb[0].mxu0
        %v5738 = vadd.f32 %v5625, %v5737
        %v5739 = vpop.f32.mrb[0].mxu0
        %v5740 = vadd.f32 %v5627, %v5739
        %v5741 = vpop.f32.mrb[0].mxu0
        %v5742 = vadd.f32 %v5629, %v5741
        %v5743 = vpop.f32.mrb[0].mxu0
        %v5744 = vadd.f32 %v5631, %v5743
        %5745 = vdwg.mxu0
        %5746 = vmatprep.subr.bf16.mxu0 %v5073
        %5747 = vmatpush1.bf16.msra.mxu0 %v5072
        %5748 = vmatprep.subr.bf16.mxu0 %v5075
        %5749 = vmatpush1.bf16.msra.mxu0 %v5074
        %5750 = vmatprep.subr.bf16.mxu0 %v5077
        %5751 = vmatpush1.bf16.msra.mxu0 %v5076
        %5752 = vmatprep.subr.bf16.mxu0 %v5079
        %5753 = vmatpush1.bf16.msra.mxu0 %v5078
        %5754 = vmatprep.subr.bf16.mxu0 %v5081
        %5755 = vmatpush1.bf16.msra.mxu0 %v5080
        %5756 = vmatprep.subr.bf16.mxu0 %v5083
        %5757 = vmatpush1.bf16.msra.mxu0 %v5082
        %5758 = vmatprep.subr.bf16.mxu0 %v5085
        %5759 = vmatpush1.bf16.msra.mxu0 %v5084
        %5760 = vmatprep.subr.bf16.mxu0 %v5087
        %5761 = vmatpush1.bf16.msra.mxu0 %v5086
        %5762 = vmatprep.subr.bf16.mxu0 %v5089
        %5763 = vmatpush1.bf16.msra.mxu0 %v5088
        %5764 = vmatprep.subr.bf16.mxu0 %v5091
        %5765 = vmatpush1.bf16.msra.mxu0 %v5090
        %5766 = vmatprep.subr.bf16.mxu0 %v5093
        %5767 = vmatpush1.bf16.msra.mxu0 %v5092
        %5768 = vmatprep.subr.bf16.mxu0 %v5095
        %5769 = vmatpush1.bf16.msra.mxu0 %v5094
        %5770 = vmatprep.subr.bf16.mxu0 %v5097
        %5771 = vmatpush1.bf16.msra.mxu0 %v5096
        %5772 = vmatprep.subr.bf16.mxu0 %v5099
        %5773 = vmatpush1.bf16.msra.mxu0 %v5098
        %5774 = vmatprep.subr.bf16.mxu0 %v5101
        %5775 = vmatpush1.bf16.msra.mxu0 %v5100
        %5776 = vmatprep.subr.bf16.mxu0 %v5103
        %5777 = vmatpush1.bf16.msra.mxu0 %v5102
        %5778 = vmatprep.mubr.bf16.mxu0 %v3849
        %5779 = vmatmul.mubr.bf16.gmra.mrb[0].mxu0 %v3848
        %v5780 = vpop.f32.mrb[0].mxu0
        %v5781 = vadd.f32 %v5668, %v5780
        %v5782 = vpop.f32.mrb[0].mxu0
        %v5783 = vadd.f32 %v5670, %v5782
        %v5784 = vpop.f32.mrb[0].mxu0
        %v5785 = vadd.f32 %v5672, %v5784
        %v5786 = vpop.f32.mrb[0].mxu0
        %v5787 = vadd.f32 %v5674, %v5786
        %5788 = vmatprep.mubr.bf16.mxu0 %v3865
        %5789 = vmatmul.mubr.bf16.gmra.mrb[0].mxu0 %v3864
        %v5790 = vpop.f32.mrb[0].mxu0
        %v5791 = vadd.f32 %v5678, %v5790
        %v5792 = vpop.f32.mrb[0].mxu0
        %v5793 = vadd.f32 %v5680, %v5792
        %v5794 = vpop.f32.mrb[0].mxu0
        %v5795 = vadd.f32 %v5682, %v5794
        %v5796 = vpop.f32.mrb[0].mxu0
        %v5797 = vadd.f32 %v5684, %v5796
        %5798 = vmatprep.mubr.bf16.mxu0 %v3881
        %5799 = vmatmul.mubr.bf16.gmra.mrb[0].mxu0 %v3880
        %v5800 = vpop.f32.mrb[0].mxu0
        %v5801 = vadd.f32 %v5688, %v5800
        %v5802 = vpop.f32.mrb[0].mxu0
        %v5803 = vadd.f32 %v5690, %v5802
        %v5804 = vpop.f32.mrb[0].mxu0
        %v5805 = vadd.f32 %v5692, %v5804
        %v5806 = vpop.f32.mrb[0].mxu0
        %v5807 = vadd.f32 %v5694, %v5806
        %5808 = vmatprep.mubr.bf16.mxu0 %v3897
        %5809 = vmatmul.mubr.bf16.gmra.mrb[0].mxu0 %v3896
        %v5810 = vpop.f32.mrb[0].mxu0
        %v5811 = vadd.f32 %v5698, %v5810
        %v5812 = vpop.f32.mrb[0].mxu0
        %v5813 = vadd.f32 %v5700, %v5812
        %v5814 = vpop.f32.mrb[0].mxu0
        %v5815 = vadd.f32 %v5702, %v5814
        %v5816 = vpop.f32.mrb[0].mxu0
        %v5817 = vadd.f32 %v5704, %v5816
        %5818 = vmatprep.mubr.bf16.mxu0 %v3913
        %5819 = vmatmul.mubr.bf16.gmra.mrb[0].mxu0 %v3912
        %v5820 = vpop.f32.mrb[0].mxu0
        %v5821 = vadd.f32 %v5708, %v5820
        %v5822 = vpop.f32.mrb[0].mxu0
        %v5823 = vadd.f32 %v5710, %v5822
        %v5824 = vpop.f32.mrb[0].mxu0
        %v5825 = vadd.f32 %v5712, %v5824
        %v5826 = vpop.f32.mrb[0].mxu0
        %v5827 = vadd.f32 %v5714, %v5826
        %5828 = vmatprep.mubr.bf16.mxu0 %v3929
        %5829 = vmatmul.mubr.bf16.gmra.mrb[0].mxu0 %v3928
        %v5830 = vpop.f32.mrb[0].mxu0
        %v5831 = vadd.f32 %v5718, %v5830
        %v5832 = vpop.f32.mrb[0].mxu0
        %v5833 = vadd.f32 %v5720, %v5832
        %v5834 = vpop.f32.mrb[0].mxu0
        %v5835 = vadd.f32 %v5722, %v5834
        %v5836 = vpop.f32.mrb[0].mxu0
        %v5837 = vadd.f32 %v5724, %v5836
        %5838 = vmatprep.mubr.bf16.mxu0 %v3945
        %5839 = vmatmul.mubr.bf16.gmra.mrb[0].mxu0 %v3944
        %v5840 = vpop.f32.mrb[0].mxu0
        %v5841 = vadd.f32 %v5728, %v5840
        %v5842 = vpop.f32.mrb[0].mxu0
        %v5843 = vadd.f32 %v5730, %v5842
        %v5844 = vpop.f32.mrb[0].mxu0
        %v5845 = vadd.f32 %v5732, %v5844
        %v5846 = vpop.f32.mrb[0].mxu0
        %v5847 = vadd.f32 %v5734, %v5846
        %5848 = vmatprep.mubr.bf16.mxu0 %v3961
        %5849 = vmatmul.mubr.bf16.gmra.mrb[0].mxu0 %v3960
        %v5850 = vpop.f32.mrb[0].mxu0
        %v5851 = vadd.f32 %v5738, %v5850
        %v5852 = vpop.f32.mrb[0].mxu0
        %v5853 = vadd.f32 %v5740, %v5852
        %v5854 = vpop.f32.mrb[0].mxu0
        %v5855 = vadd.f32 %v5742, %v5854
        %v5856 = vpop.f32.mrb[0].mxu0
        %v5857 = vadd.f32 %v5744, %v5856
        %5858 = vdwg.mxu0
        %5859 = vmatprep.subr.bf16.mxu0 %v5105
        %5860 = vmatpush1.bf16.msra.mxu0 %v5104
        %5861 = vmatprep.subr.bf16.mxu0 %v5107
        %5862 = vmatpush1.bf16.msra.mxu0 %v5106
        %5863 = vmatprep.subr.bf16.mxu0 %v5109
        %5864 = vmatpush1.bf16.msra.mxu0 %v5108
        %5865 = vmatprep.subr.bf16.mxu0 %v5111
        %5866 = vmatpush1.bf16.msra.mxu0 %v5110
        %5867 = vmatprep.subr.bf16.mxu0 %v5113
        %5868 = vmatpush1.bf16.msra.mxu0 %v5112
        %5869 = vmatprep.subr.bf16.mxu0 %v5115
        %5870 = vmatpush1.bf16.msra.mxu0 %v5114
        %5871 = vmatprep.subr.bf16.mxu0 %v5117
        %5872 = vmatpush1.bf16.msra.mxu0 %v5116
        %5873 = vmatprep.subr.bf16.mxu0 %v5119
        %5874 = vmatpush1.bf16.msra.mxu0 %v5118
        %5875 = vmatprep.subr.bf16.mxu0 %v5121
        %5876 = vmatpush1.bf16.msra.mxu0 %v5120
        %5877 = vmatprep.subr.bf16.mxu0 %v5123
        %5878 = vmatpush1.bf16.msra.mxu0 %v5122
        %5879 = vmatprep.subr.bf16.mxu0 %v5125
        %5880 = vmatpush1.bf16.msra.mxu0 %v5124
        %5881 = vmatprep.subr.bf16.mxu0 %v5127
        %5882 = vmatpush1.bf16.msra.mxu0 %v5126
        %5883 = vmatprep.subr.bf16.mxu0 %v5129
        %5884 = vmatpush1.bf16.msra.mxu0 %v5128
        %5885 = vmatprep.subr.bf16.mxu0 %v5131
        %5886 = vmatpush1.bf16.msra.mxu0 %v5130
        %5887 = vmatprep.subr.bf16.mxu0 %v5133
        %5888 = vmatpush1.bf16.msra.mxu0 %v5132
        %5889 = vmatprep.subr.bf16.mxu0 %v5135
        %5890 = vmatpush1.bf16.msra.mxu0 %v5134
        %5891 = vmatprep.mubr.bf16.mxu0 %v3851
        %5892 = vmatmul.mubr.bf16.gmra.mrb[0].mxu0 %v3850
        %v5893 = vpop.f32.mrb[0].mxu0
        %v5894 = vadd.f32 %v5781, %v5893
        %v5895 = vpop.f32.mrb[0].mxu0
        %v5896 = vadd.f32 %v5783, %v5895
        %v5897 = vpop.f32.mrb[0].mxu0
        %v5898 = vadd.f32 %v5785, %v5897
        %v5899 = vpop.f32.mrb[0].mxu0
        %v5900 = vadd.f32 %v5787, %v5899
        %5901 = vmatprep.mubr.bf16.mxu0 %v3867
        %5902 = vmatmul.mubr.bf16.gmra.mrb[0].mxu0 %v3866
        %v5903 = vpop.f32.mrb[0].mxu0
        %v5904 = vadd.f32 %v5791, %v5903
        %v5905 = vpop.f32.mrb[0].mxu0
        %v5906 = vadd.f32 %v5793, %v5905
        %v5907 = vpop.f32.mrb[0].mxu0
        %v5908 = vadd.f32 %v5795, %v5907
        %v5909 = vpop.f32.mrb[0].mxu0
        %v5910 = vadd.f32 %v5797, %v5909
        %5911 = vmatprep.mubr.bf16.mxu0 %v3883
        %5912 = vmatmul.mubr.bf16.gmra.mrb[0].mxu0 %v3882
        %v5913 = vpop.f32.mrb[0].mxu0
        %v5914 = vadd.f32 %v5801, %v5913
        %v5915 = vpop.f32.mrb[0].mxu0
        %v5916 = vadd.f32 %v5803, %v5915
        %v5917 = vpop.f32.mrb[0].mxu0
        %v5918 = vadd.f32 %v5805, %v5917
        %v5919 = vpop.f32.mrb[0].mxu0
        %v5920 = vadd.f32 %v5807, %v5919
        %5921 = vmatprep.mubr.bf16.mxu0 %v3899
        %5922 = vmatmul.mubr.bf16.gmra.mrb[0].mxu0 %v3898
        %v5923 = vpop.f32.mrb[0].mxu0
        %v5924 = vadd.f32 %v5811, %v5923
        %v5925 = vpop.f32.mrb[0].mxu0
        %v5926 = vadd.f32 %v5813, %v5925
        %v5927 = vpop.f32.mrb[0].mxu0
        %v5928 = vadd.f32 %v5815, %v5927
        %v5929 = vpop.f32.mrb[0].mxu0
        %v5930 = vadd.f32 %v5817, %v5929
        %5931 = vmatprep.mubr.bf16.mxu0 %v3915
        %5932 = vmatmul.mubr.bf16.gmra.mrb[0].mxu0 %v3914
        %v5933 = vpop.f32.mrb[0].mxu0
        %v5934 = vadd.f32 %v5821, %v5933
        %v5935 = vpop.f32.mrb[0].mxu0
        %v5936 = vadd.f32 %v5823, %v5935
        %v5937 = vpop.f32.mrb[0].mxu0
        %v5938 = vadd.f32 %v5825, %v5937
        %v5939 = vpop.f32.mrb[0].mxu0
        %v5940 = vadd.f32 %v5827, %v5939
        %5941 = vmatprep.mubr.bf16.mxu0 %v3931
        %5942 = vmatmul.mubr.bf16.gmra.mrb[0].mxu0 %v3930
        %v5943 = vpop.f32.mrb[0].mxu0
        %v5944 = vadd.f32 %v5831, %v5943
        %v5945 = vpop.f32.mrb[0].mxu0
        %v5946 = vadd.f32 %v5833, %v5945
        %v5947 = vpop.f32.mrb[0].mxu0
        %v5948 = vadd.f32 %v5835, %v5947
        %v5949 = vpop.f32.mrb[0].mxu0
        %v5950 = vadd.f32 %v5837, %v5949
        %5951 = vmatprep.mubr.bf16.mxu0 %v3947
        %5952 = vmatmul.mubr.bf16.gmra.mrb[0].mxu0 %v3946
        %v5953 = vpop.f32.mrb[0].mxu0
        %v5954 = vadd.f32 %v5841, %v5953
        %v5955 = vpop.f32.mrb[0].mxu0
        %v5956 = vadd.f32 %v5843, %v5955
        %v5957 = vpop.f32.mrb[0].mxu0
        %v5958 = vadd.f32 %v5845, %v5957
        %v5959 = vpop.f32.mrb[0].mxu0
        %v5960 = vadd.f32 %v5847, %v5959
        %5961 = vmatprep.mubr.bf16.mxu0 %v3963
        %5962 = vmatmul.mubr.bf16.gmra.mrb[0].mxu0 %v3962
        %v5963 = vpop.f32.mrb[0].mxu0
        %v5964 = vadd.f32 %v5851, %v5963
        %v5965 = vpop.f32.mrb[0].mxu0
        %v5966 = vadd.f32 %v5853, %v5965
        %v5967 = vpop.f32.mrb[0].mxu0
        %v5968 = vadd.f32 %v5855, %v5967
        %v5969 = vpop.f32.mrb[0].mxu0
        %v5970 = vadd.f32 %v5857, %v5969
        %5971 = vdwg.mxu0
        %5972 = vmatprep.subr.bf16.mxu0 %v5137
        %5973 = vmatpush1.bf16.msra.mxu0 %v5136
        %5974 = vmatprep.subr.bf16.mxu0 %v5139
        %5975 = vmatpush1.bf16.msra.mxu0 %v5138
        %5976 = vmatprep.subr.bf16.mxu0 %v5141
        %5977 = vmatpush1.bf16.msra.mxu0 %v5140
        %5978 = vmatprep.subr.bf16.mxu0 %v5143
        %5979 = vmatpush1.bf16.msra.mxu0 %v5142
        %5980 = vmatprep.subr.bf16.mxu0 %v5145
        %5981 = vmatpush1.bf16.msra.mxu0 %v5144
        %5982 = vmatprep.subr.bf16.mxu0 %v5147
        %5983 = vmatpush1.bf16.msra.mxu0 %v5146
        %5984 = vmatprep.subr.bf16.mxu0 %v5149
        %5985 = vmatpush1.bf16.msra.mxu0 %v5148
        %5986 = vmatprep.subr.bf16.mxu0 %v5151
        %5987 = vmatpush1.bf16.msra.mxu0 %v5150
        %5988 = vmatprep.subr.bf16.mxu0 %v5153
        %5989 = vmatpush1.bf16.msra.mxu0 %v5152
        %5990 = vmatprep.subr.bf16.mxu0 %v5155
        %5991 = vmatpush1.bf16.msra.mxu0 %v5154
        %5992 = vmatprep.subr.bf16.mxu0 %v5157
        %5993 = vmatpush1.bf16.msra.mxu0 %v5156
        %5994 = vmatprep.subr.bf16.mxu0 %v5159
        %5995 = vmatpush1.bf16.msra.mxu0 %v5158
        %5996 = vmatprep.subr.bf16.mxu0 %v5161
        %5997 = vmatpush1.bf16.msra.mxu0 %v5160
        %5998 = vmatprep.subr.bf16.mxu0 %v5163
        %5999 = vmatpush1.bf16.msra.mxu0 %v5162
        %6000 = vmatprep.subr.bf16.mxu0 %v5165
        %6001 = vmatpush1.bf16.msra.mxu0 %v5164
        %6002 = vmatprep.subr.bf16.mxu0 %v5167
        %6003 = vmatpush1.bf16.msra.mxu0 %v5166
        %6004 = vmatprep.mubr.bf16.mxu0 %v3853
        %6005 = vmatmul.mubr.bf16.gmra.mrb[0].mxu0 %v3852
        %v6006 = vpop.f32.mrb[0].mxu0
        %v6007 = vadd.f32 %v5894, %v6006
        %v6008 = vpop.f32.mrb[0].mxu0
        %v6009 = vadd.f32 %v5896, %v6008
        %v6010 = vpop.f32.mrb[0].mxu0
        %v6011 = vadd.f32 %v5898, %v6010
        %v6012 = vpop.f32.mrb[0].mxu0
        %v6013 = vadd.f32 %v5900, %v6012
        %6014 = vmatprep.mubr.bf16.mxu0 %v3869
        %6015 = vmatmul.mubr.bf16.gmra.mrb[0].mxu0 %v3868
        %v6016 = vpop.f32.mrb[0].mxu0
        %v6017 = vadd.f32 %v5904, %v6016
        %v6018 = vpop.f32.mrb[0].mxu0
        %v6019 = vadd.f32 %v5906, %v6018
        %v6020 = vpop.f32.mrb[0].mxu0
        %v6021 = vadd.f32 %v5908, %v6020
        %v6022 = vpop.f32.mrb[0].mxu0
        %v6023 = vadd.f32 %v5910, %v6022
        %6024 = vmatprep.mubr.bf16.mxu0 %v3885
        %6025 = vmatmul.mubr.bf16.gmra.mrb[0].mxu0 %v3884
        %v6026 = vpop.f32.mrb[0].mxu0
        %v6027 = vadd.f32 %v5914, %v6026
        %v6028 = vpop.f32.mrb[0].mxu0
        %v6029 = vadd.f32 %v5916, %v6028
        %v6030 = vpop.f32.mrb[0].mxu0
        %v6031 = vadd.f32 %v5918, %v6030
        %v6032 = vpop.f32.mrb[0].mxu0
        %v6033 = vadd.f32 %v5920, %v6032
        %6034 = vmatprep.mubr.bf16.mxu0 %v3901
        %6035 = vmatmul.mubr.bf16.gmra.mrb[0].mxu0 %v3900
        %v6036 = vpop.f32.mrb[0].mxu0
        %v6037 = vadd.f32 %v5924, %v6036
        %v6038 = vpop.f32.mrb[0].mxu0
        %v6039 = vadd.f32 %v5926, %v6038
        %v6040 = vpop.f32.mrb[0].mxu0
        %v6041 = vadd.f32 %v5928, %v6040
        %v6042 = vpop.f32.mrb[0].mxu0
        %v6043 = vadd.f32 %v5930, %v6042
        %6044 = vmatprep.mubr.bf16.mxu0 %v3917
        %6045 = vmatmul.mubr.bf16.gmra.mrb[0].mxu0 %v3916
        %v6046 = vpop.f32.mrb[0].mxu0
        %v6047 = vadd.f32 %v5934, %v6046
        %v6048 = vpop.f32.mrb[0].mxu0
        %v6049 = vadd.f32 %v5936, %v6048
        %v6050 = vpop.f32.mrb[0].mxu0
        %v6051 = vadd.f32 %v5938, %v6050
        %v6052 = vpop.f32.mrb[0].mxu0
        %v6053 = vadd.f32 %v5940, %v6052
        %6054 = vmatprep.mubr.bf16.mxu0 %v3933
        %6055 = vmatmul.mubr.bf16.gmra.mrb[0].mxu0 %v3932
        %v6056 = vpop.f32.mrb[0].mxu0
        %v6057 = vadd.f32 %v5944, %v6056
        %v6058 = vpop.f32.mrb[0].mxu0
        %v6059 = vadd.f32 %v5946, %v6058
        %v6060 = vpop.f32.mrb[0].mxu0
        %v6061 = vadd.f32 %v5948, %v6060
        %v6062 = vpop.f32.mrb[0].mxu0
        %v6063 = vadd.f32 %v5950, %v6062
        %6064 = vmatprep.mubr.bf16.mxu0 %v3949
        %6065 = vmatmul.mubr.bf16.gmra.mrb[0].mxu0 %v3948
        %v6066 = vpop.f32.mrb[0].mxu0
        %v6067 = vadd.f32 %v5954, %v6066
        %v6068 = vpop.f32.mrb[0].mxu0
        %v6069 = vadd.f32 %v5956, %v6068
        %v6070 = vpop.f32.mrb[0].mxu0
        %v6071 = vadd.f32 %v5958, %v6070
        %v6072 = vpop.f32.mrb[0].mxu0
        %v6073 = vadd.f32 %v5960, %v6072
        %6074 = vmatprep.mubr.bf16.mxu0 %v3965
        %6075 = vmatmul.mubr.bf16.gmra.mrb[0].mxu0 %v3964
        %v6076 = vpop.f32.mrb[0].mxu0
        %v6077 = vadd.f32 %v5964, %v6076
        %v6078 = vpop.f32.mrb[0].mxu0
        %v6079 = vadd.f32 %v5966, %v6078
        %v6080 = vpop.f32.mrb[0].mxu0
        %v6081 = vadd.f32 %v5968, %v6080
        %v6082 = vpop.f32.mrb[0].mxu0
        %v6083 = vadd.f32 %v5970, %v6082
        %6084 = vdwg.mxu0
        %6085 = vmatprep.subr.bf16.mxu0 %v5169
        %6086 = vmatpush1.bf16.msra.mxu0 %v5168
        %6087 = vmatprep.subr.bf16.mxu0 %v5171
        %6088 = vmatpush1.bf16.msra.mxu0 %v5170
        %6089 = vmatprep.subr.bf16.mxu0 %v5173
        %6090 = vmatpush1.bf16.msra.mxu0 %v5172
        %6091 = vmatprep.subr.bf16.mxu0 %v5175
        %6092 = vmatpush1.bf16.msra.mxu0 %v5174
        %6093 = vmatprep.subr.bf16.mxu0 %v5177
        %6094 = vmatpush1.bf16.msra.mxu0 %v5176
        %6095 = vmatprep.subr.bf16.mxu0 %v5179
        %6096 = vmatpush1.bf16.msra.mxu0 %v5178
        %6097 = vmatprep.subr.bf16.mxu0 %v5181
        %6098 = vmatpush1.bf16.msra.mxu0 %v5180
        %6099 = vmatprep.subr.bf16.mxu0 %v5183
        %6100 = vmatpush1.bf16.msra.mxu0 %v5182
        %6101 = vmatprep.subr.bf16.mxu0 %v5185
        %6102 = vmatpush1.bf16.msra.mxu0 %v5184
        %6103 = vmatprep.subr.bf16.mxu0 %v5187
        %6104 = vmatpush1.bf16.msra.mxu0 %v5186
        %6105 = vmatprep.subr.bf16.mxu0 %v5189
        %6106 = vmatpush1.bf16.msra.mxu0 %v5188
        %6107 = vmatprep.subr.bf16.mxu0 %v5191
        %6108 = vmatpush1.bf16.msra.mxu0 %v5190
        %6109 = vmatprep.subr.bf16.mxu0 %v5193
        %6110 = vmatpush1.bf16.msra.mxu0 %v5192
        %6111 = vmatprep.subr.bf16.mxu0 %v5195
        %6112 = vmatpush1.bf16.msra.mxu0 %v5194
        %6113 = vmatprep.subr.bf16.mxu0 %v5197
        %6114 = vmatpush1.bf16.msra.mxu0 %v5196
        %6115 = vmatprep.subr.bf16.mxu0 %v5199
        %6116 = vmatpush1.bf16.msra.mxu0 %v5198
        %6117 = vmatprep.mubr.bf16.mxu0 %v3855
        %6118 = vmatmul.mubr.bf16.gmra.mrb[0].mxu0 %v3854
        %v6119 = vpop.f32.mrb[0].mxu0
        %v6120 = vadd.f32 %v6007, %v6119
        %v6121 = vpop.f32.mrb[0].mxu0
        %v6122 = vadd.f32 %v6009, %v6121
        %v6123 = vpop.f32.mrb[0].mxu0
        %v6124 = vadd.f32 %v6011, %v6123
        %v6125 = vpop.f32.mrb[0].mxu0
        %v6126 = vadd.f32 %v6013, %v6125
        %6127 = vmatprep.mubr.bf16.mxu0 %v3871
        %6128 = vmatmul.mubr.bf16.gmra.mrb[0].mxu0 %v3870
        %v6129 = vpop.f32.mrb[0].mxu0
        %v6130 = vadd.f32 %v6017, %v6129
        %v6131 = vpop.f32.mrb[0].mxu0
        %v6132 = vadd.f32 %v6019, %v6131
        %v6133 = vpop.f32.mrb[0].mxu0
        %v6134 = vadd.f32 %v6021, %v6133
        %v6135 = vpop.f32.mrb[0].mxu0
        %v6136 = vadd.f32 %v6023, %v6135
        %6137 = vmatprep.mubr.bf16.mxu0 %v3887
        %6138 = vmatmul.mubr.bf16.gmra.mrb[0].mxu0 %v3886
        %v6139 = vpop.f32.mrb[0].mxu0
        %v6140 = vadd.f32 %v6027, %v6139
        %v6141 = vpop.f32.mrb[0].mxu0
        %v6142 = vadd.f32 %v6029, %v6141
        %v6143 = vpop.f32.mrb[0].mxu0
        %v6144 = vadd.f32 %v6031, %v6143
        %v6145 = vpop.f32.mrb[0].mxu0
        %v6146 = vadd.f32 %v6033, %v6145
        %6147 = vmatprep.mubr.bf16.mxu0 %v3903
        %6148 = vmatmul.mubr.bf16.gmra.mrb[0].mxu0 %v3902
        %v6149 = vpop.f32.mrb[0].mxu0
        %v6150 = vadd.f32 %v6037, %v6149
        %v6151 = vpop.f32.mrb[0].mxu0
        %v6152 = vadd.f32 %v6039, %v6151
        %v6153 = vpop.f32.mrb[0].mxu0
        %v6154 = vadd.f32 %v6041, %v6153
        %v6155 = vpop.f32.mrb[0].mxu0
        %v6156 = vadd.f32 %v6043, %v6155
        %6157 = vmatprep.mubr.bf16.mxu0 %v3919
        %6158 = vmatmul.mubr.bf16.gmra.mrb[0].mxu0 %v3918
        %v6159 = vpop.f32.mrb[0].mxu0
        %v6160 = vadd.f32 %v6047, %v6159
        %v6161 = vpop.f32.mrb[0].mxu0
        %v6162 = vadd.f32 %v6049, %v6161
        %v6163 = vpop.f32.mrb[0].mxu0
        %v6164 = vadd.f32 %v6051, %v6163
        %v6165 = vpop.f32.mrb[0].mxu0
        %v6166 = vadd.f32 %v6053, %v6165
        %6167 = vmatprep.mubr.bf16.mxu0 %v3935
        %6168 = vmatmul.mubr.bf16.gmra.mrb[0].mxu0 %v3934
        %v6169 = vpop.f32.mrb[0].mxu0
        %v6170 = vadd.f32 %v6057, %v6169
        %v6171 = vpop.f32.mrb[0].mxu0
        %v6172 = vadd.f32 %v6059, %v6171
        %v6173 = vpop.f32.mrb[0].mxu0
        %v6174 = vadd.f32 %v6061, %v6173
        %v6175 = vpop.f32.mrb[0].mxu0
        %v6176 = vadd.f32 %v6063, %v6175
        %6177 = vmatprep.mubr.bf16.mxu0 %v3951
        %6178 = vmatmul.mubr.bf16.gmra.mrb[0].mxu0 %v3950
        %v6179 = vpop.f32.mrb[0].mxu0
        %v6180 = vadd.f32 %v6067, %v6179
        %v6181 = vpop.f32.mrb[0].mxu0
        %v6182 = vadd.f32 %v6069, %v6181
        %v6183 = vpop.f32.mrb[0].mxu0
        %v6184 = vadd.f32 %v6071, %v6183
        %v6185 = vpop.f32.mrb[0].mxu0
        %v6186 = vadd.f32 %v6073, %v6185
        %6187 = vmatprep.mubr.bf16.mxu0 %v3967
        %6188 = vmatmul.mubr.bf16.gmra.mrb[0].mxu0 %v3966
        %v6189 = vpop.f32.mrb[0].mxu0
        %v6190 = vadd.f32 %v6077, %v6189
        %v6191 = vpop.f32.mrb[0].mxu0
        %v6192 = vadd.f32 %v6079, %v6191
        %v6193 = vpop.f32.mrb[0].mxu0
        %v6194 = vadd.f32 %v6081, %v6193
        %v6195 = vpop.f32.mrb[0].mxu0
        %v6196 = vadd.f32 %v6083, %v6195
        %6197 = vdwg.mxu0
        %6198 = vmatprep.subr.bf16.mxu0 %v5201
        %6199 = vmatpush1.bf16.msra.mxu0 %v5200
        %6200 = vmatprep.subr.bf16.mxu0 %v5203
        %6201 = vmatpush1.bf16.msra.mxu0 %v5202
        %6202 = vmatprep.subr.bf16.mxu0 %v5205
        %6203 = vmatpush1.bf16.msra.mxu0 %v5204
        %6204 = vmatprep.subr.bf16.mxu0 %v5207
        %6205 = vmatpush1.bf16.msra.mxu0 %v5206
        %6206 = vmatprep.subr.bf16.mxu0 %v5209
        %6207 = vmatpush1.bf16.msra.mxu0 %v5208
        %6208 = vmatprep.subr.bf16.mxu0 %v5211
        %6209 = vmatpush1.bf16.msra.mxu0 %v5210
        %6210 = vmatprep.subr.bf16.mxu0 %v5213
        %6211 = vmatpush1.bf16.msra.mxu0 %v5212
        %6212 = vmatprep.subr.bf16.mxu0 %v5215
        %6213 = vmatpush1.bf16.msra.mxu0 %v5214
        %6214 = vmatprep.subr.bf16.mxu0 %v5217
        %6215 = vmatpush1.bf16.msra.mxu0 %v5216
        %6216 = vmatprep.subr.bf16.mxu0 %v5219
        %6217 = vmatpush1.bf16.msra.mxu0 %v5218
        %6218 = vmatprep.subr.bf16.mxu0 %v5221
        %6219 = vmatpush1.bf16.msra.mxu0 %v5220
        %6220 = vmatprep.subr.bf16.mxu0 %v5223
        %6221 = vmatpush1.bf16.msra.mxu0 %v5222
        %6222 = vmatprep.subr.bf16.mxu0 %v5225
        %6223 = vmatpush1.bf16.msra.mxu0 %v5224
        %6224 = vmatprep.subr.bf16.mxu0 %v5227
        %6225 = vmatpush1.bf16.msra.mxu0 %v5226
        %6226 = vmatprep.subr.bf16.mxu0 %v5229
        %6227 = vmatpush1.bf16.msra.mxu0 %v5228
        %6228 = vmatprep.subr.bf16.mxu0 %v5231
        %6229 = vmatpush1.bf16.msra.mxu0 %v5230
        %6230 = vmatprep.mubr.bf16.mxu0 %v3857
        %6231 = vmatmul.mubr.bf16.gmra.mrb[0].mxu0 %v3856
        %v6232 = vpop.f32.mrb[0].mxu0
        %v6233 = vadd.f32 %v6120, %v6232
        %v6234 = vpop.f32.mrb[0].mxu0
        %v6235 = vadd.f32 %v6122, %v6234
        %v6236 = vpop.f32.mrb[0].mxu0
        %v6237 = vadd.f32 %v6124, %v6236
        %v6238 = vpop.f32.mrb[0].mxu0
        %v6239 = vadd.f32 %v6126, %v6238
        %6240 = vmatprep.mubr.bf16.mxu0 %v3873
        %6241 = vmatmul.mubr.bf16.gmra.mrb[0].mxu0 %v3872
        %v6242 = vpop.f32.mrb[0].mxu0
        %v6243 = vadd.f32 %v6130, %v6242
        %v6244 = vpop.f32.mrb[0].mxu0
        %v6245 = vadd.f32 %v6132, %v6244
        %v6246 = vpop.f32.mrb[0].mxu0
        %v6247 = vadd.f32 %v6134, %v6246
        %v6248 = vpop.f32.mrb[0].mxu0
        %v6249 = vadd.f32 %v6136, %v6248
        %6250 = vmatprep.mubr.bf16.mxu0 %v3889
        %6251 = vmatmul.mubr.bf16.gmra.mrb[0].mxu0 %v3888
        %v6252 = vpop.f32.mrb[0].mxu0
        %v6253 = vadd.f32 %v6140, %v6252
        %v6254 = vpop.f32.mrb[0].mxu0
        %v6255 = vadd.f32 %v6142, %v6254
        %v6256 = vpop.f32.mrb[0].mxu0
        %v6257 = vadd.f32 %v6144, %v6256
        %v6258 = vpop.f32.mrb[0].mxu0
        %v6259 = vadd.f32 %v6146, %v6258
        %6260 = vmatprep.mubr.bf16.mxu0 %v3905
        %6261 = vmatmul.mubr.bf16.gmra.mrb[0].mxu0 %v3904
        %v6262 = vpop.f32.mrb[0].mxu0
        %v6263 = vadd.f32 %v6150, %v6262
        %v6264 = vpop.f32.mrb[0].mxu0
        %v6265 = vadd.f32 %v6152, %v6264
        %v6266 = vpop.f32.mrb[0].mxu0
        %v6267 = vadd.f32 %v6154, %v6266
        %v6268 = vpop.f32.mrb[0].mxu0
        %v6269 = vadd.f32 %v6156, %v6268
        %6270 = vmatprep.mubr.bf16.mxu0 %v3921
        %6271 = vmatmul.mubr.bf16.gmra.mrb[0].mxu0 %v3920
        %v6272 = vpop.f32.mrb[0].mxu0
        %v6273 = vadd.f32 %v6160, %v6272
        %v6274 = vpop.f32.mrb[0].mxu0
        %v6275 = vadd.f32 %v6162, %v6274
        %v6276 = vpop.f32.mrb[0].mxu0
        %v6277 = vadd.f32 %v6164, %v6276
        %v6278 = vpop.f32.mrb[0].mxu0
        %v6279 = vadd.f32 %v6166, %v6278
        %6280 = vmatprep.mubr.bf16.mxu0 %v3937
        %6281 = vmatmul.mubr.bf16.gmra.mrb[0].mxu0 %v3936
        %v6282 = vpop.f32.mrb[0].mxu0
        %v6283 = vadd.f32 %v6170, %v6282
        %v6284 = vpop.f32.mrb[0].mxu0
        %v6285 = vadd.f32 %v6172, %v6284
        %v6286 = vpop.f32.mrb[0].mxu0
        %v6287 = vadd.f32 %v6174, %v6286
        %v6288 = vpop.f32.mrb[0].mxu0
        %v6289 = vadd.f32 %v6176, %v6288
        %6290 = vmatprep.mubr.bf16.mxu0 %v3953
        %6291 = vmatmul.mubr.bf16.gmra.mrb[0].mxu0 %v3952
        %v6292 = vpop.f32.mrb[0].mxu0
        %v6293 = vadd.f32 %v6180, %v6292
        %v6294 = vpop.f32.mrb[0].mxu0
        %v6295 = vadd.f32 %v6182, %v6294
        %v6296 = vpop.f32.mrb[0].mxu0
        %v6297 = vadd.f32 %v6184, %v6296
        %v6298 = vpop.f32.mrb[0].mxu0
        %v6299 = vadd.f32 %v6186, %v6298
        %6300 = vmatprep.mubr.bf16.mxu0 %v3969
        %6301 = vmatmul.mubr.bf16.gmra.mrb[0].mxu0 %v3968
        %v6302 = vpop.f32.mrb[0].mxu0
        %v6303 = vadd.f32 %v6190, %v6302
        %v6304 = vpop.f32.mrb[0].mxu0
        %v6305 = vadd.f32 %v6192, %v6304
        %v6306 = vpop.f32.mrb[0].mxu0
        %v6307 = vadd.f32 %v6194, %v6306
        %v6308 = vpop.f32.mrb[0].mxu0
        %v6309 = vadd.f32 %v6196, %v6308
        %6310 = vdwg.mxu0
        %6311 = vmatprep.subr.bf16.mxu0 %v5233
        %6312 = vmatpush1.bf16.msra.mxu0 %v5232
        %6313 = vmatprep.subr.bf16.mxu0 %v5235
        %6314 = vmatpush1.bf16.msra.mxu0 %v5234
        %6315 = vmatprep.subr.bf16.mxu0 %v5237
        %6316 = vmatpush1.bf16.msra.mxu0 %v5236
        %6317 = vmatprep.subr.bf16.mxu0 %v5239
        %6318 = vmatpush1.bf16.msra.mxu0 %v5238
        %6319 = vmatprep.subr.bf16.mxu0 %v5241
        %6320 = vmatpush1.bf16.msra.mxu0 %v5240
        %6321 = vmatprep.subr.bf16.mxu0 %v5243
        %6322 = vmatpush1.bf16.msra.mxu0 %v5242
        %6323 = vmatprep.subr.bf16.mxu0 %v5245
        %6324 = vmatpush1.bf16.msra.mxu0 %v5244
        %6325 = vmatprep.subr.bf16.mxu0 %v5247
        %6326 = vmatpush1.bf16.msra.mxu0 %v5246
        %6327 = vmatprep.subr.bf16.mxu0 %v5249
        %6328 = vmatpush1.bf16.msra.mxu0 %v5248
        %6329 = vmatprep.subr.bf16.mxu0 %v5251
        %6330 = vmatpush1.bf16.msra.mxu0 %v5250
        %6331 = vmatprep.subr.bf16.mxu0 %v5253
        %6332 = vmatpush1.bf16.msra.mxu0 %v5252
        %6333 = vmatprep.subr.bf16.mxu0 %v5255
        %6334 = vmatpush1.bf16.msra.mxu0 %v5254
        %6335 = vmatprep.subr.bf16.mxu0 %v5257
        %6336 = vmatpush1.bf16.msra.mxu0 %v5256
        %6337 = vmatprep.subr.bf16.mxu0 %v5259
        %6338 = vmatpush1.bf16.msra.mxu0 %v5258
        %6339 = vmatprep.subr.bf16.mxu0 %v5261
        %6340 = vmatpush1.bf16.msra.mxu0 %v5260
        %6341 = vmatprep.subr.bf16.mxu0 %v5263
        %6342 = vmatpush1.bf16.msra.mxu0 %v5262
        %6343 = vmatprep.mubr.bf16.mxu0 %v3859
        %6344 = vmatmul.mubr.bf16.gmra.mrb[0].mxu0 %v3858
        %v6345 = vpop.f32.mrb[0].mxu0
        %v6346 = vadd.f32 %v6233, %v6345
        %v6347 = vpop.f32.mrb[0].mxu0
        %v6348 = vadd.f32 %v6235, %v6347
        %v6349 = vpop.f32.mrb[0].mxu0
        %v6350 = vadd.f32 %v6237, %v6349
        %v6351 = vpop.f32.mrb[0].mxu0
        %v6352 = vadd.f32 %v6239, %v6351
        %6353 = vmatprep.mubr.bf16.mxu0 %v3875
        %6354 = vmatmul.mubr.bf16.gmra.mrb[0].mxu0 %v3874
        %v6355 = vpop.f32.mrb[0].mxu0
        %v6356 = vadd.f32 %v6243, %v6355
        %v6357 = vpop.f32.mrb[0].mxu0
        %v6358 = vadd.f32 %v6245, %v6357
        %v6359 = vpop.f32.mrb[0].mxu0
        %v6360 = vadd.f32 %v6247, %v6359
        %v6361 = vpop.f32.mrb[0].mxu0
        %v6362 = vadd.f32 %v6249, %v6361
        %6363 = vmatprep.mubr.bf16.mxu0 %v3891
        %6364 = vmatmul.mubr.bf16.gmra.mrb[0].mxu0 %v3890
        %v6365 = vpop.f32.mrb[0].mxu0
        %v6366 = vadd.f32 %v6253, %v6365
        %v6367 = vpop.f32.mrb[0].mxu0
        %v6368 = vadd.f32 %v6255, %v6367
        %v6369 = vpop.f32.mrb[0].mxu0
        %v6370 = vadd.f32 %v6257, %v6369
        %v6371 = vpop.f32.mrb[0].mxu0
        %v6372 = vadd.f32 %v6259, %v6371
        %6373 = vmatprep.mubr.bf16.mxu0 %v3907
        %6374 = vmatmul.mubr.bf16.gmra.mrb[0].mxu0 %v3906
        %v6375 = vpop.f32.mrb[0].mxu0
        %v6376 = vadd.f32 %v6263, %v6375
        %v6377 = vpop.f32.mrb[0].mxu0
        %v6378 = vadd.f32 %v6265, %v6377
        %v6379 = vpop.f32.mrb[0].mxu0
        %v6380 = vadd.f32 %v6267, %v6379
        %v6381 = vpop.f32.mrb[0].mxu0
        %v6382 = vadd.f32 %v6269, %v6381
        %6383 = vmatprep.mubr.bf16.mxu0 %v3923
        %6384 = vmatmul.mubr.bf16.gmra.mrb[0].mxu0 %v3922
        %v6385 = vpop.f32.mrb[0].mxu0
        %v6386 = vadd.f32 %v6273, %v6385
        %v6387 = vpop.f32.mrb[0].mxu0
        %v6388 = vadd.f32 %v6275, %v6387
        %v6389 = vpop.f32.mrb[0].mxu0
        %v6390 = vadd.f32 %v6277, %v6389
        %v6391 = vpop.f32.mrb[0].mxu0
        %v6392 = vadd.f32 %v6279, %v6391
        %6393 = vmatprep.mubr.bf16.mxu0 %v3939
        %6394 = vmatmul.mubr.bf16.gmra.mrb[0].mxu0 %v3938
        %v6395 = vpop.f32.mrb[0].mxu0
        %v6396 = vadd.f32 %v6283, %v6395
        %v6397 = vpop.f32.mrb[0].mxu0
        %v6398 = vadd.f32 %v6285, %v6397
        %v6399 = vpop.f32.mrb[0].mxu0
        %v6400 = vadd.f32 %v6287, %v6399
        %v6401 = vpop.f32.mrb[0].mxu0
        %v6402 = vadd.f32 %v6289, %v6401
        %6403 = vmatprep.mubr.bf16.mxu0 %v3955
        %6404 = vmatmul.mubr.bf16.gmra.mrb[0].mxu0 %v3954
        %v6405 = vpop.f32.mrb[0].mxu0
        %v6406 = vadd.f32 %v6293, %v6405
        %v6407 = vpop.f32.mrb[0].mxu0
        %v6408 = vadd.f32 %v6295, %v6407
        %v6409 = vpop.f32.mrb[0].mxu0
        %v6410 = vadd.f32 %v6297, %v6409
        %v6411 = vpop.f32.mrb[0].mxu0
        %v6412 = vadd.f32 %v6299, %v6411
        %6413 = vmatprep.mubr.bf16.mxu0 %v3971
        %6414 = vmatmul.mubr.bf16.gmra.mrb[0].mxu0 %v3970
        %v6415 = vpop.f32.mrb[0].mxu0
        %v6416 = vadd.f32 %v6303, %v6415
        %v6417 = vpop.f32.mrb[0].mxu0
        %v6418 = vadd.f32 %v6305, %v6417
        %v6419 = vpop.f32.mrb[0].mxu0
        %v6420 = vadd.f32 %v6307, %v6419
        %v6421 = vpop.f32.mrb[0].mxu0
        %v6422 = vadd.f32 %v6309, %v6421
        %6423 = vdwg.mxu0
        %vm6424 = vcmp.gt.f32.partialorder %v6346, 0.0
        %vm6425 = vcmp.gt.f32.partialorder %v6348, 0.0
        %vm6426 = vcmp.gt.f32.partialorder %v6350, 0.0
        %vm6427 = vcmp.gt.f32.partialorder %v6352, 0.0
        %vm6428 = vcmp.gt.f32.partialorder %v6356, 0.0
        %vm6429 = vcmp.gt.f32.partialorder %v6358, 0.0
        %vm6430 = vcmp.gt.f32.partialorder %v6360, 0.0
        %vm6431 = vcmp.gt.f32.partialorder %v6362, 0.0
        %vm6432 = vcmp.gt.f32.partialorder %v6366, 0.0
        %vm6433 = vcmp.gt.f32.partialorder %v6368, 0.0
        %vm6434 = vcmp.gt.f32.partialorder %v6370, 0.0
        %vm6435 = vcmp.gt.f32.partialorder %v6372, 0.0
        %vm6436 = vcmp.gt.f32.partialorder %v6376, 0.0
        %vm6437 = vcmp.gt.f32.partialorder %v6378, 0.0
        %vm6438 = vcmp.gt.f32.partialorder %v6380, 0.0
        %vm6439 = vcmp.gt.f32.partialorder %v6382, 0.0
        %vm6440 = vcmp.gt.f32.partialorder %v6386, 0.0
        %vm6441 = vcmp.gt.f32.partialorder %v6388, 0.0
        %vm6442 = vcmp.gt.f32.partialorder %v6390, 0.0
        %vm6443 = vcmp.gt.f32.partialorder %v6392, 0.0
        %vm6444 = vcmp.gt.f32.partialorder %v6396, 0.0
        %vm6445 = vcmp.gt.f32.partialorder %v6398, 0.0
        %vm6446 = vcmp.gt.f32.partialorder %v6400, 0.0
        %vm6447 = vcmp.gt.f32.partialorder %v6402, 0.0
        %vm6448 = vcmp.gt.f32.partialorder %v6406, 0.0
        %vm6449 = vcmp.gt.f32.partialorder %v6408, 0.0
        %vm6450 = vcmp.gt.f32.partialorder %v6410, 0.0
        %vm6451 = vcmp.gt.f32.partialorder %v6412, 0.0
        %vm6452 = vcmp.gt.f32.partialorder %v6416, 0.0
        %vm6453 = vcmp.gt.f32.partialorder %v6418, 0.0
        %vm6454 = vcmp.gt.f32.partialorder %v6420, 0.0
        %vm6455 = vcmp.gt.f32.partialorder %v6422, 0.0
        %v6456 = vmul.f32 %v6346, 0.01
        %v6457 = vmul.f32 %v6348, 0.01
        %v6458 = vmul.f32 %v6350, 0.01
        %v6459 = vmul.f32 %v6352, 0.01
        %v6460 = vmul.f32 %v6356, 0.01
        %v6461 = vmul.f32 %v6358, 0.01
        %v6462 = vmul.f32 %v6360, 0.01
        %v6463 = vmul.f32 %v6362, 0.01
        %v6464 = vmul.f32 %v6366, 0.01
        %v6465 = vmul.f32 %v6368, 0.01
        %v6466 = vmul.f32 %v6370, 0.01
        %v6467 = vmul.f32 %v6372, 0.01
        %v6468 = vmul.f32 %v6376, 0.01
        %v6469 = vmul.f32 %v6378, 0.01
        %v6470 = vmul.f32 %v6380, 0.01
        %v6471 = vmul.f32 %v6382, 0.01
        %v6472 = vmul.f32 %v6386, 0.01
        %v6473 = vmul.f32 %v6388, 0.01
        %v6474 = vmul.f32 %v6390, 0.01
        %v6475 = vmul.f32 %v6392, 0.01
        %v6476 = vmul.f32 %v6396, 0.01
        %v6477 = vmul.f32 %v6398, 0.01
        %v6478 = vmul.f32 %v6400, 0.01
        %v6479 = vmul.f32 %v6402, 0.01
        %v6480 = vmul.f32 %v6406, 0.01
        %v6481 = vmul.f32 %v6408, 0.01
        %v6482 = vmul.f32 %v6410, 0.01
        %v6483 = vmul.f32 %v6412, 0.01
        %v6484 = vmul.f32 %v6416, 0.01
        %v6485 = vmul.f32 %v6418, 0.01
        %v6486 = vmul.f32 %v6420, 0.01
        %v6487 = vmul.f32 %v6422, 0.01
        %v6488 = vsel %vm6424, %v6346, %v6456
        %v6489 = vsel %vm6425, %v6348, %v6457
        %v6490 = vsel %vm6426, %v6350, %v6458
        %v6491 = vsel %vm6427, %v6352, %v6459
        %v6492 = vsel %vm6428, %v6356, %v6460
        %v6493 = vsel %vm6429, %v6358, %v6461
        %v6494 = vsel %vm6430, %v6360, %v6462
        %v6495 = vsel %vm6431, %v6362, %v6463
        %v6496 = vsel %vm6432, %v6366, %v6464
        %v6497 = vsel %vm6433, %v6368, %v6465
        %v6498 = vsel %vm6434, %v6370, %v6466
        %v6499 = vsel %vm6435, %v6372, %v6467
        %v6500 = vsel %vm6436, %v6376, %v6468
        %v6501 = vsel %vm6437, %v6378, %v6469
        %v6502 = vsel %vm6438, %v6380, %v6470
        %v6503 = vsel %vm6439, %v6382, %v6471
        %v6504 = vsel %vm6440, %v6386, %v6472
        %v6505 = vsel %vm6441, %v6388, %v6473
        %v6506 = vsel %vm6442, %v6390, %v6474
        %v6507 = vsel %vm6443, %v6392, %v6475
        %v6508 = vsel %vm6444, %v6396, %v6476
        %v6509 = vsel %vm6445, %v6398, %v6477
        %v6510 = vsel %vm6446, %v6400, %v6478
        %v6511 = vsel %vm6447, %v6402, %v6479
        %v6512 = vsel %vm6448, %v6406, %v6480
        %v6513 = vsel %vm6449, %v6408, %v6481
        %v6514 = vsel %vm6450, %v6410, %v6482
        %v6515 = vsel %vm6451, %v6412, %v6483
        %v6516 = vsel %vm6452, %v6416, %v6484
        %v6517 = vsel %vm6453, %v6418, %v6485
        %v6518 = vsel %vm6454, %v6420, %v6486
        %v6519 = vsel %vm6455, %v6422, %v6487
        %v6520 = vld [vmem:[%s5] sm:$0xff]
        %v6521 = vld [vmem:[%s5 + $0x8] sm:$0xff]
        %v6522 = vld [vmem:[%s5 + $0x10] sm:$0xff]
        %v6523 = vld [vmem:[%s5 + $0x18] sm:$0xff]
        %v6524 = vld [vmem:[%s5 + $0x20] sm:$0xff]
        %v6525 = vld [vmem:[%s5 + $0x28] sm:$0xff]
        %v6526 = vld [vmem:[%s5 + $0x30] sm:$0xff]
        %v6527 = vld [vmem:[%s5 + $0x38] sm:$0xff]
        %v6528 = vld [vmem:[%s5 + $0x40] sm:$0xff]
        %v6529 = vld [vmem:[%s5 + $0x48] sm:$0xff]
        %v6530 = vld [vmem:[%s5 + $0x50] sm:$0xff]
        %v6531 = vld [vmem:[%s5 + $0x58] sm:$0xff]
        %v6532 = vld [vmem:[%s5 + $0x60] sm:$0xff]
        %v6533 = vld [vmem:[%s5 + $0x68] sm:$0xff]
        %v6534 = vld [vmem:[%s5 + $0x70] sm:$0xff]
        %v6535 = vld [vmem:[%s5 + $0x78] sm:$0xff]
        %v6536 = vld [vmem:[%s5 + $0x80] sm:$0xff]
        %v6537 = vld [vmem:[%s5 + $0x88] sm:$0xff]
        %v6538 = vld [vmem:[%s5 + $0x90] sm:$0xff]
        %v6539 = vld [vmem:[%s5 + $0x98] sm:$0xff]
        %v6540 = vld [vmem:[%s5 + $0xa0] sm:$0xff]
        %v6541 = vld [vmem:[%s5 + $0xa8] sm:$0xff]
        %v6542 = vld [vmem:[%s5 + $0xb0] sm:$0xff]
        %v6543 = vld [vmem:[%s5 + $0xb8] sm:$0xff]
        %v6544 = vld [vmem:[%s5 + $0xc0] sm:$0xff]
        %v6545 = vld [vmem:[%s5 + $0xc8] sm:$0xff]
        %v6546 = vld [vmem:[%s5 + $0xd0] sm:$0xff]
        %v6547 = vld [vmem:[%s5 + $0xd8] sm:$0xff]
        %v6548 = vld [vmem:[%s5 + $0xe0] sm:$0xff]
        %v6549 = vld [vmem:[%s5 + $0xe8] sm:$0xff]
        %v6550 = vld [vmem:[%s5 + $0xf0] sm:$0xff]
        %v6551 = vld [vmem:[%s5 + $0xf8] sm:$0xff]
        %v6552 = vld [vmem:[%s6] sm:$0x1]
        %v6554 = vlaneseq
        %v6555 = vshrl.u32 %v6554, 7
        %v6556 = vsub.s32 0, %v6555
        %v6557 = vrot.slane %v6552, %v6556
        %6559 = vmatprep.subr.mxu0 0.0
        %6560 = vmatpush1.msra.mxu0 %v6520
        %6561 = vmatprep.subr.mxu0 0.0
        %6562 = vmatpush1.msra.mxu0 %v6521
        %6563 = vmatprep.subr.mxu0 0.0
        %6564 = vmatpush1.msra.mxu0 %v6522
        %6565 = vmatprep.subr.mxu0 0.0
        %6566 = vmatpush1.msra.mxu0 %v6523
        %6567 = vmatprep.subr.mxu0 0.0
        %6568 = vmatpush1.msra.mxu0 %v6524
        %6569 = vmatprep.subr.mxu0 0.0
        %6570 = vmatpush1.msra.mxu0 %v6525
        %6571 = vmatprep.subr.mxu0 0.0
        %6572 = vmatpush1.msra.mxu0 %v6526
        %6573 = vmatprep.subr.mxu0 0.0
        %6574 = vmatpush1.msra.mxu0 %v6527
        %6575 = vmatprep.subr.mxu0 0.0
        %6576 = vmatpush1.msra.mxu0 %v6528
        %6577 = vmatprep.subr.mxu0 0.0
        %6578 = vmatpush1.msra.mxu0 %v6529
        %6579 = vmatprep.subr.mxu0 0.0
        %6580 = vmatpush1.msra.mxu0 %v6530
        %6581 = vmatprep.subr.mxu0 0.0
        %6582 = vmatpush1.msra.mxu0 %v6531
        %6583 = vmatprep.subr.mxu0 0.0
        %6584 = vmatpush1.msra.mxu0 %v6532
        %6585 = vmatprep.subr.mxu0 0.0
        %6586 = vmatpush1.msra.mxu0 %v6533
        %6587 = vmatprep.subr.mxu0 0.0
        %6588 = vmatpush1.msra.mxu0 %v6534
        %6589 = vmatprep.subr.mxu0 0.0
        %6590 = vmatpush1.msra.mxu0 %v6535
        %6591 = vmatprep.subr.mxu0 0.0
        %6592 = vmatpush1.msra.mxu0 %v6536
        %6593 = vmatprep.subr.mxu0 0.0
        %6594 = vmatpush1.msra.mxu0 %v6537
        %6595 = vmatprep.subr.mxu0 0.0
        %6596 = vmatpush1.msra.mxu0 %v6538
        %6597 = vmatprep.subr.mxu0 0.0
        %6598 = vmatpush1.msra.mxu0 %v6539
        %6599 = vmatprep.subr.mxu0 0.0
        %6600 = vmatpush1.msra.mxu0 %v6540
        %6601 = vmatprep.subr.mxu0 0.0
        %6602 = vmatpush1.msra.mxu0 %v6541
        %6603 = vmatprep.subr.mxu0 0.0
        %6604 = vmatpush1.msra.mxu0 %v6542
        %6605 = vmatprep.subr.mxu0 0.0
        %6606 = vmatpush1.msra.mxu0 %v6543
        %6607 = vmatprep.subr.mxu0 0.0
        %6608 = vmatpush1.msra.mxu0 %v6544
        %6609 = vmatprep.subr.mxu0 0.0
        %6610 = vmatpush1.msra.mxu0 %v6545
        %6611 = vmatprep.subr.mxu0 0.0
        %6612 = vmatpush1.msra.mxu0 %v6546
        %6613 = vmatprep.subr.mxu0 0.0
        %6614 = vmatpush1.msra.mxu0 %v6547
        %6615 = vmatprep.subr.mxu0 0.0
        %6616 = vmatpush1.msra.mxu0 %v6548
        %6617 = vmatprep.subr.mxu0 0.0
        %6618 = vmatpush1.msra.mxu0 %v6549
        %6619 = vmatprep.subr.mxu0 0.0
        %6620 = vmatpush1.msra.mxu0 %v6550
        %6621 = vmatprep.subr.mxu0 0.0
        %6622 = vmatpush1.msra.mxu0 %v6551
        %6623 = vmatprep.mubr.f32.mxu0 %v6489
        %6624 = vmatmul.mubr.f32.gmra.mrb[0].mxu0 %v6488
        %v6625 = vpop.f32.mrb[0].mxu0
        %v6626 = vadd.f32 %v6557, %v6625
        %v6627 = vpop.f32.mrb[0].mxu0
        %6628 = vmatprep.mubr.f32.mxu0 %v6491
        %6629 = vmatmul.mubr.f32.gmra.mrb[0].mxu0 %v6490
        %v6630 = vpop.f32.mrb[0].mxu0
        %v6631 = vadd.f32 %v6557, %v6630
        %v6632 = vpop.f32.mrb[0].mxu0
        %6633 = vmatprep.mubr.f32.mxu0 %v6493
        %6634 = vmatmul.mubr.f32.gmra.mrb[0].mxu0 %v6492
        %v6635 = vpop.f32.mrb[0].mxu0
        %v6636 = vadd.f32 %v6557, %v6635
        %v6637 = vpop.f32.mrb[0].mxu0
        %6638 = vmatprep.mubr.f32.mxu0 %v6495
        %6639 = vmatmul.mubr.f32.gmra.mrb[0].mxu0 %v6494
        %v6640 = vpop.f32.mrb[0].mxu0
        %v6641 = vadd.f32 %v6557, %v6640
        %v6642 = vpop.f32.mrb[0].mxu0
        %6643 = vmatprep.mubr.f32.mxu0 %v6497
        %6644 = vmatmul.mubr.f32.gmra.mrb[0].mxu0 %v6496
        %v6645 = vpop.f32.mrb[0].mxu0
        %v6646 = vadd.f32 %v6557, %v6645
        %v6647 = vpop.f32.mrb[0].mxu0
        %6648 = vmatprep.mubr.f32.mxu0 %v6499
        %6649 = vmatmul.mubr.f32.gmra.mrb[0].mxu0 %v6498
        %v6650 = vpop.f32.mrb[0].mxu0
        %v6651 = vadd.f32 %v6557, %v6650
        %v6652 = vpop.f32.mrb[0].mxu0
        %6653 = vmatprep.mubr.f32.mxu0 %v6501
        %6654 = vmatmul.mubr.f32.gmra.mrb[0].mxu0 %v6500
        %v6655 = vpop.f32.mrb[0].mxu0
        %v6656 = vadd.f32 %v6557, %v6655
        %v6657 = vpop.f32.mrb[0].mxu0
        %6658 = vmatprep.mubr.f32.mxu0 %v6503
        %6659 = vmatmul.mubr.f32.gmra.mrb[0].mxu0 %v6502
        %v6660 = vpop.f32.mrb[0].mxu0
        %v6661 = vadd.f32 %v6557, %v6660
        %v6662 = vpop.f32.mrb[0].mxu0
        %6663 = vmatprep.mubr.f32.mxu0 %v6505
        %6664 = vmatmul.mubr.f32.gmra.mrb[0].mxu0 %v6504
        %v6665 = vpop.f32.mrb[0].mxu0
        %v6666 = vadd.f32 %v6557, %v6665
        %v6667 = vpop.f32.mrb[0].mxu0
        %6668 = vmatprep.mubr.f32.mxu0 %v6507
        %6669 = vmatmul.mubr.f32.gmra.mrb[0].mxu0 %v6506
        %v6670 = vpop.f32.mrb[0].mxu0
        %v6671 = vadd.f32 %v6557, %v6670
        %v6672 = vpop.f32.mrb[0].mxu0
        %6673 = vmatprep.mubr.f32.mxu0 %v6509
        %6674 = vmatmul.mubr.f32.gmra.mrb[0].mxu0 %v6508
        %v6675 = vpop.f32.mrb[0].mxu0
        %v6676 = vadd.f32 %v6557, %v6675
        %v6677 = vpop.f32.mrb[0].mxu0
        %6678 = vmatprep.mubr.f32.mxu0 %v6511
        %6679 = vmatmul.mubr.f32.gmra.mrb[0].mxu0 %v6510
        %v6680 = vpop.f32.mrb[0].mxu0
        %v6681 = vadd.f32 %v6557, %v6680
        %v6682 = vpop.f32.mrb[0].mxu0
        %6683 = vmatprep.mubr.f32.mxu0 %v6513
        %6684 = vmatmul.mubr.f32.gmra.mrb[0].mxu0 %v6512
        %v6685 = vpop.f32.mrb[0].mxu0
        %v6686 = vadd.f32 %v6557, %v6685
        %v6687 = vpop.f32.mrb[0].mxu0
        %6688 = vmatprep.mubr.f32.mxu0 %v6515
        %6689 = vmatmul.mubr.f32.gmra.mrb[0].mxu0 %v6514
        %v6690 = vpop.f32.mrb[0].mxu0
        %v6691 = vadd.f32 %v6557, %v6690
        %v6692 = vpop.f32.mrb[0].mxu0
        %6693 = vmatprep.mubr.f32.mxu0 %v6517
        %6694 = vmatmul.mubr.f32.gmra.mrb[0].mxu0 %v6516
        %v6695 = vpop.f32.mrb[0].mxu0
        %v6696 = vadd.f32 %v6557, %v6695
        %v6697 = vpop.f32.mrb[0].mxu0
        %6698 = vmatprep.mubr.f32.mxu0 %v6519
        %6699 = vmatmul.mubr.f32.gmra.mrb[0].mxu0 %v6518
        %v6700 = vpop.f32.mrb[0].mxu0
        %v6701 = vadd.f32 %v6557, %v6700
        %v6702 = vpop.f32.mrb[0].mxu0
        %6703 = vdwg.mxu0
        %vm6704 = vcmp.gt.f32.partialorder %v6626, 0.0
        %vm6705 = vcmp.gt.f32.partialorder %v6631, 0.0
        %vm6706 = vcmp.gt.f32.partialorder %v6636, 0.0
        %vm6707 = vcmp.gt.f32.partialorder %v6641, 0.0
        %vm6708 = vcmp.gt.f32.partialorder %v6646, 0.0
        %vm6709 = vcmp.gt.f32.partialorder %v6651, 0.0
        %vm6710 = vcmp.gt.f32.partialorder %v6656, 0.0
        %vm6711 = vcmp.gt.f32.partialorder %v6661, 0.0
        %vm6712 = vcmp.gt.f32.partialorder %v6666, 0.0
        %vm6713 = vcmp.gt.f32.partialorder %v6671, 0.0
        %vm6714 = vcmp.gt.f32.partialorder %v6676, 0.0
        %vm6715 = vcmp.gt.f32.partialorder %v6681, 0.0
        %vm6716 = vcmp.gt.f32.partialorder %v6686, 0.0
        %vm6717 = vcmp.gt.f32.partialorder %v6691, 0.0
        %vm6718 = vcmp.gt.f32.partialorder %v6696, 0.0
        %vm6719 = vcmp.gt.f32.partialorder %v6701, 0.0
        %v6720 = vmul.f32 %v6626, 0.01
        %v6721 = vmul.f32 %v6631, 0.01
        %v6722 = vmul.f32 %v6636, 0.01
        %v6723 = vmul.f32 %v6641, 0.01
        %v6724 = vmul.f32 %v6646, 0.01
        %v6725 = vmul.f32 %v6651, 0.01
        %v6726 = vmul.f32 %v6656, 0.01
        %v6727 = vmul.f32 %v6661, 0.01
        %v6728 = vmul.f32 %v6666, 0.01
        %v6729 = vmul.f32 %v6671, 0.01
        %v6730 = vmul.f32 %v6676, 0.01
        %v6731 = vmul.f32 %v6681, 0.01
        %v6732 = vmul.f32 %v6686, 0.01
        %v6733 = vmul.f32 %v6691, 0.01
        %v6734 = vmul.f32 %v6696, 0.01
        %v6735 = vmul.f32 %v6701, 0.01
        %v6736 = vsel %vm6704, %v6626, %v6720
        %v6737 = vsel %vm6705, %v6631, %v6721
        %v6738 = vsel %vm6706, %v6636, %v6722
        %v6739 = vsel %vm6707, %v6641, %v6723
        %v6740 = vsel %vm6708, %v6646, %v6724
        %v6741 = vsel %vm6709, %v6651, %v6725
        %v6742 = vsel %vm6710, %v6656, %v6726
        %v6743 = vsel %vm6711, %v6661, %v6727
        %v6744 = vsel %vm6712, %v6666, %v6728
        %v6745 = vsel %vm6713, %v6671, %v6729
        %v6746 = vsel %vm6714, %v6676, %v6730
        %v6747 = vsel %vm6715, %v6681, %v6731
        %v6748 = vsel %vm6716, %v6686, %v6732
        %v6749 = vsel %vm6717, %v6691, %v6733
        %v6750 = vsel %vm6718, %v6696, %v6734
        %v6751 = vsel %vm6719, %v6701, %v6735
        %v6752 = vld [vmem:[%s7] sm:$0xff]
        %v6753 = vld [vmem:[%s7 + $0x8] sm:$0xff]
        %v6754 = vld [vmem:[%s7 + $0x10] sm:$0xff]
        %v6755 = vld [vmem:[%s7 + $0x18] sm:$0xff]
        %v6756 = vld [vmem:[%s7 + $0x20] sm:$0xff]
        %v6757 = vld [vmem:[%s7 + $0x28] sm:$0xff]
        %v6758 = vld [vmem:[%s7 + $0x30] sm:$0xff]
        %v6759 = vld [vmem:[%s7 + $0x38] sm:$0xff]
        %v6760 = vld [vmem:[%s8] sm:$0x1]
        %v6762 = vlaneseq
        %v6763 = vshrl.u32 %v6762, 7
        %v6764 = vsub.s32 0, %v6763
        %v6765 = vrot.slane %v6760, %v6764
        %vm6767 = vcmask 523264
        %v6769 = vsel %vm6767, %v6736, 0
        %v6772 = vsel %vm6767, %v6737, 0
        %v6775 = vsel %vm6767, %v6738, 0
        %v6778 = vsel %vm6767, %v6739, 0
        %v6781 = vsel %vm6767, %v6740, 0
        %v6784 = vsel %vm6767, %v6741, 0
        %v6787 = vsel %vm6767, %v6742, 0
        %v6790 = vsel %vm6767, %v6743, 0
        %v6793 = vsel %vm6767, %v6744, 0
        %v6796 = vsel %vm6767, %v6745, 0
        %v6799 = vsel %vm6767, %v6746, 0
        %v6802 = vsel %vm6767, %v6747, 0
        %v6805 = vsel %vm6767, %v6748, 0
        %v6808 = vsel %vm6767, %v6749, 0
        %v6811 = vsel %vm6767, %v6750, 0
        %v6814 = vsel %vm6767, %v6751, 0
        %6816 = vmatprep.subr.mxu0 0.0
        %6817 = vmatpush1.msra.mxu0 %v6752
        %6818 = vmatprep.subr.mxu0 0.0
        %6819 = vmatpush1.msra.mxu0 %v6753
        %6820 = vmatprep.subr.mxu0 0.0
        %6821 = vmatpush1.msra.mxu0 %v6754
        %6822 = vmatprep.subr.mxu0 0.0
        %6823 = vmatpush1.msra.mxu0 %v6755
        %6824 = vmatprep.subr.mxu0 0.0
        %6825 = vmatpush1.msra.mxu0 %v6756
        %6826 = vmatprep.subr.mxu0 0.0
        %6827 = vmatpush1.msra.mxu0 %v6757
        %6828 = vmatprep.subr.mxu0 0.0
        %6829 = vmatpush1.msra.mxu0 %v6758
        %6830 = vmatprep.subr.mxu0 0.0
        %6831 = vmatpush1.msra.mxu0 %v6759
        %6832 = vmatprep.subr.mxu0 0.0
        %6833 = vmatpush1.msra.mxu0 0.0
        %6834 = vmatprep.subr.mxu0 0.0
        %6835 = vmatpush1.msra.mxu0 0.0
        %6836 = vmatprep.subr.mxu0 0.0
        %6837 = vmatpush1.msra.mxu0 0.0
        %6838 = vmatprep.subr.mxu0 0.0
        %6839 = vmatpush1.msra.mxu0 0.0
        %6840 = vmatprep.subr.mxu0 0.0
        %6841 = vmatpush1.msra.mxu0 0.0
        %6842 = vmatprep.subr.mxu0 0.0
        %6843 = vmatpush1.msra.mxu0 0.0
        %6844 = vmatprep.subr.mxu0 0.0
        %6845 = vmatpush1.msra.mxu0 0.0
        %6846 = vmatprep.subr.mxu0 0.0
        %6847 = vmatpush1.msra.mxu0 0.0
        %6848 = vmatprep.subr.mxu0 0.0
        %6849 = vmatpush1.msra.mxu0 0.0
        %6850 = vmatprep.subr.mxu0 0.0
        %6851 = vmatpush1.msra.mxu0 0.0
        %6852 = vmatprep.subr.mxu0 0.0
        %6853 = vmatpush1.msra.mxu0 0.0
        %6854 = vmatprep.subr.mxu0 0.0
        %6855 = vmatpush1.msra.mxu0 0.0
        %6856 = vmatprep.subr.mxu0 0.0
        %6857 = vmatpush1.msra.mxu0 0.0
        %6858 = vmatprep.subr.mxu0 0.0
        %6859 = vmatpush1.msra.mxu0 0.0
        %6860 = vmatprep.subr.mxu0 0.0
        %6861 = vmatpush1.msra.mxu0 0.0
        %6862 = vmatprep.subr.mxu0 0.0
        %6863 = vmatpush1.msra.mxu0 0.0
        %6864 = vmatprep.subr.mxu0 0.0
        %6865 = vmatpush1.msra.mxu0 0.0
        %6866 = vmatprep.subr.mxu0 0.0
        %6867 = vmatpush1.msra.mxu0 0.0
        %6868 = vmatprep.subr.mxu0 0.0
        %6869 = vmatpush1.msra.mxu0 0.0
        %6870 = vmatprep.subr.mxu0 0.0
        %6871 = vmatpush1.msra.mxu0 0.0
        %6872 = vmatprep.subr.mxu0 0.0
        %6873 = vmatpush1.msra.mxu0 0.0
        %6874 = vmatprep.subr.mxu0 0.0
        %6875 = vmatpush1.msra.mxu0 0.0
        %6876 = vmatprep.subr.mxu0 0.0
        %6877 = vmatpush1.msra.mxu0 0.0
        %6878 = vmatprep.subr.mxu0 0.0
        %6879 = vmatpush1.msra.mxu0 0.0
        %6880 = vmatprep.mubr.f32.mxu0 0.0
        %6881 = vmatmul.mubr.f32.gmra.mrb[0].mxu0 %v6769
        %v6882 = vpop.f32.mrb[0].mxu0
        %v6883 = vadd.f32 %v6765, %v6882
        %v6884 = vpop.f32.mrb[0].mxu0
        %6885 = vmatprep.mubr.f32.mxu0 0.0
        %6886 = vmatmul.mubr.f32.gmra.mrb[0].mxu0 %v6772
        %v6887 = vpop.f32.mrb[0].mxu0
        %v6888 = vadd.f32 %v6765, %v6887
        %v6889 = vpop.f32.mrb[0].mxu0
        %6890 = vmatprep.mubr.f32.mxu0 0.0
        %6891 = vmatmul.mubr.f32.gmra.mrb[0].mxu0 %v6775
        %v6892 = vpop.f32.mrb[0].mxu0
        %v6893 = vadd.f32 %v6765, %v6892
        %v6894 = vpop.f32.mrb[0].mxu0
        %6895 = vmatprep.mubr.f32.mxu0 0.0
        %6896 = vmatmul.mubr.f32.gmra.mrb[0].mxu0 %v6778
        %v6897 = vpop.f32.mrb[0].mxu0
        %v6898 = vadd.f32 %v6765, %v6897
        %v6899 = vpop.f32.mrb[0].mxu0
        %6900 = vmatprep.mubr.f32.mxu0 0.0
        %6901 = vmatmul.mubr.f32.gmra.mrb[0].mxu0 %v6781
        %v6902 = vpop.f32.mrb[0].mxu0
        %v6903 = vadd.f32 %v6765, %v6902
        %v6904 = vpop.f32.mrb[0].mxu0
        %6905 = vmatprep.mubr.f32.mxu0 0.0
        %6906 = vmatmul.mubr.f32.gmra.mrb[0].mxu0 %v6784
        %v6907 = vpop.f32.mrb[0].mxu0
        %v6908 = vadd.f32 %v6765, %v6907
        %v6909 = vpop.f32.mrb[0].mxu0
        %6910 = vmatprep.mubr.f32.mxu0 0.0
        %6911 = vmatmul.mubr.f32.gmra.mrb[0].mxu0 %v6787
        %v6912 = vpop.f32.mrb[0].mxu0
        %v6913 = vadd.f32 %v6765, %v6912
        %v6914 = vpop.f32.mrb[0].mxu0
        %6915 = vmatprep.mubr.f32.mxu0 0.0
        %6916 = vmatmul.mubr.f32.gmra.mrb[0].mxu0 %v6790
        %v6917 = vpop.f32.mrb[0].mxu0
        %v6918 = vadd.f32 %v6765, %v6917
        %v6919 = vpop.f32.mrb[0].mxu0
        %6920 = vmatprep.mubr.f32.mxu0 0.0
        %6921 = vmatmul.mubr.f32.gmra.mrb[0].mxu0 %v6793
        %v6922 = vpop.f32.mrb[0].mxu0
        %v6923 = vadd.f32 %v6765, %v6922
        %v6924 = vpop.f32.mrb[0].mxu0
        %6925 = vmatprep.mubr.f32.mxu0 0.0
        %6926 = vmatmul.mubr.f32.gmra.mrb[0].mxu0 %v6796
        %v6927 = vpop.f32.mrb[0].mxu0
        %v6928 = vadd.f32 %v6765, %v6927
        %v6929 = vpop.f32.mrb[0].mxu0
        %6930 = vmatprep.mubr.f32.mxu0 0.0
        %6931 = vmatmul.mubr.f32.gmra.mrb[0].mxu0 %v6799
        %v6932 = vpop.f32.mrb[0].mxu0
        %v6933 = vadd.f32 %v6765, %v6932
        %v6934 = vpop.f32.mrb[0].mxu0
        %6935 = vmatprep.mubr.f32.mxu0 0.0
        %6936 = vmatmul.mubr.f32.gmra.mrb[0].mxu0 %v6802
        %v6937 = vpop.f32.mrb[0].mxu0
        %v6938 = vadd.f32 %v6765, %v6937
        %v6939 = vpop.f32.mrb[0].mxu0
        %6940 = vmatprep.mubr.f32.mxu0 0.0
        %6941 = vmatmul.mubr.f32.gmra.mrb[0].mxu0 %v6805
        %v6942 = vpop.f32.mrb[0].mxu0
        %v6943 = vadd.f32 %v6765, %v6942
        %v6944 = vpop.f32.mrb[0].mxu0
        %6945 = vmatprep.mubr.f32.mxu0 0.0
        %6946 = vmatmul.mubr.f32.gmra.mrb[0].mxu0 %v6808
        %v6947 = vpop.f32.mrb[0].mxu0
        %v6948 = vadd.f32 %v6765, %v6947
        %v6949 = vpop.f32.mrb[0].mxu0
        %6950 = vmatprep.mubr.f32.mxu0 0.0
        %6951 = vmatmul.mubr.f32.gmra.mrb[0].mxu0 %v6811
        %v6952 = vpop.f32.mrb[0].mxu0
        %v6953 = vadd.f32 %v6765, %v6952
        %v6954 = vpop.f32.mrb[0].mxu0
        %6955 = vmatprep.mubr.f32.mxu0 0.0
        %6956 = vmatmul.mubr.f32.gmra.mrb[0].mxu0 %v6814
        %v6957 = vpop.f32.mrb[0].mxu0
        %v6958 = vadd.f32 %v6765, %v6957
        %v6959 = vpop.f32.mrb[0].mxu0
        %6960 = vdwg.mxu0
        %vm6961 = vcmp.gt.f32.partialorder %v6883, 0.0
        %vm6962 = vcmp.gt.f32.partialorder %v6888, 0.0
        %vm6963 = vcmp.gt.f32.partialorder %v6893, 0.0
        %vm6964 = vcmp.gt.f32.partialorder %v6898, 0.0
        %vm6965 = vcmp.gt.f32.partialorder %v6903, 0.0
        %vm6966 = vcmp.gt.f32.partialorder %v6908, 0.0
        %vm6967 = vcmp.gt.f32.partialorder %v6913, 0.0
        %vm6968 = vcmp.gt.f32.partialorder %v6918, 0.0
        %vm6969 = vcmp.gt.f32.partialorder %v6923, 0.0
        %vm6970 = vcmp.gt.f32.partialorder %v6928, 0.0
        %vm6971 = vcmp.gt.f32.partialorder %v6933, 0.0
        %vm6972 = vcmp.gt.f32.partialorder %v6938, 0.0
        %vm6973 = vcmp.gt.f32.partialorder %v6943, 0.0
        %vm6974 = vcmp.gt.f32.partialorder %v6948, 0.0
        %vm6975 = vcmp.gt.f32.partialorder %v6953, 0.0
        %vm6976 = vcmp.gt.f32.partialorder %v6958, 0.0
        %v6977 = vmul.f32 %v6883, 0.01
        %v6978 = vmul.f32 %v6888, 0.01
        %v6979 = vmul.f32 %v6893, 0.01
        %v6980 = vmul.f32 %v6898, 0.01
        %v6981 = vmul.f32 %v6903, 0.01
        %v6982 = vmul.f32 %v6908, 0.01
        %v6983 = vmul.f32 %v6913, 0.01
        %v6984 = vmul.f32 %v6918, 0.01
        %v6985 = vmul.f32 %v6923, 0.01
        %v6986 = vmul.f32 %v6928, 0.01
        %v6987 = vmul.f32 %v6933, 0.01
        %v6988 = vmul.f32 %v6938, 0.01
        %v6989 = vmul.f32 %v6943, 0.01
        %v6990 = vmul.f32 %v6948, 0.01
        %v6991 = vmul.f32 %v6953, 0.01
        %v6992 = vmul.f32 %v6958, 0.01
        %v6993 = vsel %vm6961, %v6883, %v6977
        %v6994 = vsel %vm6962, %v6888, %v6978
        %v6995 = vsel %vm6963, %v6893, %v6979
        %v6996 = vsel %vm6964, %v6898, %v6980
        %v6997 = vsel %vm6965, %v6903, %v6981
        %v6998 = vsel %vm6966, %v6908, %v6982
        %v6999 = vsel %vm6967, %v6913, %v6983
        %v7000 = vsel %vm6968, %v6918, %v6984
        %v7001 = vsel %vm6969, %v6923, %v6985
        %v7002 = vsel %vm6970, %v6928, %v6986
        %v7003 = vsel %vm6971, %v6933, %v6987
        %v7004 = vsel %vm6972, %v6938, %v6988
        %v7005 = vsel %vm6973, %v6943, %v6989
        %v7006 = vsel %vm6974, %v6948, %v6990
        %v7007 = vsel %vm6975, %v6953, %v6991
        %v7008 = vsel %vm6976, %v6958, %v6992
        %v7009 = vld [vmem:[%s9] sm:$0xff]
        %v7010 = vld [vmem:[%s9 + $0x8] sm:$0xff]
        %v7011 = vld [vmem:[%s9 + $0x10] sm:$0xff]
        %v7012 = vld [vmem:[%s9 + $0x18] sm:$0xff]
        %v7013 = vld [vmem:[%s10] sm:$0x1]
        %v7015 = vlaneseq
        %v7016 = vshrl.u32 %v7015, 7
        %v7017 = vsub.s32 0, %v7016
        %v7018 = vrot.slane %v7013, %v7017
        %vm7020 = vcmask 261120
        %v7022 = vsel %vm7020, %v6993, 0
        %v7025 = vsel %vm7020, %v6994, 0
        %v7028 = vsel %vm7020, %v6995, 0
        %v7031 = vsel %vm7020, %v6996, 0
        %v7034 = vsel %vm7020, %v6997, 0
        %v7037 = vsel %vm7020, %v6998, 0
        %v7040 = vsel %vm7020, %v6999, 0
        %v7043 = vsel %vm7020, %v7000, 0
        %v7046 = vsel %vm7020, %v7001, 0
        %v7049 = vsel %vm7020, %v7002, 0
        %v7052 = vsel %vm7020, %v7003, 0
        %v7055 = vsel %vm7020, %v7004, 0
        %v7058 = vsel %vm7020, %v7005, 0
        %v7061 = vsel %vm7020, %v7006, 0
        %v7064 = vsel %vm7020, %v7007, 0
        %v7067 = vsel %vm7020, %v7008, 0
        %7069 = vmatprep.subr.mxu0 0.0
        %7070 = vmatpush1.msra.mxu0 %v7009
        %7071 = vmatprep.subr.mxu0 0.0
        %7072 = vmatpush1.msra.mxu0 %v7010
        %7073 = vmatprep.subr.mxu0 0.0
        %7074 = vmatpush1.msra.mxu0 %v7011
        %7075 = vmatprep.subr.mxu0 0.0
        %7076 = vmatpush1.msra.mxu0 %v7012
        %7077 = vmatprep.subr.mxu0 0.0
        %7078 = vmatpush1.msra.mxu0 0.0
        %7079 = vmatprep.subr.mxu0 0.0
        %7080 = vmatpush1.msra.mxu0 0.0
        %7081 = vmatprep.subr.mxu0 0.0
        %7082 = vmatpush1.msra.mxu0 0.0
        %7083 = vmatprep.subr.mxu0 0.0
        %7084 = vmatpush1.msra.mxu0 0.0
        %7085 = vmatprep.subr.mxu0 0.0
        %7086 = vmatpush1.msra.mxu0 0.0
        %7087 = vmatprep.subr.mxu0 0.0
        %7088 = vmatpush1.msra.mxu0 0.0
        %7089 = vmatprep.subr.mxu0 0.0
        %7090 = vmatpush1.msra.mxu0 0.0
        %7091 = vmatprep.subr.mxu0 0.0
        %7092 = vmatpush1.msra.mxu0 0.0
        %7093 = vmatprep.subr.mxu0 0.0
        %7094 = vmatpush1.msra.mxu0 0.0
        %7095 = vmatprep.subr.mxu0 0.0
        %7096 = vmatpush1.msra.mxu0 0.0
        %7097 = vmatprep.subr.mxu0 0.0
        %7098 = vmatpush1.msra.mxu0 0.0
        %7099 = vmatprep.subr.mxu0 0.0
        %7100 = vmatpush1.msra.mxu0 0.0
        %7101 = vmatprep.subr.mxu0 0.0
        %7102 = vmatpush1.msra.mxu0 0.0
        %7103 = vmatprep.subr.mxu0 0.0
        %7104 = vmatpush1.msra.mxu0 0.0
        %7105 = vmatprep.subr.mxu0 0.0
        %7106 = vmatpush1.msra.mxu0 0.0
        %7107 = vmatprep.subr.mxu0 0.0
        %7108 = vmatpush1.msra.mxu0 0.0
        %7109 = vmatprep.subr.mxu0 0.0
        %7110 = vmatpush1.msra.mxu0 0.0
        %7111 = vmatprep.subr.mxu0 0.0
        %7112 = vmatpush1.msra.mxu0 0.0
        %7113 = vmatprep.subr.mxu0 0.0
        %7114 = vmatpush1.msra.mxu0 0.0
        %7115 = vmatprep.subr.mxu0 0.0
        %7116 = vmatpush1.msra.mxu0 0.0
        %7117 = vmatprep.subr.mxu0 0.0
        %7118 = vmatpush1.msra.mxu0 0.0
        %7119 = vmatprep.subr.mxu0 0.0
        %7120 = vmatpush1.msra.mxu0 0.0
        %7121 = vmatprep.subr.mxu0 0.0
        %7122 = vmatpush1.msra.mxu0 0.0
        %7123 = vmatprep.subr.mxu0 0.0
        %7124 = vmatpush1.msra.mxu0 0.0
        %7125 = vmatprep.subr.mxu0 0.0
        %7126 = vmatpush1.msra.mxu0 0.0
        %7127 = vmatprep.subr.mxu0 0.0
        %7128 = vmatpush1.msra.mxu0 0.0
        %7129 = vmatprep.subr.mxu0 0.0
        %7130 = vmatpush1.msra.mxu0 0.0
        %7131 = vmatprep.subr.mxu0 0.0
        %7132 = vmatpush1.msra.mxu0 0.0
        %7133 = vmatprep.mubr.f32.mxu0 0.0
        %7134 = vmatmul.mubr.f32.gmra.mrb[0].mxu0 %v7022
        %v7135 = vpop.f32.mrb[0].mxu0
        %v7136 = vadd.f32 %v7018, %v7135
        %v7137 = vpop.f32.mrb[0].mxu0
        %7138 = vmatprep.mubr.f32.mxu0 0.0
        %7139 = vmatmul.mubr.f32.gmra.mrb[0].mxu0 %v7025
        %v7140 = vpop.f32.mrb[0].mxu0
        %v7141 = vadd.f32 %v7018, %v7140
        %v7142 = vpop.f32.mrb[0].mxu0
        %7143 = vmatprep.mubr.f32.mxu0 0.0
        %7144 = vmatmul.mubr.f32.gmra.mrb[0].mxu0 %v7028
        %v7145 = vpop.f32.mrb[0].mxu0
        %v7146 = vadd.f32 %v7018, %v7145
        %v7147 = vpop.f32.mrb[0].mxu0
        %7148 = vmatprep.mubr.f32.mxu0 0.0
        %7149 = vmatmul.mubr.f32.gmra.mrb[0].mxu0 %v7031
        %v7150 = vpop.f32.mrb[0].mxu0
        %v7151 = vadd.f32 %v7018, %v7150
        %v7152 = vpop.f32.mrb[0].mxu0
        %7153 = vmatprep.mubr.f32.mxu0 0.0
        %7154 = vmatmul.mubr.f32.gmra.mrb[0].mxu0 %v7034
        %v7155 = vpop.f32.mrb[0].mxu0
        %v7156 = vadd.f32 %v7018, %v7155
        %v7157 = vpop.f32.mrb[0].mxu0
        %7158 = vmatprep.mubr.f32.mxu0 0.0
        %7159 = vmatmul.mubr.f32.gmra.mrb[0].mxu0 %v7037
        %v7160 = vpop.f32.mrb[0].mxu0
        %v7161 = vadd.f32 %v7018, %v7160
        %v7162 = vpop.f32.mrb[0].mxu0
        %7163 = vmatprep.mubr.f32.mxu0 0.0
        %7164 = vmatmul.mubr.f32.gmra.mrb[0].mxu0 %v7040
        %v7165 = vpop.f32.mrb[0].mxu0
        %v7166 = vadd.f32 %v7018, %v7165
        %v7167 = vpop.f32.mrb[0].mxu0
        %7168 = vmatprep.mubr.f32.mxu0 0.0
        %7169 = vmatmul.mubr.f32.gmra.mrb[0].mxu0 %v7043
        %v7170 = vpop.f32.mrb[0].mxu0
        %v7171 = vadd.f32 %v7018, %v7170
        %v7172 = vpop.f32.mrb[0].mxu0
        %7173 = vmatprep.mubr.f32.mxu0 0.0
        %7174 = vmatmul.mubr.f32.gmra.mrb[0].mxu0 %v7046
        %v7175 = vpop.f32.mrb[0].mxu0
        %v7176 = vadd.f32 %v7018, %v7175
        %v7177 = vpop.f32.mrb[0].mxu0
        %7178 = vmatprep.mubr.f32.mxu0 0.0
        %7179 = vmatmul.mubr.f32.gmra.mrb[0].mxu0 %v7049
        %v7180 = vpop.f32.mrb[0].mxu0
        %v7181 = vadd.f32 %v7018, %v7180
        %v7182 = vpop.f32.mrb[0].mxu0
        %7183 = vmatprep.mubr.f32.mxu0 0.0
        %7184 = vmatmul.mubr.f32.gmra.mrb[0].mxu0 %v7052
        %v7185 = vpop.f32.mrb[0].mxu0
        %v7186 = vadd.f32 %v7018, %v7185
        %v7187 = vpop.f32.mrb[0].mxu0
        %7188 = vmatprep.mubr.f32.mxu0 0.0
        %7189 = vmatmul.mubr.f32.gmra.mrb[0].mxu0 %v7055
        %v7190 = vpop.f32.mrb[0].mxu0
        %v7191 = vadd.f32 %v7018, %v7190
        %v7192 = vpop.f32.mrb[0].mxu0
        %7193 = vmatprep.mubr.f32.mxu0 0.0
        %7194 = vmatmul.mubr.f32.gmra.mrb[0].mxu0 %v7058
        %v7195 = vpop.f32.mrb[0].mxu0
        %v7196 = vadd.f32 %v7018, %v7195
        %v7197 = vpop.f32.mrb[0].mxu0
        %7198 = vmatprep.mubr.f32.mxu0 0.0
        %7199 = vmatmul.mubr.f32.gmra.mrb[0].mxu0 %v7061
        %v7200 = vpop.f32.mrb[0].mxu0
        %v7201 = vadd.f32 %v7018, %v7200
        %v7202 = vpop.f32.mrb[0].mxu0
        %7203 = vmatprep.mubr.f32.mxu0 0.0
        %7204 = vmatmul.mubr.f32.gmra.mrb[0].mxu0 %v7064
        %v7205 = vpop.f32.mrb[0].mxu0
        %v7206 = vadd.f32 %v7018, %v7205
        %v7207 = vpop.f32.mrb[0].mxu0
        %7208 = vmatprep.mubr.f32.mxu0 0.0
        %7209 = vmatmul.mubr.f32.gmra.mrb[0].mxu0 %v7067
        %v7210 = vpop.f32.mrb[0].mxu0
        %v7211 = vadd.f32 %v7018, %v7210
        %v7212 = vpop.f32.mrb[0].mxu0
        %7213 = vdwg.mxu0
        %vm7214 = vcmp.gt.f32.partialorder %v7136, 0.0
        %vm7215 = vcmp.gt.f32.partialorder %v7141, 0.0
        %vm7216 = vcmp.gt.f32.partialorder %v7146, 0.0
        %vm7217 = vcmp.gt.f32.partialorder %v7151, 0.0
        %vm7218 = vcmp.gt.f32.partialorder %v7156, 0.0
        %vm7219 = vcmp.gt.f32.partialorder %v7161, 0.0
        %vm7220 = vcmp.gt.f32.partialorder %v7166, 0.0
        %vm7221 = vcmp.gt.f32.partialorder %v7171, 0.0
        %vm7222 = vcmp.gt.f32.partialorder %v7176, 0.0
        %vm7223 = vcmp.gt.f32.partialorder %v7181, 0.0
        %vm7224 = vcmp.gt.f32.partialorder %v7186, 0.0
        %vm7225 = vcmp.gt.f32.partialorder %v7191, 0.0
        %vm7226 = vcmp.gt.f32.partialorder %v7196, 0.0
        %vm7227 = vcmp.gt.f32.partialorder %v7201, 0.0
        %vm7228 = vcmp.gt.f32.partialorder %v7206, 0.0
        %vm7229 = vcmp.gt.f32.partialorder %v7211, 0.0
        %v7230 = vmul.f32 %v7136, 0.01
        %v7231 = vmul.f32 %v7141, 0.01
        %v7232 = vmul.f32 %v7146, 0.01
        %v7233 = vmul.f32 %v7151, 0.01
        %v7234 = vmul.f32 %v7156, 0.01
        %v7235 = vmul.f32 %v7161, 0.01
        %v7236 = vmul.f32 %v7166, 0.01
        %v7237 = vmul.f32 %v7171, 0.01
        %v7238 = vmul.f32 %v7176, 0.01
        %v7239 = vmul.f32 %v7181, 0.01
        %v7240 = vmul.f32 %v7186, 0.01
        %v7241 = vmul.f32 %v7191, 0.01
        %v7242 = vmul.f32 %v7196, 0.01
        %v7243 = vmul.f32 %v7201, 0.01
        %v7244 = vmul.f32 %v7206, 0.01
        %v7245 = vmul.f32 %v7211, 0.01
        %v7246 = vsel %vm7214, %v7136, %v7230
        %v7247 = vsel %vm7215, %v7141, %v7231
        %v7248 = vsel %vm7216, %v7146, %v7232
        %v7249 = vsel %vm7217, %v7151, %v7233
        %v7250 = vsel %vm7218, %v7156, %v7234
        %v7251 = vsel %vm7219, %v7161, %v7235
        %v7252 = vsel %vm7220, %v7166, %v7236
        %v7253 = vsel %vm7221, %v7171, %v7237
        %v7254 = vsel %vm7222, %v7176, %v7238
        %v7255 = vsel %vm7223, %v7181, %v7239
        %v7256 = vsel %vm7224, %v7186, %v7240
        %v7257 = vsel %vm7225, %v7191, %v7241
        %v7258 = vsel %vm7226, %v7196, %v7242
        %v7259 = vsel %vm7227, %v7201, %v7243
        %v7260 = vsel %vm7228, %v7206, %v7244
        %v7261 = vsel %vm7229, %v7211, %v7245
        %v7262 = vld [vmem:[%s11] sm:$0xff]
        %v7263 = vld [vmem:[%s11 + $0x8] sm:$0xff]
        %v7264 = vld [vmem:[#allocation2] sm:$0x1]
        %v7266 = vlaneseq
        %v7267 = vshrl.u32 %v7266, 7
        %v7268 = vsub.s32 0, %v7267
        %v7269 = vrot.slane %v7264, %v7268
        %vm7271 = vcmask 130048
        %v7273 = vsel %vm7271, %v7246, 0
        %v7276 = vsel %vm7271, %v7247, 0
        %v7279 = vsel %vm7271, %v7248, 0
        %v7282 = vsel %vm7271, %v7249, 0
        %v7285 = vsel %vm7271, %v7250, 0
        %v7288 = vsel %vm7271, %v7251, 0
        %v7291 = vsel %vm7271, %v7252, 0
        %v7294 = vsel %vm7271, %v7253, 0
        %v7297 = vsel %vm7271, %v7254, 0
        %v7300 = vsel %vm7271, %v7255, 0
        %v7303 = vsel %vm7271, %v7256, 0
        %v7306 = vsel %vm7271, %v7257, 0
        %v7309 = vsel %vm7271, %v7258, 0
        %v7312 = vsel %vm7271, %v7259, 0
        %v7315 = vsel %vm7271, %v7260, 0
        %v7318 = vsel %vm7271, %v7261, 0
        %7320 = vmatprep.subr.mxu0 0.0
        %7321 = vmatpush1.msra.mxu0 %v7262
        %7322 = vmatprep.subr.mxu0 0.0
        %7323 = vmatpush1.msra.mxu0 %v7263
        %7324 = vmatprep.subr.mxu0 0.0
        %7325 = vmatpush1.msra.mxu0 0.0
        %7326 = vmatprep.subr.mxu0 0.0
        %7327 = vmatpush1.msra.mxu0 0.0
        %7328 = vmatprep.subr.mxu0 0.0
        %7329 = vmatpush1.msra.mxu0 0.0
        %7330 = vmatprep.subr.mxu0 0.0
        %7331 = vmatpush1.msra.mxu0 0.0
        %7332 = vmatprep.subr.mxu0 0.0
        %7333 = vmatpush1.msra.mxu0 0.0
        %7334 = vmatprep.subr.mxu0 0.0
        %7335 = vmatpush1.msra.mxu0 0.0
        %7336 = vmatprep.subr.mxu0 0.0
        %7337 = vmatpush1.msra.mxu0 0.0
        %7338 = vmatprep.subr.mxu0 0.0
        %7339 = vmatpush1.msra.mxu0 0.0
        %7340 = vmatprep.subr.mxu0 0.0
        %7341 = vmatpush1.msra.mxu0 0.0
        %7342 = vmatprep.subr.mxu0 0.0
        %7343 = vmatpush1.msra.mxu0 0.0
        %7344 = vmatprep.subr.mxu0 0.0
        %7345 = vmatpush1.msra.mxu0 0.0
        %7346 = vmatprep.subr.mxu0 0.0
        %7347 = vmatpush1.msra.mxu0 0.0
        %7348 = vmatprep.subr.mxu0 0.0
        %7349 = vmatpush1.msra.mxu0 0.0
        %7350 = vmatprep.subr.mxu0 0.0
        %7351 = vmatpush1.msra.mxu0 0.0
        %7352 = vmatprep.subr.mxu0 0.0
        %7353 = vmatpush1.msra.mxu0 0.0
        %7354 = vmatprep.subr.mxu0 0.0
        %7355 = vmatpush1.msra.mxu0 0.0
        %7356 = vmatprep.subr.mxu0 0.0
        %7357 = vmatpush1.msra.mxu0 0.0
        %7358 = vmatprep.subr.mxu0 0.0
        %7359 = vmatpush1.msra.mxu0 0.0
        %7360 = vmatprep.subr.mxu0 0.0
        %7361 = vmatpush1.msra.mxu0 0.0
        %7362 = vmatprep.subr.mxu0 0.0
        %7363 = vmatpush1.msra.mxu0 0.0
        %7364 = vmatprep.subr.mxu0 0.0
        %7365 = vmatpush1.msra.mxu0 0.0
        %7366 = vmatprep.subr.mxu0 0.0
        %7367 = vmatpush1.msra.mxu0 0.0
        %7368 = vmatprep.subr.mxu0 0.0
        %7369 = vmatpush1.msra.mxu0 0.0
        %7370 = vmatprep.subr.mxu0 0.0
        %7371 = vmatpush1.msra.mxu0 0.0
        %7372 = vmatprep.subr.mxu0 0.0
        %7373 = vmatpush1.msra.mxu0 0.0
        %7374 = vmatprep.subr.mxu0 0.0
        %7375 = vmatpush1.msra.mxu0 0.0
        %7376 = vmatprep.subr.mxu0 0.0
        %7377 = vmatpush1.msra.mxu0 0.0
        %7378 = vmatprep.subr.mxu0 0.0
        %7379 = vmatpush1.msra.mxu0 0.0
        %7380 = vmatprep.subr.mxu0 0.0
        %7381 = vmatpush1.msra.mxu0 0.0
        %7382 = vmatprep.subr.mxu0 0.0
        %7383 = vmatpush1.msra.mxu0 0.0
        %7384 = vmatprep.mubr.f32.mxu0 0.0
        %7385 = vmatmul.mubr.f32.gmra.mrb[0].mxu0 %v7273
        %v7386 = vpop.f32.mrb[0].mxu0
        %v7387 = vadd.f32 %v7269, %v7386
        %v7388 = vpop.f32.mrb[0].mxu0
        %7389 = vmatprep.mubr.f32.mxu0 0.0
        %7390 = vmatmul.mubr.f32.gmra.mrb[0].mxu0 %v7276
        %v7391 = vpop.f32.mrb[0].mxu0
        %v7392 = vadd.f32 %v7269, %v7391
        %v7393 = vpop.f32.mrb[0].mxu0
        %7394 = vmatprep.mubr.f32.mxu0 0.0
        %7395 = vmatmul.mubr.f32.gmra.mrb[0].mxu0 %v7279
        %v7396 = vpop.f32.mrb[0].mxu0
        %v7397 = vadd.f32 %v7269, %v7396
        %v7398 = vpop.f32.mrb[0].mxu0
        %7399 = vmatprep.mubr.f32.mxu0 0.0
        %7400 = vmatmul.mubr.f32.gmra.mrb[0].mxu0 %v7282
        %v7401 = vpop.f32.mrb[0].mxu0
        %v7402 = vadd.f32 %v7269, %v7401
        %v7403 = vpop.f32.mrb[0].mxu0
        %7404 = vmatprep.mubr.f32.mxu0 0.0
        %7405 = vmatmul.mubr.f32.gmra.mrb[0].mxu0 %v7285
        %v7406 = vpop.f32.mrb[0].mxu0
        %v7407 = vadd.f32 %v7269, %v7406
        %v7408 = vpop.f32.mrb[0].mxu0
        %7409 = vmatprep.mubr.f32.mxu0 0.0
        %7410 = vmatmul.mubr.f32.gmra.mrb[0].mxu0 %v7288
        %v7411 = vpop.f32.mrb[0].mxu0
        %v7412 = vadd.f32 %v7269, %v7411
        %v7413 = vpop.f32.mrb[0].mxu0
        %7414 = vmatprep.mubr.f32.mxu0 0.0
        %7415 = vmatmul.mubr.f32.gmra.mrb[0].mxu0 %v7291
        %v7416 = vpop.f32.mrb[0].mxu0
        %v7417 = vadd.f32 %v7269, %v7416
        %v7418 = vpop.f32.mrb[0].mxu0
        %7419 = vmatprep.mubr.f32.mxu0 0.0
        %7420 = vmatmul.mubr.f32.gmra.mrb[0].mxu0 %v7294
        %v7421 = vpop.f32.mrb[0].mxu0
        %v7422 = vadd.f32 %v7269, %v7421
        %v7423 = vpop.f32.mrb[0].mxu0
        %7424 = vmatprep.mubr.f32.mxu0 0.0
        %7425 = vmatmul.mubr.f32.gmra.mrb[0].mxu0 %v7297
        %v7426 = vpop.f32.mrb[0].mxu0
        %v7427 = vadd.f32 %v7269, %v7426
        %v7428 = vpop.f32.mrb[0].mxu0
        %7429 = vmatprep.mubr.f32.mxu0 0.0
        %7430 = vmatmul.mubr.f32.gmra.mrb[0].mxu0 %v7300
        %v7431 = vpop.f32.mrb[0].mxu0
        %v7432 = vadd.f32 %v7269, %v7431
        %v7433 = vpop.f32.mrb[0].mxu0
        %7434 = vmatprep.mubr.f32.mxu0 0.0
        %7435 = vmatmul.mubr.f32.gmra.mrb[0].mxu0 %v7303
        %v7436 = vpop.f32.mrb[0].mxu0
        %v7437 = vadd.f32 %v7269, %v7436
        %v7438 = vpop.f32.mrb[0].mxu0
        %7439 = vmatprep.mubr.f32.mxu0 0.0
        %7440 = vmatmul.mubr.f32.gmra.mrb[0].mxu0 %v7306
        %v7441 = vpop.f32.mrb[0].mxu0
        %v7442 = vadd.f32 %v7269, %v7441
        %v7443 = vpop.f32.mrb[0].mxu0
        %7444 = vmatprep.mubr.f32.mxu0 0.0
        %7445 = vmatmul.mubr.f32.gmra.mrb[0].mxu0 %v7309
        %v7446 = vpop.f32.mrb[0].mxu0
        %v7447 = vadd.f32 %v7269, %v7446
        %v7448 = vpop.f32.mrb[0].mxu0
        %7449 = vmatprep.mubr.f32.mxu0 0.0
        %7450 = vmatmul.mubr.f32.gmra.mrb[0].mxu0 %v7312
        %v7451 = vpop.f32.mrb[0].mxu0
        %v7452 = vadd.f32 %v7269, %v7451
        %v7453 = vpop.f32.mrb[0].mxu0
        %7454 = vmatprep.mubr.f32.mxu0 0.0
        %7455 = vmatmul.mubr.f32.gmra.mrb[0].mxu0 %v7315
        %v7456 = vpop.f32.mrb[0].mxu0
        %v7457 = vadd.f32 %v7269, %v7456
        %v7458 = vpop.f32.mrb[0].mxu0
        %7459 = vmatprep.mubr.f32.mxu0 0.0
        %7460 = vmatmul.mubr.f32.gmra.mrb[0].mxu0 %v7318
        %v7461 = vpop.f32.mrb[0].mxu0
        %v7462 = vadd.f32 %v7269, %v7461
        %v7463 = vpop.f32.mrb[0].mxu0
        %7464 = vdwg.mxu0
        %vm7465 = vcmask 7168
        %7466 = vst.msk [vmem:[%s502] sm:$0xff] %vm7465, %v7387
        %7467 = vst.msk [vmem:[%s502 + $0x8] sm:$0xff] %vm7465, %v7392
        %7468 = vst.msk [vmem:[%s502 + $0x10] sm:$0xff] %vm7465, %v7397
        %7469 = vst.msk [vmem:[%s502 + $0x18] sm:$0xff] %vm7465, %v7402
        %7470 = vst.msk [vmem:[%s502 + $0x20] sm:$0xff] %vm7465, %v7407
        %7471 = vst.msk [vmem:[%s502 + $0x28] sm:$0xff] %vm7465, %v7412
        %7472 = vst.msk [vmem:[%s502 + $0x30] sm:$0xff] %vm7465, %v7417
        %7473 = vst.msk [vmem:[%s502 + $0x38] sm:$0xff] %vm7465, %v7422
        %7474 = vst.msk [vmem:[%s502 + $0x40] sm:$0xff] %vm7465, %v7427
        %7475 = vst.msk [vmem:[%s502 + $0x48] sm:$0xff] %vm7465, %v7432
        %7476 = vst.msk [vmem:[%s502 + $0x50] sm:$0xff] %vm7465, %v7437
        %7477 = vst.msk [vmem:[%s502 + $0x58] sm:$0xff] %vm7465, %v7442
        %7478 = vst.msk [vmem:[%s502 + $0x60] sm:$0xff] %vm7465, %v7447
        %7479 = vst.msk [vmem:[%s502 + $0x68] sm:$0xff] %vm7465, %v7452
        %7480 = vst.msk [vmem:[%s502 + $0x70] sm:$0xff] %vm7465, %v7457
        %7481 = vst.msk [vmem:[%s502 + $0x78] sm:$0xff] %vm7465, %v7462
        %s7482 = smul.u32 16, %s29
        %p7483 = scmp.lt.s32.totalorder %s7482, 31
        %s7484 = scalar_select %p7483, %s7482, 31
        %s7485 = smul.addr %s7484, 8
        %s7486 = scalar_lea.vmem %s13, %s7485
        // Predicated region
        $region89: #{tpu_custom_call.1} parent=71 // pred_check
          %p7487 = pneg %p325
        $region90: #{tpu_custom_call.1} parent=71 // pred_check_branch
          %7489 = sbr.rel (%p7487) target = $region92
        $region91: #{tpu_custom_call.1} parent=71 // pred_region
          %s7490 = smul.u32 16, %s29
        $region92: #{tpu_custom_call.1} parent=71 // pred_fallthru
          _
      $region72: #{tpu_custom_call.1} parent=5 // pred_fallthru
        _
      %p7491 = scmp.le.s32.totalorder 2, %s24
      // Predicated region
      $region93: #{tpu_custom_call.1} parent=5 // pred_check
        %p7492 = pneg %p7491
      $region94: #{tpu_custom_call.1} parent=5 // pred_check_branch
        %7494 = sbr.rel (%p7492) target = $region96
      $region95: #{tpu_custom_call.1} parent=5 // pred_region
        %s7495 = ssub.s32 %s24, 2
        // Predicated region
        $region97: #{tpu_custom_call.1} parent=95 // pred_check
          %p7496 = pneg %p331
        $region98: #{tpu_custom_call.1} parent=95 // pred_check_branch
          %7498 = sbr.rel (%p7496) target = $region100
        $region99: #{tpu_custom_call.1} parent=95 // pred_region
          %s7499 = smul.u32 16, %s30
          %p7500 = scmp.lt.s32.totalorder %s7499, 31
          %s7501 = scalar_select %p7500, %s7499, 31
          %s7502 = smul.addr %s7501, 8
          %s7503 = scalar_lea.vmem %s13, %s7502
        $region100: #{tpu_custom_call.1} parent=95 // pred_fallthru
          _
      $region96: #{tpu_custom_call.1} parent=5 // pred_fallthru
        _
    $region6: #{tpu_custom_call.1} parent=1 // loop_footer
      %s28 = sadd.s32 1, %s24
    $region7: #{tpu_custom_call.1} parent=1 // loop_footer_branch
      %23 = sbr.rel target = $region3
    $region8: #{tpu_custom_call.1} parent=1 // loop_exit
      _
    %7504 = vsyncpa [#allocation4], 1
    %s7505 = scalar_lea.sflag [#allocation4], 1
    %7506 = vsyncpa %s7505, 1
    %7507 = vsyncpa [#allocation6], 1
    %7508 = vsyncpa [#allocation9], 1

</llo_original>
